<compile_context>
chip_gen: v6e
topology: v6e:2x2x1
jax: 0.10.0
libtpu: 0.0.40
codegen_flags: <defaults>
</compile_context>

<pallas_src>
import functools

import jax
import jax.numpy as jnp
from jax.experimental import pallas as pl
from jax.experimental.pallas import tpu as pltpu

# Layer sizes of the autoencoder (encoder then decoder).
DIMS = [784, 128, 64, 36, 18, 9, 18, 36, 64, 128, 784]
N_LAYERS = len(DIMS) - 1  # 10 Linear layers


def _ae_kernel(x_ref, *refs):
    # refs = (w0, b0, w1, b1, ..., w9, b9, out_ref)
    out_ref = refs[-1]
    param_refs = refs[:-1]

    # Cast to bf16 in-kernel: avoids a separate full-HBM-pass XLA astype on x.
    h = x_ref[...].astype(jnp.bfloat16)  # (TB, 784)
    for li in range(N_LAYERS):
        w = param_refs[2 * li][...]        # (in, out) bf16, VMEM-resident
        b = param_refs[2 * li + 1][...]    # (1, out)  f32
        # bf16 x bf16 -> f32 accumulation on the MXU, bias add in f32.
        z = jnp.dot(h, w, preferred_element_type=jnp.float32) + b
        if li < N_LAYERS - 1:
            h = jnp.maximum(z, 0.0).astype(jnp.bfloat16)   # ReLU (VPU)
        else:
            # Sigmoid via tanh: one EUP op per vreg (vs exp + reciprocal),
            # extra mul/add lands on the 4-wide VALU which has slack.
            h = 0.5 * jnp.tanh(0.5 * z) + 0.5
    out_ref[...] = h.astype(out_ref.dtype)  # bf16 store


def _round_up(x, m):
    return ((x + m - 1) // m) * m


@functools.partial(jax.jit, static_argnames=("tile_b",))
def ae_forward(x, params, tile_b=None):
    """x: (B, 784) float32; params: list of (w, b) with w (in, out), b (1, out).

    Returns (B, 784) bfloat16 (cast outside if f32 is truly required).
    """
    B, D_in = x.shape
    assert D_in == DIMS[0]

    if tile_b is None:
        if B <= 256:
            # One right-sized tile: no wasted rows for small batches.
            tile_b = max(8, _round_up(B, 8))
        else:
            # >=2 tiles so both v7x TensorCores run; 256-aligned for the MXU;
            # capped at 512 to stay VMEM-friendly on v5e.
            tile_b = min(512, _round_up(-(-B // 2), 256))
    n_tiles = pl.cdiv(B, tile_b)  # ragged final block handled by Pallas masking

    # Input is the only per-step pipelined ref; weights/biases are whole-array
    # VMEM residents (loaded once, no per-step double-buffer rotation).
    in_specs = [pl.BlockSpec((tile_b, DIMS[0]), lambda i: (i, 0))]
    vmem_spec = pl.BlockSpec(memory_space=pltpu.MemorySpace.VMEM)
    flat_params = []
    for (w, b) in params:
        flat_params.extend([w.astype(jnp.bfloat16), b])  # bf16 weights, f32 bias
        in_specs.extend([vmem_spec, vmem_spec])

    out_spec = pl.BlockSpec((tile_b, DIMS[-1]), lambda i: (i, 0))

    flops = 2 * B * sum(DIMS[i] * DIMS[i + 1] for i in range(N_LAYERS))
    w_bytes = sum(DIMS[i] * DIMS[i + 1] * 2 + DIMS[i + 1] * 4
                  for i in range(N_LAYERS))
    cost = pl.CostEstimate(
        flops=flops,
        transcendentals=B * DIMS[-1],
        bytes_accessed=B * DIMS[0] * 4 + B * DIMS[-1] * 2 + w_bytes,
    )

    return pl.pallas_call(
        _ae_kernel,
        out_shape=jax.ShapeDtypeStruct((B, DIMS[-1]), jnp.bfloat16),
        grid_spec=pltpu.PrefetchScalarGridSpec(
            num_scalar_prefetch=0,
            grid=(n_tiles,),
            in_specs=in_specs,
            out_specs=out_spec,
        ),
        compiler_params=pltpu.CompilerParams(
            dimension_semantics=("parallel",),      # shard tiles across v7x's 2 TCs
            vmem_limit_bytes=32 * 1024 * 1024,      # live set ~6 MiB; explicit headroom
        ),
        cost_estimate=cost,
    )(x, *flat_params)


def init_params(key):
    """Deterministic init mimicking torch.nn.Linear default (uniform +/- 1/sqrt(fan_in))."""
    params = []
    for li in range(N_LAYERS):
        fan_in, fan_out = DIMS[li], DIMS[li + 1]
        key, kw, kb = jax.random.split(key, 3)
        bound = 1.0 / jnp.sqrt(float(fan_in))
        # PyTorch stores weight as (out, in) and computes x @ W.T; we store
        # the already-transposed (in, out) matrix so the kernel does x @ W.
        w = jax.random.uniform(kw, (fan_in, fan_out), jnp.float32, -bound, bound)
        b = jax.random.uniform(kb, (1, fan_out), jnp.float32, -bound, bound)
        params.append((w, b))
    return params


def ae_reference(x, params):
    """Plain-JAX reference with the same bf16-matmul / f32-accumulate recipe."""
    h = x.astype(jnp.bfloat16)
    for li, (w, b) in enumerate(params):
        z = jnp.dot(h, w.astype(jnp.bfloat16), preferred_element_type=jnp.float32) + b
        if li < N_LAYERS - 1:
            h = jnp.maximum(z, 0.0).astype(jnp.bfloat16)
        else:
            h = jax.nn.sigmoid(z)
    return h


if __name__ == "__main__":
    key = jax.random.PRNGKey(0)
    key, kx = jax.random.split(key)

    # Non-multiple of the tile size on purpose: exercises the ragged final
    # block and gives a 2-step grid (both TensorCores active on v7x).
    B = 300
    x = jax.random.normal(kx, (B, 28 * 28), jnp.float32)
    params = init_params(key)

    out = ae_forward(x, params)
    out = jax.block_until_ready(out)

    ref = ae_reference(x, params)
    assert out.shape == (B, 28 * 28), out.shape
    assert out.dtype == jnp.bfloat16, out.dtype
    out_f32 = out.astype(jnp.float32)
    max_err = float(jnp.max(jnp.abs(out_f32 - ref)))
    # bf16 matmuls + bf16 output quantization: ~1e-3 level deviations expected.
    assert jnp.allclose(out_f32, ref, atol=2e-2, rtol=2e-2), max_err

    print("KERNEL_OK")
</pallas_src>

<mosaic_0001>
module attributes {stable_mosaic.version = 11 : i64} {
  func.func @_ae_kernel(%arg0: i32, %arg1: memref<256x784xf32, #tpu.memory_space<vmem>>, %arg2: memref<784x128xbf16, #tpu.memory_space<vmem>>, %arg3: memref<1x128xf32, #tpu.memory_space<vmem>>, %arg4: memref<128x64xbf16, #tpu.memory_space<vmem>>, %arg5: memref<1x64xf32, #tpu.memory_space<vmem>>, %arg6: memref<64x36xbf16, #tpu.memory_space<vmem>>, %arg7: memref<1x36xf32, #tpu.memory_space<vmem>>, %arg8: memref<36x18xbf16, #tpu.memory_space<vmem>>, %arg9: memref<1x18xf32, #tpu.memory_space<vmem>>, %arg10: memref<18x9xbf16, #tpu.memory_space<vmem>>, %arg11: memref<1x9xf32, #tpu.memory_space<vmem>>, %arg12: memref<9x18xbf16, #tpu.memory_space<vmem>>, %arg13: memref<1x18xf32, #tpu.memory_space<vmem>>, %arg14: memref<18x36xbf16, #tpu.memory_space<vmem>>, %arg15: memref<1x36xf32, #tpu.memory_space<vmem>>, %arg16: memref<36x64xbf16, #tpu.memory_space<vmem>>, %arg17: memref<1x64xf32, #tpu.memory_space<vmem>>, %arg18: memref<64x128xbf16, #tpu.memory_space<vmem>>, %arg19: memref<1x128xf32, #tpu.memory_space<vmem>>, %arg20: memref<128x784xbf16, #tpu.memory_space<vmem>>, %arg21: memref<1x784xf32, #tpu.memory_space<vmem>>, %arg22: memref<256x784xbf16, #tpu.memory_space<vmem>>) attributes {dimension_semantics = [#tpu.dimension_semantics<parallel>], iteration_bounds = array<i64: 2>, scalar_prefetch = 0 : i64, scratch_operands = 0 : i64, tpu.core_type = #tpu.core_type<tc>, window_params = [{transform_indices = @transform_0, window_bounds = array<i64: 256, 784>}, {pipeline_mode = #tpu.pipeline_mode<synchronous>, transform_indices = @transform_1, window_bounds = array<i64: 784, 128>}, {pipeline_mode = #tpu.pipeline_mode<synchronous>, transform_indices = @transform_2, window_bounds = array<i64: 1, 128>}, {pipeline_mode = #tpu.pipeline_mode<synchronous>, transform_indices = @transform_3, window_bounds = array<i64: 128, 64>}, {pipeline_mode = #tpu.pipeline_mode<synchronous>, transform_indices = @transform_4, window_bounds = array<i64: 1, 64>}, {pipeline_mode = #tpu.pipeline_mode<synchronous>, transform_indices = @transform_5, window_bounds = array<i64: 64, 36>}, {pipeline_mode = #tpu.pipeline_mode<synchronous>, transform_indices = @transform_6, window_bounds = array<i64: 1, 36>}, {pipeline_mode = #tpu.pipeline_mode<synchronous>, transform_indices = @transform_7, window_bounds = array<i64: 36, 18>}, {pipeline_mode = #tpu.pipeline_mode<synchronous>, transform_indices = @transform_8, window_bounds = array<i64: 1, 18>}, {pipeline_mode = #tpu.pipeline_mode<synchronous>, transform_indices = @transform_9, window_bounds = array<i64: 18, 9>}, {pipeline_mode = #tpu.pipeline_mode<synchronous>, transform_indices = @transform_10, window_bounds = array<i64: 1, 9>}, {pipeline_mode = #tpu.pipeline_mode<synchronous>, transform_indices = @transform_11, window_bounds = array<i64: 9, 18>}, {pipeline_mode = #tpu.pipeline_mode<synchronous>, transform_indices = @transform_12, window_bounds = array<i64: 1, 18>}, {pipeline_mode = #tpu.pipeline_mode<synchronous>, transform_indices = @transform_13, window_bounds = array<i64: 18, 36>}, {pipeline_mode = #tpu.pipeline_mode<synchronous>, transform_indices = @transform_14, window_bounds = array<i64: 1, 36>}, {pipeline_mode = #tpu.pipeline_mode<synchronous>, transform_indices = @transform_15, window_bounds = array<i64: 36, 64>}, {pipeline_mode = #tpu.pipeline_mode<synchronous>, transform_indices = @transform_16, window_bounds = array<i64: 1, 64>}, {pipeline_mode = #tpu.pipeline_mode<synchronous>, transform_indices = @transform_17, window_bounds = array<i64: 64, 128>}, {pipeline_mode = #tpu.pipeline_mode<synchronous>, transform_indices = @transform_18, window_bounds = array<i64: 1, 128>}, {pipeline_mode = #tpu.pipeline_mode<synchronous>, transform_indices = @transform_19, window_bounds = array<i64: 128, 784>}, {pipeline_mode = #tpu.pipeline_mode<synchronous>, transform_indices = @transform_20, window_bounds = array<i64: 1, 784>}, {transform_indices = @transform_21, window_bounds = array<i64: 256, 784>}]} {
    %c0 = arith.constant 0 : index
    %c0_0 = arith.constant 0 : index
    %0 = vector.load %arg1[%c0, %c0_0] : memref<256x784xf32, #tpu.memory_space<vmem>>, vector<256x784xf32>
    %1 = arith.truncf %0 : vector<256x784xf32> to vector<256x784xbf16>
    %c0_1 = arith.constant 0 : index
    %c0_2 = arith.constant 0 : index
    %2 = vector.load %arg2[%c0_1, %c0_2] : memref<784x128xbf16, #tpu.memory_space<vmem>>, vector<784x128xbf16>
    %c0_3 = arith.constant 0 : index
    %c0_4 = arith.constant 0 : index
    %3 = vector.load %arg3[%c0_3, %c0_4] : memref<1x128xf32, #tpu.memory_space<vmem>>, vector<1x128xf32>
    %cst = arith.constant dense<0.000000e+00> : vector<256x128xf32>
    %4 = tpu.matmul %1, %2, %cst {dimension_numbers = #tpu.dot_dimension_numbers<[1], [0], [0], [1], [0, 0, 1, 1], [], []>} : vector<256x784xbf16>, vector<784x128xbf16>, vector<256x128xf32> -> vector<256x128xf32>
    %5 = vector.broadcast %3 : vector<1x128xf32> to vector<256x128xf32>
    %6 = arith.addf %4, %5 : vector<256x128xf32>
    %cst_5 = arith.constant 0.000000e+00 : f32
    %7 = vector.broadcast %cst_5 : f32 to vector<256x128xf32>
    %8 = arith.maximumf %6, %7 : vector<256x128xf32>
    %9 = arith.truncf %8 : vector<256x128xf32> to vector<256x128xbf16>
    %c0_6 = arith.constant 0 : index
    %c0_7 = arith.constant 0 : index
    %10 = vector.load %arg4[%c0_6, %c0_7] : memref<128x64xbf16, #tpu.memory_space<vmem>>, vector<128x64xbf16>
    %c0_8 = arith.constant 0 : index
    %c0_9 = arith.constant 0 : index
    %11 = vector.load %arg5[%c0_8, %c0_9] : memref<1x64xf32, #tpu.memory_space<vmem>>, vector<1x64xf32>
    %cst_10 = arith.constant dense<0.000000e+00> : vector<256x64xf32>
    %12 = tpu.matmul %9, %10, %cst_10 {dimension_numbers = #tpu.dot_dimension_numbers<[1], [0], [0], [1], [0, 0, 1, 1], [], []>} : vector<256x128xbf16>, vector<128x64xbf16>, vector<256x64xf32> -> vector<256x64xf32>
    %13 = vector.broadcast %11 : vector<1x64xf32> to vector<256x64xf32>
    %14 = arith.addf %12, %13 : vector<256x64xf32>
    %cst_11 = arith.constant 0.000000e+00 : f32
    %15 = vector.broadcast %cst_11 : f32 to vector<256x64xf32>
    %16 = arith.maximumf %14, %15 : vector<256x64xf32>
    %17 = arith.truncf %16 : vector<256x64xf32> to vector<256x64xbf16>
    %c0_12 = arith.constant 0 : index
    %c0_13 = arith.constant 0 : index
    %18 = vector.load %arg6[%c0_12, %c0_13] : memref<64x36xbf16, #tpu.memory_space<vmem>>, vector<64x36xbf16>
    %c0_14 = arith.constant 0 : index
    %c0_15 = arith.constant 0 : index
    %19 = vector.load %arg7[%c0_14, %c0_15] : memref<1x36xf32, #tpu.memory_space<vmem>>, vector<1x36xf32>
    %cst_16 = arith.constant dense<0.000000e+00> : vector<256x36xf32>
    %20 = tpu.matmul %17, %18, %cst_16 {dimension_numbers = #tpu.dot_dimension_numbers<[1], [0], [0], [1], [0, 0, 1, 1], [], []>} : vector<256x64xbf16>, vector<64x36xbf16>, vector<256x36xf32> -> vector<256x36xf32>
    %21 = vector.broadcast %19 : vector<1x36xf32> to vector<256x36xf32>
    %22 = arith.addf %20, %21 : vector<256x36xf32>
    %cst_17 = arith.constant 0.000000e+00 : f32
    %23 = vector.broadcast %cst_17 : f32 to vector<256x36xf32>
    %24 = arith.maximumf %22, %23 : vector<256x36xf32>
    %25 = arith.truncf %24 : vector<256x36xf32> to vector<256x36xbf16>
    %c0_18 = arith.constant 0 : index
    %c0_19 = arith.constant 0 : index
    %26 = vector.load %arg8[%c0_18, %c0_19] : memref<36x18xbf16, #tpu.memory_space<vmem>>, vector<36x18xbf16>
    %c0_20 = arith.constant 0 : index
    %c0_21 = arith.constant 0 : index
    %27 = vector.load %arg9[%c0_20, %c0_21] : memref<1x18xf32, #tpu.memory_space<vmem>>, vector<1x18xf32>
    %cst_22 = arith.constant dense<0.000000e+00> : vector<256x18xf32>
    %28 = tpu.matmul %25, %26, %cst_22 {dimension_numbers = #tpu.dot_dimension_numbers<[1], [0], [0], [1], [0, 0, 1, 1], [], []>} : vector<256x36xbf16>, vector<36x18xbf16>, vector<256x18xf32> -> vector<256x18xf32>
    %29 = vector.broadcast %27 : vector<1x18xf32> to vector<256x18xf32>
    %30 = arith.addf %28, %29 : vector<256x18xf32>
    %cst_23 = arith.constant 0.000000e+00 : f32
    %31 = vector.broadcast %cst_23 : f32 to vector<256x18xf32>
    %32 = arith.maximumf %30, %31 : vector<256x18xf32>
    %33 = arith.truncf %32 : vector<256x18xf32> to vector<256x18xbf16>
    %c0_24 = arith.constant 0 : index
    %c0_25 = arith.constant 0 : index
    %34 = vector.load %arg10[%c0_24, %c0_25] : memref<18x9xbf16, #tpu.memory_space<vmem>>, vector<18x9xbf16>
    %c0_26 = arith.constant 0 : index
    %c0_27 = arith.constant 0 : index
    %35 = vector.load %arg11[%c0_26, %c0_27] : memref<1x9xf32, #tpu.memory_space<vmem>>, vector<1x9xf32>
    %cst_28 = arith.constant dense<0.000000e+00> : vector<256x9xf32>
    %36 = tpu.matmul %33, %34, %cst_28 {dimension_numbers = #tpu.dot_dimension_numbers<[1], [0], [0], [1], [0, 0, 1, 1], [], []>} : vector<256x18xbf16>, vector<18x9xbf16>, vector<256x9xf32> -> vector<256x9xf32>
    %37 = vector.broadcast %35 : vector<1x9xf32> to vector<256x9xf32>
    %38 = arith.addf %36, %37 : vector<256x9xf32>
    %cst_29 = arith.constant 0.000000e+00 : f32
    %39 = vector.broadcast %cst_29 : f32 to vector<256x9xf32>
    %40 = arith.maximumf %38, %39 : vector<256x9xf32>
    %41 = arith.truncf %40 : vector<256x9xf32> to vector<256x9xbf16>
    %c0_30 = arith.constant 0 : index
    %c0_31 = arith.constant 0 : index
    %42 = vector.load %arg12[%c0_30, %c0_31] : memref<9x18xbf16, #tpu.memory_space<vmem>>, vector<9x18xbf16>
    %c0_32 = arith.constant 0 : index
    %c0_33 = arith.constant 0 : index
    %43 = vector.load %arg13[%c0_32, %c0_33] : memref<1x18xf32, #tpu.memory_space<vmem>>, vector<1x18xf32>
    %cst_34 = arith.constant dense<0.000000e+00> : vector<256x18xf32>
    %44 = tpu.matmul %41, %42, %cst_34 {dimension_numbers = #tpu.dot_dimension_numbers<[1], [0], [0], [1], [0, 0, 1, 1], [], []>} : vector<256x9xbf16>, vector<9x18xbf16>, vector<256x18xf32> -> vector<256x18xf32>
    %45 = vector.broadcast %43 : vector<1x18xf32> to vector<256x18xf32>
    %46 = arith.addf %44, %45 : vector<256x18xf32>
    %cst_35 = arith.constant 0.000000e+00 : f32
    %47 = vector.broadcast %cst_35 : f32 to vector<256x18xf32>
    %48 = arith.maximumf %46, %47 : vector<256x18xf32>
    %49 = arith.truncf %48 : vector<256x18xf32> to vector<256x18xbf16>
    %c0_36 = arith.constant 0 : index
    %c0_37 = arith.constant 0 : index
    %50 = vector.load %arg14[%c0_36, %c0_37] : memref<18x36xbf16, #tpu.memory_space<vmem>>, vector<18x36xbf16>
    %c0_38 = arith.constant 0 : index
    %c0_39 = arith.constant 0 : index
    %51 = vector.load %arg15[%c0_38, %c0_39] : memref<1x36xf32, #tpu.memory_space<vmem>>, vector<1x36xf32>
    %cst_40 = arith.constant dense<0.000000e+00> : vector<256x36xf32>
    %52 = tpu.matmul %49, %50, %cst_40 {dimension_numbers = #tpu.dot_dimension_numbers<[1], [0], [0], [1], [0, 0, 1, 1], [], []>} : vector<256x18xbf16>, vector<18x36xbf16>, vector<256x36xf32> -> vector<256x36xf32>
    %53 = vector.broadcast %51 : vector<1x36xf32> to vector<256x36xf32>
    %54 = arith.addf %52, %53 : vector<256x36xf32>
    %cst_41 = arith.constant 0.000000e+00 : f32
    %55 = vector.broadcast %cst_41 : f32 to vector<256x36xf32>
    %56 = arith.maximumf %54, %55 : vector<256x36xf32>
    %57 = arith.truncf %56 : vector<256x36xf32> to vector<256x36xbf16>
    %c0_42 = arith.constant 0 : index
    %c0_43 = arith.constant 0 : index
    %58 = vector.load %arg16[%c0_42, %c0_43] : memref<36x64xbf16, #tpu.memory_space<vmem>>, vector<36x64xbf16>
    %c0_44 = arith.constant 0 : index
    %c0_45 = arith.constant 0 : index
    %59 = vector.load %arg17[%c0_44, %c0_45] : memref<1x64xf32, #tpu.memory_space<vmem>>, vector<1x64xf32>
    %cst_46 = arith.constant dense<0.000000e+00> : vector<256x64xf32>
    %60 = tpu.matmul %57, %58, %cst_46 {dimension_numbers = #tpu.dot_dimension_numbers<[1], [0], [0], [1], [0, 0, 1, 1], [], []>} : vector<256x36xbf16>, vector<36x64xbf16>, vector<256x64xf32> -> vector<256x64xf32>
    %61 = vector.broadcast %59 : vector<1x64xf32> to vector<256x64xf32>
    %62 = arith.addf %60, %61 : vector<256x64xf32>
    %cst_47 = arith.constant 0.000000e+00 : f32
    %63 = vector.broadcast %cst_47 : f32 to vector<256x64xf32>
    %64 = arith.maximumf %62, %63 : vector<256x64xf32>
    %65 = arith.truncf %64 : vector<256x64xf32> to vector<256x64xbf16>
    %c0_48 = arith.constant 0 : index
    %c0_49 = arith.constant 0 : index
    %66 = vector.load %arg18[%c0_48, %c0_49] : memref<64x128xbf16, #tpu.memory_space<vmem>>, vector<64x128xbf16>
    %c0_50 = arith.constant 0 : index
    %c0_51 = arith.constant 0 : index
    %67 = vector.load %arg19[%c0_50, %c0_51] : memref<1x128xf32, #tpu.memory_space<vmem>>, vector<1x128xf32>
    %cst_52 = arith.constant dense<0.000000e+00> : vector<256x128xf32>
    %68 = tpu.matmul %65, %66, %cst_52 {dimension_numbers = #tpu.dot_dimension_numbers<[1], [0], [0], [1], [0, 0, 1, 1], [], []>} : vector<256x64xbf16>, vector<64x128xbf16>, vector<256x128xf32> -> vector<256x128xf32>
    %69 = vector.broadcast %67 : vector<1x128xf32> to vector<256x128xf32>
    %70 = arith.addf %68, %69 : vector<256x128xf32>
    %cst_53 = arith.constant 0.000000e+00 : f32
    %71 = vector.broadcast %cst_53 : f32 to vector<256x128xf32>
    %72 = arith.maximumf %70, %71 : vector<256x128xf32>
    %73 = arith.truncf %72 : vector<256x128xf32> to vector<256x128xbf16>
    %c0_54 = arith.constant 0 : index
    %c0_55 = arith.constant 0 : index
    %74 = vector.load %arg20[%c0_54, %c0_55] : memref<128x784xbf16, #tpu.memory_space<vmem>>, vector<128x784xbf16>
    %c0_56 = arith.constant 0 : index
    %c0_57 = arith.constant 0 : index
    %75 = vector.load %arg21[%c0_56, %c0_57] : memref<1x784xf32, #tpu.memory_space<vmem>>, vector<1x784xf32>
    %cst_58 = arith.constant dense<0.000000e+00> : vector<256x784xf32>
    %76 = tpu.matmul %73, %74, %cst_58 {dimension_numbers = #tpu.dot_dimension_numbers<[1], [0], [0], [1], [0, 0, 1, 1], [], []>} : vector<256x128xbf16>, vector<128x784xbf16>, vector<256x784xf32> -> vector<256x784xf32>
    %77 = vector.broadcast %75 : vector<1x784xf32> to vector<256x784xf32>
    %78 = arith.addf %76, %77 : vector<256x784xf32>
    %cst_59 = arith.constant 5.000000e-01 : f32
    %79 = vector.broadcast %cst_59 : f32 to vector<256x784xf32>
    %80 = arith.mulf %79, %78 : vector<256x784xf32>
    %81 = math.tanh %80 : vector<256x784xf32>
    %cst_60 = arith.constant 5.000000e-01 : f32
    %82 = vector.broadcast %cst_60 : f32 to vector<256x784xf32>
    %83 = arith.mulf %82, %81 : vector<256x784xf32>
    %cst_61 = arith.constant 5.000000e-01 : f32
    %84 = vector.broadcast %cst_61 : f32 to vector<256x784xf32>
    %85 = arith.addf %83, %84 : vector<256x784xf32>
    %86 = arith.truncf %85 : vector<256x784xf32> to vector<256x784xbf16>
    %c0_62 = arith.constant 0 : index
    %c0_63 = arith.constant 0 : index
    %87 = vector.load %arg22[%c0_62, %c0_63] : memref<256x784xbf16, #tpu.memory_space<vmem>>, vector<256x784xbf16>
    tpu.vector_store %arg22[%c0_62, %c0_63], %86 {strides = array<i32>} : memref<256x784xbf16, #tpu.memory_space<vmem>>, vector<256x784xbf16>,
    return
  }
  func.func @transform_0(%arg0: i32) -> (i32, i32) {
    %c0_i32 = arith.constant 0 : i32
    %c0_i32_0 = arith.constant 0 : i32
    return %arg0, %c0_i32 : i32, i32
  }
  func.func @transform_1(%arg0: i32) -> (i32, i32) {
    %c0_i32 = arith.constant 0 : i32
    %c0_i32_0 = arith.constant 0 : i32
    %c0_i32_1 = arith.constant 0 : i32
    return %c0_i32, %c0_i32_0 : i32, i32
  }
  func.func @transform_2(%arg0: i32) -> (i32, i32) {
    %c0_i32 = arith.constant 0 : i32
    %c0_i32_0 = arith.constant 0 : i32
    %c0_i32_1 = arith.constant 0 : i32
    return %c0_i32, %c0_i32_0 : i32, i32
  }
  func.func @transform_3(%arg0: i32) -> (i32, i32) {
    %c0_i32 = arith.constant 0 : i32
    %c0_i32_0 = arith.constant 0 : i32
    %c0_i32_1 = arith.constant 0 : i32
    return %c0_i32, %c0_i32_0 : i32, i32
  }
  func.func @transform_4(%arg0: i32) -> (i32, i32) {
    %c0_i32 = arith.constant 0 : i32
    %c0_i32_0 = arith.constant 0 : i32
    %c0_i32_1 = arith.constant 0 : i32
    return %c0_i32, %c0_i32_0 : i32, i32
  }
  func.func @transform_5(%arg0: i32) -> (i32, i32) {
    %c0_i32 = arith.constant 0 : i32
    %c0_i32_0 = arith.constant 0 : i32
    %c0_i32_1 = arith.constant 0 : i32
    return %c0_i32, %c0_i32_0 : i32, i32
  }
  func.func @transform_6(%arg0: i32) -> (i32, i32) {
    %c0_i32 = arith.constant 0 : i32
    %c0_i32_0 = arith.constant 0 : i32
    %c0_i32_1 = arith.constant 0 : i32
    return %c0_i32, %c0_i32_0 : i32, i32
  }
  func.func @transform_7(%arg0: i32) -> (i32, i32) {
    %c0_i32 = arith.constant 0 : i32
    %c0_i32_0 = arith.constant 0 : i32
    %c0_i32_1 = arith.constant 0 : i32
    return %c0_i32, %c0_i32_0 : i32, i32
  }
  func.func @transform_8(%arg0: i32) -> (i32, i32) {
    %c0_i32 = arith.constant 0 : i32
    %c0_i32_0 = arith.constant 0 : i32
    %c0_i32_1 = arith.constant 0 : i32
    return %c0_i32, %c0_i32_0 : i32, i32
  }
  func.func @transform_9(%arg0: i32) -> (i32, i32) {
    %c0_i32 = arith.constant 0 : i32
    %c0_i32_0 = arith.constant 0 : i32
    %c0_i32_1 = arith.constant 0 : i32
    return %c0_i32, %c0_i32_0 : i32, i32
  }
  func.func @transform_10(%arg0: i32) -> (i32, i32) {
    %c0_i32 = arith.constant 0 : i32
    %c0_i32_0 = arith.constant 0 : i32
    %c0_i32_1 = arith.constant 0 : i32
    return %c0_i32, %c0_i32_0 : i32, i32
  }
  func.func @transform_11(%arg0: i32) -> (i32, i32) {
    %c0_i32 = arith.constant 0 : i32
    %c0_i32_0 = arith.constant 0 : i32
    %c0_i32_1 = arith.constant 0 : i32
    return %c0_i32, %c0_i32_0 : i32, i32
  }
  func.func @transform_12(%arg0: i32) -> (i32, i32) {
    %c0_i32 = arith.constant 0 : i32
    %c0_i32_0 = arith.constant 0 : i32
    %c0_i32_1 = arith.constant 0 : i32
    return %c0_i32, %c0_i32_0 : i32, i32
  }
  func.func @transform_13(%arg0: i32) -> (i32, i32) {
    %c0_i32 = arith.constant 0 : i32
    %c0_i32_0 = arith.constant 0 : i32
    %c0_i32_1 = arith.constant 0 : i32
    return %c0_i32, %c0_i32_0 : i32, i32
  }
  func.func @transform_14(%arg0: i32) -> (i32, i32) {
    %c0_i32 = arith.constant 0 : i32
    %c0_i32_0 = arith.constant 0 : i32
    %c0_i32_1 = arith.constant 0 : i32
    return %c0_i32, %c0_i32_0 : i32, i32
  }
  func.func @transform_15(%arg0: i32) -> (i32, i32) {
    %c0_i32 = arith.constant 0 : i32
    %c0_i32_0 = arith.constant 0 : i32
    %c0_i32_1 = arith.constant 0 : i32
    return %c0_i32, %c0_i32_0 : i32, i32
  }
  func.func @transform_16(%arg0: i32) -> (i32, i32) {
    %c0_i32 = arith.constant 0 : i32
    %c0_i32_0 = arith.constant 0 : i32
    %c0_i32_1 = arith.constant 0 : i32
    return %c0_i32, %c0_i32_0 : i32, i32
  }
  func.func @transform_17(%arg0: i32) -> (i32, i32) {
    %c0_i32 = arith.constant 0 : i32
    %c0_i32_0 = arith.constant 0 : i32
    %c0_i32_1 = arith.constant 0 : i32
    return %c0_i32, %c0_i32_0 : i32, i32
  }
  func.func @transform_18(%arg0: i32) -> (i32, i32) {
    %c0_i32 = arith.constant 0 : i32
    %c0_i32_0 = arith.constant 0 : i32
    %c0_i32_1 = arith.constant 0 : i32
    return %c0_i32, %c0_i32_0 : i32, i32
  }
  func.func @transform_19(%arg0: i32) -> (i32, i32) {
    %c0_i32 = arith.constant 0 : i32
    %c0_i32_0 = arith.constant 0 : i32
    %c0_i32_1 = arith.constant 0 : i32
    return %c0_i32, %c0_i32_0 : i32, i32
  }
  func.func @transform_20(%arg0: i32) -> (i32, i32) {
    %c0_i32 = arith.constant 0 : i32
    %c0_i32_0 = arith.constant 0 : i32
    %c0_i32_1 = arith.constant 0 : i32
    return %c0_i32, %c0_i32_0 : i32, i32
  }
  func.func @transform_21(%arg0: i32) -> (i32, i32) {
    %c0_i32 = arith.constant 0 : i32
    %c0_i32_0 = arith.constant 0 : i32
    return %arg0, %c0_i32 : i32, i32
  }
}

</mosaic_0001>

<llo_original>
// kernel: ae_forward.1
$region0: #{ae_forward.1}
  #allocation0 [shape = 'u32[]', space=smem, size = 0x4, offset = 0x4, fixed_abs, tag = 'smem constant byte address 0x4 - core index']
  #allocation1 [shape = 'u32[144,128]{1,0:T(1,128)}', space=vmem, size = 0x12000, scoped, tag = 'internal scratch']
  %s0 = inlined_call_operand.vmem [shape: f32[300,784], index: 0, kind: input, shape index: {}]
  %s1 = inlined_call_operand.vmem [shape: bf16[784,128], index: 1, kind: input, shape index: {}]
  %s2 = inlined_call_operand.vmem [shape: f32[1,128], index: 2, kind: input, shape index: {}]
  %s3 = inlined_call_operand.vmem [shape: bf16[128,64], index: 3, kind: input, shape index: {}]
  %s4 = inlined_call_operand.vmem [shape: f32[1,64], index: 4, kind: input, shape index: {}]
  %s5 = inlined_call_operand.vmem [shape: bf16[64,36], index: 5, kind: input, shape index: {}]
  %s6 = inlined_call_operand.vmem [shape: f32[1,36], index: 6, kind: input, shape index: {}]
  %s7 = inlined_call_operand.vmem [shape: bf16[36,18], index: 7, kind: input, shape index: {}]
  %s8 = inlined_call_operand.vmem [shape: f32[1,18], index: 8, kind: input, shape index: {}]
  %s9 = inlined_call_operand.vmem [shape: bf16[18,9], index: 9, kind: input, shape index: {}]
  %s10 = inlined_call_operand.vmem [shape: f32[1,9], index: 10, kind: input, shape index: {}]
  %s11 = inlined_call_operand.vmem [shape: bf16[9,18], index: 11, kind: input, shape index: {}]
  %s12 = inlined_call_operand.vmem [shape: f32[1,18], index: 12, kind: input, shape index: {}]
  %s13 = inlined_call_operand.vmem [shape: bf16[18,36], index: 13, kind: input, shape index: {}]
  %s14 = inlined_call_operand.vmem [shape: f32[1,36], index: 14, kind: input, shape index: {}]
  %s15 = inlined_call_operand.vmem [shape: bf16[36,64], index: 15, kind: input, shape index: {}]
  %s16 = inlined_call_operand.vmem [shape: f32[1,64], index: 16, kind: input, shape index: {}]
  %s17 = inlined_call_operand.vmem [shape: bf16[64,128], index: 17, kind: input, shape index: {}]
  %s18 = inlined_call_operand.vmem [shape: f32[1,128], index: 18, kind: input, shape index: {}]
  %s19 = inlined_call_operand.vmem [shape: bf16[128,784], index: 19, kind: input, shape index: {}]
  %s20 = inlined_call_operand.vmem [shape: f32[1,784], index: 20, kind: input, shape index: {}]
  %s21 = inlined_call_operand.hbm [shape: bf16[300,784], index: 21, kind: output, shape index: {}]
  %s22 = sld [smem:[#allocation0]]
  $region117: #{ae_forward.1} parent=0
    _
  %s24 = ssub.s32 1, %s22
  %s25 = scalar_select 0, %s24, %s22
  $region1: #{ae_forward.1} parent=0
    #allocation2 [shape = 'u8[917504]{0}', space=vmem, size = 0xe0000, scoped, tag = 'output window, operand 0']
    #allocation3 [shape = 's32[2]{0}', space=sflag, size = 0x8, scoped, tag = 'scoped memory for ae_forward.1']
    %26 = vsyncpa [#allocation3], 0
    %s27 = scalar_lea.sflag [#allocation3], 1
    %28 = vsyncpa %s27, 0
    loop: start=0, step=1, limit=4
    $region2: #{ae_forward.1} parent=1 // loop_pre_header
      _
    $region3: #{ae_forward.1} parent=1 // loop_header
      %s30 = sphi 0, %s34
      %p31 = scmp.ge.s32.totalorder %s30, 4
      %s40 = sphi 0, %s42
      %s43 = sphi 0, %s40
      %s44 = sphi 0, %s43
      %s60 = sphi 0, %s44
      %s64 = sphi 0, %s64
      %s66 = sphi 0, %s64
      %s67 = sphi 0, %s66
      %s81 = sphi 0, %s67
      %s85 = sphi 0, %s85
      %s87 = sphi 0, %s85
      %s88 = sphi 0, %s87
      %s102 = sphi 0, %s88
      %s106 = sphi 0, %s106
      %s108 = sphi 0, %s106
      %s109 = sphi 0, %s108
      %s123 = sphi 0, %s109
      %s127 = sphi 0, %s127
      %s129 = sphi 0, %s127
      %s130 = sphi 0, %s129
      %s144 = sphi 0, %s130
      %s148 = sphi 0, %s148
      %s150 = sphi 0, %s148
      %s151 = sphi 0, %s150
      %s165 = sphi 0, %s151
      %s169 = sphi 0, %s169
      %s171 = sphi 0, %s169
      %s172 = sphi 0, %s171
      %s186 = sphi 0, %s172
      %s190 = sphi 0, %s190
      %s192 = sphi 0, %s190
      %s193 = sphi 0, %s192
      %s207 = sphi 0, %s193
      %s211 = sphi 0, %s211
      %s213 = sphi 0, %s211
      %s214 = sphi 0, %s213
      %s228 = sphi 0, %s214
      %s232 = sphi 0, %s232
      %s234 = sphi 0, %s232
      %s235 = sphi 0, %s234
      %s249 = sphi 0, %s235
      %s253 = sphi 0, %s253
      %s255 = sphi 0, %s253
      %s256 = sphi 0, %s255
      %s270 = sphi 0, %s256
      %s274 = sphi 0, %s274
      %s276 = sphi 0, %s274
      %s277 = sphi 0, %s276
      %s291 = sphi 0, %s277
      %s295 = sphi 0, %s295
      %s297 = sphi 0, %s295
      %s298 = sphi 0, %s297
      %s312 = sphi 0, %s298
      %s316 = sphi 0, %s316
      %s318 = sphi 0, %s316
      %s319 = sphi 0, %s318
      %s333 = sphi 0, %s319
      %s337 = sphi 0, %s337
      %s339 = sphi 0, %s337
      %s340 = sphi 0, %s339
      %s354 = sphi 0, %s340
      %s358 = sphi 0, %s358
      %s360 = sphi 0, %s358
      %s361 = sphi 0, %s360
      %s375 = sphi 0, %s361
      %s379 = sphi 0, %s379
      %s381 = sphi 0, %s379
      %s382 = sphi 0, %s381
      %s396 = sphi 0, %s382
      %s400 = sphi 0, %s400
      %s402 = sphi 0, %s400
      %s403 = sphi 0, %s402
      %s417 = sphi 0, %s403
      %s421 = sphi 0, %s421
      %s423 = sphi 0, %s421
      %s424 = sphi 0, %s423
      %s438 = sphi 0, %s424
      %s442 = sphi 0, %s442
      %s444 = sphi 0, %s442
      %s445 = sphi 0, %s444
      %s459 = sphi 0, %s445
      %s463 = sphi 0, %s463
      %s465 = sphi 0, %s463
      %s466 = sphi 0, %s465
      %s480 = sphi 0, %s466
      %s486 = sphi 0, %s488
      %s489 = sphi 0, %s486
      %s490 = sphi 0, %s489
      %s506 = sphi 0, %s490
    $region4: #{ae_forward.1} parent=1 // loop_header_branch
      %33 = sbr.rel (%p31) target = $region8
    $region5: #{ae_forward.1} parent=1 // loop_body
      %s35 = ssub.s32 %s30, 1
      %s36 = ssub.s32 %s30, 2
      %s37 = sadd.s32 %s30, 1
      %s38 = ssub.s32 %s30, %s37
      %p39 = scmp.eq.s32.totalorder %s38, 0
      %s41 = sadd.s32 %s40, 1
      %s42 = scalar_select %p39, %s40, %s41
      %p45 = pneg %p39
      %p46 = scmp.eq.s32.totalorder %s30, 1
      %p47 = por %p45, %p46
      %p48 = scmp.ne.s32.totalorder %s40, %s43
      %p49 = scmp.eq.s32.totalorder %s30, 0
      %p50 = por %p48, %p49
      %p51 = scmp.ne.s32.totalorder %s40, %s43
      %p52 = scmp.eq.s32.totalorder %s35, 1
      %p53 = por %p51, %p52
      %p54 = scmp.ne.s32.totalorder %s43, %s44
      %p55 = scmp.eq.s32.totalorder %s35, 0
      %p56 = por %p54, %p55
      %p57 = scmp.ne.s32.totalorder %s43, %s44
      %p58 = scmp.eq.s32.totalorder %s36, 1
      %p59 = por %p57, %p58
      %p61 = scmp.ne.s32.totalorder %s44, %s60
      %p62 = scmp.eq.s32.totalorder %s36, 0
      %p63 = por %p61, %p62
      %s65 = sadd.s32 %s64, 1
      %p68 = scmp.eq.s32.totalorder %s30, 1
      %p69 = scmp.ne.s32.totalorder %s64, %s66
      %p70 = scmp.eq.s32.totalorder %s30, 0
      %p71 = por %p69, %p70
      %p72 = scmp.ne.s32.totalorder %s64, %s66
      %p73 = scmp.eq.s32.totalorder %s35, 1
      %p74 = por %p72, %p73
      %p75 = scmp.ne.s32.totalorder %s66, %s67
      %p76 = scmp.eq.s32.totalorder %s35, 0
      %p77 = por %p75, %p76
      %p78 = scmp.ne.s32.totalorder %s66, %s67
      %p79 = scmp.eq.s32.totalorder %s36, 1
      %p80 = por %p78, %p79
      %p82 = scmp.ne.s32.totalorder %s67, %s81
      %p83 = scmp.eq.s32.totalorder %s36, 0
      %p84 = por %p82, %p83
      %s86 = sadd.s32 %s85, 1
      %p89 = scmp.eq.s32.totalorder %s30, 1
      %p90 = scmp.ne.s32.totalorder %s85, %s87
      %p91 = scmp.eq.s32.totalorder %s30, 0
      %p92 = por %p90, %p91
      %p93 = scmp.ne.s32.totalorder %s85, %s87
      %p94 = scmp.eq.s32.totalorder %s35, 1
      %p95 = por %p93, %p94
      %p96 = scmp.ne.s32.totalorder %s87, %s88
      %p97 = scmp.eq.s32.totalorder %s35, 0
      %p98 = por %p96, %p97
      %p99 = scmp.ne.s32.totalorder %s87, %s88
      %p100 = scmp.eq.s32.totalorder %s36, 1
      %p101 = por %p99, %p100
      %p103 = scmp.ne.s32.totalorder %s88, %s102
      %p104 = scmp.eq.s32.totalorder %s36, 0
      %p105 = por %p103, %p104
      %s107 = sadd.s32 %s106, 1
      %p110 = scmp.eq.s32.totalorder %s30, 1
      %p111 = scmp.ne.s32.totalorder %s106, %s108
      %p112 = scmp.eq.s32.totalorder %s30, 0
      %p113 = por %p111, %p112
      %p114 = scmp.ne.s32.totalorder %s106, %s108
      %p115 = scmp.eq.s32.totalorder %s35, 1
      %p116 = por %p114, %p115
      %p117 = scmp.ne.s32.totalorder %s108, %s109
      %p118 = scmp.eq.s32.totalorder %s35, 0
      %p119 = por %p117, %p118
      %p120 = scmp.ne.s32.totalorder %s108, %s109
      %p121 = scmp.eq.s32.totalorder %s36, 1
      %p122 = por %p120, %p121
      %p124 = scmp.ne.s32.totalorder %s109, %s123
      %p125 = scmp.eq.s32.totalorder %s36, 0
      %p126 = por %p124, %p125
      %s128 = sadd.s32 %s127, 1
      %p131 = scmp.eq.s32.totalorder %s30, 1
      %p132 = scmp.ne.s32.totalorder %s127, %s129
      %p133 = scmp.eq.s32.totalorder %s30, 0
      %p134 = por %p132, %p133
      %p135 = scmp.ne.s32.totalorder %s127, %s129
      %p136 = scmp.eq.s32.totalorder %s35, 1
      %p137 = por %p135, %p136
      %p138 = scmp.ne.s32.totalorder %s129, %s130
      %p139 = scmp.eq.s32.totalorder %s35, 0
      %p140 = por %p138, %p139
      %p141 = scmp.ne.s32.totalorder %s129, %s130
      %p142 = scmp.eq.s32.totalorder %s36, 1
      %p143 = por %p141, %p142
      %p145 = scmp.ne.s32.totalorder %s130, %s144
      %p146 = scmp.eq.s32.totalorder %s36, 0
      %p147 = por %p145, %p146
      %s149 = sadd.s32 %s148, 1
      %p152 = scmp.eq.s32.totalorder %s30, 1
      %p153 = scmp.ne.s32.totalorder %s148, %s150
      %p154 = scmp.eq.s32.totalorder %s30, 0
      %p155 = por %p153, %p154
      %p156 = scmp.ne.s32.totalorder %s148, %s150
      %p157 = scmp.eq.s32.totalorder %s35, 1
      %p158 = por %p156, %p157
      %p159 = scmp.ne.s32.totalorder %s150, %s151
      %p160 = scmp.eq.s32.totalorder %s35, 0
      %p161 = por %p159, %p160
      %p162 = scmp.ne.s32.totalorder %s150, %s151
      %p163 = scmp.eq.s32.totalorder %s36, 1
      %p164 = por %p162, %p163
      %p166 = scmp.ne.s32.totalorder %s151, %s165
      %p167 = scmp.eq.s32.totalorder %s36, 0
      %p168 = por %p166, %p167
      %s170 = sadd.s32 %s169, 1
      %p173 = scmp.eq.s32.totalorder %s30, 1
      %p174 = scmp.ne.s32.totalorder %s169, %s171
      %p175 = scmp.eq.s32.totalorder %s30, 0
      %p176 = por %p174, %p175
      %p177 = scmp.ne.s32.totalorder %s169, %s171
      %p178 = scmp.eq.s32.totalorder %s35, 1
      %p179 = por %p177, %p178
      %p180 = scmp.ne.s32.totalorder %s171, %s172
      %p181 = scmp.eq.s32.totalorder %s35, 0
      %p182 = por %p180, %p181
      %p183 = scmp.ne.s32.totalorder %s171, %s172
      %p184 = scmp.eq.s32.totalorder %s36, 1
      %p185 = por %p183, %p184
      %p187 = scmp.ne.s32.totalorder %s172, %s186
      %p188 = scmp.eq.s32.totalorder %s36, 0
      %p189 = por %p187, %p188
      %s191 = sadd.s32 %s190, 1
      %p194 = scmp.eq.s32.totalorder %s30, 1
      %p195 = scmp.ne.s32.totalorder %s190, %s192
      %p196 = scmp.eq.s32.totalorder %s30, 0
      %p197 = por %p195, %p196
      %p198 = scmp.ne.s32.totalorder %s190, %s192
      %p199 = scmp.eq.s32.totalorder %s35, 1
      %p200 = por %p198, %p199
      %p201 = scmp.ne.s32.totalorder %s192, %s193
      %p202 = scmp.eq.s32.totalorder %s35, 0
      %p203 = por %p201, %p202
      %p204 = scmp.ne.s32.totalorder %s192, %s193
      %p205 = scmp.eq.s32.totalorder %s36, 1
      %p206 = por %p204, %p205
      %p208 = scmp.ne.s32.totalorder %s193, %s207
      %p209 = scmp.eq.s32.totalorder %s36, 0
      %p210 = por %p208, %p209
      %s212 = sadd.s32 %s211, 1
      %p215 = scmp.eq.s32.totalorder %s30, 1
      %p216 = scmp.ne.s32.totalorder %s211, %s213
      %p217 = scmp.eq.s32.totalorder %s30, 0
      %p218 = por %p216, %p217
      %p219 = scmp.ne.s32.totalorder %s211, %s213
      %p220 = scmp.eq.s32.totalorder %s35, 1
      %p221 = por %p219, %p220
      %p222 = scmp.ne.s32.totalorder %s213, %s214
      %p223 = scmp.eq.s32.totalorder %s35, 0
      %p224 = por %p222, %p223
      %p225 = scmp.ne.s32.totalorder %s213, %s214
      %p226 = scmp.eq.s32.totalorder %s36, 1
      %p227 = por %p225, %p226
      %p229 = scmp.ne.s32.totalorder %s214, %s228
      %p230 = scmp.eq.s32.totalorder %s36, 0
      %p231 = por %p229, %p230
      %s233 = sadd.s32 %s232, 1
      %p236 = scmp.eq.s32.totalorder %s30, 1
      %p237 = scmp.ne.s32.totalorder %s232, %s234
      %p238 = scmp.eq.s32.totalorder %s30, 0
      %p239 = por %p237, %p238
      %p240 = scmp.ne.s32.totalorder %s232, %s234
      %p241 = scmp.eq.s32.totalorder %s35, 1
      %p242 = por %p240, %p241
      %p243 = scmp.ne.s32.totalorder %s234, %s235
      %p244 = scmp.eq.s32.totalorder %s35, 0
      %p245 = por %p243, %p244
      %p246 = scmp.ne.s32.totalorder %s234, %s235
      %p247 = scmp.eq.s32.totalorder %s36, 1
      %p248 = por %p246, %p247
      %p250 = scmp.ne.s32.totalorder %s235, %s249
      %p251 = scmp.eq.s32.totalorder %s36, 0
      %p252 = por %p250, %p251
      %s254 = sadd.s32 %s253, 1
      %p257 = scmp.eq.s32.totalorder %s30, 1
      %p258 = scmp.ne.s32.totalorder %s253, %s255
      %p259 = scmp.eq.s32.totalorder %s30, 0
      %p260 = por %p258, %p259
      %p261 = scmp.ne.s32.totalorder %s253, %s255
      %p262 = scmp.eq.s32.totalorder %s35, 1
      %p263 = por %p261, %p262
      %p264 = scmp.ne.s32.totalorder %s255, %s256
      %p265 = scmp.eq.s32.totalorder %s35, 0
      %p266 = por %p264, %p265
      %p267 = scmp.ne.s32.totalorder %s255, %s256
      %p268 = scmp.eq.s32.totalorder %s36, 1
      %p269 = por %p267, %p268
      %p271 = scmp.ne.s32.totalorder %s256, %s270
      %p272 = scmp.eq.s32.totalorder %s36, 0
      %p273 = por %p271, %p272
      %s275 = sadd.s32 %s274, 1
      %p278 = scmp.eq.s32.totalorder %s30, 1
      %p279 = scmp.ne.s32.totalorder %s274, %s276
      %p280 = scmp.eq.s32.totalorder %s30, 0
      %p281 = por %p279, %p280
      %p282 = scmp.ne.s32.totalorder %s274, %s276
      %p283 = scmp.eq.s32.totalorder %s35, 1
      %p284 = por %p282, %p283
      %p285 = scmp.ne.s32.totalorder %s276, %s277
      %p286 = scmp.eq.s32.totalorder %s35, 0
      %p287 = por %p285, %p286
      %p288 = scmp.ne.s32.totalorder %s276, %s277
      %p289 = scmp.eq.s32.totalorder %s36, 1
      %p290 = por %p288, %p289
      %p292 = scmp.ne.s32.totalorder %s277, %s291
      %p293 = scmp.eq.s32.totalorder %s36, 0
      %p294 = por %p292, %p293
      %s296 = sadd.s32 %s295, 1
      %p299 = scmp.eq.s32.totalorder %s30, 1
      %p300 = scmp.ne.s32.totalorder %s295, %s297
      %p301 = scmp.eq.s32.totalorder %s30, 0
      %p302 = por %p300, %p301
      %p303 = scmp.ne.s32.totalorder %s295, %s297
      %p304 = scmp.eq.s32.totalorder %s35, 1
      %p305 = por %p303, %p304
      %p306 = scmp.ne.s32.totalorder %s297, %s298
      %p307 = scmp.eq.s32.totalorder %s35, 0
      %p308 = por %p306, %p307
      %p309 = scmp.ne.s32.totalorder %s297, %s298
      %p310 = scmp.eq.s32.totalorder %s36, 1
      %p311 = por %p309, %p310
      %p313 = scmp.ne.s32.totalorder %s298, %s312
      %p314 = scmp.eq.s32.totalorder %s36, 0
      %p315 = por %p313, %p314
      %s317 = sadd.s32 %s316, 1
      %p320 = scmp.eq.s32.totalorder %s30, 1
      %p321 = scmp.ne.s32.totalorder %s316, %s318
      %p322 = scmp.eq.s32.totalorder %s30, 0
      %p323 = por %p321, %p322
      %p324 = scmp.ne.s32.totalorder %s316, %s318
      %p325 = scmp.eq.s32.totalorder %s35, 1
      %p326 = por %p324, %p325
      %p327 = scmp.ne.s32.totalorder %s318, %s319
      %p328 = scmp.eq.s32.totalorder %s35, 0
      %p329 = por %p327, %p328
      %p330 = scmp.ne.s32.totalorder %s318, %s319
      %p331 = scmp.eq.s32.totalorder %s36, 1
      %p332 = por %p330, %p331
      %p334 = scmp.ne.s32.totalorder %s319, %s333
      %p335 = scmp.eq.s32.totalorder %s36, 0
      %p336 = por %p334, %p335
      %s338 = sadd.s32 %s337, 1
      %p341 = scmp.eq.s32.totalorder %s30, 1
      %p342 = scmp.ne.s32.totalorder %s337, %s339
      %p343 = scmp.eq.s32.totalorder %s30, 0
      %p344 = por %p342, %p343
      %p345 = scmp.ne.s32.totalorder %s337, %s339
      %p346 = scmp.eq.s32.totalorder %s35, 1
      %p347 = por %p345, %p346
      %p348 = scmp.ne.s32.totalorder %s339, %s340
      %p349 = scmp.eq.s32.totalorder %s35, 0
      %p350 = por %p348, %p349
      %p351 = scmp.ne.s32.totalorder %s339, %s340
      %p352 = scmp.eq.s32.totalorder %s36, 1
      %p353 = por %p351, %p352
      %p355 = scmp.ne.s32.totalorder %s340, %s354
      %p356 = scmp.eq.s32.totalorder %s36, 0
      %p357 = por %p355, %p356
      %s359 = sadd.s32 %s358, 1
      %p362 = scmp.eq.s32.totalorder %s30, 1
      %p363 = scmp.ne.s32.totalorder %s358, %s360
      %p364 = scmp.eq.s32.totalorder %s30, 0
      %p365 = por %p363, %p364
      %p366 = scmp.ne.s32.totalorder %s358, %s360
      %p367 = scmp.eq.s32.totalorder %s35, 1
      %p368 = por %p366, %p367
      %p369 = scmp.ne.s32.totalorder %s360, %s361
      %p370 = scmp.eq.s32.totalorder %s35, 0
      %p371 = por %p369, %p370
      %p372 = scmp.ne.s32.totalorder %s360, %s361
      %p373 = scmp.eq.s32.totalorder %s36, 1
      %p374 = por %p372, %p373
      %p376 = scmp.ne.s32.totalorder %s361, %s375
      %p377 = scmp.eq.s32.totalorder %s36, 0
      %p378 = por %p376, %p377
      %s380 = sadd.s32 %s379, 1
      %p383 = scmp.eq.s32.totalorder %s30, 1
      %p384 = scmp.ne.s32.totalorder %s379, %s381
      %p385 = scmp.eq.s32.totalorder %s30, 0
      %p386 = por %p384, %p385
      %p387 = scmp.ne.s32.totalorder %s379, %s381
      %p388 = scmp.eq.s32.totalorder %s35, 1
      %p389 = por %p387, %p388
      %p390 = scmp.ne.s32.totalorder %s381, %s382
      %p391 = scmp.eq.s32.totalorder %s35, 0
      %p392 = por %p390, %p391
      %p393 = scmp.ne.s32.totalorder %s381, %s382
      %p394 = scmp.eq.s32.totalorder %s36, 1
      %p395 = por %p393, %p394
      %p397 = scmp.ne.s32.totalorder %s382, %s396
      %p398 = scmp.eq.s32.totalorder %s36, 0
      %p399 = por %p397, %p398
      %s401 = sadd.s32 %s400, 1
      %p404 = scmp.eq.s32.totalorder %s30, 1
      %p405 = scmp.ne.s32.totalorder %s400, %s402
      %p406 = scmp.eq.s32.totalorder %s30, 0
      %p407 = por %p405, %p406
      %p408 = scmp.ne.s32.totalorder %s400, %s402
      %p409 = scmp.eq.s32.totalorder %s35, 1
      %p410 = por %p408, %p409
      %p411 = scmp.ne.s32.totalorder %s402, %s403
      %p412 = scmp.eq.s32.totalorder %s35, 0
      %p413 = por %p411, %p412
      %p414 = scmp.ne.s32.totalorder %s402, %s403
      %p415 = scmp.eq.s32.totalorder %s36, 1
      %p416 = por %p414, %p415
      %p418 = scmp.ne.s32.totalorder %s403, %s417
      %p419 = scmp.eq.s32.totalorder %s36, 0
      %p420 = por %p418, %p419
      %s422 = sadd.s32 %s421, 1
      %p425 = scmp.eq.s32.totalorder %s30, 1
      %p426 = scmp.ne.s32.totalorder %s421, %s423
      %p427 = scmp.eq.s32.totalorder %s30, 0
      %p428 = por %p426, %p427
      %p429 = scmp.ne.s32.totalorder %s421, %s423
      %p430 = scmp.eq.s32.totalorder %s35, 1
      %p431 = por %p429, %p430
      %p432 = scmp.ne.s32.totalorder %s423, %s424
      %p433 = scmp.eq.s32.totalorder %s35, 0
      %p434 = por %p432, %p433
      %p435 = scmp.ne.s32.totalorder %s423, %s424
      %p436 = scmp.eq.s32.totalorder %s36, 1
      %p437 = por %p435, %p436
      %p439 = scmp.ne.s32.totalorder %s424, %s438
      %p440 = scmp.eq.s32.totalorder %s36, 0
      %p441 = por %p439, %p440
      %s443 = sadd.s32 %s442, 1
      %p446 = scmp.eq.s32.totalorder %s30, 1
      %p447 = scmp.ne.s32.totalorder %s442, %s444
      %p448 = scmp.eq.s32.totalorder %s30, 0
      %p449 = por %p447, %p448
      %p450 = scmp.ne.s32.totalorder %s442, %s444
      %p451 = scmp.eq.s32.totalorder %s35, 1
      %p452 = por %p450, %p451
      %p453 = scmp.ne.s32.totalorder %s444, %s445
      %p454 = scmp.eq.s32.totalorder %s35, 0
      %p455 = por %p453, %p454
      %p456 = scmp.ne.s32.totalorder %s444, %s445
      %p457 = scmp.eq.s32.totalorder %s36, 1
      %p458 = por %p456, %p457
      %p460 = scmp.ne.s32.totalorder %s445, %s459
      %p461 = scmp.eq.s32.totalorder %s36, 0
      %p462 = por %p460, %p461
      %s464 = sadd.s32 %s463, 1
      %p467 = scmp.eq.s32.totalorder %s30, 1
      %p468 = scmp.ne.s32.totalorder %s463, %s465
      %p469 = scmp.eq.s32.totalorder %s30, 0
      %p470 = por %p468, %p469
      %p471 = scmp.ne.s32.totalorder %s463, %s465
      %p472 = scmp.eq.s32.totalorder %s35, 1
      %p473 = por %p471, %p472
      %p474 = scmp.ne.s32.totalorder %s465, %s466
      %p475 = scmp.eq.s32.totalorder %s35, 0
      %p476 = por %p474, %p475
      %p477 = scmp.ne.s32.totalorder %s465, %s466
      %p478 = scmp.eq.s32.totalorder %s36, 1
      %p479 = por %p477, %p478
      %p481 = scmp.ne.s32.totalorder %s466, %s480
      %p482 = scmp.eq.s32.totalorder %s36, 0
      %p483 = por %p481, %p482
      %s484 = ssub.s32 %s30, %s37
      %p485 = scmp.eq.s32.totalorder %s484, 0
      %s487 = sadd.s32 %s486, 1
      %s488 = scalar_select %p485, %s486, %s487
      %p491 = pneg %p485
      %p492 = scmp.eq.s32.totalorder %s30, 1
      %p493 = por %p491, %p492
      %p494 = scmp.ne.s32.totalorder %s486, %s489
      %p495 = scmp.eq.s32.totalorder %s30, 0
      %p496 = por %p494, %p495
      %p497 = scmp.ne.s32.totalorder %s486, %s489
      %p498 = scmp.eq.s32.totalorder %s35, 1
      %p499 = por %p497, %p498
      %p500 = scmp.ne.s32.totalorder %s489, %s490
      %p501 = scmp.eq.s32.totalorder %s35, 0
      %p502 = por %p500, %p501
      %p503 = scmp.ne.s32.totalorder %s489, %s490
      %p504 = scmp.eq.s32.totalorder %s36, 1
      %p505 = por %p503, %p504
      %p507 = scmp.ne.s32.totalorder %s490, %s506
      %p508 = scmp.eq.s32.totalorder %s36, 0
      %p509 = por %p507, %p508
      %p510 = scmp.le.s32.totalorder 1, %s30
      %p511 = scmp.lt.s32.totalorder %s30, 3
      %p512 = pnand %p510, %p511
      %p513 = pneg %p512
      // Predicated region
      $region9: #{ae_forward.1} parent=5 // pred_check
        _
      $region10: #{ae_forward.1} parent=5 // pred_check_branch
        %515 = sbr.rel (%p512) target = $region12
      $region11: #{ae_forward.1} parent=5 // pred_region
        %s516 = ssub.s32 %s30, 1
        // Predicated region
        $region13: #{ae_forward.1} parent=11 // pred_check
          %p517 = pneg %p77
        $region14: #{ae_forward.1} parent=11 // pred_check_branch
          %519 = sbr.rel (%p517) target = $region16
        $region15: #{ae_forward.1} parent=11 // pred_region
          _
        $region16: #{ae_forward.1} parent=11 // pred_fallthru
          _
        // Predicated region
        $region17: #{ae_forward.1} parent=11 // pred_check
          %p520 = pneg %p98
        $region18: #{ae_forward.1} parent=11 // pred_check_branch
          %522 = sbr.rel (%p520) target = $region20
        $region19: #{ae_forward.1} parent=11 // pred_region
          _
        $region20: #{ae_forward.1} parent=11 // pred_fallthru
          _
        // Predicated region
        $region21: #{ae_forward.1} parent=11 // pred_check
          %p523 = pneg %p119
        $region22: #{ae_forward.1} parent=11 // pred_check_branch
          %525 = sbr.rel (%p523) target = $region24
        $region23: #{ae_forward.1} parent=11 // pred_region
          _
        $region24: #{ae_forward.1} parent=11 // pred_fallthru
          _
        // Predicated region
        $region25: #{ae_forward.1} parent=11 // pred_check
          %p526 = pneg %p140
        $region26: #{ae_forward.1} parent=11 // pred_check_branch
          %528 = sbr.rel (%p526) target = $region28
        $region27: #{ae_forward.1} parent=11 // pred_region
          _
        $region28: #{ae_forward.1} parent=11 // pred_fallthru
          _
        // Predicated region
        $region29: #{ae_forward.1} parent=11 // pred_check
          %p529 = pneg %p161
        $region30: #{ae_forward.1} parent=11 // pred_check_branch
          %531 = sbr.rel (%p529) target = $region32
        $region31: #{ae_forward.1} parent=11 // pred_region
          _
        $region32: #{ae_forward.1} parent=11 // pred_fallthru
          _
        // Predicated region
        $region33: #{ae_forward.1} parent=11 // pred_check
          %p532 = pneg %p182
        $region34: #{ae_forward.1} parent=11 // pred_check_branch
          %534 = sbr.rel (%p532) target = $region36
        $region35: #{ae_forward.1} parent=11 // pred_region
          _
        $region36: #{ae_forward.1} parent=11 // pred_fallthru
          _
        // Predicated region
        $region37: #{ae_forward.1} parent=11 // pred_check
          %p535 = pneg %p203
        $region38: #{ae_forward.1} parent=11 // pred_check_branch
          %537 = sbr.rel (%p535) target = $region40
        $region39: #{ae_forward.1} parent=11 // pred_region
          _
        $region40: #{ae_forward.1} parent=11 // pred_fallthru
          _
        // Predicated region
        $region41: #{ae_forward.1} parent=11 // pred_check
          %p538 = pneg %p224
        $region42: #{ae_forward.1} parent=11 // pred_check_branch
          %540 = sbr.rel (%p538) target = $region44
        $region43: #{ae_forward.1} parent=11 // pred_region
          _
        $region44: #{ae_forward.1} parent=11 // pred_fallthru
          _
        // Predicated region
        $region45: #{ae_forward.1} parent=11 // pred_check
          %p541 = pneg %p245
        $region46: #{ae_forward.1} parent=11 // pred_check_branch
          %543 = sbr.rel (%p541) target = $region48
        $region47: #{ae_forward.1} parent=11 // pred_region
          _
        $region48: #{ae_forward.1} parent=11 // pred_fallthru
          _
        // Predicated region
        $region49: #{ae_forward.1} parent=11 // pred_check
          %p544 = pneg %p266
        $region50: #{ae_forward.1} parent=11 // pred_check_branch
          %546 = sbr.rel (%p544) target = $region52
        $region51: #{ae_forward.1} parent=11 // pred_region
          _
        $region52: #{ae_forward.1} parent=11 // pred_fallthru
          _
        // Predicated region
        $region53: #{ae_forward.1} parent=11 // pred_check
          %p547 = pneg %p287
        $region54: #{ae_forward.1} parent=11 // pred_check_branch
          %549 = sbr.rel (%p547) target = $region56
        $region55: #{ae_forward.1} parent=11 // pred_region
          _
        $region56: #{ae_forward.1} parent=11 // pred_fallthru
          _
        // Predicated region
        $region57: #{ae_forward.1} parent=11 // pred_check
          %p550 = pneg %p308
        $region58: #{ae_forward.1} parent=11 // pred_check_branch
          %552 = sbr.rel (%p550) target = $region60
        $region59: #{ae_forward.1} parent=11 // pred_region
          _
        $region60: #{ae_forward.1} parent=11 // pred_fallthru
          _
        // Predicated region
        $region61: #{ae_forward.1} parent=11 // pred_check
          %p553 = pneg %p329
        $region62: #{ae_forward.1} parent=11 // pred_check_branch
          %555 = sbr.rel (%p553) target = $region64
        $region63: #{ae_forward.1} parent=11 // pred_region
          _
        $region64: #{ae_forward.1} parent=11 // pred_fallthru
          _
        // Predicated region
        $region65: #{ae_forward.1} parent=11 // pred_check
          %p556 = pneg %p350
        $region66: #{ae_forward.1} parent=11 // pred_check_branch
          %558 = sbr.rel (%p556) target = $region68
        $region67: #{ae_forward.1} parent=11 // pred_region
          _
        $region68: #{ae_forward.1} parent=11 // pred_fallthru
          _
        // Predicated region
        $region69: #{ae_forward.1} parent=11 // pred_check
          %p559 = pneg %p371
        $region70: #{ae_forward.1} parent=11 // pred_check_branch
          %561 = sbr.rel (%p559) target = $region72
        $region71: #{ae_forward.1} parent=11 // pred_region
          _
        $region72: #{ae_forward.1} parent=11 // pred_fallthru
          _
        // Predicated region
        $region73: #{ae_forward.1} parent=11 // pred_check
          %p562 = pneg %p392
        $region74: #{ae_forward.1} parent=11 // pred_check_branch
          %564 = sbr.rel (%p562) target = $region76
        $region75: #{ae_forward.1} parent=11 // pred_region
          _
        $region76: #{ae_forward.1} parent=11 // pred_fallthru
          _
        // Predicated region
        $region77: #{ae_forward.1} parent=11 // pred_check
          %p565 = pneg %p413
        $region78: #{ae_forward.1} parent=11 // pred_check_branch
          %567 = sbr.rel (%p565) target = $region80
        $region79: #{ae_forward.1} parent=11 // pred_region
          _
        $region80: #{ae_forward.1} parent=11 // pred_fallthru
          _
        // Predicated region
        $region81: #{ae_forward.1} parent=11 // pred_check
          %p568 = pneg %p434
        $region82: #{ae_forward.1} parent=11 // pred_check_branch
          %570 = sbr.rel (%p568) target = $region84
        $region83: #{ae_forward.1} parent=11 // pred_region
          _
        $region84: #{ae_forward.1} parent=11 // pred_fallthru
          _
        // Predicated region
        $region85: #{ae_forward.1} parent=11 // pred_check
          %p571 = pneg %p455
        $region86: #{ae_forward.1} parent=11 // pred_check_branch
          %573 = sbr.rel (%p571) target = $region88
        $region87: #{ae_forward.1} parent=11 // pred_region
          _
        $region88: #{ae_forward.1} parent=11 // pred_fallthru
          _
        // Predicated region
        $region89: #{ae_forward.1} parent=11 // pred_check
          %p574 = pneg %p476
        $region90: #{ae_forward.1} parent=11 // pred_check_branch
          %576 = sbr.rel (%p574) target = $region92
        $region91: #{ae_forward.1} parent=11 // pred_region
          _
        $region92: #{ae_forward.1} parent=11 // pred_fallthru
          _
      $region12: #{ae_forward.1} parent=5 // pred_fallthru
        _
      %p577 = scmp.lt.s32.totalorder %s30, 2
      // Predicated region
      $region93: #{ae_forward.1} parent=5 // pred_check
        %p578 = pneg %p577
      $region94: #{ae_forward.1} parent=5 // pred_check_branch
        %580 = sbr.rel (%p578) target = $region96
      $region95: #{ae_forward.1} parent=5 // pred_region
        // Predicated region
        $region97: #{ae_forward.1} parent=95 // pred_check
          %p581 = pneg %p50
        $region98: #{ae_forward.1} parent=95 // pred_check_branch
          %583 = sbr.rel (%p581) target = $region100
        $region99: #{ae_forward.1} parent=95 // pred_region
          %s584 = smul.u32 32, %s30
          %s585 = ssub.s32 38, %s584
          %p586 = scmp.lt.s32.totalorder %s585, 32
          %s587 = scalar_select %p586, %s585, 32
          %s588 = smul.u32 128, %s587
          %s589 = smul.u32 %s588, 7
          %p590 = scmp.lt.s32.totalorder %s584, 37
          %s591 = scalar_select %p590, %s584, 37
          %s592 = smul.addr %s591, 7
          %s593 = smul.addr %s592, 8
          %s594 = scalar_lea.vmem %s0, %s593
          %s595 = smul.u32 32, %s30
          %s596 = ssub.s32 38, %s595
          %p597 = scmp.lt.s32.totalorder %s596, 32
          %s598 = scalar_select %p597, %s596, 32
          %s599 = smul.u32 128, %s598
          %s600 = smul.u32 %s599, 7
        $region100: #{ae_forward.1} parent=95 // pred_fallthru
          _
      $region96: #{ae_forward.1} parent=5 // pred_fallthru
        _
      %p601 = scmp.le.s32.totalorder 1, %s30
      %p602 = scmp.lt.s32.totalorder %s30, 3
      %p603 = pnand %p601, %p602
      %p604 = pneg %p603
      // Predicated region
      $region101: #{ae_forward.1} parent=5 // pred_check
        _
      $region102: #{ae_forward.1} parent=5 // pred_check_branch
        %606 = sbr.rel (%p603) target = $region104
      $region103: #{ae_forward.1} parent=5 // pred_region
        %s607 = ssub.s32 %s30, 1
        %s608 = smul.u32 32, %s35
        %s609 = ssub.s32 38, %s608
        %p610 = scmp.lt.s32.totalorder %s609, 32
        %s611 = scalar_select %p610, %s609, 32
        %s612 = smul.u32 128, %s611
        %s613 = smul.u32 %s612, 7
        %p614 = scmp.lt.s32.totalorder %s608, 37
        %s615 = scalar_select %p614, %s608, 37
        %s616 = smul.addr %s615, 7
        %s617 = smul.addr %s616, 8
        %s618 = scalar_lea.vmem %s0, %s617
        %p619 = pneg %p56
        %p620 = pneg %p53
        %p621 = pneg %p77
        %p622 = pneg %p74
        %p623 = pneg %p98
        %p624 = pneg %p95
        %p625 = pneg %p119
        %p626 = pneg %p116
        %p627 = pneg %p140
        %p628 = pneg %p137
        %p629 = pneg %p161
        %p630 = pneg %p158
        %p631 = pneg %p182
        %p632 = pneg %p179
        %p633 = pneg %p203
        %p634 = pneg %p200
        %p635 = pneg %p224
        %p636 = pneg %p221
        %p637 = pneg %p245
        %p638 = pneg %p242
        %p639 = pneg %p266
        %p640 = pneg %p263
        %p641 = pneg %p287
        %p642 = pneg %p284
        %p643 = pneg %p308
        %p644 = pneg %p305
        %p645 = pneg %p329
        %p646 = pneg %p326
        %p647 = pneg %p350
        %p648 = pneg %p347
        %p649 = pneg %p371
        %p650 = pneg %p368
        %p651 = pneg %p392
        %p652 = pneg %p389
        %p653 = pneg %p413
        %p654 = pneg %p410
        %p655 = pneg %p434
        %p656 = pneg %p431
        %p657 = pneg %p455
        %p658 = pneg %p452
        %p659 = pneg %p476
        %p660 = pneg %p473
        %p661 = pneg %p502
        %p662 = pneg %p499
        %s663 = sand.u32 %s489, 1
        %s664 = scalar_lea.sflag [#allocation3], %s663
        %s665 = sand.u32 %s489, 1
        %s666 = smul.addr %s665, 896
        %s667 = scalar_lea.vmem [#allocation2], %s666
        %s668 = smul.u32 32, %s35
        %s669 = ssub.s32 38, %s668
        %p670 = scmp.lt.s32.totalorder %s669, 32
        %s671 = scalar_select %p670, %s669, 32
        %s672 = smul.u32 128, %s671
        %s673 = smul.u32 %s672, 7
        %p674 = scmp.lt.s32.totalorder %s668, 37
        %s675 = scalar_select %p674, %s668, 37
        %s676 = smul.addr %s675, 7
        %s677 = smul.addr %s676, 8
        %s678 = scalar_lea.vmem %s0, %s677
        %s679 = smul.u32 32, %s35
        %s680 = ssub.s32 38, %s679
        %p681 = scmp.lt.s32.totalorder %s680, 32
        %s682 = scalar_select %p681, %s680, 32
        %s683 = smul.u32 128, %s682
        %s684 = smul.u32 %s683, 7
        %s685 = smul.u32 32, %s35
        %s686 = ssub.s32 38, %s685
        %p687 = scmp.lt.s32.totalorder %s686, 32
        %s688 = scalar_select %p687, %s686, 32
        %s689 = smul.u32 64, %s688
        %s690 = smul.u32 %s689, 7
        %v692 = vld [vmem:[%s678] sm:$0xff]
        %v693 = vld [vmem:[%s678 + $0x8] sm:$0xff]
        %v694 = vld [vmem:[%s678 + $0x10] sm:$0xff]
        %v695 = vld [vmem:[%s678 + $0x18] sm:$0xff]
        %v696 = vld [vmem:[%s678 + $0x20] sm:$0xff]
        %v697 = vld [vmem:[%s678 + $0x28] sm:$0xff]
        %v698 = vld [vmem:[%s678 + $0x30] sm:$0xff]
        %v699 = vld [vmem:[%s678 + $0x38] sm:$0xff]
        %v700 = vld [vmem:[%s678 + $0x40] sm:$0xff]
        %v701 = vld [vmem:[%s678 + $0x48] sm:$0xff]
        %v702 = vld [vmem:[%s678 + $0x50] sm:$0xff]
        %v703 = vld [vmem:[%s678 + $0x58] sm:$0xff]
        %v704 = vld [vmem:[%s678 + $0x60] sm:$0xff]
        %v705 = vld [vmem:[%s678 + $0x68] sm:$0xff]
        %v706 = vld [vmem:[%s678 + $0x70] sm:$0xff]
        %v707 = vld [vmem:[%s678 + $0x78] sm:$0xff]
        %v708 = vld [vmem:[%s678 + $0x80] sm:$0xff]
        %v709 = vld [vmem:[%s678 + $0x88] sm:$0xff]
        %v710 = vld [vmem:[%s678 + $0x90] sm:$0xff]
        %v711 = vld [vmem:[%s678 + $0x98] sm:$0xff]
        %v712 = vld [vmem:[%s678 + $0xa0] sm:$0xff]
        %v713 = vld [vmem:[%s678 + $0xa8] sm:$0xff]
        %v714 = vld [vmem:[%s678 + $0xb0] sm:$0xff]
        %v715 = vld [vmem:[%s678 + $0xb8] sm:$0xff]
        %v716 = vld [vmem:[%s678 + $0xc0] sm:$0xff]
        %v717 = vld [vmem:[%s678 + $0xc8] sm:$0xff]
        %v718 = vld [vmem:[%s678 + $0xd0] sm:$0xff]
        %v719 = vld [vmem:[%s678 + $0xd8] sm:$0xff]
        %v720 = vld [vmem:[%s678 + $0xe0] sm:$0xff]
        %v721 = vld [vmem:[%s678 + $0xe8] sm:$0xff]
        %v722 = vld [vmem:[%s678 + $0xf0] sm:$0xff]
        %v723 = vld [vmem:[%s678 + $0xf8] sm:$0xff]
        %v724 = vld [vmem:[%s678 + $0x100] sm:$0xff]
        %v725 = vld [vmem:[%s678 + $0x108] sm:$0xff]
        %v726 = vld [vmem:[%s678 + $0x110] sm:$0xff]
        %v727 = vld [vmem:[%s678 + $0x118] sm:$0xff]
        %v728 = vld [vmem:[%s678 + $0x120] sm:$0xff]
        %v729 = vld [vmem:[%s678 + $0x128] sm:$0xff]
        %v730 = vld [vmem:[%s678 + $0x130] sm:$0xff]
        %v731 = vld [vmem:[%s678 + $0x138] sm:$0xff]
        %v732 = vld [vmem:[%s678 + $0x140] sm:$0xff]
        %v733 = vld [vmem:[%s678 + $0x148] sm:$0xff]
        %v734 = vld [vmem:[%s678 + $0x150] sm:$0xff]
        %v735 = vld [vmem:[%s678 + $0x158] sm:$0xff]
        %v736 = vld [vmem:[%s678 + $0x160] sm:$0xff]
        %v737 = vld [vmem:[%s678 + $0x168] sm:$0xff]
        %v738 = vld [vmem:[%s678 + $0x170] sm:$0xff]
        %v739 = vld [vmem:[%s678 + $0x178] sm:$0xff]
        %v740 = vld [vmem:[%s678 + $0x180] sm:$0xff]
        %v741 = vld [vmem:[%s678 + $0x188] sm:$0xff]
        %v742 = vld [vmem:[%s678 + $0x190] sm:$0xff]
        %v743 = vld [vmem:[%s678 + $0x198] sm:$0xff]
        %v744 = vld [vmem:[%s678 + $0x1a0] sm:$0xff]
        %v745 = vld [vmem:[%s678 + $0x1a8] sm:$0xff]
        %v746 = vld [vmem:[%s678 + $0x1b0] sm:$0xff]
        %v747 = vld [vmem:[%s678 + $0x1b8] sm:$0xff]
        %v748 = vld [vmem:[%s678 + $0x1c0] sm:$0xff]
        %v749 = vld [vmem:[%s678 + $0x1c8] sm:$0xff]
        %v750 = vld [vmem:[%s678 + $0x1d0] sm:$0xff]
        %v751 = vld [vmem:[%s678 + $0x1d8] sm:$0xff]
        %v752 = vld [vmem:[%s678 + $0x1e0] sm:$0xff]
        %v753 = vld [vmem:[%s678 + $0x1e8] sm:$0xff]
        %v754 = vld [vmem:[%s678 + $0x1f0] sm:$0xff]
        %v755 = vld [vmem:[%s678 + $0x1f8] sm:$0xff]
        %v756 = vld [vmem:[%s678 + $0x200] sm:$0xff]
        %v757 = vld [vmem:[%s678 + $0x208] sm:$0xff]
        %v758 = vld [vmem:[%s678 + $0x210] sm:$0xff]
        %v759 = vld [vmem:[%s678 + $0x218] sm:$0xff]
        %v760 = vld [vmem:[%s678 + $0x220] sm:$0xff]
        %v761 = vld [vmem:[%s678 + $0x228] sm:$0xff]
        %v762 = vld [vmem:[%s678 + $0x230] sm:$0xff]
        %v763 = vld [vmem:[%s678 + $0x238] sm:$0xff]
        %v764 = vld [vmem:[%s678 + $0x240] sm:$0xff]
        %v765 = vld [vmem:[%s678 + $0x248] sm:$0xff]
        %v766 = vld [vmem:[%s678 + $0x250] sm:$0xff]
        %v767 = vld [vmem:[%s678 + $0x258] sm:$0xff]
        %v768 = vld [vmem:[%s678 + $0x260] sm:$0xff]
        %v769 = vld [vmem:[%s678 + $0x268] sm:$0xff]
        %v770 = vld [vmem:[%s678 + $0x270] sm:$0xff]
        %v771 = vld [vmem:[%s678 + $0x278] sm:$0xff]
        %v772 = vld [vmem:[%s678 + $0x280] sm:$0xff]
        %v773 = vld [vmem:[%s678 + $0x288] sm:$0xff]
        %v774 = vld [vmem:[%s678 + $0x290] sm:$0xff]
        %v775 = vld [vmem:[%s678 + $0x298] sm:$0xff]
        %v776 = vld [vmem:[%s678 + $0x2a0] sm:$0xff]
        %v777 = vld [vmem:[%s678 + $0x2a8] sm:$0xff]
        %v778 = vld [vmem:[%s678 + $0x2b0] sm:$0xff]
        %v779 = vld [vmem:[%s678 + $0x2b8] sm:$0xff]
        %v780 = vld [vmem:[%s678 + $0x2c0] sm:$0xff]
        %v781 = vld [vmem:[%s678 + $0x2c8] sm:$0xff]
        %v782 = vld [vmem:[%s678 + $0x2d0] sm:$0xff]
        %v783 = vld [vmem:[%s678 + $0x2d8] sm:$0xff]
        %v784 = vld [vmem:[%s678 + $0x2e0] sm:$0xff]
        %v785 = vld [vmem:[%s678 + $0x2e8] sm:$0xff]
        %v786 = vld [vmem:[%s678 + $0x2f0] sm:$0xff]
        %v787 = vld [vmem:[%s678 + $0x2f8] sm:$0xff]
        %v788 = vld [vmem:[%s678 + $0x300] sm:$0xff]
        %v789 = vld [vmem:[%s678 + $0x308] sm:$0xff]
        %v790 = vld [vmem:[%s678 + $0x310] sm:$0xff]
        %v791 = vld [vmem:[%s678 + $0x318] sm:$0xff]
        %v792 = vld [vmem:[%s678 + $0x320] sm:$0xff]
        %v793 = vld [vmem:[%s678 + $0x328] sm:$0xff]
        %v794 = vld [vmem:[%s678 + $0x330] sm:$0xff]
        %v795 = vld [vmem:[%s678 + $0x338] sm:$0xff]
        %v796 = vld [vmem:[%s678 + $0x340] sm:$0xff]
        %v797 = vld [vmem:[%s678 + $0x348] sm:$0xff]
        %v798 = vld [vmem:[%s678 + $0x350] sm:$0xff]
        %v799 = vld [vmem:[%s678 + $0x358] sm:$0xff]
        %v800 = vld [vmem:[%s678 + $0x360] sm:$0xff]
        %v801 = vld [vmem:[%s678 + $0x368] sm:$0xff]
        %v802 = vld [vmem:[%s678 + $0x370] sm:$0xff]
        %v803 = vld [vmem:[%s678 + $0x378] sm:$0xff]
        %v804 = vld [vmem:[%s678 + $0x380] sm:$0xff]
        %v805 = vld [vmem:[%s678 + $0x388] sm:$0xff]
        %v806 = vld [vmem:[%s678 + $0x390] sm:$0xff]
        %v807 = vld [vmem:[%s678 + $0x398] sm:$0xff]
        %v808 = vld [vmem:[%s678 + $0x3a0] sm:$0xff]
        %v809 = vld [vmem:[%s678 + $0x3a8] sm:$0xff]
        %v810 = vld [vmem:[%s678 + $0x3b0] sm:$0xff]
        %v811 = vld [vmem:[%s678 + $0x3b8] sm:$0xff]
        %v812 = vld [vmem:[%s678 + $0x3c0] sm:$0xff]
        %v813 = vld [vmem:[%s678 + $0x3c8] sm:$0xff]
        %v814 = vld [vmem:[%s678 + $0x3d0] sm:$0xff]
        %v815 = vld [vmem:[%s678 + $0x3d8] sm:$0xff]
        %v816 = vld [vmem:[%s678 + $0x3e0] sm:$0xff]
        %v817 = vld [vmem:[%s678 + $0x3e8] sm:$0xff]
        %v818 = vld [vmem:[%s678 + $0x3f0] sm:$0xff]
        %v819 = vld [vmem:[%s678 + $0x3f8] sm:$0xff]
        %v820 = vld [vmem:[%s678 + $0x400] sm:$0xff]
        %v821 = vld [vmem:[%s678 + $0x408] sm:$0xff]
        %v822 = vld [vmem:[%s678 + $0x410] sm:$0xff]
        %v823 = vld [vmem:[%s678 + $0x418] sm:$0xff]
        %v824 = vld [vmem:[%s678 + $0x420] sm:$0xff]
        %v825 = vld [vmem:[%s678 + $0x428] sm:$0xff]
        %v826 = vld [vmem:[%s678 + $0x430] sm:$0xff]
        %v827 = vld [vmem:[%s678 + $0x438] sm:$0xff]
        %v828 = vld [vmem:[%s678 + $0x440] sm:$0xff]
        %v829 = vld [vmem:[%s678 + $0x448] sm:$0xff]
        %v830 = vld [vmem:[%s678 + $0x450] sm:$0xff]
        %v831 = vld [vmem:[%s678 + $0x458] sm:$0xff]
        %v832 = vld [vmem:[%s678 + $0x460] sm:$0xff]
        %v833 = vld [vmem:[%s678 + $0x468] sm:$0xff]
        %v834 = vld [vmem:[%s678 + $0x470] sm:$0xff]
        %v835 = vld [vmem:[%s678 + $0x478] sm:$0xff]
        %v836 = vld [vmem:[%s678 + $0x480] sm:$0xff]
        %v837 = vld [vmem:[%s678 + $0x488] sm:$0xff]
        %v838 = vld [vmem:[%s678 + $0x490] sm:$0xff]
        %v839 = vld [vmem:[%s678 + $0x498] sm:$0xff]
        %v840 = vld [vmem:[%s678 + $0x4a0] sm:$0xff]
        %v841 = vld [vmem:[%s678 + $0x4a8] sm:$0xff]
        %v842 = vld [vmem:[%s678 + $0x4b0] sm:$0xff]
        %v843 = vld [vmem:[%s678 + $0x4b8] sm:$0xff]
        %v844 = vld [vmem:[%s678 + $0x4c0] sm:$0xff]
        %v845 = vld [vmem:[%s678 + $0x4c8] sm:$0xff]
        %v846 = vld [vmem:[%s678 + $0x4d0] sm:$0xff]
        %v847 = vld [vmem:[%s678 + $0x4d8] sm:$0xff]
        %v848 = vld [vmem:[%s678 + $0x4e0] sm:$0xff]
        %v849 = vld [vmem:[%s678 + $0x4e8] sm:$0xff]
        %v850 = vld [vmem:[%s678 + $0x4f0] sm:$0xff]
        %v851 = vld [vmem:[%s678 + $0x4f8] sm:$0xff]
        %v852 = vld [vmem:[%s678 + $0x500] sm:$0xff]
        %v853 = vld [vmem:[%s678 + $0x508] sm:$0xff]
        %v854 = vld [vmem:[%s678 + $0x510] sm:$0xff]
        %v855 = vld [vmem:[%s678 + $0x518] sm:$0xff]
        %v856 = vld [vmem:[%s678 + $0x520] sm:$0xff]
        %v857 = vld [vmem:[%s678 + $0x528] sm:$0xff]
        %v858 = vld [vmem:[%s678 + $0x530] sm:$0xff]
        %v859 = vld [vmem:[%s678 + $0x538] sm:$0xff]
        %v860 = vld [vmem:[%s678 + $0x540] sm:$0xff]
        %v861 = vld [vmem:[%s678 + $0x548] sm:$0xff]
        %v862 = vld [vmem:[%s678 + $0x550] sm:$0xff]
        %v863 = vld [vmem:[%s678 + $0x558] sm:$0xff]
        %v864 = vld [vmem:[%s678 + $0x560] sm:$0xff]
        %v865 = vld [vmem:[%s678 + $0x568] sm:$0xff]
        %v866 = vld [vmem:[%s678 + $0x570] sm:$0xff]
        %v867 = vld [vmem:[%s678 + $0x578] sm:$0xff]
        %v868 = vld [vmem:[%s678 + $0x580] sm:$0xff]
        %v869 = vld [vmem:[%s678 + $0x588] sm:$0xff]
        %v870 = vld [vmem:[%s678 + $0x590] sm:$0xff]
        %v871 = vld [vmem:[%s678 + $0x598] sm:$0xff]
        %v872 = vld [vmem:[%s678 + $0x5a0] sm:$0xff]
        %v873 = vld [vmem:[%s678 + $0x5a8] sm:$0xff]
        %v874 = vld [vmem:[%s678 + $0x5b0] sm:$0xff]
        %v875 = vld [vmem:[%s678 + $0x5b8] sm:$0xff]
        %v876 = vld [vmem:[%s678 + $0x5c0] sm:$0xff]
        %v877 = vld [vmem:[%s678 + $0x5c8] sm:$0xff]
        %v878 = vld [vmem:[%s678 + $0x5d0] sm:$0xff]
        %v879 = vld [vmem:[%s678 + $0x5d8] sm:$0xff]
        %v880 = vld [vmem:[%s678 + $0x5e0] sm:$0xff]
        %v881 = vld [vmem:[%s678 + $0x5e8] sm:$0xff]
        %v882 = vld [vmem:[%s678 + $0x5f0] sm:$0xff]
        %v883 = vld [vmem:[%s678 + $0x5f8] sm:$0xff]
        %v884 = vld [vmem:[%s678 + $0x600] sm:$0xff]
        %v885 = vld [vmem:[%s678 + $0x608] sm:$0xff]
        %v886 = vld [vmem:[%s678 + $0x610] sm:$0xff]
        %v887 = vld [vmem:[%s678 + $0x618] sm:$0xff]
        %v888 = vld [vmem:[%s678 + $0x620] sm:$0xff]
        %v889 = vld [vmem:[%s678 + $0x628] sm:$0xff]
        %v890 = vld [vmem:[%s678 + $0x630] sm:$0xff]
        %v891 = vld [vmem:[%s678 + $0x638] sm:$0xff]
        %v892 = vld [vmem:[%s678 + $0x640] sm:$0xff]
        %v893 = vld [vmem:[%s678 + $0x648] sm:$0xff]
        %v894 = vld [vmem:[%s678 + $0x650] sm:$0xff]
        %v895 = vld [vmem:[%s678 + $0x658] sm:$0xff]
        %v896 = vld [vmem:[%s678 + $0x660] sm:$0xff]
        %v897 = vld [vmem:[%s678 + $0x668] sm:$0xff]
        %v898 = vld [vmem:[%s678 + $0x670] sm:$0xff]
        %v899 = vld [vmem:[%s678 + $0x678] sm:$0xff]
        %v900 = vld [vmem:[%s678 + $0x680] sm:$0xff]
        %v901 = vld [vmem:[%s678 + $0x688] sm:$0xff]
        %v902 = vld [vmem:[%s678 + $0x690] sm:$0xff]
        %v903 = vld [vmem:[%s678 + $0x698] sm:$0xff]
        %v904 = vld [vmem:[%s678 + $0x6a0] sm:$0xff]
        %v905 = vld [vmem:[%s678 + $0x6a8] sm:$0xff]
        %v906 = vld [vmem:[%s678 + $0x6b0] sm:$0xff]
        %v907 = vld [vmem:[%s678 + $0x6b8] sm:$0xff]
        %v908 = vld [vmem:[%s678 + $0x6c0] sm:$0xff]
        %v909 = vld [vmem:[%s678 + $0x6c8] sm:$0xff]
        %v910 = vld [vmem:[%s678 + $0x6d0] sm:$0xff]
        %v911 = vld [vmem:[%s678 + $0x6d8] sm:$0xff]
        %v912 = vld [vmem:[%s678 + $0x6e0] sm:$0xff]
        %v913 = vld [vmem:[%s678 + $0x6e8] sm:$0xff]
        %v914 = vld [vmem:[%s678 + $0x6f0] sm:$0xff]
        %v915 = vld [vmem:[%s678 + $0x6f8] sm:$0xff]
        %v916 = vpack.c.bf16 %v699, %v692
        %v917 = vpack.c.bf16 %v700, %v693
        %v918 = vpack.c.bf16 %v701, %v694
        %v919 = vpack.c.bf16 %v702, %v695
        %v920 = vpack.c.bf16 %v703, %v696
        %v921 = vpack.c.bf16 %v704, %v697
        %v922 = vpack.c.bf16 %v705, %v698
        %v923 = vpack.c.bf16 %v713, %v706
        %v924 = vpack.c.bf16 %v714, %v707
        %v925 = vpack.c.bf16 %v715, %v708
        %v926 = vpack.c.bf16 %v716, %v709
        %v927 = vpack.c.bf16 %v717, %v710
        %v928 = vpack.c.bf16 %v718, %v711
        %v929 = vpack.c.bf16 %v719, %v712
        %v930 = vpack.c.bf16 %v727, %v720
        %v931 = vpack.c.bf16 %v728, %v721
        %v932 = vpack.c.bf16 %v729, %v722
        %v933 = vpack.c.bf16 %v730, %v723
        %v934 = vpack.c.bf16 %v731, %v724
        %v935 = vpack.c.bf16 %v732, %v725
        %v936 = vpack.c.bf16 %v733, %v726
        %v937 = vpack.c.bf16 %v741, %v734
        %v938 = vpack.c.bf16 %v742, %v735
        %v939 = vpack.c.bf16 %v743, %v736
        %v940 = vpack.c.bf16 %v744, %v737
        %v941 = vpack.c.bf16 %v745, %v738
        %v942 = vpack.c.bf16 %v746, %v739
        %v943 = vpack.c.bf16 %v747, %v740
        %v944 = vpack.c.bf16 %v755, %v748
        %v945 = vpack.c.bf16 %v756, %v749
        %v946 = vpack.c.bf16 %v757, %v750
        %v947 = vpack.c.bf16 %v758, %v751
        %v948 = vpack.c.bf16 %v759, %v752
        %v949 = vpack.c.bf16 %v760, %v753
        %v950 = vpack.c.bf16 %v761, %v754
        %v951 = vpack.c.bf16 %v769, %v762
        %v952 = vpack.c.bf16 %v770, %v763
        %v953 = vpack.c.bf16 %v771, %v764
        %v954 = vpack.c.bf16 %v772, %v765
        %v955 = vpack.c.bf16 %v773, %v766
        %v956 = vpack.c.bf16 %v774, %v767
        %v957 = vpack.c.bf16 %v775, %v768
        %v958 = vpack.c.bf16 %v783, %v776
        %v959 = vpack.c.bf16 %v784, %v777
        %v960 = vpack.c.bf16 %v785, %v778
        %v961 = vpack.c.bf16 %v786, %v779
        %v962 = vpack.c.bf16 %v787, %v780
        %v963 = vpack.c.bf16 %v788, %v781
        %v964 = vpack.c.bf16 %v789, %v782
        %v965 = vpack.c.bf16 %v797, %v790
        %v966 = vpack.c.bf16 %v798, %v791
        %v967 = vpack.c.bf16 %v799, %v792
        %v968 = vpack.c.bf16 %v800, %v793
        %v969 = vpack.c.bf16 %v801, %v794
        %v970 = vpack.c.bf16 %v802, %v795
        %v971 = vpack.c.bf16 %v803, %v796
        %v972 = vpack.c.bf16 %v811, %v804
        %v973 = vpack.c.bf16 %v812, %v805
        %v974 = vpack.c.bf16 %v813, %v806
        %v975 = vpack.c.bf16 %v814, %v807
        %v976 = vpack.c.bf16 %v815, %v808
        %v977 = vpack.c.bf16 %v816, %v809
        %v978 = vpack.c.bf16 %v817, %v810
        %v979 = vpack.c.bf16 %v825, %v818
        %v980 = vpack.c.bf16 %v826, %v819
        %v981 = vpack.c.bf16 %v827, %v820
        %v982 = vpack.c.bf16 %v828, %v821
        %v983 = vpack.c.bf16 %v829, %v822
        %v984 = vpack.c.bf16 %v830, %v823
        %v985 = vpack.c.bf16 %v831, %v824
        %v986 = vpack.c.bf16 %v839, %v832
        %v987 = vpack.c.bf16 %v840, %v833
        %v988 = vpack.c.bf16 %v841, %v834
        %v989 = vpack.c.bf16 %v842, %v835
        %v990 = vpack.c.bf16 %v843, %v836
        %v991 = vpack.c.bf16 %v844, %v837
        %v992 = vpack.c.bf16 %v845, %v838
        %v993 = vpack.c.bf16 %v853, %v846
        %v994 = vpack.c.bf16 %v854, %v847
        %v995 = vpack.c.bf16 %v855, %v848
        %v996 = vpack.c.bf16 %v856, %v849
        %v997 = vpack.c.bf16 %v857, %v850
        %v998 = vpack.c.bf16 %v858, %v851
        %v999 = vpack.c.bf16 %v859, %v852
        %v1000 = vpack.c.bf16 %v867, %v860
        %v1001 = vpack.c.bf16 %v868, %v861
        %v1002 = vpack.c.bf16 %v869, %v862
        %v1003 = vpack.c.bf16 %v870, %v863
        %v1004 = vpack.c.bf16 %v871, %v864
        %v1005 = vpack.c.bf16 %v872, %v865
        %v1006 = vpack.c.bf16 %v873, %v866
        %v1007 = vpack.c.bf16 %v881, %v874
        %v1008 = vpack.c.bf16 %v882, %v875
        %v1009 = vpack.c.bf16 %v883, %v876
        %v1010 = vpack.c.bf16 %v884, %v877
        %v1011 = vpack.c.bf16 %v885, %v878
        %v1012 = vpack.c.bf16 %v886, %v879
        %v1013 = vpack.c.bf16 %v887, %v880
        %v1014 = vpack.c.bf16 %v895, %v888
        %v1015 = vpack.c.bf16 %v896, %v889
        %v1016 = vpack.c.bf16 %v897, %v890
        %v1017 = vpack.c.bf16 %v898, %v891
        %v1018 = vpack.c.bf16 %v899, %v892
        %v1019 = vpack.c.bf16 %v900, %v893
        %v1020 = vpack.c.bf16 %v901, %v894
        %v1021 = vpack.c.bf16 %v909, %v902
        %v1022 = vpack.c.bf16 %v910, %v903
        %v1023 = vpack.c.bf16 %v911, %v904
        %v1024 = vpack.c.bf16 %v912, %v905
        %v1025 = vpack.c.bf16 %v913, %v906
        %v1026 = vpack.c.bf16 %v914, %v907
        %v1027 = vpack.c.bf16 %v915, %v908
        %v1028 = vld [vmem:[%s1] sm:$0xf]
        %v1029 = vld [vmem:[%s1 + $0x4] sm:$0xf]
        %v1030 = vld [vmem:[%s1 + $0x8] sm:$0xf]
        %v1031 = vld [vmem:[%s1 + $0xc] sm:$0xf]
        %v1032 = vld [vmem:[%s1 + $0x10] sm:$0xf]
        %v1033 = vld [vmem:[%s1 + $0x14] sm:$0xf]
        %v1034 = vld [vmem:[%s1 + $0x18] sm:$0xf]
        %v1035 = vld [vmem:[%s1 + $0x1c] sm:$0xf]
        %v1036 = vld [vmem:[%s1 + $0x20] sm:$0xf]
        %v1037 = vld [vmem:[%s1 + $0x24] sm:$0xf]
        %v1038 = vld [vmem:[%s1 + $0x28] sm:$0xf]
        %v1039 = vld [vmem:[%s1 + $0x2c] sm:$0xf]
        %v1040 = vld [vmem:[%s1 + $0x30] sm:$0xf]
        %v1041 = vld [vmem:[%s1 + $0x34] sm:$0xf]
        %v1042 = vld [vmem:[%s1 + $0x38] sm:$0xf]
        %v1043 = vld [vmem:[%s1 + $0x3c] sm:$0xf]
        %v1044 = vld [vmem:[%s1 + $0x40] sm:$0xf]
        %v1045 = vld [vmem:[%s1 + $0x44] sm:$0xf]
        %v1046 = vld [vmem:[%s1 + $0x48] sm:$0xf]
        %v1047 = vld [vmem:[%s1 + $0x4c] sm:$0xf]
        %v1048 = vld [vmem:[%s1 + $0x50] sm:$0xf]
        %v1049 = vld [vmem:[%s1 + $0x54] sm:$0xf]
        %v1050 = vld [vmem:[%s1 + $0x58] sm:$0xf]
        %v1051 = vld [vmem:[%s1 + $0x5c] sm:$0xf]
        %v1052 = vld [vmem:[%s1 + $0x60] sm:$0xf]
        %v1053 = vld [vmem:[%s1 + $0x64] sm:$0xf]
        %v1054 = vld [vmem:[%s1 + $0x68] sm:$0xf]
        %v1055 = vld [vmem:[%s1 + $0x6c] sm:$0xf]
        %v1056 = vld [vmem:[%s1 + $0x70] sm:$0xf]
        %v1057 = vld [vmem:[%s1 + $0x74] sm:$0xf]
        %v1058 = vld [vmem:[%s1 + $0x78] sm:$0xf]
        %v1059 = vld [vmem:[%s1 + $0x7c] sm:$0xf]
        %v1060 = vld [vmem:[%s1 + $0x80] sm:$0xf]
        %v1061 = vld [vmem:[%s1 + $0x84] sm:$0xf]
        %v1062 = vld [vmem:[%s1 + $0x88] sm:$0xf]
        %v1063 = vld [vmem:[%s1 + $0x8c] sm:$0xf]
        %v1064 = vld [vmem:[%s1 + $0x90] sm:$0xf]
        %v1065 = vld [vmem:[%s1 + $0x94] sm:$0xf]
        %v1066 = vld [vmem:[%s1 + $0x98] sm:$0xf]
        %v1067 = vld [vmem:[%s1 + $0x9c] sm:$0xf]
        %v1068 = vld [vmem:[%s1 + $0xa0] sm:$0xf]
        %v1069 = vld [vmem:[%s1 + $0xa4] sm:$0xf]
        %v1070 = vld [vmem:[%s1 + $0xa8] sm:$0xf]
        %v1071 = vld [vmem:[%s1 + $0xac] sm:$0xf]
        %v1072 = vld [vmem:[%s1 + $0xb0] sm:$0xf]
        %v1073 = vld [vmem:[%s1 + $0xb4] sm:$0xf]
        %v1074 = vld [vmem:[%s1 + $0xb8] sm:$0xf]
        %v1075 = vld [vmem:[%s1 + $0xbc] sm:$0xf]
        %v1076 = vld [vmem:[%s1 + $0xc0] sm:$0xf]
        %v1077 = vld [vmem:[%s1 + $0xc4] sm:$0xf]
        %v1078 = vld [vmem:[%s1 + $0xc8] sm:$0xf]
        %v1079 = vld [vmem:[%s1 + $0xcc] sm:$0xf]
        %v1080 = vld [vmem:[%s1 + $0xd0] sm:$0xf]
        %v1081 = vld [vmem:[%s1 + $0xd4] sm:$0xf]
        %v1082 = vld [vmem:[%s1 + $0xd8] sm:$0xf]
        %v1083 = vld [vmem:[%s1 + $0xdc] sm:$0xf]
        %v1084 = vld [vmem:[%s1 + $0xe0] sm:$0xf]
        %v1085 = vld [vmem:[%s1 + $0xe4] sm:$0xf]
        %v1086 = vld [vmem:[%s1 + $0xe8] sm:$0xf]
        %v1087 = vld [vmem:[%s1 + $0xec] sm:$0xf]
        %v1088 = vld [vmem:[%s1 + $0xf0] sm:$0xf]
        %v1089 = vld [vmem:[%s1 + $0xf4] sm:$0xf]
        %v1090 = vld [vmem:[%s1 + $0xf8] sm:$0xf]
        %v1091 = vld [vmem:[%s1 + $0xfc] sm:$0xf]
        %v1092 = vld [vmem:[%s1 + $0x100] sm:$0xf]
        %v1093 = vld [vmem:[%s1 + $0x104] sm:$0xf]
        %v1094 = vld [vmem:[%s1 + $0x108] sm:$0xf]
        %v1095 = vld [vmem:[%s1 + $0x10c] sm:$0xf]
        %v1096 = vld [vmem:[%s1 + $0x110] sm:$0xf]
        %v1097 = vld [vmem:[%s1 + $0x114] sm:$0xf]
        %v1098 = vld [vmem:[%s1 + $0x118] sm:$0xf]
        %v1099 = vld [vmem:[%s1 + $0x11c] sm:$0xf]
        %v1100 = vld [vmem:[%s1 + $0x120] sm:$0xf]
        %v1101 = vld [vmem:[%s1 + $0x124] sm:$0xf]
        %v1102 = vld [vmem:[%s1 + $0x128] sm:$0xf]
        %v1103 = vld [vmem:[%s1 + $0x12c] sm:$0xf]
        %v1104 = vld [vmem:[%s1 + $0x130] sm:$0xf]
        %v1105 = vld [vmem:[%s1 + $0x134] sm:$0xf]
        %v1106 = vld [vmem:[%s1 + $0x138] sm:$0xf]
        %v1107 = vld [vmem:[%s1 + $0x13c] sm:$0xf]
        %v1108 = vld [vmem:[%s1 + $0x140] sm:$0xf]
        %v1109 = vld [vmem:[%s1 + $0x144] sm:$0xf]
        %v1110 = vld [vmem:[%s1 + $0x148] sm:$0xf]
        %v1111 = vld [vmem:[%s1 + $0x14c] sm:$0xf]
        %v1112 = vld [vmem:[%s1 + $0x150] sm:$0xf]
        %v1113 = vld [vmem:[%s1 + $0x154] sm:$0xf]
        %v1114 = vld [vmem:[%s1 + $0x158] sm:$0xf]
        %v1115 = vld [vmem:[%s1 + $0x15c] sm:$0xf]
        %v1116 = vld [vmem:[%s1 + $0x160] sm:$0xf]
        %v1117 = vld [vmem:[%s1 + $0x164] sm:$0xf]
        %v1118 = vld [vmem:[%s1 + $0x168] sm:$0xf]
        %v1119 = vld [vmem:[%s1 + $0x16c] sm:$0xf]
        %v1120 = vld [vmem:[%s1 + $0x170] sm:$0xf]
        %v1121 = vld [vmem:[%s1 + $0x174] sm:$0xf]
        %v1122 = vld [vmem:[%s1 + $0x178] sm:$0xf]
        %v1123 = vld [vmem:[%s1 + $0x17c] sm:$0xf]
        %v1124 = vld [vmem:[%s1 + $0x180] sm:$0xf]
        %v1125 = vld [vmem:[%s1 + $0x184] sm:$0xf]
        %v1126 = vld [vmem:[%s2] sm:$0x1]
        %v1128 = vlaneseq
        %v1129 = vshrl.u32 %v1128, 7
        %v1130 = vsub.s32 0, %v1129
        %v1131 = vrot.slane %v1126, %v1130
        %v1231 = vunpack.c.l.b16 %v1028
        %v1232 = vunpack.c.l.b16 %v1029
        %v1233 = vunpack.c.l.b16 %v1030
        %v1234 = vunpack.c.l.b16 %v1031
        %v1235 = vunpack.c.l.b16 %v1032
        %v1236 = vunpack.c.l.b16 %v1033
        %v1237 = vunpack.c.l.b16 %v1034
        %v1238 = vunpack.c.l.b16 %v1035
        %v1239 = vunpack.c.l.b16 %v1036
        %v1240 = vunpack.c.l.b16 %v1037
        %v1241 = vunpack.c.l.b16 %v1038
        %v1242 = vunpack.c.l.b16 %v1039
        %v1243 = vunpack.c.l.b16 %v1040
        %v1244 = vunpack.c.l.b16 %v1041
        %v1245 = vunpack.c.l.b16 %v1042
        %v1246 = vunpack.c.l.b16 %v1043
        %v1247 = vunpack.c.l.b16 %v1044
        %v1248 = vunpack.c.l.b16 %v1045
        %v1249 = vunpack.c.l.b16 %v1046
        %v1250 = vunpack.c.l.b16 %v1047
        %v1251 = vunpack.c.l.b16 %v1048
        %v1252 = vunpack.c.l.b16 %v1049
        %v1253 = vunpack.c.l.b16 %v1050
        %v1254 = vunpack.c.l.b16 %v1051
        %v1255 = vunpack.c.l.b16 %v1052
        %v1256 = vunpack.c.l.b16 %v1053
        %v1257 = vunpack.c.l.b16 %v1054
        %v1258 = vunpack.c.l.b16 %v1055
        %v1259 = vunpack.c.l.b16 %v1056
        %v1260 = vunpack.c.l.b16 %v1057
        %v1261 = vunpack.c.l.b16 %v1058
        %v1262 = vunpack.c.l.b16 %v1059
        %v1263 = vunpack.c.l.b16 %v1060
        %v1264 = vunpack.c.l.b16 %v1061
        %v1265 = vunpack.c.l.b16 %v1062
        %v1266 = vunpack.c.l.b16 %v1063
        %v1267 = vunpack.c.l.b16 %v1064
        %v1268 = vunpack.c.l.b16 %v1065
        %v1269 = vunpack.c.l.b16 %v1066
        %v1270 = vunpack.c.l.b16 %v1067
        %v1271 = vunpack.c.l.b16 %v1068
        %v1272 = vunpack.c.l.b16 %v1069
        %v1273 = vunpack.c.l.b16 %v1070
        %v1274 = vunpack.c.l.b16 %v1071
        %v1275 = vunpack.c.l.b16 %v1072
        %v1276 = vunpack.c.l.b16 %v1073
        %v1277 = vunpack.c.l.b16 %v1074
        %v1278 = vunpack.c.l.b16 %v1075
        %v1279 = vunpack.c.l.b16 %v1076
        %v1280 = vunpack.c.l.b16 %v1077
        %v1281 = vunpack.c.l.b16 %v1078
        %v1282 = vunpack.c.l.b16 %v1079
        %v1283 = vunpack.c.l.b16 %v1080
        %v1284 = vunpack.c.l.b16 %v1081
        %v1285 = vunpack.c.l.b16 %v1082
        %v1286 = vunpack.c.l.b16 %v1083
        %v1287 = vunpack.c.l.b16 %v1084
        %v1288 = vunpack.c.l.b16 %v1085
        %v1289 = vunpack.c.l.b16 %v1086
        %v1290 = vunpack.c.l.b16 %v1087
        %v1291 = vunpack.c.l.b16 %v1088
        %v1292 = vunpack.c.l.b16 %v1089
        %v1293 = vunpack.c.l.b16 %v1090
        %v1294 = vunpack.c.l.b16 %v1091
        %v1295 = vunpack.c.l.b16 %v1092
        %v1296 = vunpack.c.l.b16 %v1093
        %v1297 = vunpack.c.l.b16 %v1094
        %v1298 = vunpack.c.l.b16 %v1095
        %v1299 = vunpack.c.l.b16 %v1096
        %v1300 = vunpack.c.l.b16 %v1097
        %v1301 = vunpack.c.l.b16 %v1098
        %v1302 = vunpack.c.l.b16 %v1099
        %v1303 = vunpack.c.l.b16 %v1100
        %v1304 = vunpack.c.l.b16 %v1101
        %v1305 = vunpack.c.l.b16 %v1102
        %v1306 = vunpack.c.l.b16 %v1103
        %v1307 = vunpack.c.l.b16 %v1104
        %v1308 = vunpack.c.l.b16 %v1105
        %v1309 = vunpack.c.l.b16 %v1106
        %v1310 = vunpack.c.l.b16 %v1107
        %v1311 = vunpack.c.l.b16 %v1108
        %v1312 = vunpack.c.l.b16 %v1109
        %v1313 = vunpack.c.l.b16 %v1110
        %v1314 = vunpack.c.l.b16 %v1111
        %v1315 = vunpack.c.l.b16 %v1112
        %v1316 = vunpack.c.l.b16 %v1113
        %v1317 = vunpack.c.l.b16 %v1114
        %v1318 = vunpack.c.l.b16 %v1115
        %v1319 = vunpack.c.l.b16 %v1116
        %v1320 = vunpack.c.l.b16 %v1117
        %v1321 = vunpack.c.l.b16 %v1118
        %v1322 = vunpack.c.l.b16 %v1119
        %v1323 = vunpack.c.l.b16 %v1120
        %v1324 = vunpack.c.l.b16 %v1121
        %v1325 = vunpack.c.l.b16 %v1122
        %v1326 = vunpack.c.l.b16 %v1123
        %v1327 = vunpack.c.l.b16 %v1124
        %v1328 = vunpack.c.l.b16 %v1125
        %v1329 = vpack.c.b16 %v1232, %v1231
        %v1330 = vpack.c.b16 %v1234, %v1233
        %v1331 = vpack.c.b16 %v1236, %v1235
        %v1332 = vpack.c.b16 %v1238, %v1237
        %v1333 = vpack.c.b16 %v1240, %v1239
        %v1334 = vpack.c.b16 %v1242, %v1241
        %v1335 = vpack.c.b16 %v1244, %v1243
        %v1336 = vpack.c.b16 %v1246, %v1245
        %v1337 = vpack.c.b16 %v1248, %v1247
        %v1338 = vpack.c.b16 %v1250, %v1249
        %v1339 = vpack.c.b16 %v1252, %v1251
        %v1340 = vpack.c.b16 %v1254, %v1253
        %v1341 = vpack.c.b16 %v1256, %v1255
        %v1342 = vpack.c.b16 %v1258, %v1257
        %v1343 = vpack.c.b16 %v1260, %v1259
        %v1344 = vpack.c.b16 %v1262, %v1261
        %v1345 = vpack.c.b16 %v1264, %v1263
        %v1346 = vpack.c.b16 %v1266, %v1265
        %v1347 = vpack.c.b16 %v1268, %v1267
        %v1348 = vpack.c.b16 %v1270, %v1269
        %v1349 = vpack.c.b16 %v1272, %v1271
        %v1350 = vpack.c.b16 %v1274, %v1273
        %v1351 = vpack.c.b16 %v1276, %v1275
        %v1352 = vpack.c.b16 %v1278, %v1277
        %v1353 = vpack.c.b16 %v1280, %v1279
        %v1354 = vpack.c.b16 %v1282, %v1281
        %v1355 = vpack.c.b16 %v1284, %v1283
        %v1356 = vpack.c.b16 %v1286, %v1285
        %v1357 = vpack.c.b16 %v1288, %v1287
        %v1358 = vpack.c.b16 %v1290, %v1289
        %v1359 = vpack.c.b16 %v1292, %v1291
        %v1360 = vpack.c.b16 %v1294, %v1293
        %v1361 = vpack.c.b16 %v1296, %v1295
        %v1362 = vpack.c.b16 %v1298, %v1297
        %v1363 = vpack.c.b16 %v1300, %v1299
        %v1364 = vpack.c.b16 %v1302, %v1301
        %v1365 = vpack.c.b16 %v1304, %v1303
        %v1366 = vpack.c.b16 %v1306, %v1305
        %v1367 = vpack.c.b16 %v1308, %v1307
        %v1368 = vpack.c.b16 %v1310, %v1309
        %v1369 = vpack.c.b16 %v1312, %v1311
        %v1370 = vpack.c.b16 %v1314, %v1313
        %v1371 = vpack.c.b16 %v1316, %v1315
        %v1372 = vpack.c.b16 %v1318, %v1317
        %v1373 = vpack.c.b16 %v1320, %v1319
        %v1374 = vpack.c.b16 %v1322, %v1321
        %v1375 = vpack.c.b16 %v1324, %v1323
        %v1376 = vpack.c.b16 %v1326, %v1325
        %v1377 = vpack.c.b16 %v1328, %v1327
        %vm1427 = vcmask 130048
        %v1429 = vsel %vm1427, %v922, 0
        %v1432 = vsel %vm1427, %v929, 0
        %v1435 = vsel %vm1427, %v936, 0
        %v1438 = vsel %vm1427, %v943, 0
        %v1441 = vsel %vm1427, %v950, 0
        %v1444 = vsel %vm1427, %v957, 0
        %v1447 = vsel %vm1427, %v964, 0
        %v1450 = vsel %vm1427, %v971, 0
        %v1453 = vsel %vm1427, %v978, 0
        %v1456 = vsel %vm1427, %v985, 0
        %v1459 = vsel %vm1427, %v992, 0
        %v1462 = vsel %vm1427, %v999, 0
        %v1465 = vsel %vm1427, %v1006, 0
        %v1468 = vsel %vm1427, %v1013, 0
        %v1471 = vsel %vm1427, %v1020, 0
        %v1474 = vsel %vm1427, %v1027, 0
        %1476 = vmatprep.subr.bf16.mxu0 0
        %1477 = vmatpush1.bf16.msra.mxu0 %v1336
        %1478 = vmatprep.subr.bf16.mxu0 0
        %1479 = vmatpush1.bf16.msra.mxu0 %v1335
        %1480 = vmatprep.subr.bf16.mxu0 0
        %1481 = vmatpush1.bf16.msra.mxu0 %v1334
        %1482 = vmatprep.subr.bf16.mxu0 0
        %1483 = vmatpush1.bf16.msra.mxu0 %v1333
        %1484 = vmatprep.subr.bf16.mxu0 0
        %1485 = vmatpush1.bf16.msra.mxu0 %v1332
        %1486 = vmatprep.subr.bf16.mxu0 0
        %1487 = vmatpush1.bf16.msra.mxu0 %v1331
        %1488 = vmatprep.subr.bf16.mxu0 0
        %1489 = vmatpush1.bf16.msra.mxu0 %v1330
        %1490 = vmatprep.subr.bf16.mxu0 0
        %1491 = vmatpush1.bf16.msra.mxu0 %v1329
        %1492 = vmatprep.subr.bf16.mxu0 0
        %1493 = vmatpush2.bf16.msra.mxu0 %v1344
        %1494 = vmatprep.subr.bf16.mxu0 0
        %1495 = vmatpush2.bf16.msra.mxu0 %v1343
        %1496 = vmatprep.subr.bf16.mxu0 0
        %1497 = vmatpush2.bf16.msra.mxu0 %v1342
        %1498 = vmatprep.subr.bf16.mxu0 0
        %1499 = vmatpush2.bf16.msra.mxu0 %v1341
        %1500 = vmatprep.subr.bf16.mxu0 0
        %1501 = vmatpush2.bf16.msra.mxu0 %v1340
        %1502 = vmatprep.subr.bf16.mxu0 0
        %1503 = vmatpush2.bf16.msra.mxu0 %v1339
        %1504 = vmatprep.subr.bf16.mxu0 0
        %1505 = vmatpush2.bf16.msra.mxu0 %v1338
        %1506 = vmatprep.subr.bf16.mxu0 0
        %1507 = vmatpush2.bf16.msra.mxu0 %v1337
        %1508 = vmatprep.mubr.bf16.mxu0 %v917
        %1509 = vmatmul.mubr.bf16.gmra.mxu0 %v916
        %v1510 = vpop.f32.mrf.mxu0
        %v1511 = vadd.f32 %v1131, %v1510
        %v1512 = vpop.f32.mrf.mxu0
        %v1513 = vpop.f32.mrf.mxu0
        %v1514 = vadd.f32 %v1131, %v1513
        %v1515 = vpop.f32.mrf.mxu0
        %1516 = vmatprep.mubr.bf16.mxu0 %v924
        %1517 = vmatmul.mubr.bf16.gmra.mxu0 %v923
        %v1518 = vpop.f32.mrf.mxu0
        %v1519 = vadd.f32 %v1131, %v1518
        %v1520 = vpop.f32.mrf.mxu0
        %v1521 = vpop.f32.mrf.mxu0
        %v1522 = vadd.f32 %v1131, %v1521
        %v1523 = vpop.f32.mrf.mxu0
        %1524 = vmatprep.mubr.bf16.mxu0 %v931
        %1525 = vmatmul.mubr.bf16.gmra.mxu0 %v930
        %v1526 = vpop.f32.mrf.mxu0
        %v1527 = vadd.f32 %v1131, %v1526
        %v1528 = vpop.f32.mrf.mxu0
        %v1529 = vpop.f32.mrf.mxu0
        %v1530 = vadd.f32 %v1131, %v1529
        %v1531 = vpop.f32.mrf.mxu0
        %1532 = vmatprep.mubr.bf16.mxu0 %v938
        %1533 = vmatmul.mubr.bf16.gmra.mxu0 %v937
        %v1534 = vpop.f32.mrf.mxu0
        %v1535 = vadd.f32 %v1131, %v1534
        %v1536 = vpop.f32.mrf.mxu0
        %v1537 = vpop.f32.mrf.mxu0
        %v1538 = vadd.f32 %v1131, %v1537
        %v1539 = vpop.f32.mrf.mxu0
        %1540 = vmatprep.mubr.bf16.mxu0 %v945
        %1541 = vmatmul.mubr.bf16.gmra.mxu0 %v944
        %v1542 = vpop.f32.mrf.mxu0
        %v1543 = vadd.f32 %v1131, %v1542
        %v1544 = vpop.f32.mrf.mxu0
        %v1545 = vpop.f32.mrf.mxu0
        %v1546 = vadd.f32 %v1131, %v1545
        %v1547 = vpop.f32.mrf.mxu0
        %1548 = vmatprep.mubr.bf16.mxu0 %v952
        %1549 = vmatmul.mubr.bf16.gmra.mxu0 %v951
        %v1550 = vpop.f32.mrf.mxu0
        %v1551 = vadd.f32 %v1131, %v1550
        %v1552 = vpop.f32.mrf.mxu0
        %v1553 = vpop.f32.mrf.mxu0
        %v1554 = vadd.f32 %v1131, %v1553
        %v1555 = vpop.f32.mrf.mxu0
        %1556 = vmatprep.mubr.bf16.mxu0 %v959
        %1557 = vmatmul.mubr.bf16.gmra.mxu0 %v958
        %v1558 = vpop.f32.mrf.mxu0
        %v1559 = vadd.f32 %v1131, %v1558
        %v1560 = vpop.f32.mrf.mxu0
        %v1561 = vpop.f32.mrf.mxu0
        %v1562 = vadd.f32 %v1131, %v1561
        %v1563 = vpop.f32.mrf.mxu0
        %1564 = vmatprep.mubr.bf16.mxu0 %v966
        %1565 = vmatmul.mubr.bf16.gmra.mxu0 %v965
        %v1566 = vpop.f32.mrf.mxu0
        %v1567 = vadd.f32 %v1131, %v1566
        %v1568 = vpop.f32.mrf.mxu0
        %v1569 = vpop.f32.mrf.mxu0
        %v1570 = vadd.f32 %v1131, %v1569
        %v1571 = vpop.f32.mrf.mxu0
        %1572 = vmatprep.mubr.bf16.mxu0 %v973
        %1573 = vmatmul.mubr.bf16.gmra.mxu0 %v972
        %v1574 = vpop.f32.mrf.mxu0
        %v1575 = vadd.f32 %v1131, %v1574
        %v1576 = vpop.f32.mrf.mxu0
        %v1577 = vpop.f32.mrf.mxu0
        %v1578 = vadd.f32 %v1131, %v1577
        %v1579 = vpop.f32.mrf.mxu0
        %1580 = vmatprep.mubr.bf16.mxu0 %v980
        %1581 = vmatmul.mubr.bf16.gmra.mxu0 %v979
        %v1582 = vpop.f32.mrf.mxu0
        %v1583 = vadd.f32 %v1131, %v1582
        %v1584 = vpop.f32.mrf.mxu0
        %v1585 = vpop.f32.mrf.mxu0
        %v1586 = vadd.f32 %v1131, %v1585
        %v1587 = vpop.f32.mrf.mxu0
        %1588 = vmatprep.mubr.bf16.mxu0 %v987
        %1589 = vmatmul.mubr.bf16.gmra.mxu0 %v986
        %v1590 = vpop.f32.mrf.mxu0
        %v1591 = vadd.f32 %v1131, %v1590
        %v1592 = vpop.f32.mrf.mxu0
        %v1593 = vpop.f32.mrf.mxu0
        %v1594 = vadd.f32 %v1131, %v1593
        %v1595 = vpop.f32.mrf.mxu0
        %1596 = vmatprep.mubr.bf16.mxu0 %v994
        %1597 = vmatmul.mubr.bf16.gmra.mxu0 %v993
        %v1598 = vpop.f32.mrf.mxu0
        %v1599 = vadd.f32 %v1131, %v1598
        %v1600 = vpop.f32.mrf.mxu0
        %v1601 = vpop.f32.mrf.mxu0
        %v1602 = vadd.f32 %v1131, %v1601
        %v1603 = vpop.f32.mrf.mxu0
        %1604 = vmatprep.mubr.bf16.mxu0 %v1001
        %1605 = vmatmul.mubr.bf16.gmra.mxu0 %v1000
        %v1606 = vpop.f32.mrf.mxu0
        %v1607 = vadd.f32 %v1131, %v1606
        %v1608 = vpop.f32.mrf.mxu0
        %v1609 = vpop.f32.mrf.mxu0
        %v1610 = vadd.f32 %v1131, %v1609
        %v1611 = vpop.f32.mrf.mxu0
        %1612 = vmatprep.mubr.bf16.mxu0 %v1008
        %1613 = vmatmul.mubr.bf16.gmra.mxu0 %v1007
        %v1614 = vpop.f32.mrf.mxu0
        %v1615 = vadd.f32 %v1131, %v1614
        %v1616 = vpop.f32.mrf.mxu0
        %v1617 = vpop.f32.mrf.mxu0
        %v1618 = vadd.f32 %v1131, %v1617
        %v1619 = vpop.f32.mrf.mxu0
        %1620 = vmatprep.mubr.bf16.mxu0 %v1015
        %1621 = vmatmul.mubr.bf16.gmra.mxu0 %v1014
        %v1622 = vpop.f32.mrf.mxu0
        %v1623 = vadd.f32 %v1131, %v1622
        %v1624 = vpop.f32.mrf.mxu0
        %v1625 = vpop.f32.mrf.mxu0
        %v1626 = vadd.f32 %v1131, %v1625
        %v1627 = vpop.f32.mrf.mxu0
        %1628 = vmatprep.mubr.bf16.mxu0 %v1022
        %1629 = vmatmul.mubr.bf16.gmra.mxu0 %v1021
        %v1630 = vpop.f32.mrf.mxu0
        %v1631 = vadd.f32 %v1131, %v1630
        %v1632 = vpop.f32.mrf.mxu0
        %v1633 = vpop.f32.mrf.mxu0
        %v1634 = vadd.f32 %v1131, %v1633
        %v1635 = vpop.f32.mrf.mxu0
        %1636 = vdwg.mxu0
        %1637 = vmatprep.subr.bf16.mxu0 0
        %1638 = vmatpush1.bf16.msra.mxu0 %v1352
        %1639 = vmatprep.subr.bf16.mxu0 0
        %1640 = vmatpush1.bf16.msra.mxu0 %v1351
        %1641 = vmatprep.subr.bf16.mxu0 0
        %1642 = vmatpush1.bf16.msra.mxu0 %v1350
        %1643 = vmatprep.subr.bf16.mxu0 0
        %1644 = vmatpush1.bf16.msra.mxu0 %v1349
        %1645 = vmatprep.subr.bf16.mxu0 0
        %1646 = vmatpush1.bf16.msra.mxu0 %v1348
        %1647 = vmatprep.subr.bf16.mxu0 0
        %1648 = vmatpush1.bf16.msra.mxu0 %v1347
        %1649 = vmatprep.subr.bf16.mxu0 0
        %1650 = vmatpush1.bf16.msra.mxu0 %v1346
        %1651 = vmatprep.subr.bf16.mxu0 0
        %1652 = vmatpush1.bf16.msra.mxu0 %v1345
        %1653 = vmatprep.subr.bf16.mxu0 0
        %1654 = vmatpush2.bf16.msra.mxu0 %v1360
        %1655 = vmatprep.subr.bf16.mxu0 0
        %1656 = vmatpush2.bf16.msra.mxu0 %v1359
        %1657 = vmatprep.subr.bf16.mxu0 0
        %1658 = vmatpush2.bf16.msra.mxu0 %v1358
        %1659 = vmatprep.subr.bf16.mxu0 0
        %1660 = vmatpush2.bf16.msra.mxu0 %v1357
        %1661 = vmatprep.subr.bf16.mxu0 0
        %1662 = vmatpush2.bf16.msra.mxu0 %v1356
        %1663 = vmatprep.subr.bf16.mxu0 0
        %1664 = vmatpush2.bf16.msra.mxu0 %v1355
        %1665 = vmatprep.subr.bf16.mxu0 0
        %1666 = vmatpush2.bf16.msra.mxu0 %v1354
        %1667 = vmatprep.subr.bf16.mxu0 0
        %1668 = vmatpush2.bf16.msra.mxu0 %v1353
        %1669 = vmatprep.mubr.bf16.mxu0 %v919
        %1670 = vmatmul.mubr.bf16.gmra.mxu0 %v918
        %v1671 = vpop.f32.mrf.mxu0
        %v1672 = vadd.f32 %v1511, %v1671
        %v1673 = vpop.f32.mrf.mxu0
        %v1674 = vpop.f32.mrf.mxu0
        %v1675 = vadd.f32 %v1514, %v1674
        %v1676 = vpop.f32.mrf.mxu0
        %1677 = vmatprep.mubr.bf16.mxu0 %v926
        %1678 = vmatmul.mubr.bf16.gmra.mxu0 %v925
        %v1679 = vpop.f32.mrf.mxu0
        %v1680 = vadd.f32 %v1519, %v1679
        %v1681 = vpop.f32.mrf.mxu0
        %v1682 = vpop.f32.mrf.mxu0
        %v1683 = vadd.f32 %v1522, %v1682
        %v1684 = vpop.f32.mrf.mxu0
        %1685 = vmatprep.mubr.bf16.mxu0 %v933
        %1686 = vmatmul.mubr.bf16.gmra.mxu0 %v932
        %v1687 = vpop.f32.mrf.mxu0
        %v1688 = vadd.f32 %v1527, %v1687
        %v1689 = vpop.f32.mrf.mxu0
        %v1690 = vpop.f32.mrf.mxu0
        %v1691 = vadd.f32 %v1530, %v1690
        %v1692 = vpop.f32.mrf.mxu0
        %1693 = vmatprep.mubr.bf16.mxu0 %v940
        %1694 = vmatmul.mubr.bf16.gmra.mxu0 %v939
        %v1695 = vpop.f32.mrf.mxu0
        %v1696 = vadd.f32 %v1535, %v1695
        %v1697 = vpop.f32.mrf.mxu0
        %v1698 = vpop.f32.mrf.mxu0
        %v1699 = vadd.f32 %v1538, %v1698
        %v1700 = vpop.f32.mrf.mxu0
        %1701 = vmatprep.mubr.bf16.mxu0 %v947
        %1702 = vmatmul.mubr.bf16.gmra.mxu0 %v946
        %v1703 = vpop.f32.mrf.mxu0
        %v1704 = vadd.f32 %v1543, %v1703
        %v1705 = vpop.f32.mrf.mxu0
        %v1706 = vpop.f32.mrf.mxu0
        %v1707 = vadd.f32 %v1546, %v1706
        %v1708 = vpop.f32.mrf.mxu0
        %1709 = vmatprep.mubr.bf16.mxu0 %v954
        %1710 = vmatmul.mubr.bf16.gmra.mxu0 %v953
        %v1711 = vpop.f32.mrf.mxu0
        %v1712 = vadd.f32 %v1551, %v1711
        %v1713 = vpop.f32.mrf.mxu0
        %v1714 = vpop.f32.mrf.mxu0
        %v1715 = vadd.f32 %v1554, %v1714
        %v1716 = vpop.f32.mrf.mxu0
        %1717 = vmatprep.mubr.bf16.mxu0 %v961
        %1718 = vmatmul.mubr.bf16.gmra.mxu0 %v960
        %v1719 = vpop.f32.mrf.mxu0
        %v1720 = vadd.f32 %v1559, %v1719
        %v1721 = vpop.f32.mrf.mxu0
        %v1722 = vpop.f32.mrf.mxu0
        %v1723 = vadd.f32 %v1562, %v1722
        %v1724 = vpop.f32.mrf.mxu0
        %1725 = vmatprep.mubr.bf16.mxu0 %v968
        %1726 = vmatmul.mubr.bf16.gmra.mxu0 %v967
        %v1727 = vpop.f32.mrf.mxu0
        %v1728 = vadd.f32 %v1567, %v1727
        %v1729 = vpop.f32.mrf.mxu0
        %v1730 = vpop.f32.mrf.mxu0
        %v1731 = vadd.f32 %v1570, %v1730
        %v1732 = vpop.f32.mrf.mxu0
        %1733 = vmatprep.mubr.bf16.mxu0 %v975
        %1734 = vmatmul.mubr.bf16.gmra.mxu0 %v974
        %v1735 = vpop.f32.mrf.mxu0
        %v1736 = vadd.f32 %v1575, %v1735
        %v1737 = vpop.f32.mrf.mxu0
        %v1738 = vpop.f32.mrf.mxu0
        %v1739 = vadd.f32 %v1578, %v1738
        %v1740 = vpop.f32.mrf.mxu0
        %1741 = vmatprep.mubr.bf16.mxu0 %v982
        %1742 = vmatmul.mubr.bf16.gmra.mxu0 %v981
        %v1743 = vpop.f32.mrf.mxu0
        %v1744 = vadd.f32 %v1583, %v1743
        %v1745 = vpop.f32.mrf.mxu0
        %v1746 = vpop.f32.mrf.mxu0
        %v1747 = vadd.f32 %v1586, %v1746
        %v1748 = vpop.f32.mrf.mxu0
        %1749 = vmatprep.mubr.bf16.mxu0 %v989
        %1750 = vmatmul.mubr.bf16.gmra.mxu0 %v988
        %v1751 = vpop.f32.mrf.mxu0
        %v1752 = vadd.f32 %v1591, %v1751
        %v1753 = vpop.f32.mrf.mxu0
        %v1754 = vpop.f32.mrf.mxu0
        %v1755 = vadd.f32 %v1594, %v1754
        %v1756 = vpop.f32.mrf.mxu0
        %1757 = vmatprep.mubr.bf16.mxu0 %v996
        %1758 = vmatmul.mubr.bf16.gmra.mxu0 %v995
        %v1759 = vpop.f32.mrf.mxu0
        %v1760 = vadd.f32 %v1599, %v1759
        %v1761 = vpop.f32.mrf.mxu0
        %v1762 = vpop.f32.mrf.mxu0
        %v1763 = vadd.f32 %v1602, %v1762
        %v1764 = vpop.f32.mrf.mxu0
        %1765 = vmatprep.mubr.bf16.mxu0 %v1003
        %1766 = vmatmul.mubr.bf16.gmra.mxu0 %v1002
        %v1767 = vpop.f32.mrf.mxu0
        %v1768 = vadd.f32 %v1607, %v1767
        %v1769 = vpop.f32.mrf.mxu0
        %v1770 = vpop.f32.mrf.mxu0
        %v1771 = vadd.f32 %v1610, %v1770
        %v1772 = vpop.f32.mrf.mxu0
        %1773 = vmatprep.mubr.bf16.mxu0 %v1010
        %1774 = vmatmul.mubr.bf16.gmra.mxu0 %v1009
        %v1775 = vpop.f32.mrf.mxu0
        %v1776 = vadd.f32 %v1615, %v1775
        %v1777 = vpop.f32.mrf.mxu0
        %v1778 = vpop.f32.mrf.mxu0
        %v1779 = vadd.f32 %v1618, %v1778
        %v1780 = vpop.f32.mrf.mxu0
        %1781 = vmatprep.mubr.bf16.mxu0 %v1017
        %1782 = vmatmul.mubr.bf16.gmra.mxu0 %v1016
        %v1783 = vpop.f32.mrf.mxu0
        %v1784 = vadd.f32 %v1623, %v1783
        %v1785 = vpop.f32.mrf.mxu0
        %v1786 = vpop.f32.mrf.mxu0
        %v1787 = vadd.f32 %v1626, %v1786
        %v1788 = vpop.f32.mrf.mxu0
        %1789 = vmatprep.mubr.bf16.mxu0 %v1024
        %1790 = vmatmul.mubr.bf16.gmra.mxu0 %v1023
        %v1791 = vpop.f32.mrf.mxu0
        %v1792 = vadd.f32 %v1631, %v1791
        %v1793 = vpop.f32.mrf.mxu0
        %v1794 = vpop.f32.mrf.mxu0
        %v1795 = vadd.f32 %v1634, %v1794
        %v1796 = vpop.f32.mrf.mxu0
        %1797 = vdwg.mxu0
        %1798 = vmatprep.subr.bf16.mxu0 0
        %1799 = vmatpush1.bf16.msra.mxu0 %v1368
        %1800 = vmatprep.subr.bf16.mxu0 0
        %1801 = vmatpush1.bf16.msra.mxu0 %v1367
        %1802 = vmatprep.subr.bf16.mxu0 0
        %1803 = vmatpush1.bf16.msra.mxu0 %v1366
        %1804 = vmatprep.subr.bf16.mxu0 0
        %1805 = vmatpush1.bf16.msra.mxu0 %v1365
        %1806 = vmatprep.subr.bf16.mxu0 0
        %1807 = vmatpush1.bf16.msra.mxu0 %v1364
        %1808 = vmatprep.subr.bf16.mxu0 0
        %1809 = vmatpush1.bf16.msra.mxu0 %v1363
        %1810 = vmatprep.subr.bf16.mxu0 0
        %1811 = vmatpush1.bf16.msra.mxu0 %v1362
        %1812 = vmatprep.subr.bf16.mxu0 0
        %1813 = vmatpush1.bf16.msra.mxu0 %v1361
        %1814 = vmatprep.subr.bf16.mxu0 0
        %1815 = vmatpush2.bf16.msra.mxu0 %v1376
        %1816 = vmatprep.subr.bf16.mxu0 0
        %1817 = vmatpush2.bf16.msra.mxu0 %v1375
        %1818 = vmatprep.subr.bf16.mxu0 0
        %1819 = vmatpush2.bf16.msra.mxu0 %v1374
        %1820 = vmatprep.subr.bf16.mxu0 0
        %1821 = vmatpush2.bf16.msra.mxu0 %v1373
        %1822 = vmatprep.subr.bf16.mxu0 0
        %1823 = vmatpush2.bf16.msra.mxu0 %v1372
        %1824 = vmatprep.subr.bf16.mxu0 0
        %1825 = vmatpush2.bf16.msra.mxu0 %v1371
        %1826 = vmatprep.subr.bf16.mxu0 0
        %1827 = vmatpush2.bf16.msra.mxu0 %v1370
        %1828 = vmatprep.subr.bf16.mxu0 0
        %1829 = vmatpush2.bf16.msra.mxu0 %v1369
        %1830 = vmatprep.mubr.bf16.mxu0 %v921
        %1831 = vmatmul.mubr.bf16.gmra.mxu0 %v920
        %v1832 = vpop.f32.mrf.mxu0
        %v1833 = vadd.f32 %v1672, %v1832
        %v1834 = vpop.f32.mrf.mxu0
        %v1835 = vpop.f32.mrf.mxu0
        %v1836 = vadd.f32 %v1675, %v1835
        %v1837 = vpop.f32.mrf.mxu0
        %1838 = vmatprep.mubr.bf16.mxu0 %v928
        %1839 = vmatmul.mubr.bf16.gmra.mxu0 %v927
        %v1840 = vpop.f32.mrf.mxu0
        %v1841 = vadd.f32 %v1680, %v1840
        %v1842 = vpop.f32.mrf.mxu0
        %v1843 = vpop.f32.mrf.mxu0
        %v1844 = vadd.f32 %v1683, %v1843
        %v1845 = vpop.f32.mrf.mxu0
        %1846 = vmatprep.mubr.bf16.mxu0 %v935
        %1847 = vmatmul.mubr.bf16.gmra.mxu0 %v934
        %v1848 = vpop.f32.mrf.mxu0
        %v1849 = vadd.f32 %v1688, %v1848
        %v1850 = vpop.f32.mrf.mxu0
        %v1851 = vpop.f32.mrf.mxu0
        %v1852 = vadd.f32 %v1691, %v1851
        %v1853 = vpop.f32.mrf.mxu0
        %1854 = vmatprep.mubr.bf16.mxu0 %v942
        %1855 = vmatmul.mubr.bf16.gmra.mxu0 %v941
        %v1856 = vpop.f32.mrf.mxu0
        %v1857 = vadd.f32 %v1696, %v1856
        %v1858 = vpop.f32.mrf.mxu0
        %v1859 = vpop.f32.mrf.mxu0
        %v1860 = vadd.f32 %v1699, %v1859
        %v1861 = vpop.f32.mrf.mxu0
        %1862 = vmatprep.mubr.bf16.mxu0 %v949
        %1863 = vmatmul.mubr.bf16.gmra.mxu0 %v948
        %v1864 = vpop.f32.mrf.mxu0
        %v1865 = vadd.f32 %v1704, %v1864
        %v1866 = vpop.f32.mrf.mxu0
        %v1867 = vpop.f32.mrf.mxu0
        %v1868 = vadd.f32 %v1707, %v1867
        %v1869 = vpop.f32.mrf.mxu0
        %1870 = vmatprep.mubr.bf16.mxu0 %v956
        %1871 = vmatmul.mubr.bf16.gmra.mxu0 %v955
        %v1872 = vpop.f32.mrf.mxu0
        %v1873 = vadd.f32 %v1712, %v1872
        %v1874 = vpop.f32.mrf.mxu0
        %v1875 = vpop.f32.mrf.mxu0
        %v1876 = vadd.f32 %v1715, %v1875
        %v1877 = vpop.f32.mrf.mxu0
        %1878 = vmatprep.mubr.bf16.mxu0 %v963
        %1879 = vmatmul.mubr.bf16.gmra.mxu0 %v962
        %v1880 = vpop.f32.mrf.mxu0
        %v1881 = vadd.f32 %v1720, %v1880
        %v1882 = vpop.f32.mrf.mxu0
        %v1883 = vpop.f32.mrf.mxu0
        %v1884 = vadd.f32 %v1723, %v1883
        %v1885 = vpop.f32.mrf.mxu0
        %1886 = vmatprep.mubr.bf16.mxu0 %v970
        %1887 = vmatmul.mubr.bf16.gmra.mxu0 %v969
        %v1888 = vpop.f32.mrf.mxu0
        %v1889 = vadd.f32 %v1728, %v1888
        %v1890 = vpop.f32.mrf.mxu0
        %v1891 = vpop.f32.mrf.mxu0
        %v1892 = vadd.f32 %v1731, %v1891
        %v1893 = vpop.f32.mrf.mxu0
        %1894 = vmatprep.mubr.bf16.mxu0 %v977
        %1895 = vmatmul.mubr.bf16.gmra.mxu0 %v976
        %v1896 = vpop.f32.mrf.mxu0
        %v1897 = vadd.f32 %v1736, %v1896
        %v1898 = vpop.f32.mrf.mxu0
        %v1899 = vpop.f32.mrf.mxu0
        %v1900 = vadd.f32 %v1739, %v1899
        %v1901 = vpop.f32.mrf.mxu0
        %1902 = vmatprep.mubr.bf16.mxu0 %v984
        %1903 = vmatmul.mubr.bf16.gmra.mxu0 %v983
        %v1904 = vpop.f32.mrf.mxu0
        %v1905 = vadd.f32 %v1744, %v1904
        %v1906 = vpop.f32.mrf.mxu0
        %v1907 = vpop.f32.mrf.mxu0
        %v1908 = vadd.f32 %v1747, %v1907
        %v1909 = vpop.f32.mrf.mxu0
        %1910 = vmatprep.mubr.bf16.mxu0 %v991
        %1911 = vmatmul.mubr.bf16.gmra.mxu0 %v990
        %v1912 = vpop.f32.mrf.mxu0
        %v1913 = vadd.f32 %v1752, %v1912
        %v1914 = vpop.f32.mrf.mxu0
        %v1915 = vpop.f32.mrf.mxu0
        %v1916 = vadd.f32 %v1755, %v1915
        %v1917 = vpop.f32.mrf.mxu0
        %1918 = vmatprep.mubr.bf16.mxu0 %v998
        %1919 = vmatmul.mubr.bf16.gmra.mxu0 %v997
        %v1920 = vpop.f32.mrf.mxu0
        %v1921 = vadd.f32 %v1760, %v1920
        %v1922 = vpop.f32.mrf.mxu0
        %v1923 = vpop.f32.mrf.mxu0
        %v1924 = vadd.f32 %v1763, %v1923
        %v1925 = vpop.f32.mrf.mxu0
        %1926 = vmatprep.mubr.bf16.mxu0 %v1005
        %1927 = vmatmul.mubr.bf16.gmra.mxu0 %v1004
        %v1928 = vpop.f32.mrf.mxu0
        %v1929 = vadd.f32 %v1768, %v1928
        %v1930 = vpop.f32.mrf.mxu0
        %v1931 = vpop.f32.mrf.mxu0
        %v1932 = vadd.f32 %v1771, %v1931
        %v1933 = vpop.f32.mrf.mxu0
        %1934 = vmatprep.mubr.bf16.mxu0 %v1012
        %1935 = vmatmul.mubr.bf16.gmra.mxu0 %v1011
        %v1936 = vpop.f32.mrf.mxu0
        %v1937 = vadd.f32 %v1776, %v1936
        %v1938 = vpop.f32.mrf.mxu0
        %v1939 = vpop.f32.mrf.mxu0
        %v1940 = vadd.f32 %v1779, %v1939
        %v1941 = vpop.f32.mrf.mxu0
        %1942 = vmatprep.mubr.bf16.mxu0 %v1019
        %1943 = vmatmul.mubr.bf16.gmra.mxu0 %v1018
        %v1944 = vpop.f32.mrf.mxu0
        %v1945 = vadd.f32 %v1784, %v1944
        %v1946 = vpop.f32.mrf.mxu0
        %v1947 = vpop.f32.mrf.mxu0
        %v1948 = vadd.f32 %v1787, %v1947
        %v1949 = vpop.f32.mrf.mxu0
        %1950 = vmatprep.mubr.bf16.mxu0 %v1026
        %1951 = vmatmul.mubr.bf16.gmra.mxu0 %v1025
        %v1952 = vpop.f32.mrf.mxu0
        %v1953 = vadd.f32 %v1792, %v1952
        %v1954 = vpop.f32.mrf.mxu0
        %v1955 = vpop.f32.mrf.mxu0
        %v1956 = vadd.f32 %v1795, %v1955
        %v1957 = vpop.f32.mrf.mxu0
        %1958 = vdwg.mxu0
        %1959 = vmatprep.subr.bf16.mxu0 0
        %1960 = vmatpush1.bf16.msra.mxu0 0
        %1961 = vmatprep.subr.bf16.mxu0 0
        %1962 = vmatpush1.bf16.msra.mxu0 0
        %1963 = vmatprep.subr.bf16.mxu0 0
        %1964 = vmatpush1.bf16.msra.mxu0 0
        %1965 = vmatprep.subr.bf16.mxu0 0
        %1966 = vmatpush1.bf16.msra.mxu0 0
        %1967 = vmatprep.subr.bf16.mxu0 0
        %1968 = vmatpush1.bf16.msra.mxu0 0
        %1969 = vmatprep.subr.bf16.mxu0 0
        %1970 = vmatpush1.bf16.msra.mxu0 0
        %1971 = vmatprep.subr.bf16.mxu0 0
        %1972 = vmatpush1.bf16.msra.mxu0 0
        %1973 = vmatprep.subr.bf16.mxu0 0
        %1974 = vmatpush1.bf16.msra.mxu0 %v1377
        %1975 = vmatprep.subr.bf16.mxu0 0
        %1976 = vmatpush2.bf16.msra.mxu0 0
        %1977 = vmatprep.subr.bf16.mxu0 0
        %1978 = vmatpush2.bf16.msra.mxu0 0
        %1979 = vmatprep.subr.bf16.mxu0 0
        %1980 = vmatpush2.bf16.msra.mxu0 0
        %1981 = vmatprep.subr.bf16.mxu0 0
        %1982 = vmatpush2.bf16.msra.mxu0 0
        %1983 = vmatprep.subr.bf16.mxu0 0
        %1984 = vmatpush2.bf16.msra.mxu0 0
        %1985 = vmatprep.subr.bf16.mxu0 0
        %1986 = vmatpush2.bf16.msra.mxu0 0
        %1987 = vmatprep.subr.bf16.mxu0 0
        %1988 = vmatpush2.bf16.msra.mxu0 0
        %1989 = vmatprep.subr.bf16.mxu0 0
        %1990 = vmatpush2.bf16.msra.mxu0 0
        %1991 = vmatprep.mubr.bf16.mxu0 0
        %1992 = vmatmul.mubr.bf16.gmra.mxu0 %v1429
        %v1993 = vpop.f32.mrf.mxu0
        %v1994 = vadd.f32 %v1833, %v1993
        %v1995 = vpop.f32.mrf.mxu0
        %v1996 = vpop.f32.mrf.mxu0
        %v1997 = vadd.f32 %v1836, %v1996
        %v1998 = vpop.f32.mrf.mxu0
        %1999 = vmatprep.mubr.bf16.mxu0 0
        %2000 = vmatmul.mubr.bf16.gmra.mxu0 %v1432
        %v2001 = vpop.f32.mrf.mxu0
        %v2002 = vadd.f32 %v1841, %v2001
        %v2003 = vpop.f32.mrf.mxu0
        %v2004 = vpop.f32.mrf.mxu0
        %v2005 = vadd.f32 %v1844, %v2004
        %v2006 = vpop.f32.mrf.mxu0
        %2007 = vmatprep.mubr.bf16.mxu0 0
        %2008 = vmatmul.mubr.bf16.gmra.mxu0 %v1435
        %v2009 = vpop.f32.mrf.mxu0
        %v2010 = vadd.f32 %v1849, %v2009
        %v2011 = vpop.f32.mrf.mxu0
        %v2012 = vpop.f32.mrf.mxu0
        %v2013 = vadd.f32 %v1852, %v2012
        %v2014 = vpop.f32.mrf.mxu0
        %2015 = vmatprep.mubr.bf16.mxu0 0
        %2016 = vmatmul.mubr.bf16.gmra.mxu0 %v1438
        %v2017 = vpop.f32.mrf.mxu0
        %v2018 = vadd.f32 %v1857, %v2017
        %v2019 = vpop.f32.mrf.mxu0
        %v2020 = vpop.f32.mrf.mxu0
        %v2021 = vadd.f32 %v1860, %v2020
        %v2022 = vpop.f32.mrf.mxu0
        %2023 = vmatprep.mubr.bf16.mxu0 0
        %2024 = vmatmul.mubr.bf16.gmra.mxu0 %v1441
        %v2025 = vpop.f32.mrf.mxu0
        %v2026 = vadd.f32 %v1865, %v2025
        %v2027 = vpop.f32.mrf.mxu0
        %v2028 = vpop.f32.mrf.mxu0
        %v2029 = vadd.f32 %v1868, %v2028
        %v2030 = vpop.f32.mrf.mxu0
        %2031 = vmatprep.mubr.bf16.mxu0 0
        %2032 = vmatmul.mubr.bf16.gmra.mxu0 %v1444
        %v2033 = vpop.f32.mrf.mxu0
        %v2034 = vadd.f32 %v1873, %v2033
        %v2035 = vpop.f32.mrf.mxu0
        %v2036 = vpop.f32.mrf.mxu0
        %v2037 = vadd.f32 %v1876, %v2036
        %v2038 = vpop.f32.mrf.mxu0
        %2039 = vmatprep.mubr.bf16.mxu0 0
        %2040 = vmatmul.mubr.bf16.gmra.mxu0 %v1447
        %v2041 = vpop.f32.mrf.mxu0
        %v2042 = vadd.f32 %v1881, %v2041
        %v2043 = vpop.f32.mrf.mxu0
        %v2044 = vpop.f32.mrf.mxu0
        %v2045 = vadd.f32 %v1884, %v2044
        %v2046 = vpop.f32.mrf.mxu0
        %2047 = vmatprep.mubr.bf16.mxu0 0
        %2048 = vmatmul.mubr.bf16.gmra.mxu0 %v1450
        %v2049 = vpop.f32.mrf.mxu0
        %v2050 = vadd.f32 %v1889, %v2049
        %v2051 = vpop.f32.mrf.mxu0
        %v2052 = vpop.f32.mrf.mxu0
        %v2053 = vadd.f32 %v1892, %v2052
        %v2054 = vpop.f32.mrf.mxu0
        %2055 = vmatprep.mubr.bf16.mxu0 0
        %2056 = vmatmul.mubr.bf16.gmra.mxu0 %v1453
        %v2057 = vpop.f32.mrf.mxu0
        %v2058 = vadd.f32 %v1897, %v2057
        %v2059 = vpop.f32.mrf.mxu0
        %v2060 = vpop.f32.mrf.mxu0
        %v2061 = vadd.f32 %v1900, %v2060
        %v2062 = vpop.f32.mrf.mxu0
        %2063 = vmatprep.mubr.bf16.mxu0 0
        %2064 = vmatmul.mubr.bf16.gmra.mxu0 %v1456
        %v2065 = vpop.f32.mrf.mxu0
        %v2066 = vadd.f32 %v1905, %v2065
        %v2067 = vpop.f32.mrf.mxu0
        %v2068 = vpop.f32.mrf.mxu0
        %v2069 = vadd.f32 %v1908, %v2068
        %v2070 = vpop.f32.mrf.mxu0
        %2071 = vmatprep.mubr.bf16.mxu0 0
        %2072 = vmatmul.mubr.bf16.gmra.mxu0 %v1459
        %v2073 = vpop.f32.mrf.mxu0
        %v2074 = vadd.f32 %v1913, %v2073
        %v2075 = vpop.f32.mrf.mxu0
        %v2076 = vpop.f32.mrf.mxu0
        %v2077 = vadd.f32 %v1916, %v2076
        %v2078 = vpop.f32.mrf.mxu0
        %2079 = vmatprep.mubr.bf16.mxu0 0
        %2080 = vmatmul.mubr.bf16.gmra.mxu0 %v1462
        %v2081 = vpop.f32.mrf.mxu0
        %v2082 = vadd.f32 %v1921, %v2081
        %v2083 = vpop.f32.mrf.mxu0
        %v2084 = vpop.f32.mrf.mxu0
        %v2085 = vadd.f32 %v1924, %v2084
        %v2086 = vpop.f32.mrf.mxu0
        %2087 = vmatprep.mubr.bf16.mxu0 0
        %2088 = vmatmul.mubr.bf16.gmra.mxu0 %v1465
        %v2089 = vpop.f32.mrf.mxu0
        %v2090 = vadd.f32 %v1929, %v2089
        %v2091 = vpop.f32.mrf.mxu0
        %v2092 = vpop.f32.mrf.mxu0
        %v2093 = vadd.f32 %v1932, %v2092
        %v2094 = vpop.f32.mrf.mxu0
        %2095 = vmatprep.mubr.bf16.mxu0 0
        %2096 = vmatmul.mubr.bf16.gmra.mxu0 %v1468
        %v2097 = vpop.f32.mrf.mxu0
        %v2098 = vadd.f32 %v1937, %v2097
        %v2099 = vpop.f32.mrf.mxu0
        %v2100 = vpop.f32.mrf.mxu0
        %v2101 = vadd.f32 %v1940, %v2100
        %v2102 = vpop.f32.mrf.mxu0
        %2103 = vmatprep.mubr.bf16.mxu0 0
        %2104 = vmatmul.mubr.bf16.gmra.mxu0 %v1471
        %v2105 = vpop.f32.mrf.mxu0
        %v2106 = vadd.f32 %v1945, %v2105
        %v2107 = vpop.f32.mrf.mxu0
        %v2108 = vpop.f32.mrf.mxu0
        %v2109 = vadd.f32 %v1948, %v2108
        %v2110 = vpop.f32.mrf.mxu0
        %2111 = vmatprep.mubr.bf16.mxu0 0
        %2112 = vmatmul.mubr.bf16.gmra.mxu0 %v1474
        %v2113 = vpop.f32.mrf.mxu0
        %v2114 = vadd.f32 %v1953, %v2113
        %v2115 = vpop.f32.mrf.mxu0
        %v2116 = vpop.f32.mrf.mxu0
        %v2117 = vadd.f32 %v1956, %v2116
        %v2118 = vpop.f32.mrf.mxu0
        %2119 = vdwg.mxu0
        %v2120 = vmax.f32 %v1994, 0.0
        %v2121 = vmax.f32 %v1997, 0.0
        %v2122 = vmax.f32 %v2002, 0.0
        %v2123 = vmax.f32 %v2005, 0.0
        %v2124 = vmax.f32 %v2010, 0.0
        %v2125 = vmax.f32 %v2013, 0.0
        %v2126 = vmax.f32 %v2018, 0.0
        %v2127 = vmax.f32 %v2021, 0.0
        %v2128 = vmax.f32 %v2026, 0.0
        %v2129 = vmax.f32 %v2029, 0.0
        %v2130 = vmax.f32 %v2034, 0.0
        %v2131 = vmax.f32 %v2037, 0.0
        %v2132 = vmax.f32 %v2042, 0.0
        %v2133 = vmax.f32 %v2045, 0.0
        %v2134 = vmax.f32 %v2050, 0.0
        %v2135 = vmax.f32 %v2053, 0.0
        %v2136 = vmax.f32 %v2058, 0.0
        %v2137 = vmax.f32 %v2061, 0.0
        %v2138 = vmax.f32 %v2066, 0.0
        %v2139 = vmax.f32 %v2069, 0.0
        %v2140 = vmax.f32 %v2074, 0.0
        %v2141 = vmax.f32 %v2077, 0.0
        %v2142 = vmax.f32 %v2082, 0.0
        %v2143 = vmax.f32 %v2085, 0.0
        %v2144 = vmax.f32 %v2090, 0.0
        %v2145 = vmax.f32 %v2093, 0.0
        %v2146 = vmax.f32 %v2098, 0.0
        %v2147 = vmax.f32 %v2101, 0.0
        %v2148 = vmax.f32 %v2106, 0.0
        %v2149 = vmax.f32 %v2109, 0.0
        %v2150 = vmax.f32 %v2114, 0.0
        %v2151 = vmax.f32 %v2117, 0.0
        %v2152 = vpack.c.bf16 %v2121, %v2120
        %v2153 = vpack.c.bf16 %v2123, %v2122
        %v2154 = vpack.c.bf16 %v2125, %v2124
        %v2155 = vpack.c.bf16 %v2127, %v2126
        %v2156 = vpack.c.bf16 %v2129, %v2128
        %v2157 = vpack.c.bf16 %v2131, %v2130
        %v2158 = vpack.c.bf16 %v2133, %v2132
        %v2159 = vpack.c.bf16 %v2135, %v2134
        %v2160 = vpack.c.bf16 %v2137, %v2136
        %v2161 = vpack.c.bf16 %v2139, %v2138
        %v2162 = vpack.c.bf16 %v2141, %v2140
        %v2163 = vpack.c.bf16 %v2143, %v2142
        %v2164 = vpack.c.bf16 %v2145, %v2144
        %v2165 = vpack.c.bf16 %v2147, %v2146
        %v2166 = vpack.c.bf16 %v2149, %v2148
        %v2167 = vpack.c.bf16 %v2151, %v2150
        %v2168 = vld [vmem:[%s3] sm:$0xf]
        %v2169 = vld [vmem:[%s3 + $0x4] sm:$0xf]
        %v2170 = vld [vmem:[%s3 + $0x8] sm:$0xf]
        %v2171 = vld [vmem:[%s3 + $0xc] sm:$0xf]
        %v2172 = vld [vmem:[%s3 + $0x10] sm:$0xf]
        %v2173 = vld [vmem:[%s3 + $0x14] sm:$0xf]
        %v2174 = vld [vmem:[%s3 + $0x18] sm:$0xf]
        %v2175 = vld [vmem:[%s3 + $0x1c] sm:$0xf]
        %v2176 = vld [vmem:[%s3 + $0x20] sm:$0xf]
        %v2177 = vld [vmem:[%s3 + $0x24] sm:$0xf]
        %v2178 = vld [vmem:[%s3 + $0x28] sm:$0xf]
        %v2179 = vld [vmem:[%s3 + $0x2c] sm:$0xf]
        %v2180 = vld [vmem:[%s3 + $0x30] sm:$0xf]
        %v2181 = vld [vmem:[%s3 + $0x34] sm:$0xf]
        %v2182 = vld [vmem:[%s3 + $0x38] sm:$0xf]
        %v2183 = vld [vmem:[%s3 + $0x3c] sm:$0xf]
        %v2184 = vld [vmem:[%s4] sm:$0x1]
        %v2186 = vlaneseq
        %v2187 = vshrl.u32 %v2186, 7
        %v2188 = vsub.s32 0, %v2187
        %v2189 = vrot.slane %v2184, %v2188
        %v2207 = vunpack.c.l.b16 %v2168
        %v2208 = vunpack.c.l.b16 %v2169
        %v2209 = vunpack.c.l.b16 %v2170
        %v2210 = vunpack.c.l.b16 %v2171
        %v2211 = vunpack.c.l.b16 %v2172
        %v2212 = vunpack.c.l.b16 %v2173
        %v2213 = vunpack.c.l.b16 %v2174
        %v2214 = vunpack.c.l.b16 %v2175
        %v2215 = vunpack.c.l.b16 %v2176
        %v2216 = vunpack.c.l.b16 %v2177
        %v2217 = vunpack.c.l.b16 %v2178
        %v2218 = vunpack.c.l.b16 %v2179
        %v2219 = vunpack.c.l.b16 %v2180
        %v2220 = vunpack.c.l.b16 %v2181
        %v2221 = vunpack.c.l.b16 %v2182
        %v2222 = vunpack.c.l.b16 %v2183
        %v2223 = vpack.c.b16 %v2208, %v2207
        %v2224 = vpack.c.b16 %v2210, %v2209
        %v2225 = vpack.c.b16 %v2212, %v2211
        %v2226 = vpack.c.b16 %v2214, %v2213
        %v2227 = vpack.c.b16 %v2216, %v2215
        %v2228 = vpack.c.b16 %v2218, %v2217
        %v2229 = vpack.c.b16 %v2220, %v2219
        %v2230 = vpack.c.b16 %v2222, %v2221
        %2239 = vmatprep.subr.bf16.mxu0 0
        %2240 = vmatpush1.bf16.msra.mxu0 %v2230
        %2241 = vmatprep.subr.bf16.mxu0 0
        %2242 = vmatpush1.bf16.msra.mxu0 %v2229
        %2243 = vmatprep.subr.bf16.mxu0 0
        %2244 = vmatpush1.bf16.msra.mxu0 %v2228
        %2245 = vmatprep.subr.bf16.mxu0 0
        %2246 = vmatpush1.bf16.msra.mxu0 %v2227
        %2247 = vmatprep.subr.bf16.mxu0 0
        %2248 = vmatpush1.bf16.msra.mxu0 %v2226
        %2249 = vmatprep.subr.bf16.mxu0 0
        %2250 = vmatpush1.bf16.msra.mxu0 %v2225
        %2251 = vmatprep.subr.bf16.mxu0 0
        %2252 = vmatpush1.bf16.msra.mxu0 %v2224
        %2253 = vmatprep.subr.bf16.mxu0 0
        %2254 = vmatpush1.bf16.msra.mxu0 %v2223
        %2255 = vmatprep.subr.bf16.mxu0 0
        %2256 = vmatpush2.bf16.msra.mxu0 0
        %2257 = vmatprep.subr.bf16.mxu0 0
        %2258 = vmatpush2.bf16.msra.mxu0 0
        %2259 = vmatprep.subr.bf16.mxu0 0
        %2260 = vmatpush2.bf16.msra.mxu0 0
        %2261 = vmatprep.subr.bf16.mxu0 0
        %2262 = vmatpush2.bf16.msra.mxu0 0
        %2263 = vmatprep.subr.bf16.mxu0 0
        %2264 = vmatpush2.bf16.msra.mxu0 0
        %2265 = vmatprep.subr.bf16.mxu0 0
        %2266 = vmatpush2.bf16.msra.mxu0 0
        %2267 = vmatprep.subr.bf16.mxu0 0
        %2268 = vmatpush2.bf16.msra.mxu0 0
        %2269 = vmatprep.subr.bf16.mxu0 0
        %2270 = vmatpush2.bf16.msra.mxu0 0
        %2271 = vmatprep.mubr.bf16.mxu0 0
        %2272 = vmatmul.mubr.bf16.gmra.mxu0 %v2152
        %v2273 = vpop.f32.mrf.mxu0
        %v2274 = vadd.f32 %v2189, %v2273
        %v2275 = vpop.f32.mrf.mxu0
        %v2276 = vpop.f32.mrf.mxu0
        %v2277 = vadd.f32 %v2189, %v2276
        %v2278 = vpop.f32.mrf.mxu0
        %2279 = vmatprep.mubr.bf16.mxu0 0
        %2280 = vmatmul.mubr.bf16.gmra.mxu0 %v2153
        %v2281 = vpop.f32.mrf.mxu0
        %v2282 = vadd.f32 %v2189, %v2281
        %v2283 = vpop.f32.mrf.mxu0
        %v2284 = vpop.f32.mrf.mxu0
        %v2285 = vadd.f32 %v2189, %v2284
        %v2286 = vpop.f32.mrf.mxu0
        %2287 = vmatprep.mubr.bf16.mxu0 0
        %2288 = vmatmul.mubr.bf16.gmra.mxu0 %v2154
        %v2289 = vpop.f32.mrf.mxu0
        %v2290 = vadd.f32 %v2189, %v2289
        %v2291 = vpop.f32.mrf.mxu0
        %v2292 = vpop.f32.mrf.mxu0
        %v2293 = vadd.f32 %v2189, %v2292
        %v2294 = vpop.f32.mrf.mxu0
        %2295 = vmatprep.mubr.bf16.mxu0 0
        %2296 = vmatmul.mubr.bf16.gmra.mxu0 %v2155
        %v2297 = vpop.f32.mrf.mxu0
        %v2298 = vadd.f32 %v2189, %v2297
        %v2299 = vpop.f32.mrf.mxu0
        %v2300 = vpop.f32.mrf.mxu0
        %v2301 = vadd.f32 %v2189, %v2300
        %v2302 = vpop.f32.mrf.mxu0
        %2303 = vmatprep.mubr.bf16.mxu0 0
        %2304 = vmatmul.mubr.bf16.gmra.mxu0 %v2156
        %v2305 = vpop.f32.mrf.mxu0
        %v2306 = vadd.f32 %v2189, %v2305
        %v2307 = vpop.f32.mrf.mxu0
        %v2308 = vpop.f32.mrf.mxu0
        %v2309 = vadd.f32 %v2189, %v2308
        %v2310 = vpop.f32.mrf.mxu0
        %2311 = vmatprep.mubr.bf16.mxu0 0
        %2312 = vmatmul.mubr.bf16.gmra.mxu0 %v2157
        %v2313 = vpop.f32.mrf.mxu0
        %v2314 = vadd.f32 %v2189, %v2313
        %v2315 = vpop.f32.mrf.mxu0
        %v2316 = vpop.f32.mrf.mxu0
        %v2317 = vadd.f32 %v2189, %v2316
        %v2318 = vpop.f32.mrf.mxu0
        %2319 = vmatprep.mubr.bf16.mxu0 0
        %2320 = vmatmul.mubr.bf16.gmra.mxu0 %v2158
        %v2321 = vpop.f32.mrf.mxu0
        %v2322 = vadd.f32 %v2189, %v2321
        %v2323 = vpop.f32.mrf.mxu0
        %v2324 = vpop.f32.mrf.mxu0
        %v2325 = vadd.f32 %v2189, %v2324
        %v2326 = vpop.f32.mrf.mxu0
        %2327 = vmatprep.mubr.bf16.mxu0 0
        %2328 = vmatmul.mubr.bf16.gmra.mxu0 %v2159
        %v2329 = vpop.f32.mrf.mxu0
        %v2330 = vadd.f32 %v2189, %v2329
        %v2331 = vpop.f32.mrf.mxu0
        %v2332 = vpop.f32.mrf.mxu0
        %v2333 = vadd.f32 %v2189, %v2332
        %v2334 = vpop.f32.mrf.mxu0
        %2335 = vmatprep.mubr.bf16.mxu0 0
        %2336 = vmatmul.mubr.bf16.gmra.mxu0 %v2160
        %v2337 = vpop.f32.mrf.mxu0
        %v2338 = vadd.f32 %v2189, %v2337
        %v2339 = vpop.f32.mrf.mxu0
        %v2340 = vpop.f32.mrf.mxu0
        %v2341 = vadd.f32 %v2189, %v2340
        %v2342 = vpop.f32.mrf.mxu0
        %2343 = vmatprep.mubr.bf16.mxu0 0
        %2344 = vmatmul.mubr.bf16.gmra.mxu0 %v2161
        %v2345 = vpop.f32.mrf.mxu0
        %v2346 = vadd.f32 %v2189, %v2345
        %v2347 = vpop.f32.mrf.mxu0
        %v2348 = vpop.f32.mrf.mxu0
        %v2349 = vadd.f32 %v2189, %v2348
        %v2350 = vpop.f32.mrf.mxu0
        %2351 = vmatprep.mubr.bf16.mxu0 0
        %2352 = vmatmul.mubr.bf16.gmra.mxu0 %v2162
        %v2353 = vpop.f32.mrf.mxu0
        %v2354 = vadd.f32 %v2189, %v2353
        %v2355 = vpop.f32.mrf.mxu0
        %v2356 = vpop.f32.mrf.mxu0
        %v2357 = vadd.f32 %v2189, %v2356
        %v2358 = vpop.f32.mrf.mxu0
        %2359 = vmatprep.mubr.bf16.mxu0 0
        %2360 = vmatmul.mubr.bf16.gmra.mxu0 %v2163
        %v2361 = vpop.f32.mrf.mxu0
        %v2362 = vadd.f32 %v2189, %v2361
        %v2363 = vpop.f32.mrf.mxu0
        %v2364 = vpop.f32.mrf.mxu0
        %v2365 = vadd.f32 %v2189, %v2364
        %v2366 = vpop.f32.mrf.mxu0
        %2367 = vmatprep.mubr.bf16.mxu0 0
        %2368 = vmatmul.mubr.bf16.gmra.mxu0 %v2164
        %v2369 = vpop.f32.mrf.mxu0
        %v2370 = vadd.f32 %v2189, %v2369
        %v2371 = vpop.f32.mrf.mxu0
        %v2372 = vpop.f32.mrf.mxu0
        %v2373 = vadd.f32 %v2189, %v2372
        %v2374 = vpop.f32.mrf.mxu0
        %2375 = vmatprep.mubr.bf16.mxu0 0
        %2376 = vmatmul.mubr.bf16.gmra.mxu0 %v2165
        %v2377 = vpop.f32.mrf.mxu0
        %v2378 = vadd.f32 %v2189, %v2377
        %v2379 = vpop.f32.mrf.mxu0
        %v2380 = vpop.f32.mrf.mxu0
        %v2381 = vadd.f32 %v2189, %v2380
        %v2382 = vpop.f32.mrf.mxu0
        %2383 = vmatprep.mubr.bf16.mxu0 0
        %2384 = vmatmul.mubr.bf16.gmra.mxu0 %v2166
        %v2385 = vpop.f32.mrf.mxu0
        %v2386 = vadd.f32 %v2189, %v2385
        %v2387 = vpop.f32.mrf.mxu0
        %v2388 = vpop.f32.mrf.mxu0
        %v2389 = vadd.f32 %v2189, %v2388
        %v2390 = vpop.f32.mrf.mxu0
        %2391 = vmatprep.mubr.bf16.mxu0 0
        %2392 = vmatmul.mubr.bf16.gmra.mxu0 %v2167
        %v2393 = vpop.f32.mrf.mxu0
        %v2394 = vadd.f32 %v2189, %v2393
        %v2395 = vpop.f32.mrf.mxu0
        %v2396 = vpop.f32.mrf.mxu0
        %v2397 = vadd.f32 %v2189, %v2396
        %v2398 = vpop.f32.mrf.mxu0
        %2399 = vdwg.mxu0
        %v2400 = vmax.f32 %v2274, 0.0
        %v2401 = vmax.f32 %v2277, 0.0
        %v2402 = vmax.f32 %v2282, 0.0
        %v2403 = vmax.f32 %v2285, 0.0
        %v2404 = vmax.f32 %v2290, 0.0
        %v2405 = vmax.f32 %v2293, 0.0
        %v2406 = vmax.f32 %v2298, 0.0
        %v2407 = vmax.f32 %v2301, 0.0
        %v2408 = vmax.f32 %v2306, 0.0
        %v2409 = vmax.f32 %v2309, 0.0
        %v2410 = vmax.f32 %v2314, 0.0
        %v2411 = vmax.f32 %v2317, 0.0
        %v2412 = vmax.f32 %v2322, 0.0
        %v2413 = vmax.f32 %v2325, 0.0
        %v2414 = vmax.f32 %v2330, 0.0
        %v2415 = vmax.f32 %v2333, 0.0
        %v2416 = vmax.f32 %v2338, 0.0
        %v2417 = vmax.f32 %v2341, 0.0
        %v2418 = vmax.f32 %v2346, 0.0
        %v2419 = vmax.f32 %v2349, 0.0
        %v2420 = vmax.f32 %v2354, 0.0
        %v2421 = vmax.f32 %v2357, 0.0
        %v2422 = vmax.f32 %v2362, 0.0
        %v2423 = vmax.f32 %v2365, 0.0
        %v2424 = vmax.f32 %v2370, 0.0
        %v2425 = vmax.f32 %v2373, 0.0
        %v2426 = vmax.f32 %v2378, 0.0
        %v2427 = vmax.f32 %v2381, 0.0
        %v2428 = vmax.f32 %v2386, 0.0
        %v2429 = vmax.f32 %v2389, 0.0
        %v2430 = vmax.f32 %v2394, 0.0
        %v2431 = vmax.f32 %v2397, 0.0
        %v2432 = vpack.c.bf16 %v2401, %v2400
        %v2433 = vpack.c.bf16 %v2403, %v2402
        %v2434 = vpack.c.bf16 %v2405, %v2404
        %v2435 = vpack.c.bf16 %v2407, %v2406
        %v2436 = vpack.c.bf16 %v2409, %v2408
        %v2437 = vpack.c.bf16 %v2411, %v2410
        %v2438 = vpack.c.bf16 %v2413, %v2412
        %v2439 = vpack.c.bf16 %v2415, %v2414
        %v2440 = vpack.c.bf16 %v2417, %v2416
        %v2441 = vpack.c.bf16 %v2419, %v2418
        %v2442 = vpack.c.bf16 %v2421, %v2420
        %v2443 = vpack.c.bf16 %v2423, %v2422
        %v2444 = vpack.c.bf16 %v2425, %v2424
        %v2445 = vpack.c.bf16 %v2427, %v2426
        %v2446 = vpack.c.bf16 %v2429, %v2428
        %v2447 = vpack.c.bf16 %v2431, %v2430
        %v2448 = vld [vmem:[%s5] sm:$0xf]
        %v2449 = vld [vmem:[%s5 + $0x4] sm:$0xf]
        %v2450 = vld [vmem:[%s5 + $0x8] sm:$0xf]
        %v2451 = vld [vmem:[%s5 + $0xc] sm:$0xf]
        %v2452 = vld [vmem:[%s5 + $0x10] sm:$0xf]
        %v2453 = vld [vmem:[%s5 + $0x14] sm:$0xf]
        %v2454 = vld [vmem:[%s5 + $0x18] sm:$0xf]
        %v2455 = vld [vmem:[%s5 + $0x1c] sm:$0xf]
        %v2456 = vld [vmem:[%s6] sm:$0x1]
        %v2458 = vlaneseq
        %v2459 = vshrl.u32 %v2458, 7
        %v2460 = vsub.s32 0, %v2459
        %v2461 = vrot.slane %v2456, %v2460
        %v2471 = vunpack.c.l.b16 %v2448
        %v2472 = vunpack.c.l.b16 %v2449
        %v2473 = vunpack.c.l.b16 %v2450
        %v2474 = vunpack.c.l.b16 %v2451
        %v2475 = vunpack.c.l.b16 %v2452
        %v2476 = vunpack.c.l.b16 %v2453
        %v2477 = vunpack.c.l.b16 %v2454
        %v2478 = vunpack.c.l.b16 %v2455
        %v2479 = vpack.c.b16 %v2472, %v2471
        %v2480 = vpack.c.b16 %v2474, %v2473
        %v2481 = vpack.c.b16 %v2476, %v2475
        %v2482 = vpack.c.b16 %v2478, %v2477
        %vm2487 = vcmask 523264
        %v2489 = vsel %vm2487, %v2432, 0
        %v2492 = vsel %vm2487, %v2433, 0
        %v2495 = vsel %vm2487, %v2434, 0
        %v2498 = vsel %vm2487, %v2435, 0
        %v2501 = vsel %vm2487, %v2436, 0
        %v2504 = vsel %vm2487, %v2437, 0
        %v2507 = vsel %vm2487, %v2438, 0
        %v2510 = vsel %vm2487, %v2439, 0
        %v2513 = vsel %vm2487, %v2440, 0
        %v2516 = vsel %vm2487, %v2441, 0
        %v2519 = vsel %vm2487, %v2442, 0
        %v2522 = vsel %vm2487, %v2443, 0
        %v2525 = vsel %vm2487, %v2444, 0
        %v2528 = vsel %vm2487, %v2445, 0
        %v2531 = vsel %vm2487, %v2446, 0
        %v2534 = vsel %vm2487, %v2447, 0
        %2536 = vmatprep.subr.bf16.mxu0 0
        %2537 = vmatpush1.bf16.msra.mxu0 0
        %2538 = vmatprep.subr.bf16.mxu0 0
        %2539 = vmatpush1.bf16.msra.mxu0 0
        %2540 = vmatprep.subr.bf16.mxu0 0
        %2541 = vmatpush1.bf16.msra.mxu0 0
        %2542 = vmatprep.subr.bf16.mxu0 0
        %2543 = vmatpush1.bf16.msra.mxu0 0
        %2544 = vmatprep.subr.bf16.mxu0 0
        %2545 = vmatpush1.bf16.msra.mxu0 %v2482
        %2546 = vmatprep.subr.bf16.mxu0 0
        %2547 = vmatpush1.bf16.msra.mxu0 %v2481
        %2548 = vmatprep.subr.bf16.mxu0 0
        %2549 = vmatpush1.bf16.msra.mxu0 %v2480
        %2550 = vmatprep.subr.bf16.mxu0 0
        %2551 = vmatpush1.bf16.msra.mxu0 %v2479
        %2552 = vmatprep.subr.bf16.mxu0 0
        %2553 = vmatpush2.bf16.msra.mxu0 0
        %2554 = vmatprep.subr.bf16.mxu0 0
        %2555 = vmatpush2.bf16.msra.mxu0 0
        %2556 = vmatprep.subr.bf16.mxu0 0
        %2557 = vmatpush2.bf16.msra.mxu0 0
        %2558 = vmatprep.subr.bf16.mxu0 0
        %2559 = vmatpush2.bf16.msra.mxu0 0
        %2560 = vmatprep.subr.bf16.mxu0 0
        %2561 = vmatpush2.bf16.msra.mxu0 0
        %2562 = vmatprep.subr.bf16.mxu0 0
        %2563 = vmatpush2.bf16.msra.mxu0 0
        %2564 = vmatprep.subr.bf16.mxu0 0
        %2565 = vmatpush2.bf16.msra.mxu0 0
        %2566 = vmatprep.subr.bf16.mxu0 0
        %2567 = vmatpush2.bf16.msra.mxu0 0
        %2568 = vmatprep.mubr.bf16.mxu0 0
        %2569 = vmatmul.mubr.bf16.gmra.mxu0 %v2489
        %v2570 = vpop.f32.mrf.mxu0
        %v2571 = vadd.f32 %v2461, %v2570
        %v2572 = vpop.f32.mrf.mxu0
        %v2573 = vpop.f32.mrf.mxu0
        %v2574 = vadd.f32 %v2461, %v2573
        %v2575 = vpop.f32.mrf.mxu0
        %2576 = vmatprep.mubr.bf16.mxu0 0
        %2577 = vmatmul.mubr.bf16.gmra.mxu0 %v2492
        %v2578 = vpop.f32.mrf.mxu0
        %v2579 = vadd.f32 %v2461, %v2578
        %v2580 = vpop.f32.mrf.mxu0
        %v2581 = vpop.f32.mrf.mxu0
        %v2582 = vadd.f32 %v2461, %v2581
        %v2583 = vpop.f32.mrf.mxu0
        %2584 = vmatprep.mubr.bf16.mxu0 0
        %2585 = vmatmul.mubr.bf16.gmra.mxu0 %v2495
        %v2586 = vpop.f32.mrf.mxu0
        %v2587 = vadd.f32 %v2461, %v2586
        %v2588 = vpop.f32.mrf.mxu0
        %v2589 = vpop.f32.mrf.mxu0
        %v2590 = vadd.f32 %v2461, %v2589
        %v2591 = vpop.f32.mrf.mxu0
        %2592 = vmatprep.mubr.bf16.mxu0 0
        %2593 = vmatmul.mubr.bf16.gmra.mxu0 %v2498
        %v2594 = vpop.f32.mrf.mxu0
        %v2595 = vadd.f32 %v2461, %v2594
        %v2596 = vpop.f32.mrf.mxu0
        %v2597 = vpop.f32.mrf.mxu0
        %v2598 = vadd.f32 %v2461, %v2597
        %v2599 = vpop.f32.mrf.mxu0
        %2600 = vmatprep.mubr.bf16.mxu0 0
        %2601 = vmatmul.mubr.bf16.gmra.mxu0 %v2501
        %v2602 = vpop.f32.mrf.mxu0
        %v2603 = vadd.f32 %v2461, %v2602
        %v2604 = vpop.f32.mrf.mxu0
        %v2605 = vpop.f32.mrf.mxu0
        %v2606 = vadd.f32 %v2461, %v2605
        %v2607 = vpop.f32.mrf.mxu0
        %2608 = vmatprep.mubr.bf16.mxu0 0
        %2609 = vmatmul.mubr.bf16.gmra.mxu0 %v2504
        %v2610 = vpop.f32.mrf.mxu0
        %v2611 = vadd.f32 %v2461, %v2610
        %v2612 = vpop.f32.mrf.mxu0
        %v2613 = vpop.f32.mrf.mxu0
        %v2614 = vadd.f32 %v2461, %v2613
        %v2615 = vpop.f32.mrf.mxu0
        %2616 = vmatprep.mubr.bf16.mxu0 0
        %2617 = vmatmul.mubr.bf16.gmra.mxu0 %v2507
        %v2618 = vpop.f32.mrf.mxu0
        %v2619 = vadd.f32 %v2461, %v2618
        %v2620 = vpop.f32.mrf.mxu0
        %v2621 = vpop.f32.mrf.mxu0
        %v2622 = vadd.f32 %v2461, %v2621
        %v2623 = vpop.f32.mrf.mxu0
        %2624 = vmatprep.mubr.bf16.mxu0 0
        %2625 = vmatmul.mubr.bf16.gmra.mxu0 %v2510
        %v2626 = vpop.f32.mrf.mxu0
        %v2627 = vadd.f32 %v2461, %v2626
        %v2628 = vpop.f32.mrf.mxu0
        %v2629 = vpop.f32.mrf.mxu0
        %v2630 = vadd.f32 %v2461, %v2629
        %v2631 = vpop.f32.mrf.mxu0
        %2632 = vmatprep.mubr.bf16.mxu0 0
        %2633 = vmatmul.mubr.bf16.gmra.mxu0 %v2513
        %v2634 = vpop.f32.mrf.mxu0
        %v2635 = vadd.f32 %v2461, %v2634
        %v2636 = vpop.f32.mrf.mxu0
        %v2637 = vpop.f32.mrf.mxu0
        %v2638 = vadd.f32 %v2461, %v2637
        %v2639 = vpop.f32.mrf.mxu0
        %2640 = vmatprep.mubr.bf16.mxu0 0
        %2641 = vmatmul.mubr.bf16.gmra.mxu0 %v2516
        %v2642 = vpop.f32.mrf.mxu0
        %v2643 = vadd.f32 %v2461, %v2642
        %v2644 = vpop.f32.mrf.mxu0
        %v2645 = vpop.f32.mrf.mxu0
        %v2646 = vadd.f32 %v2461, %v2645
        %v2647 = vpop.f32.mrf.mxu0
        %2648 = vmatprep.mubr.bf16.mxu0 0
        %2649 = vmatmul.mubr.bf16.gmra.mxu0 %v2519
        %v2650 = vpop.f32.mrf.mxu0
        %v2651 = vadd.f32 %v2461, %v2650
        %v2652 = vpop.f32.mrf.mxu0
        %v2653 = vpop.f32.mrf.mxu0
        %v2654 = vadd.f32 %v2461, %v2653
        %v2655 = vpop.f32.mrf.mxu0
        %2656 = vmatprep.mubr.bf16.mxu0 0
        %2657 = vmatmul.mubr.bf16.gmra.mxu0 %v2522
        %v2658 = vpop.f32.mrf.mxu0
        %v2659 = vadd.f32 %v2461, %v2658
        %v2660 = vpop.f32.mrf.mxu0
        %v2661 = vpop.f32.mrf.mxu0
        %v2662 = vadd.f32 %v2461, %v2661
        %v2663 = vpop.f32.mrf.mxu0
        %2664 = vmatprep.mubr.bf16.mxu0 0
        %2665 = vmatmul.mubr.bf16.gmra.mxu0 %v2525
        %v2666 = vpop.f32.mrf.mxu0
        %v2667 = vadd.f32 %v2461, %v2666
        %v2668 = vpop.f32.mrf.mxu0
        %v2669 = vpop.f32.mrf.mxu0
        %v2670 = vadd.f32 %v2461, %v2669
        %v2671 = vpop.f32.mrf.mxu0
        %2672 = vmatprep.mubr.bf16.mxu0 0
        %2673 = vmatmul.mubr.bf16.gmra.mxu0 %v2528
        %v2674 = vpop.f32.mrf.mxu0
        %v2675 = vadd.f32 %v2461, %v2674
        %v2676 = vpop.f32.mrf.mxu0
        %v2677 = vpop.f32.mrf.mxu0
        %v2678 = vadd.f32 %v2461, %v2677
        %v2679 = vpop.f32.mrf.mxu0
        %2680 = vmatprep.mubr.bf16.mxu0 0
        %2681 = vmatmul.mubr.bf16.gmra.mxu0 %v2531
        %v2682 = vpop.f32.mrf.mxu0
        %v2683 = vadd.f32 %v2461, %v2682
        %v2684 = vpop.f32.mrf.mxu0
        %v2685 = vpop.f32.mrf.mxu0
        %v2686 = vadd.f32 %v2461, %v2685
        %v2687 = vpop.f32.mrf.mxu0
        %2688 = vmatprep.mubr.bf16.mxu0 0
        %2689 = vmatmul.mubr.bf16.gmra.mxu0 %v2534
        %v2690 = vpop.f32.mrf.mxu0
        %v2691 = vadd.f32 %v2461, %v2690
        %v2692 = vpop.f32.mrf.mxu0
        %v2693 = vpop.f32.mrf.mxu0
        %v2694 = vadd.f32 %v2461, %v2693
        %v2695 = vpop.f32.mrf.mxu0
        %2696 = vdwg.mxu0
        %v2697 = vmax.f32 %v2571, 0.0
        %v2698 = vmax.f32 %v2574, 0.0
        %v2699 = vmax.f32 %v2579, 0.0
        %v2700 = vmax.f32 %v2582, 0.0
        %v2701 = vmax.f32 %v2587, 0.0
        %v2702 = vmax.f32 %v2590, 0.0
        %v2703 = vmax.f32 %v2595, 0.0
        %v2704 = vmax.f32 %v2598, 0.0
        %v2705 = vmax.f32 %v2603, 0.0
        %v2706 = vmax.f32 %v2606, 0.0
        %v2707 = vmax.f32 %v2611, 0.0
        %v2708 = vmax.f32 %v2614, 0.0
        %v2709 = vmax.f32 %v2619, 0.0
        %v2710 = vmax.f32 %v2622, 0.0
        %v2711 = vmax.f32 %v2627, 0.0
        %v2712 = vmax.f32 %v2630, 0.0
        %v2713 = vmax.f32 %v2635, 0.0
        %v2714 = vmax.f32 %v2638, 0.0
        %v2715 = vmax.f32 %v2643, 0.0
        %v2716 = vmax.f32 %v2646, 0.0
        %v2717 = vmax.f32 %v2651, 0.0
        %v2718 = vmax.f32 %v2654, 0.0
        %v2719 = vmax.f32 %v2659, 0.0
        %v2720 = vmax.f32 %v2662, 0.0
        %v2721 = vmax.f32 %v2667, 0.0
        %v2722 = vmax.f32 %v2670, 0.0
        %v2723 = vmax.f32 %v2675, 0.0
        %v2724 = vmax.f32 %v2678, 0.0
        %v2725 = vmax.f32 %v2683, 0.0
        %v2726 = vmax.f32 %v2686, 0.0
        %v2727 = vmax.f32 %v2691, 0.0
        %v2728 = vmax.f32 %v2694, 0.0
        %v2729 = vpack.c.bf16 %v2698, %v2697
        %v2730 = vpack.c.bf16 %v2700, %v2699
        %v2731 = vpack.c.bf16 %v2702, %v2701
        %v2732 = vpack.c.bf16 %v2704, %v2703
        %v2733 = vpack.c.bf16 %v2706, %v2705
        %v2734 = vpack.c.bf16 %v2708, %v2707
        %v2735 = vpack.c.bf16 %v2710, %v2709
        %v2736 = vpack.c.bf16 %v2712, %v2711
        %v2737 = vpack.c.bf16 %v2714, %v2713
        %v2738 = vpack.c.bf16 %v2716, %v2715
        %v2739 = vpack.c.bf16 %v2718, %v2717
        %v2740 = vpack.c.bf16 %v2720, %v2719
        %v2741 = vpack.c.bf16 %v2722, %v2721
        %v2742 = vpack.c.bf16 %v2724, %v2723
        %v2743 = vpack.c.bf16 %v2726, %v2725
        %v2744 = vpack.c.bf16 %v2728, %v2727
        %v2745 = vld [vmem:[%s7] sm:$0xf]
        %v2746 = vld [vmem:[%s7 + $0x4] sm:$0xf]
        %v2747 = vld [vmem:[%s7 + $0x8] sm:$0xf]
        %v2748 = vld [vmem:[%s7 + $0xc] sm:$0xf]
        %v2749 = vld [vmem:[%s7 + $0x10] sm:$0x3]
        %v2750 = vld [vmem:[%s8] sm:$0x1]
        %v2752 = vlaneseq
        %v2753 = vshrl.u32 %v2752, 7
        %v2754 = vsub.s32 0, %v2753
        %v2755 = vrot.slane %v2750, %v2754
        %v2762 = vunpack.c.l.b16 %v2745
        %v2763 = vunpack.c.l.b16 %v2746
        %v2764 = vunpack.c.l.b16 %v2747
        %v2765 = vunpack.c.l.b16 %v2748
        %v2766 = vunpack.c.l.b16 %v2749
        %v2767 = vpack.c.b16 %v2763, %v2762
        %v2768 = vpack.c.b16 %v2765, %v2764
        %v2769 = vpack.c.b16 %v2766, %v2766
        %vm2772 = vcmask 293888
        %v2774 = vsel %vm2772, %v2729, 0
        %v2777 = vsel %vm2772, %v2730, 0
        %v2780 = vsel %vm2772, %v2731, 0
        %v2783 = vsel %vm2772, %v2732, 0
        %v2786 = vsel %vm2772, %v2733, 0
        %v2789 = vsel %vm2772, %v2734, 0
        %v2792 = vsel %vm2772, %v2735, 0
        %v2795 = vsel %vm2772, %v2736, 0
        %v2798 = vsel %vm2772, %v2737, 0
        %v2801 = vsel %vm2772, %v2738, 0
        %v2804 = vsel %vm2772, %v2739, 0
        %v2807 = vsel %vm2772, %v2740, 0
        %v2810 = vsel %vm2772, %v2741, 0
        %v2813 = vsel %vm2772, %v2742, 0
        %v2816 = vsel %vm2772, %v2743, 0
        %v2819 = vsel %vm2772, %v2744, 0
        %vm2821 = vcmask 1041408
        %v2823 = vsel %vm2821, %v2769, 0
        %2825 = vmatprep.subr.bf16.mxu0 0
        %2826 = vmatpush1.bf16.msra.mxu0 0
        %2827 = vmatprep.subr.bf16.mxu0 0
        %2828 = vmatpush1.bf16.msra.mxu0 0
        %2829 = vmatprep.subr.bf16.mxu0 0
        %2830 = vmatpush1.bf16.msra.mxu0 0
        %2831 = vmatprep.subr.bf16.mxu0 0
        %2832 = vmatpush1.bf16.msra.mxu0 0
        %2833 = vmatprep.subr.bf16.mxu0 0
        %2834 = vmatpush1.bf16.msra.mxu0 0
        %2835 = vmatprep.subr.bf16.mxu0 0
        %2836 = vmatpush1.bf16.msra.mxu0 %v2823
        %2837 = vmatprep.subr.bf16.mxu0 0
        %2838 = vmatpush1.bf16.msra.mxu0 %v2768
        %2839 = vmatprep.subr.bf16.mxu0 0
        %2840 = vmatpush1.bf16.msra.mxu0 %v2767
        %2841 = vmatprep.subr.bf16.mxu0 0
        %2842 = vmatpush2.bf16.msra.mxu0 0
        %2843 = vmatprep.subr.bf16.mxu0 0
        %2844 = vmatpush2.bf16.msra.mxu0 0
        %2845 = vmatprep.subr.bf16.mxu0 0
        %2846 = vmatpush2.bf16.msra.mxu0 0
        %2847 = vmatprep.subr.bf16.mxu0 0
        %2848 = vmatpush2.bf16.msra.mxu0 0
        %2849 = vmatprep.subr.bf16.mxu0 0
        %2850 = vmatpush2.bf16.msra.mxu0 0
        %2851 = vmatprep.subr.bf16.mxu0 0
        %2852 = vmatpush2.bf16.msra.mxu0 0
        %2853 = vmatprep.subr.bf16.mxu0 0
        %2854 = vmatpush2.bf16.msra.mxu0 0
        %2855 = vmatprep.subr.bf16.mxu0 0
        %2856 = vmatpush2.bf16.msra.mxu0 0
        %2857 = vmatprep.mubr.bf16.mxu0 0
        %2858 = vmatmul.mubr.bf16.gmra.mxu0 %v2774
        %v2859 = vpop.f32.mrf.mxu0
        %v2860 = vadd.f32 %v2755, %v2859
        %v2861 = vpop.f32.mrf.mxu0
        %v2862 = vpop.f32.mrf.mxu0
        %v2863 = vadd.f32 %v2755, %v2862
        %v2864 = vpop.f32.mrf.mxu0
        %2865 = vmatprep.mubr.bf16.mxu0 0
        %2866 = vmatmul.mubr.bf16.gmra.mxu0 %v2777
        %v2867 = vpop.f32.mrf.mxu0
        %v2868 = vadd.f32 %v2755, %v2867
        %v2869 = vpop.f32.mrf.mxu0
        %v2870 = vpop.f32.mrf.mxu0
        %v2871 = vadd.f32 %v2755, %v2870
        %v2872 = vpop.f32.mrf.mxu0
        %2873 = vmatprep.mubr.bf16.mxu0 0
        %2874 = vmatmul.mubr.bf16.gmra.mxu0 %v2780
        %v2875 = vpop.f32.mrf.mxu0
        %v2876 = vadd.f32 %v2755, %v2875
        %v2877 = vpop.f32.mrf.mxu0
        %v2878 = vpop.f32.mrf.mxu0
        %v2879 = vadd.f32 %v2755, %v2878
        %v2880 = vpop.f32.mrf.mxu0
        %2881 = vmatprep.mubr.bf16.mxu0 0
        %2882 = vmatmul.mubr.bf16.gmra.mxu0 %v2783
        %v2883 = vpop.f32.mrf.mxu0
        %v2884 = vadd.f32 %v2755, %v2883
        %v2885 = vpop.f32.mrf.mxu0
        %v2886 = vpop.f32.mrf.mxu0
        %v2887 = vadd.f32 %v2755, %v2886
        %v2888 = vpop.f32.mrf.mxu0
        %2889 = vmatprep.mubr.bf16.mxu0 0
        %2890 = vmatmul.mubr.bf16.gmra.mxu0 %v2786
        %v2891 = vpop.f32.mrf.mxu0
        %v2892 = vadd.f32 %v2755, %v2891
        %v2893 = vpop.f32.mrf.mxu0
        %v2894 = vpop.f32.mrf.mxu0
        %v2895 = vadd.f32 %v2755, %v2894
        %v2896 = vpop.f32.mrf.mxu0
        %2897 = vmatprep.mubr.bf16.mxu0 0
        %2898 = vmatmul.mubr.bf16.gmra.mxu0 %v2789
        %v2899 = vpop.f32.mrf.mxu0
        %v2900 = vadd.f32 %v2755, %v2899
        %v2901 = vpop.f32.mrf.mxu0
        %v2902 = vpop.f32.mrf.mxu0
        %v2903 = vadd.f32 %v2755, %v2902
        %v2904 = vpop.f32.mrf.mxu0
        %2905 = vmatprep.mubr.bf16.mxu0 0
        %2906 = vmatmul.mubr.bf16.gmra.mxu0 %v2792
        %v2907 = vpop.f32.mrf.mxu0
        %v2908 = vadd.f32 %v2755, %v2907
        %v2909 = vpop.f32.mrf.mxu0
        %v2910 = vpop.f32.mrf.mxu0
        %v2911 = vadd.f32 %v2755, %v2910
        %v2912 = vpop.f32.mrf.mxu0
        %2913 = vmatprep.mubr.bf16.mxu0 0
        %2914 = vmatmul.mubr.bf16.gmra.mxu0 %v2795
        %v2915 = vpop.f32.mrf.mxu0
        %v2916 = vadd.f32 %v2755, %v2915
        %v2917 = vpop.f32.mrf.mxu0
        %v2918 = vpop.f32.mrf.mxu0
        %v2919 = vadd.f32 %v2755, %v2918
        %v2920 = vpop.f32.mrf.mxu0
        %2921 = vmatprep.mubr.bf16.mxu0 0
        %2922 = vmatmul.mubr.bf16.gmra.mxu0 %v2798
        %v2923 = vpop.f32.mrf.mxu0
        %v2924 = vadd.f32 %v2755, %v2923
        %v2925 = vpop.f32.mrf.mxu0
        %v2926 = vpop.f32.mrf.mxu0
        %v2927 = vadd.f32 %v2755, %v2926
        %v2928 = vpop.f32.mrf.mxu0
        %2929 = vmatprep.mubr.bf16.mxu0 0
        %2930 = vmatmul.mubr.bf16.gmra.mxu0 %v2801
        %v2931 = vpop.f32.mrf.mxu0
        %v2932 = vadd.f32 %v2755, %v2931
        %v2933 = vpop.f32.mrf.mxu0
        %v2934 = vpop.f32.mrf.mxu0
        %v2935 = vadd.f32 %v2755, %v2934
        %v2936 = vpop.f32.mrf.mxu0
        %2937 = vmatprep.mubr.bf16.mxu0 0
        %2938 = vmatmul.mubr.bf16.gmra.mxu0 %v2804
        %v2939 = vpop.f32.mrf.mxu0
        %v2940 = vadd.f32 %v2755, %v2939
        %v2941 = vpop.f32.mrf.mxu0
        %v2942 = vpop.f32.mrf.mxu0
        %v2943 = vadd.f32 %v2755, %v2942
        %v2944 = vpop.f32.mrf.mxu0
        %2945 = vmatprep.mubr.bf16.mxu0 0
        %2946 = vmatmul.mubr.bf16.gmra.mxu0 %v2807
        %v2947 = vpop.f32.mrf.mxu0
        %v2948 = vadd.f32 %v2755, %v2947
        %v2949 = vpop.f32.mrf.mxu0
        %v2950 = vpop.f32.mrf.mxu0
        %v2951 = vadd.f32 %v2755, %v2950
        %v2952 = vpop.f32.mrf.mxu0
        %2953 = vmatprep.mubr.bf16.mxu0 0
        %2954 = vmatmul.mubr.bf16.gmra.mxu0 %v2810
        %v2955 = vpop.f32.mrf.mxu0
        %v2956 = vadd.f32 %v2755, %v2955
        %v2957 = vpop.f32.mrf.mxu0
        %v2958 = vpop.f32.mrf.mxu0
        %v2959 = vadd.f32 %v2755, %v2958
        %v2960 = vpop.f32.mrf.mxu0
        %2961 = vmatprep.mubr.bf16.mxu0 0
        %2962 = vmatmul.mubr.bf16.gmra.mxu0 %v2813
        %v2963 = vpop.f32.mrf.mxu0
        %v2964 = vadd.f32 %v2755, %v2963
        %v2965 = vpop.f32.mrf.mxu0
        %v2966 = vpop.f32.mrf.mxu0
        %v2967 = vadd.f32 %v2755, %v2966
        %v2968 = vpop.f32.mrf.mxu0
        %2969 = vmatprep.mubr.bf16.mxu0 0
        %2970 = vmatmul.mubr.bf16.gmra.mxu0 %v2816
        %v2971 = vpop.f32.mrf.mxu0
        %v2972 = vadd.f32 %v2755, %v2971
        %v2973 = vpop.f32.mrf.mxu0
        %v2974 = vpop.f32.mrf.mxu0
        %v2975 = vadd.f32 %v2755, %v2974
        %v2976 = vpop.f32.mrf.mxu0
        %2977 = vmatprep.mubr.bf16.mxu0 0
        %2978 = vmatmul.mubr.bf16.gmra.mxu0 %v2819
        %v2979 = vpop.f32.mrf.mxu0
        %v2980 = vadd.f32 %v2755, %v2979
        %v2981 = vpop.f32.mrf.mxu0
        %v2982 = vpop.f32.mrf.mxu0
        %v2983 = vadd.f32 %v2755, %v2982
        %v2984 = vpop.f32.mrf.mxu0
        %2985 = vdwg.mxu0
        %v2986 = vmax.f32 %v2860, 0.0
        %v2987 = vmax.f32 %v2863, 0.0
        %v2988 = vmax.f32 %v2868, 0.0
        %v2989 = vmax.f32 %v2871, 0.0
        %v2990 = vmax.f32 %v2876, 0.0
        %v2991 = vmax.f32 %v2879, 0.0
        %v2992 = vmax.f32 %v2884, 0.0
        %v2993 = vmax.f32 %v2887, 0.0
        %v2994 = vmax.f32 %v2892, 0.0
        %v2995 = vmax.f32 %v2895, 0.0
        %v2996 = vmax.f32 %v2900, 0.0
        %v2997 = vmax.f32 %v2903, 0.0
        %v2998 = vmax.f32 %v2908, 0.0
        %v2999 = vmax.f32 %v2911, 0.0
        %v3000 = vmax.f32 %v2916, 0.0
        %v3001 = vmax.f32 %v2919, 0.0
        %v3002 = vmax.f32 %v2924, 0.0
        %v3003 = vmax.f32 %v2927, 0.0
        %v3004 = vmax.f32 %v2932, 0.0
        %v3005 = vmax.f32 %v2935, 0.0
        %v3006 = vmax.f32 %v2940, 0.0
        %v3007 = vmax.f32 %v2943, 0.0
        %v3008 = vmax.f32 %v2948, 0.0
        %v3009 = vmax.f32 %v2951, 0.0
        %v3010 = vmax.f32 %v2956, 0.0
        %v3011 = vmax.f32 %v2959, 0.0
        %v3012 = vmax.f32 %v2964, 0.0
        %v3013 = vmax.f32 %v2967, 0.0
        %v3014 = vmax.f32 %v2972, 0.0
        %v3015 = vmax.f32 %v2975, 0.0
        %v3016 = vmax.f32 %v2980, 0.0
        %v3017 = vmax.f32 %v2983, 0.0
        %v3018 = vpack.c.bf16 %v2987, %v2986
        %v3019 = vpack.c.bf16 %v2989, %v2988
        %v3020 = vpack.c.bf16 %v2991, %v2990
        %v3021 = vpack.c.bf16 %v2993, %v2992
        %v3022 = vpack.c.bf16 %v2995, %v2994
        %v3023 = vpack.c.bf16 %v2997, %v2996
        %v3024 = vpack.c.bf16 %v2999, %v2998
        %v3025 = vpack.c.bf16 %v3001, %v3000
        %v3026 = vpack.c.bf16 %v3003, %v3002
        %v3027 = vpack.c.bf16 %v3005, %v3004
        %v3028 = vpack.c.bf16 %v3007, %v3006
        %v3029 = vpack.c.bf16 %v3009, %v3008
        %v3030 = vpack.c.bf16 %v3011, %v3010
        %v3031 = vpack.c.bf16 %v3013, %v3012
        %v3032 = vpack.c.bf16 %v3015, %v3014
        %v3033 = vpack.c.bf16 %v3017, %v3016
        %v3034 = vld [vmem:[%s9] sm:$0xf]
        %v3035 = vld [vmem:[%s9 + $0x4] sm:$0xf]
        %v3036 = vld [vmem:[%s9 + $0x8] sm:$0x1]
        %v3037 = vld [vmem:[%s10] sm:$0x1]
        %v3039 = vlaneseq
        %v3040 = vshrl.u32 %v3039, 7
        %v3041 = vsub.s32 0, %v3040
        %v3042 = vrot.slane %v3037, %v3041
        %v3047 = vunpack.c.l.b16 %v3034
        %v3048 = vunpack.c.l.b16 %v3035
        %v3049 = vunpack.c.l.b16 %v3036
        %v3050 = vpack.c.b16 %v3048, %v3047
        %v3051 = vpack.c.b16 %v3049, %v3049
        %vm3053 = vcmask 146432
        %v3055 = vsel %vm3053, %v3018, 0
        %v3058 = vsel %vm3053, %v3019, 0
        %v3061 = vsel %vm3053, %v3020, 0
        %v3064 = vsel %vm3053, %v3021, 0
        %v3067 = vsel %vm3053, %v3022, 0
        %v3070 = vsel %vm3053, %v3023, 0
        %v3073 = vsel %vm3053, %v3024, 0
        %v3076 = vsel %vm3053, %v3025, 0
        %v3079 = vsel %vm3053, %v3026, 0
        %v3082 = vsel %vm3053, %v3027, 0
        %v3085 = vsel %vm3053, %v3028, 0
        %v3088 = vsel %vm3053, %v3029, 0
        %v3091 = vsel %vm3053, %v3030, 0
        %v3094 = vsel %vm3053, %v3031, 0
        %v3097 = vsel %vm3053, %v3032, 0
        %v3100 = vsel %vm3053, %v3033, 0
        %vm3102 = vcmask 1040384
        %v3104 = vsel %vm3102, %v3051, 0
        %3106 = vmatprep.subr.bf16.mxu0 0
        %3107 = vmatpush1.bf16.msra.mxu0 0
        %3108 = vmatprep.subr.bf16.mxu0 0
        %3109 = vmatpush1.bf16.msra.mxu0 0
        %3110 = vmatprep.subr.bf16.mxu0 0
        %3111 = vmatpush1.bf16.msra.mxu0 0
        %3112 = vmatprep.subr.bf16.mxu0 0
        %3113 = vmatpush1.bf16.msra.mxu0 0
        %3114 = vmatprep.subr.bf16.mxu0 0
        %3115 = vmatpush1.bf16.msra.mxu0 0
        %3116 = vmatprep.subr.bf16.mxu0 0
        %3117 = vmatpush1.bf16.msra.mxu0 0
        %3118 = vmatprep.subr.bf16.mxu0 0
        %3119 = vmatpush1.bf16.msra.mxu0 %v3104
        %3120 = vmatprep.subr.bf16.mxu0 0
        %3121 = vmatpush1.bf16.msra.mxu0 %v3050
        %3122 = vmatprep.subr.bf16.mxu0 0
        %3123 = vmatpush2.bf16.msra.mxu0 0
        %3124 = vmatprep.subr.bf16.mxu0 0
        %3125 = vmatpush2.bf16.msra.mxu0 0
        %3126 = vmatprep.subr.bf16.mxu0 0
        %3127 = vmatpush2.bf16.msra.mxu0 0
        %3128 = vmatprep.subr.bf16.mxu0 0
        %3129 = vmatpush2.bf16.msra.mxu0 0
        %3130 = vmatprep.subr.bf16.mxu0 0
        %3131 = vmatpush2.bf16.msra.mxu0 0
        %3132 = vmatprep.subr.bf16.mxu0 0
        %3133 = vmatpush2.bf16.msra.mxu0 0
        %3134 = vmatprep.subr.bf16.mxu0 0
        %3135 = vmatpush2.bf16.msra.mxu0 0
        %3136 = vmatprep.subr.bf16.mxu0 0
        %3137 = vmatpush2.bf16.msra.mxu0 0
        %3138 = vmatprep.mubr.bf16.mxu0 0
        %3139 = vmatmul.mubr.bf16.gmra.mxu0 %v3055
        %v3140 = vpop.f32.mrf.mxu0
        %v3141 = vadd.f32 %v3042, %v3140
        %v3142 = vpop.f32.mrf.mxu0
        %v3143 = vpop.f32.mrf.mxu0
        %v3144 = vadd.f32 %v3042, %v3143
        %v3145 = vpop.f32.mrf.mxu0
        %3146 = vmatprep.mubr.bf16.mxu0 0
        %3147 = vmatmul.mubr.bf16.gmra.mxu0 %v3058
        %v3148 = vpop.f32.mrf.mxu0
        %v3149 = vadd.f32 %v3042, %v3148
        %v3150 = vpop.f32.mrf.mxu0
        %v3151 = vpop.f32.mrf.mxu0
        %v3152 = vadd.f32 %v3042, %v3151
        %v3153 = vpop.f32.mrf.mxu0
        %3154 = vmatprep.mubr.bf16.mxu0 0
        %3155 = vmatmul.mubr.bf16.gmra.mxu0 %v3061
        %v3156 = vpop.f32.mrf.mxu0
        %v3157 = vadd.f32 %v3042, %v3156
        %v3158 = vpop.f32.mrf.mxu0
        %v3159 = vpop.f32.mrf.mxu0
        %v3160 = vadd.f32 %v3042, %v3159
        %v3161 = vpop.f32.mrf.mxu0
        %3162 = vmatprep.mubr.bf16.mxu0 0
        %3163 = vmatmul.mubr.bf16.gmra.mxu0 %v3064
        %v3164 = vpop.f32.mrf.mxu0
        %v3165 = vadd.f32 %v3042, %v3164
        %v3166 = vpop.f32.mrf.mxu0
        %v3167 = vpop.f32.mrf.mxu0
        %v3168 = vadd.f32 %v3042, %v3167
        %v3169 = vpop.f32.mrf.mxu0
        %3170 = vmatprep.mubr.bf16.mxu0 0
        %3171 = vmatmul.mubr.bf16.gmra.mxu0 %v3067
        %v3172 = vpop.f32.mrf.mxu0
        %v3173 = vadd.f32 %v3042, %v3172
        %v3174 = vpop.f32.mrf.mxu0
        %v3175 = vpop.f32.mrf.mxu0
        %v3176 = vadd.f32 %v3042, %v3175
        %v3177 = vpop.f32.mrf.mxu0
        %3178 = vmatprep.mubr.bf16.mxu0 0
        %3179 = vmatmul.mubr.bf16.gmra.mxu0 %v3070
        %v3180 = vpop.f32.mrf.mxu0
        %v3181 = vadd.f32 %v3042, %v3180
        %v3182 = vpop.f32.mrf.mxu0
        %v3183 = vpop.f32.mrf.mxu0
        %v3184 = vadd.f32 %v3042, %v3183
        %v3185 = vpop.f32.mrf.mxu0
        %3186 = vmatprep.mubr.bf16.mxu0 0
        %3187 = vmatmul.mubr.bf16.gmra.mxu0 %v3073
        %v3188 = vpop.f32.mrf.mxu0
        %v3189 = vadd.f32 %v3042, %v3188
        %v3190 = vpop.f32.mrf.mxu0
        %v3191 = vpop.f32.mrf.mxu0
        %v3192 = vadd.f32 %v3042, %v3191
        %v3193 = vpop.f32.mrf.mxu0
        %3194 = vmatprep.mubr.bf16.mxu0 0
        %3195 = vmatmul.mubr.bf16.gmra.mxu0 %v3076
        %v3196 = vpop.f32.mrf.mxu0
        %v3197 = vadd.f32 %v3042, %v3196
        %v3198 = vpop.f32.mrf.mxu0
        %v3199 = vpop.f32.mrf.mxu0
        %v3200 = vadd.f32 %v3042, %v3199
        %v3201 = vpop.f32.mrf.mxu0
        %3202 = vmatprep.mubr.bf16.mxu0 0
        %3203 = vmatmul.mubr.bf16.gmra.mxu0 %v3079
        %v3204 = vpop.f32.mrf.mxu0
        %v3205 = vadd.f32 %v3042, %v3204
        %v3206 = vpop.f32.mrf.mxu0
        %v3207 = vpop.f32.mrf.mxu0
        %v3208 = vadd.f32 %v3042, %v3207
        %v3209 = vpop.f32.mrf.mxu0
        %3210 = vmatprep.mubr.bf16.mxu0 0
        %3211 = vmatmul.mubr.bf16.gmra.mxu0 %v3082
        %v3212 = vpop.f32.mrf.mxu0
        %v3213 = vadd.f32 %v3042, %v3212
        %v3214 = vpop.f32.mrf.mxu0
        %v3215 = vpop.f32.mrf.mxu0
        %v3216 = vadd.f32 %v3042, %v3215
        %v3217 = vpop.f32.mrf.mxu0
        %3218 = vmatprep.mubr.bf16.mxu0 0
        %3219 = vmatmul.mubr.bf16.gmra.mxu0 %v3085
        %v3220 = vpop.f32.mrf.mxu0
        %v3221 = vadd.f32 %v3042, %v3220
        %v3222 = vpop.f32.mrf.mxu0
        %v3223 = vpop.f32.mrf.mxu0
        %v3224 = vadd.f32 %v3042, %v3223
        %v3225 = vpop.f32.mrf.mxu0
        %3226 = vmatprep.mubr.bf16.mxu0 0
        %3227 = vmatmul.mubr.bf16.gmra.mxu0 %v3088
        %v3228 = vpop.f32.mrf.mxu0
        %v3229 = vadd.f32 %v3042, %v3228
        %v3230 = vpop.f32.mrf.mxu0
        %v3231 = vpop.f32.mrf.mxu0
        %v3232 = vadd.f32 %v3042, %v3231
        %v3233 = vpop.f32.mrf.mxu0
        %3234 = vmatprep.mubr.bf16.mxu0 0
        %3235 = vmatmul.mubr.bf16.gmra.mxu0 %v3091
        %v3236 = vpop.f32.mrf.mxu0
        %v3237 = vadd.f32 %v3042, %v3236
        %v3238 = vpop.f32.mrf.mxu0
        %v3239 = vpop.f32.mrf.mxu0
        %v3240 = vadd.f32 %v3042, %v3239
        %v3241 = vpop.f32.mrf.mxu0
        %3242 = vmatprep.mubr.bf16.mxu0 0
        %3243 = vmatmul.mubr.bf16.gmra.mxu0 %v3094
        %v3244 = vpop.f32.mrf.mxu0
        %v3245 = vadd.f32 %v3042, %v3244
        %v3246 = vpop.f32.mrf.mxu0
        %v3247 = vpop.f32.mrf.mxu0
        %v3248 = vadd.f32 %v3042, %v3247
        %v3249 = vpop.f32.mrf.mxu0
        %3250 = vmatprep.mubr.bf16.mxu0 0
        %3251 = vmatmul.mubr.bf16.gmra.mxu0 %v3097
        %v3252 = vpop.f32.mrf.mxu0
        %v3253 = vadd.f32 %v3042, %v3252
        %v3254 = vpop.f32.mrf.mxu0
        %v3255 = vpop.f32.mrf.mxu0
        %v3256 = vadd.f32 %v3042, %v3255
        %v3257 = vpop.f32.mrf.mxu0
        %3258 = vmatprep.mubr.bf16.mxu0 0
        %3259 = vmatmul.mubr.bf16.gmra.mxu0 %v3100
        %v3260 = vpop.f32.mrf.mxu0
        %v3261 = vadd.f32 %v3042, %v3260
        %v3262 = vpop.f32.mrf.mxu0
        %v3263 = vpop.f32.mrf.mxu0
        %v3264 = vadd.f32 %v3042, %v3263
        %v3265 = vpop.f32.mrf.mxu0
        %3266 = vdwg.mxu0
        %v3267 = vmax.f32 %v3141, 0.0
        %v3268 = vmax.f32 %v3144, 0.0
        %v3269 = vmax.f32 %v3149, 0.0
        %v3270 = vmax.f32 %v3152, 0.0
        %v3271 = vmax.f32 %v3157, 0.0
        %v3272 = vmax.f32 %v3160, 0.0
        %v3273 = vmax.f32 %v3165, 0.0
        %v3274 = vmax.f32 %v3168, 0.0
        %v3275 = vmax.f32 %v3173, 0.0
        %v3276 = vmax.f32 %v3176, 0.0
        %v3277 = vmax.f32 %v3181, 0.0
        %v3278 = vmax.f32 %v3184, 0.0
        %v3279 = vmax.f32 %v3189, 0.0
        %v3280 = vmax.f32 %v3192, 0.0
        %v3281 = vmax.f32 %v3197, 0.0
        %v3282 = vmax.f32 %v3200, 0.0
        %v3283 = vmax.f32 %v3205, 0.0
        %v3284 = vmax.f32 %v3208, 0.0
        %v3285 = vmax.f32 %v3213, 0.0
        %v3286 = vmax.f32 %v3216, 0.0
        %v3287 = vmax.f32 %v3221, 0.0
        %v3288 = vmax.f32 %v3224, 0.0
        %v3289 = vmax.f32 %v3229, 0.0
        %v3290 = vmax.f32 %v3232, 0.0
        %v3291 = vmax.f32 %v3237, 0.0
        %v3292 = vmax.f32 %v3240, 0.0
        %v3293 = vmax.f32 %v3245, 0.0
        %v3294 = vmax.f32 %v3248, 0.0
        %v3295 = vmax.f32 %v3253, 0.0
        %v3296 = vmax.f32 %v3256, 0.0
        %v3297 = vmax.f32 %v3261, 0.0
        %v3298 = vmax.f32 %v3264, 0.0
        %v3299 = vpack.c.bf16 %v3268, %v3267
        %v3300 = vpack.c.bf16 %v3270, %v3269
        %v3301 = vpack.c.bf16 %v3272, %v3271
        %v3302 = vpack.c.bf16 %v3274, %v3273
        %v3303 = vpack.c.bf16 %v3276, %v3275
        %v3304 = vpack.c.bf16 %v3278, %v3277
        %v3305 = vpack.c.bf16 %v3280, %v3279
        %v3306 = vpack.c.bf16 %v3282, %v3281
        %v3307 = vpack.c.bf16 %v3284, %v3283
        %v3308 = vpack.c.bf16 %v3286, %v3285
        %v3309 = vpack.c.bf16 %v3288, %v3287
        %v3310 = vpack.c.bf16 %v3290, %v3289
        %v3311 = vpack.c.bf16 %v3292, %v3291
        %v3312 = vpack.c.bf16 %v3294, %v3293
        %v3313 = vpack.c.bf16 %v3296, %v3295
        %v3314 = vpack.c.bf16 %v3298, %v3297
        %v3315 = vld [vmem:[%s11] sm:$0xf]
        %v3316 = vld [vmem:[%s11 + $0x4] sm:$0x1]
        %v3317 = vld [vmem:[%s12] sm:$0x1]
        %v3319 = vlaneseq
        %v3320 = vshrl.u32 %v3319, 7
        %v3321 = vsub.s32 0, %v3320
        %v3322 = vrot.slane %v3317, %v3321
        %v3326 = vunpack.c.l.b16 %v3315
        %v3327 = vunpack.c.l.b16 %v3316
        %v3328 = vpack.c.b16 %v3327, %v3326
        %vm3329 = vcmask 72704
        %v3331 = vsel %vm3329, %v3299, 0
        %v3334 = vsel %vm3329, %v3300, 0
        %v3337 = vsel %vm3329, %v3301, 0
        %v3340 = vsel %vm3329, %v3302, 0
        %v3343 = vsel %vm3329, %v3303, 0
        %v3346 = vsel %vm3329, %v3304, 0
        %v3349 = vsel %vm3329, %v3305, 0
        %v3352 = vsel %vm3329, %v3306, 0
        %v3355 = vsel %vm3329, %v3307, 0
        %v3358 = vsel %vm3329, %v3308, 0
        %v3361 = vsel %vm3329, %v3309, 0
        %v3364 = vsel %vm3329, %v3310, 0
        %v3367 = vsel %vm3329, %v3311, 0
        %v3370 = vsel %vm3329, %v3312, 0
        %v3373 = vsel %vm3329, %v3313, 0
        %v3376 = vsel %vm3329, %v3314, 0
        %vm3378 = vcmask 1043456
        %vm3379 = vcmask 1044480
        %v3380 = vsel %vm3378, 4294967295, 65535
        %v3381 = vsel %vm3379, %v3380, 0
        %v3383 = vand.u32 %v3328, %v3381
        %3385 = vmatprep.subr.bf16.mxu0 0
        %3386 = vmatpush1.bf16.msra.mxu0 0
        %3387 = vmatprep.subr.bf16.mxu0 0
        %3388 = vmatpush1.bf16.msra.mxu0 0
        %3389 = vmatprep.subr.bf16.mxu0 0
        %3390 = vmatpush1.bf16.msra.mxu0 0
        %3391 = vmatprep.subr.bf16.mxu0 0
        %3392 = vmatpush1.bf16.msra.mxu0 0
        %3393 = vmatprep.subr.bf16.mxu0 0
        %3394 = vmatpush1.bf16.msra.mxu0 0
        %3395 = vmatprep.subr.bf16.mxu0 0
        %3396 = vmatpush1.bf16.msra.mxu0 0
        %3397 = vmatprep.subr.bf16.mxu0 0
        %3398 = vmatpush1.bf16.msra.mxu0 0
        %3399 = vmatprep.subr.bf16.mxu0 0
        %3400 = vmatpush1.bf16.msra.mxu0 %v3383
        %3401 = vmatprep.subr.bf16.mxu0 0
        %3402 = vmatpush2.bf16.msra.mxu0 0
        %3403 = vmatprep.subr.bf16.mxu0 0
        %3404 = vmatpush2.bf16.msra.mxu0 0
        %3405 = vmatprep.subr.bf16.mxu0 0
        %3406 = vmatpush2.bf16.msra.mxu0 0
        %3407 = vmatprep.subr.bf16.mxu0 0
        %3408 = vmatpush2.bf16.msra.mxu0 0
        %3409 = vmatprep.subr.bf16.mxu0 0
        %3410 = vmatpush2.bf16.msra.mxu0 0
        %3411 = vmatprep.subr.bf16.mxu0 0
        %3412 = vmatpush2.bf16.msra.mxu0 0
        %3413 = vmatprep.subr.bf16.mxu0 0
        %3414 = vmatpush2.bf16.msra.mxu0 0
        %3415 = vmatprep.subr.bf16.mxu0 0
        %3416 = vmatpush2.bf16.msra.mxu0 0
        %3417 = vmatprep.mubr.bf16.mxu0 0
        %3418 = vmatmul.mubr.bf16.gmra.mxu0 %v3331
        %v3419 = vpop.f32.mrf.mxu0
        %v3420 = vadd.f32 %v3322, %v3419
        %v3421 = vpop.f32.mrf.mxu0
        %v3422 = vpop.f32.mrf.mxu0
        %v3423 = vadd.f32 %v3322, %v3422
        %v3424 = vpop.f32.mrf.mxu0
        %3425 = vmatprep.mubr.bf16.mxu0 0
        %3426 = vmatmul.mubr.bf16.gmra.mxu0 %v3334
        %v3427 = vpop.f32.mrf.mxu0
        %v3428 = vadd.f32 %v3322, %v3427
        %v3429 = vpop.f32.mrf.mxu0
        %v3430 = vpop.f32.mrf.mxu0
        %v3431 = vadd.f32 %v3322, %v3430
        %v3432 = vpop.f32.mrf.mxu0
        %3433 = vmatprep.mubr.bf16.mxu0 0
        %3434 = vmatmul.mubr.bf16.gmra.mxu0 %v3337
        %v3435 = vpop.f32.mrf.mxu0
        %v3436 = vadd.f32 %v3322, %v3435
        %v3437 = vpop.f32.mrf.mxu0
        %v3438 = vpop.f32.mrf.mxu0
        %v3439 = vadd.f32 %v3322, %v3438
        %v3440 = vpop.f32.mrf.mxu0
        %3441 = vmatprep.mubr.bf16.mxu0 0
        %3442 = vmatmul.mubr.bf16.gmra.mxu0 %v3340
        %v3443 = vpop.f32.mrf.mxu0
        %v3444 = vadd.f32 %v3322, %v3443
        %v3445 = vpop.f32.mrf.mxu0
        %v3446 = vpop.f32.mrf.mxu0
        %v3447 = vadd.f32 %v3322, %v3446
        %v3448 = vpop.f32.mrf.mxu0
        %3449 = vmatprep.mubr.bf16.mxu0 0
        %3450 = vmatmul.mubr.bf16.gmra.mxu0 %v3343
        %v3451 = vpop.f32.mrf.mxu0
        %v3452 = vadd.f32 %v3322, %v3451
        %v3453 = vpop.f32.mrf.mxu0
        %v3454 = vpop.f32.mrf.mxu0
        %v3455 = vadd.f32 %v3322, %v3454
        %v3456 = vpop.f32.mrf.mxu0
        %3457 = vmatprep.mubr.bf16.mxu0 0
        %3458 = vmatmul.mubr.bf16.gmra.mxu0 %v3346
        %v3459 = vpop.f32.mrf.mxu0
        %v3460 = vadd.f32 %v3322, %v3459
        %v3461 = vpop.f32.mrf.mxu0
        %v3462 = vpop.f32.mrf.mxu0
        %v3463 = vadd.f32 %v3322, %v3462
        %v3464 = vpop.f32.mrf.mxu0
        %3465 = vmatprep.mubr.bf16.mxu0 0
        %3466 = vmatmul.mubr.bf16.gmra.mxu0 %v3349
        %v3467 = vpop.f32.mrf.mxu0
        %v3468 = vadd.f32 %v3322, %v3467
        %v3469 = vpop.f32.mrf.mxu0
        %v3470 = vpop.f32.mrf.mxu0
        %v3471 = vadd.f32 %v3322, %v3470
        %v3472 = vpop.f32.mrf.mxu0
        %3473 = vmatprep.mubr.bf16.mxu0 0
        %3474 = vmatmul.mubr.bf16.gmra.mxu0 %v3352
        %v3475 = vpop.f32.mrf.mxu0
        %v3476 = vadd.f32 %v3322, %v3475
        %v3477 = vpop.f32.mrf.mxu0
        %v3478 = vpop.f32.mrf.mxu0
        %v3479 = vadd.f32 %v3322, %v3478
        %v3480 = vpop.f32.mrf.mxu0
        %3481 = vmatprep.mubr.bf16.mxu0 0
        %3482 = vmatmul.mubr.bf16.gmra.mxu0 %v3355
        %v3483 = vpop.f32.mrf.mxu0
        %v3484 = vadd.f32 %v3322, %v3483
        %v3485 = vpop.f32.mrf.mxu0
        %v3486 = vpop.f32.mrf.mxu0
        %v3487 = vadd.f32 %v3322, %v3486
        %v3488 = vpop.f32.mrf.mxu0
        %3489 = vmatprep.mubr.bf16.mxu0 0
        %3490 = vmatmul.mubr.bf16.gmra.mxu0 %v3358
        %v3491 = vpop.f32.mrf.mxu0
        %v3492 = vadd.f32 %v3322, %v3491
        %v3493 = vpop.f32.mrf.mxu0
        %v3494 = vpop.f32.mrf.mxu0
        %v3495 = vadd.f32 %v3322, %v3494
        %v3496 = vpop.f32.mrf.mxu0
        %3497 = vmatprep.mubr.bf16.mxu0 0
        %3498 = vmatmul.mubr.bf16.gmra.mxu0 %v3361
        %v3499 = vpop.f32.mrf.mxu0
        %v3500 = vadd.f32 %v3322, %v3499
        %v3501 = vpop.f32.mrf.mxu0
        %v3502 = vpop.f32.mrf.mxu0
        %v3503 = vadd.f32 %v3322, %v3502
        %v3504 = vpop.f32.mrf.mxu0
        %3505 = vmatprep.mubr.bf16.mxu0 0
        %3506 = vmatmul.mubr.bf16.gmra.mxu0 %v3364
        %v3507 = vpop.f32.mrf.mxu0
        %v3508 = vadd.f32 %v3322, %v3507
        %v3509 = vpop.f32.mrf.mxu0
        %v3510 = vpop.f32.mrf.mxu0
        %v3511 = vadd.f32 %v3322, %v3510
        %v3512 = vpop.f32.mrf.mxu0
        %3513 = vmatprep.mubr.bf16.mxu0 0
        %3514 = vmatmul.mubr.bf16.gmra.mxu0 %v3367
        %v3515 = vpop.f32.mrf.mxu0
        %v3516 = vadd.f32 %v3322, %v3515
        %v3517 = vpop.f32.mrf.mxu0
        %v3518 = vpop.f32.mrf.mxu0
        %v3519 = vadd.f32 %v3322, %v3518
        %v3520 = vpop.f32.mrf.mxu0
        %3521 = vmatprep.mubr.bf16.mxu0 0
        %3522 = vmatmul.mubr.bf16.gmra.mxu0 %v3370
        %v3523 = vpop.f32.mrf.mxu0
        %v3524 = vadd.f32 %v3322, %v3523
        %v3525 = vpop.f32.mrf.mxu0
        %v3526 = vpop.f32.mrf.mxu0
        %v3527 = vadd.f32 %v3322, %v3526
        %v3528 = vpop.f32.mrf.mxu0
        %3529 = vmatprep.mubr.bf16.mxu0 0
        %3530 = vmatmul.mubr.bf16.gmra.mxu0 %v3373
        %v3531 = vpop.f32.mrf.mxu0
        %v3532 = vadd.f32 %v3322, %v3531
        %v3533 = vpop.f32.mrf.mxu0
        %v3534 = vpop.f32.mrf.mxu0
        %v3535 = vadd.f32 %v3322, %v3534
        %v3536 = vpop.f32.mrf.mxu0
        %3537 = vmatprep.mubr.bf16.mxu0 0
        %3538 = vmatmul.mubr.bf16.gmra.mxu0 %v3376
        %v3539 = vpop.f32.mrf.mxu0
        %v3540 = vadd.f32 %v3322, %v3539
        %v3541 = vpop.f32.mrf.mxu0
        %v3542 = vpop.f32.mrf.mxu0
        %v3543 = vadd.f32 %v3322, %v3542
        %v3544 = vpop.f32.mrf.mxu0
        %3545 = vdwg.mxu0
        %v3546 = vmax.f32 %v3420, 0.0
        %v3547 = vmax.f32 %v3423, 0.0
        %v3548 = vmax.f32 %v3428, 0.0
        %v3549 = vmax.f32 %v3431, 0.0
        %v3550 = vmax.f32 %v3436, 0.0
        %v3551 = vmax.f32 %v3439, 0.0
        %v3552 = vmax.f32 %v3444, 0.0
        %v3553 = vmax.f32 %v3447, 0.0
        %v3554 = vmax.f32 %v3452, 0.0
        %v3555 = vmax.f32 %v3455, 0.0
        %v3556 = vmax.f32 %v3460, 0.0
        %v3557 = vmax.f32 %v3463, 0.0
        %v3558 = vmax.f32 %v3468, 0.0
        %v3559 = vmax.f32 %v3471, 0.0
        %v3560 = vmax.f32 %v3476, 0.0
        %v3561 = vmax.f32 %v3479, 0.0
        %v3562 = vmax.f32 %v3484, 0.0
        %v3563 = vmax.f32 %v3487, 0.0
        %v3564 = vmax.f32 %v3492, 0.0
        %v3565 = vmax.f32 %v3495, 0.0
        %v3566 = vmax.f32 %v3500, 0.0
        %v3567 = vmax.f32 %v3503, 0.0
        %v3568 = vmax.f32 %v3508, 0.0
        %v3569 = vmax.f32 %v3511, 0.0
        %v3570 = vmax.f32 %v3516, 0.0
        %v3571 = vmax.f32 %v3519, 0.0
        %v3572 = vmax.f32 %v3524, 0.0
        %v3573 = vmax.f32 %v3527, 0.0
        %v3574 = vmax.f32 %v3532, 0.0
        %v3575 = vmax.f32 %v3535, 0.0
        %v3576 = vmax.f32 %v3540, 0.0
        %v3577 = vmax.f32 %v3543, 0.0
        %v3578 = vpack.c.bf16 %v3547, %v3546
        %v3579 = vpack.c.bf16 %v3549, %v3548
        %v3580 = vpack.c.bf16 %v3551, %v3550
        %v3581 = vpack.c.bf16 %v3553, %v3552
        %v3582 = vpack.c.bf16 %v3555, %v3554
        %v3583 = vpack.c.bf16 %v3557, %v3556
        %v3584 = vpack.c.bf16 %v3559, %v3558
        %v3585 = vpack.c.bf16 %v3561, %v3560
        %v3586 = vpack.c.bf16 %v3563, %v3562
        %v3587 = vpack.c.bf16 %v3565, %v3564
        %v3588 = vpack.c.bf16 %v3567, %v3566
        %v3589 = vpack.c.bf16 %v3569, %v3568
        %v3590 = vpack.c.bf16 %v3571, %v3570
        %v3591 = vpack.c.bf16 %v3573, %v3572
        %v3592 = vpack.c.bf16 %v3575, %v3574
        %v3593 = vpack.c.bf16 %v3577, %v3576
        %v3594 = vld [vmem:[%s13] sm:$0xf]
        %v3595 = vld [vmem:[%s13 + $0x4] sm:$0xf]
        %v3596 = vld [vmem:[%s13 + $0x8] sm:$0x1]
        %v3597 = vld [vmem:[%s14] sm:$0x1]
        %v3599 = vlaneseq
        %v3600 = vshrl.u32 %v3599, 7
        %v3601 = vsub.s32 0, %v3600
        %v3602 = vrot.slane %v3597, %v3601
        %v3607 = vunpack.c.l.b16 %v3594
        %v3608 = vunpack.c.l.b16 %v3595
        %v3609 = vunpack.c.l.b16 %v3596
        %v3610 = vpack.c.b16 %v3608, %v3607
        %v3611 = vpack.c.b16 %v3609, %v3609
        %v3614 = vsel %vm3053, %v3578, 0
        %v3617 = vsel %vm3053, %v3579, 0
        %v3620 = vsel %vm3053, %v3580, 0
        %v3623 = vsel %vm3053, %v3581, 0
        %v3626 = vsel %vm3053, %v3582, 0
        %v3629 = vsel %vm3053, %v3583, 0
        %v3632 = vsel %vm3053, %v3584, 0
        %v3635 = vsel %vm3053, %v3585, 0
        %v3638 = vsel %vm3053, %v3586, 0
        %v3641 = vsel %vm3053, %v3587, 0
        %v3644 = vsel %vm3053, %v3588, 0
        %v3647 = vsel %vm3053, %v3589, 0
        %v3650 = vsel %vm3053, %v3590, 0
        %v3653 = vsel %vm3053, %v3591, 0
        %v3656 = vsel %vm3053, %v3592, 0
        %v3659 = vsel %vm3053, %v3593, 0
        %v3662 = vsel %vm3102, %v3611, 0
        %3664 = vmatprep.subr.bf16.mxu0 0
        %3665 = vmatpush1.bf16.msra.mxu0 0
        %3666 = vmatprep.subr.bf16.mxu0 0
        %3667 = vmatpush1.bf16.msra.mxu0 0
        %3668 = vmatprep.subr.bf16.mxu0 0
        %3669 = vmatpush1.bf16.msra.mxu0 0
        %3670 = vmatprep.subr.bf16.mxu0 0
        %3671 = vmatpush1.bf16.msra.mxu0 0
        %3672 = vmatprep.subr.bf16.mxu0 0
        %3673 = vmatpush1.bf16.msra.mxu0 0
        %3674 = vmatprep.subr.bf16.mxu0 0
        %3675 = vmatpush1.bf16.msra.mxu0 0
        %3676 = vmatprep.subr.bf16.mxu0 0
        %3677 = vmatpush1.bf16.msra.mxu0 %v3662
        %3678 = vmatprep.subr.bf16.mxu0 0
        %3679 = vmatpush1.bf16.msra.mxu0 %v3610
        %3680 = vmatprep.subr.bf16.mxu0 0
        %3681 = vmatpush2.bf16.msra.mxu0 0
        %3682 = vmatprep.subr.bf16.mxu0 0
        %3683 = vmatpush2.bf16.msra.mxu0 0
        %3684 = vmatprep.subr.bf16.mxu0 0
        %3685 = vmatpush2.bf16.msra.mxu0 0
        %3686 = vmatprep.subr.bf16.mxu0 0
        %3687 = vmatpush2.bf16.msra.mxu0 0
        %3688 = vmatprep.subr.bf16.mxu0 0
        %3689 = vmatpush2.bf16.msra.mxu0 0
        %3690 = vmatprep.subr.bf16.mxu0 0
        %3691 = vmatpush2.bf16.msra.mxu0 0
        %3692 = vmatprep.subr.bf16.mxu0 0
        %3693 = vmatpush2.bf16.msra.mxu0 0
        %3694 = vmatprep.subr.bf16.mxu0 0
        %3695 = vmatpush2.bf16.msra.mxu0 0
        %3696 = vmatprep.mubr.bf16.mxu0 0
        %3697 = vmatmul.mubr.bf16.gmra.mxu0 %v3614
        %v3698 = vpop.f32.mrf.mxu0
        %v3699 = vadd.f32 %v3602, %v3698
        %v3700 = vpop.f32.mrf.mxu0
        %v3701 = vpop.f32.mrf.mxu0
        %v3702 = vadd.f32 %v3602, %v3701
        %v3703 = vpop.f32.mrf.mxu0
        %3704 = vmatprep.mubr.bf16.mxu0 0
        %3705 = vmatmul.mubr.bf16.gmra.mxu0 %v3617
        %v3706 = vpop.f32.mrf.mxu0
        %v3707 = vadd.f32 %v3602, %v3706
        %v3708 = vpop.f32.mrf.mxu0
        %v3709 = vpop.f32.mrf.mxu0
        %v3710 = vadd.f32 %v3602, %v3709
        %v3711 = vpop.f32.mrf.mxu0
        %3712 = vmatprep.mubr.bf16.mxu0 0
        %3713 = vmatmul.mubr.bf16.gmra.mxu0 %v3620
        %v3714 = vpop.f32.mrf.mxu0
        %v3715 = vadd.f32 %v3602, %v3714
        %v3716 = vpop.f32.mrf.mxu0
        %v3717 = vpop.f32.mrf.mxu0
        %v3718 = vadd.f32 %v3602, %v3717
        %v3719 = vpop.f32.mrf.mxu0
        %3720 = vmatprep.mubr.bf16.mxu0 0
        %3721 = vmatmul.mubr.bf16.gmra.mxu0 %v3623
        %v3722 = vpop.f32.mrf.mxu0
        %v3723 = vadd.f32 %v3602, %v3722
        %v3724 = vpop.f32.mrf.mxu0
        %v3725 = vpop.f32.mrf.mxu0
        %v3726 = vadd.f32 %v3602, %v3725
        %v3727 = vpop.f32.mrf.mxu0
        %3728 = vmatprep.mubr.bf16.mxu0 0
        %3729 = vmatmul.mubr.bf16.gmra.mxu0 %v3626
        %v3730 = vpop.f32.mrf.mxu0
        %v3731 = vadd.f32 %v3602, %v3730
        %v3732 = vpop.f32.mrf.mxu0
        %v3733 = vpop.f32.mrf.mxu0
        %v3734 = vadd.f32 %v3602, %v3733
        %v3735 = vpop.f32.mrf.mxu0
        %3736 = vmatprep.mubr.bf16.mxu0 0
        %3737 = vmatmul.mubr.bf16.gmra.mxu0 %v3629
        %v3738 = vpop.f32.mrf.mxu0
        %v3739 = vadd.f32 %v3602, %v3738
        %v3740 = vpop.f32.mrf.mxu0
        %v3741 = vpop.f32.mrf.mxu0
        %v3742 = vadd.f32 %v3602, %v3741
        %v3743 = vpop.f32.mrf.mxu0
        %3744 = vmatprep.mubr.bf16.mxu0 0
        %3745 = vmatmul.mubr.bf16.gmra.mxu0 %v3632
        %v3746 = vpop.f32.mrf.mxu0
        %v3747 = vadd.f32 %v3602, %v3746
        %v3748 = vpop.f32.mrf.mxu0
        %v3749 = vpop.f32.mrf.mxu0
        %v3750 = vadd.f32 %v3602, %v3749
        %v3751 = vpop.f32.mrf.mxu0
        %3752 = vmatprep.mubr.bf16.mxu0 0
        %3753 = vmatmul.mubr.bf16.gmra.mxu0 %v3635
        %v3754 = vpop.f32.mrf.mxu0
        %v3755 = vadd.f32 %v3602, %v3754
        %v3756 = vpop.f32.mrf.mxu0
        %v3757 = vpop.f32.mrf.mxu0
        %v3758 = vadd.f32 %v3602, %v3757
        %v3759 = vpop.f32.mrf.mxu0
        %3760 = vmatprep.mubr.bf16.mxu0 0
        %3761 = vmatmul.mubr.bf16.gmra.mxu0 %v3638
        %v3762 = vpop.f32.mrf.mxu0
        %v3763 = vadd.f32 %v3602, %v3762
        %v3764 = vpop.f32.mrf.mxu0
        %v3765 = vpop.f32.mrf.mxu0
        %v3766 = vadd.f32 %v3602, %v3765
        %v3767 = vpop.f32.mrf.mxu0
        %3768 = vmatprep.mubr.bf16.mxu0 0
        %3769 = vmatmul.mubr.bf16.gmra.mxu0 %v3641
        %v3770 = vpop.f32.mrf.mxu0
        %v3771 = vadd.f32 %v3602, %v3770
        %v3772 = vpop.f32.mrf.mxu0
        %v3773 = vpop.f32.mrf.mxu0
        %v3774 = vadd.f32 %v3602, %v3773
        %v3775 = vpop.f32.mrf.mxu0
        %3776 = vmatprep.mubr.bf16.mxu0 0
        %3777 = vmatmul.mubr.bf16.gmra.mxu0 %v3644
        %v3778 = vpop.f32.mrf.mxu0
        %v3779 = vadd.f32 %v3602, %v3778
        %v3780 = vpop.f32.mrf.mxu0
        %v3781 = vpop.f32.mrf.mxu0
        %v3782 = vadd.f32 %v3602, %v3781
        %v3783 = vpop.f32.mrf.mxu0
        %3784 = vmatprep.mubr.bf16.mxu0 0
        %3785 = vmatmul.mubr.bf16.gmra.mxu0 %v3647
        %v3786 = vpop.f32.mrf.mxu0
        %v3787 = vadd.f32 %v3602, %v3786
        %v3788 = vpop.f32.mrf.mxu0
        %v3789 = vpop.f32.mrf.mxu0
        %v3790 = vadd.f32 %v3602, %v3789
        %v3791 = vpop.f32.mrf.mxu0
        %3792 = vmatprep.mubr.bf16.mxu0 0
        %3793 = vmatmul.mubr.bf16.gmra.mxu0 %v3650
        %v3794 = vpop.f32.mrf.mxu0
        %v3795 = vadd.f32 %v3602, %v3794
        %v3796 = vpop.f32.mrf.mxu0
        %v3797 = vpop.f32.mrf.mxu0
        %v3798 = vadd.f32 %v3602, %v3797
        %v3799 = vpop.f32.mrf.mxu0
        %3800 = vmatprep.mubr.bf16.mxu0 0
        %3801 = vmatmul.mubr.bf16.gmra.mxu0 %v3653
        %v3802 = vpop.f32.mrf.mxu0
        %v3803 = vadd.f32 %v3602, %v3802
        %v3804 = vpop.f32.mrf.mxu0
        %v3805 = vpop.f32.mrf.mxu0
        %v3806 = vadd.f32 %v3602, %v3805
        %v3807 = vpop.f32.mrf.mxu0
        %3808 = vmatprep.mubr.bf16.mxu0 0
        %3809 = vmatmul.mubr.bf16.gmra.mxu0 %v3656
        %v3810 = vpop.f32.mrf.mxu0
        %v3811 = vadd.f32 %v3602, %v3810
        %v3812 = vpop.f32.mrf.mxu0
        %v3813 = vpop.f32.mrf.mxu0
        %v3814 = vadd.f32 %v3602, %v3813
        %v3815 = vpop.f32.mrf.mxu0
        %3816 = vmatprep.mubr.bf16.mxu0 0
        %3817 = vmatmul.mubr.bf16.gmra.mxu0 %v3659
        %v3818 = vpop.f32.mrf.mxu0
        %v3819 = vadd.f32 %v3602, %v3818
        %v3820 = vpop.f32.mrf.mxu0
        %v3821 = vpop.f32.mrf.mxu0
        %v3822 = vadd.f32 %v3602, %v3821
        %v3823 = vpop.f32.mrf.mxu0
        %3824 = vdwg.mxu0
        %v3825 = vmax.f32 %v3699, 0.0
        %v3826 = vmax.f32 %v3702, 0.0
        %v3827 = vmax.f32 %v3707, 0.0
        %v3828 = vmax.f32 %v3710, 0.0
        %v3829 = vmax.f32 %v3715, 0.0
        %v3830 = vmax.f32 %v3718, 0.0
        %v3831 = vmax.f32 %v3723, 0.0
        %v3832 = vmax.f32 %v3726, 0.0
        %v3833 = vmax.f32 %v3731, 0.0
        %v3834 = vmax.f32 %v3734, 0.0
        %v3835 = vmax.f32 %v3739, 0.0
        %v3836 = vmax.f32 %v3742, 0.0
        %v3837 = vmax.f32 %v3747, 0.0
        %v3838 = vmax.f32 %v3750, 0.0
        %v3839 = vmax.f32 %v3755, 0.0
        %v3840 = vmax.f32 %v3758, 0.0
        %v3841 = vmax.f32 %v3763, 0.0
        %v3842 = vmax.f32 %v3766, 0.0
        %v3843 = vmax.f32 %v3771, 0.0
        %v3844 = vmax.f32 %v3774, 0.0
        %v3845 = vmax.f32 %v3779, 0.0
        %v3846 = vmax.f32 %v3782, 0.0
        %v3847 = vmax.f32 %v3787, 0.0
        %v3848 = vmax.f32 %v3790, 0.0
        %v3849 = vmax.f32 %v3795, 0.0
        %v3850 = vmax.f32 %v3798, 0.0
        %v3851 = vmax.f32 %v3803, 0.0
        %v3852 = vmax.f32 %v3806, 0.0
        %v3853 = vmax.f32 %v3811, 0.0
        %v3854 = vmax.f32 %v3814, 0.0
        %v3855 = vmax.f32 %v3819, 0.0
        %v3856 = vmax.f32 %v3822, 0.0
        %v3857 = vpack.c.bf16 %v3826, %v3825
        %v3858 = vpack.c.bf16 %v3828, %v3827
        %v3859 = vpack.c.bf16 %v3830, %v3829
        %v3860 = vpack.c.bf16 %v3832, %v3831
        %v3861 = vpack.c.bf16 %v3834, %v3833
        %v3862 = vpack.c.bf16 %v3836, %v3835
        %v3863 = vpack.c.bf16 %v3838, %v3837
        %v3864 = vpack.c.bf16 %v3840, %v3839
        %v3865 = vpack.c.bf16 %v3842, %v3841
        %v3866 = vpack.c.bf16 %v3844, %v3843
        %v3867 = vpack.c.bf16 %v3846, %v3845
        %v3868 = vpack.c.bf16 %v3848, %v3847
        %v3869 = vpack.c.bf16 %v3850, %v3849
        %v3870 = vpack.c.bf16 %v3852, %v3851
        %v3871 = vpack.c.bf16 %v3854, %v3853
        %v3872 = vpack.c.bf16 %v3856, %v3855
        %v3873 = vld [vmem:[%s15] sm:$0xf]
        %v3874 = vld [vmem:[%s15 + $0x4] sm:$0xf]
        %v3875 = vld [vmem:[%s15 + $0x8] sm:$0xf]
        %v3876 = vld [vmem:[%s15 + $0xc] sm:$0xf]
        %v3877 = vld [vmem:[%s15 + $0x10] sm:$0x3]
        %v3878 = vld [vmem:[%s16] sm:$0x1]
        %v3880 = vlaneseq
        %v3881 = vshrl.u32 %v3880, 7
        %v3882 = vsub.s32 0, %v3881
        %v3883 = vrot.slane %v3878, %v3882
        %v3890 = vunpack.c.l.b16 %v3873
        %v3891 = vunpack.c.l.b16 %v3874
        %v3892 = vunpack.c.l.b16 %v3875
        %v3893 = vunpack.c.l.b16 %v3876
        %v3894 = vunpack.c.l.b16 %v3877
        %v3895 = vpack.c.b16 %v3891, %v3890
        %v3896 = vpack.c.b16 %v3893, %v3892
        %v3897 = vpack.c.b16 %v3894, %v3894
        %v3901 = vsel %vm2772, %v3857, 0
        %v3904 = vsel %vm2772, %v3858, 0
        %v3907 = vsel %vm2772, %v3859, 0
        %v3910 = vsel %vm2772, %v3860, 0
        %v3913 = vsel %vm2772, %v3861, 0
        %v3916 = vsel %vm2772, %v3862, 0
        %v3919 = vsel %vm2772, %v3863, 0
        %v3922 = vsel %vm2772, %v3864, 0
        %v3925 = vsel %vm2772, %v3865, 0
        %v3928 = vsel %vm2772, %v3866, 0
        %v3931 = vsel %vm2772, %v3867, 0
        %v3934 = vsel %vm2772, %v3868, 0
        %v3937 = vsel %vm2772, %v3869, 0
        %v3940 = vsel %vm2772, %v3870, 0
        %v3943 = vsel %vm2772, %v3871, 0
        %v3946 = vsel %vm2772, %v3872, 0
        %v3949 = vsel %vm2821, %v3897, 0
        %3951 = vmatprep.subr.bf16.mxu0 0
        %3952 = vmatpush1.bf16.msra.mxu0 0
        %3953 = vmatprep.subr.bf16.mxu0 0
        %3954 = vmatpush1.bf16.msra.mxu0 0
        %3955 = vmatprep.subr.bf16.mxu0 0
        %3956 = vmatpush1.bf16.msra.mxu0 0
        %3957 = vmatprep.subr.bf16.mxu0 0
        %3958 = vmatpush1.bf16.msra.mxu0 0
        %3959 = vmatprep.subr.bf16.mxu0 0
        %3960 = vmatpush1.bf16.msra.mxu0 0
        %3961 = vmatprep.subr.bf16.mxu0 0
        %3962 = vmatpush1.bf16.msra.mxu0 %v3949
        %3963 = vmatprep.subr.bf16.mxu0 0
        %3964 = vmatpush1.bf16.msra.mxu0 %v3896
        %3965 = vmatprep.subr.bf16.mxu0 0
        %3966 = vmatpush1.bf16.msra.mxu0 %v3895
        %3967 = vmatprep.subr.bf16.mxu0 0
        %3968 = vmatpush2.bf16.msra.mxu0 0
        %3969 = vmatprep.subr.bf16.mxu0 0
        %3970 = vmatpush2.bf16.msra.mxu0 0
        %3971 = vmatprep.subr.bf16.mxu0 0
        %3972 = vmatpush2.bf16.msra.mxu0 0
        %3973 = vmatprep.subr.bf16.mxu0 0
        %3974 = vmatpush2.bf16.msra.mxu0 0
        %3975 = vmatprep.subr.bf16.mxu0 0
        %3976 = vmatpush2.bf16.msra.mxu0 0
        %3977 = vmatprep.subr.bf16.mxu0 0
        %3978 = vmatpush2.bf16.msra.mxu0 0
        %3979 = vmatprep.subr.bf16.mxu0 0
        %3980 = vmatpush2.bf16.msra.mxu0 0
        %3981 = vmatprep.subr.bf16.mxu0 0
        %3982 = vmatpush2.bf16.msra.mxu0 0
        %3983 = vmatprep.mubr.bf16.mxu0 0
        %3984 = vmatmul.mubr.bf16.gmra.mxu0 %v3901
        %v3985 = vpop.f32.mrf.mxu0
        %v3986 = vadd.f32 %v3883, %v3985
        %v3987 = vpop.f32.mrf.mxu0
        %v3988 = vpop.f32.mrf.mxu0
        %v3989 = vadd.f32 %v3883, %v3988
        %v3990 = vpop.f32.mrf.mxu0
        %3991 = vmatprep.mubr.bf16.mxu0 0
        %3992 = vmatmul.mubr.bf16.gmra.mxu0 %v3904
        %v3993 = vpop.f32.mrf.mxu0
        %v3994 = vadd.f32 %v3883, %v3993
        %v3995 = vpop.f32.mrf.mxu0
        %v3996 = vpop.f32.mrf.mxu0
        %v3997 = vadd.f32 %v3883, %v3996
        %v3998 = vpop.f32.mrf.mxu0
        %3999 = vmatprep.mubr.bf16.mxu0 0
        %4000 = vmatmul.mubr.bf16.gmra.mxu0 %v3907
        %v4001 = vpop.f32.mrf.mxu0
        %v4002 = vadd.f32 %v3883, %v4001
        %v4003 = vpop.f32.mrf.mxu0
        %v4004 = vpop.f32.mrf.mxu0
        %v4005 = vadd.f32 %v3883, %v4004
        %v4006 = vpop.f32.mrf.mxu0
        %4007 = vmatprep.mubr.bf16.mxu0 0
        %4008 = vmatmul.mubr.bf16.gmra.mxu0 %v3910
        %v4009 = vpop.f32.mrf.mxu0
        %v4010 = vadd.f32 %v3883, %v4009
        %v4011 = vpop.f32.mrf.mxu0
        %v4012 = vpop.f32.mrf.mxu0
        %v4013 = vadd.f32 %v3883, %v4012
        %v4014 = vpop.f32.mrf.mxu0
        %4015 = vmatprep.mubr.bf16.mxu0 0
        %4016 = vmatmul.mubr.bf16.gmra.mxu0 %v3913
        %v4017 = vpop.f32.mrf.mxu0
        %v4018 = vadd.f32 %v3883, %v4017
        %v4019 = vpop.f32.mrf.mxu0
        %v4020 = vpop.f32.mrf.mxu0
        %v4021 = vadd.f32 %v3883, %v4020
        %v4022 = vpop.f32.mrf.mxu0
        %4023 = vmatprep.mubr.bf16.mxu0 0
        %4024 = vmatmul.mubr.bf16.gmra.mxu0 %v3916
        %v4025 = vpop.f32.mrf.mxu0
        %v4026 = vadd.f32 %v3883, %v4025
        %v4027 = vpop.f32.mrf.mxu0
        %v4028 = vpop.f32.mrf.mxu0
        %v4029 = vadd.f32 %v3883, %v4028
        %v4030 = vpop.f32.mrf.mxu0
        %4031 = vmatprep.mubr.bf16.mxu0 0
        %4032 = vmatmul.mubr.bf16.gmra.mxu0 %v3919
        %v4033 = vpop.f32.mrf.mxu0
        %v4034 = vadd.f32 %v3883, %v4033
        %v4035 = vpop.f32.mrf.mxu0
        %v4036 = vpop.f32.mrf.mxu0
        %v4037 = vadd.f32 %v3883, %v4036
        %v4038 = vpop.f32.mrf.mxu0
        %4039 = vmatprep.mubr.bf16.mxu0 0
        %4040 = vmatmul.mubr.bf16.gmra.mxu0 %v3922
        %v4041 = vpop.f32.mrf.mxu0
        %v4042 = vadd.f32 %v3883, %v4041
        %v4043 = vpop.f32.mrf.mxu0
        %v4044 = vpop.f32.mrf.mxu0
        %v4045 = vadd.f32 %v3883, %v4044
        %v4046 = vpop.f32.mrf.mxu0
        %4047 = vmatprep.mubr.bf16.mxu0 0
        %4048 = vmatmul.mubr.bf16.gmra.mxu0 %v3925
        %v4049 = vpop.f32.mrf.mxu0
        %v4050 = vadd.f32 %v3883, %v4049
        %v4051 = vpop.f32.mrf.mxu0
        %v4052 = vpop.f32.mrf.mxu0
        %v4053 = vadd.f32 %v3883, %v4052
        %v4054 = vpop.f32.mrf.mxu0
        %4055 = vmatprep.mubr.bf16.mxu0 0
        %4056 = vmatmul.mubr.bf16.gmra.mxu0 %v3928
        %v4057 = vpop.f32.mrf.mxu0
        %v4058 = vadd.f32 %v3883, %v4057
        %v4059 = vpop.f32.mrf.mxu0
        %v4060 = vpop.f32.mrf.mxu0
        %v4061 = vadd.f32 %v3883, %v4060
        %v4062 = vpop.f32.mrf.mxu0
        %4063 = vmatprep.mubr.bf16.mxu0 0
        %4064 = vmatmul.mubr.bf16.gmra.mxu0 %v3931
        %v4065 = vpop.f32.mrf.mxu0
        %v4066 = vadd.f32 %v3883, %v4065
        %v4067 = vpop.f32.mrf.mxu0
        %v4068 = vpop.f32.mrf.mxu0
        %v4069 = vadd.f32 %v3883, %v4068
        %v4070 = vpop.f32.mrf.mxu0
        %4071 = vmatprep.mubr.bf16.mxu0 0
        %4072 = vmatmul.mubr.bf16.gmra.mxu0 %v3934
        %v4073 = vpop.f32.mrf.mxu0
        %v4074 = vadd.f32 %v3883, %v4073
        %v4075 = vpop.f32.mrf.mxu0
        %v4076 = vpop.f32.mrf.mxu0
        %v4077 = vadd.f32 %v3883, %v4076
        %v4078 = vpop.f32.mrf.mxu0
        %4079 = vmatprep.mubr.bf16.mxu0 0
        %4080 = vmatmul.mubr.bf16.gmra.mxu0 %v3937
        %v4081 = vpop.f32.mrf.mxu0
        %v4082 = vadd.f32 %v3883, %v4081
        %v4083 = vpop.f32.mrf.mxu0
        %v4084 = vpop.f32.mrf.mxu0
        %v4085 = vadd.f32 %v3883, %v4084
        %v4086 = vpop.f32.mrf.mxu0
        %4087 = vmatprep.mubr.bf16.mxu0 0
        %4088 = vmatmul.mubr.bf16.gmra.mxu0 %v3940
        %v4089 = vpop.f32.mrf.mxu0
        %v4090 = vadd.f32 %v3883, %v4089
        %v4091 = vpop.f32.mrf.mxu0
        %v4092 = vpop.f32.mrf.mxu0
        %v4093 = vadd.f32 %v3883, %v4092
        %v4094 = vpop.f32.mrf.mxu0
        %4095 = vmatprep.mubr.bf16.mxu0 0
        %4096 = vmatmul.mubr.bf16.gmra.mxu0 %v3943
        %v4097 = vpop.f32.mrf.mxu0
        %v4098 = vadd.f32 %v3883, %v4097
        %v4099 = vpop.f32.mrf.mxu0
        %v4100 = vpop.f32.mrf.mxu0
        %v4101 = vadd.f32 %v3883, %v4100
        %v4102 = vpop.f32.mrf.mxu0
        %4103 = vmatprep.mubr.bf16.mxu0 0
        %4104 = vmatmul.mubr.bf16.gmra.mxu0 %v3946
        %v4105 = vpop.f32.mrf.mxu0
        %v4106 = vadd.f32 %v3883, %v4105
        %v4107 = vpop.f32.mrf.mxu0
        %v4108 = vpop.f32.mrf.mxu0
        %v4109 = vadd.f32 %v3883, %v4108
        %v4110 = vpop.f32.mrf.mxu0
        %4111 = vdwg.mxu0
        %v4112 = vmax.f32 %v3986, 0.0
        %v4113 = vmax.f32 %v3989, 0.0
        %v4114 = vmax.f32 %v3994, 0.0
        %v4115 = vmax.f32 %v3997, 0.0
        %v4116 = vmax.f32 %v4002, 0.0
        %v4117 = vmax.f32 %v4005, 0.0
        %v4118 = vmax.f32 %v4010, 0.0
        %v4119 = vmax.f32 %v4013, 0.0
        %v4120 = vmax.f32 %v4018, 0.0
        %v4121 = vmax.f32 %v4021, 0.0
        %v4122 = vmax.f32 %v4026, 0.0
        %v4123 = vmax.f32 %v4029, 0.0
        %v4124 = vmax.f32 %v4034, 0.0
        %v4125 = vmax.f32 %v4037, 0.0
        %v4126 = vmax.f32 %v4042, 0.0
        %v4127 = vmax.f32 %v4045, 0.0
        %v4128 = vmax.f32 %v4050, 0.0
        %v4129 = vmax.f32 %v4053, 0.0
        %v4130 = vmax.f32 %v4058, 0.0
        %v4131 = vmax.f32 %v4061, 0.0
        %v4132 = vmax.f32 %v4066, 0.0
        %v4133 = vmax.f32 %v4069, 0.0
        %v4134 = vmax.f32 %v4074, 0.0
        %v4135 = vmax.f32 %v4077, 0.0
        %v4136 = vmax.f32 %v4082, 0.0
        %v4137 = vmax.f32 %v4085, 0.0
        %v4138 = vmax.f32 %v4090, 0.0
        %v4139 = vmax.f32 %v4093, 0.0
        %v4140 = vmax.f32 %v4098, 0.0
        %v4141 = vmax.f32 %v4101, 0.0
        %v4142 = vmax.f32 %v4106, 0.0
        %v4143 = vmax.f32 %v4109, 0.0
        %v4144 = vpack.c.bf16 %v4113, %v4112
        %v4145 = vpack.c.bf16 %v4115, %v4114
        %v4146 = vpack.c.bf16 %v4117, %v4116
        %v4147 = vpack.c.bf16 %v4119, %v4118
        %v4148 = vpack.c.bf16 %v4121, %v4120
        %v4149 = vpack.c.bf16 %v4123, %v4122
        %v4150 = vpack.c.bf16 %v4125, %v4124
        %v4151 = vpack.c.bf16 %v4127, %v4126
        %v4152 = vpack.c.bf16 %v4129, %v4128
        %v4153 = vpack.c.bf16 %v4131, %v4130
        %v4154 = vpack.c.bf16 %v4133, %v4132
        %v4155 = vpack.c.bf16 %v4135, %v4134
        %v4156 = vpack.c.bf16 %v4137, %v4136
        %v4157 = vpack.c.bf16 %v4139, %v4138
        %v4158 = vpack.c.bf16 %v4141, %v4140
        %v4159 = vpack.c.bf16 %v4143, %v4142
        %v4160 = vld [vmem:[%s17] sm:$0xf]
        %v4161 = vld [vmem:[%s17 + $0x4] sm:$0xf]
        %v4162 = vld [vmem:[%s17 + $0x8] sm:$0xf]
        %v4163 = vld [vmem:[%s17 + $0xc] sm:$0xf]
        %v4164 = vld [vmem:[%s17 + $0x10] sm:$0xf]
        %v4165 = vld [vmem:[%s17 + $0x14] sm:$0xf]
        %v4166 = vld [vmem:[%s17 + $0x18] sm:$0xf]
        %v4167 = vld [vmem:[%s17 + $0x1c] sm:$0xf]
        %v4168 = vld [vmem:[%s18] sm:$0x1]
        %v4170 = vlaneseq
        %v4171 = vshrl.u32 %v4170, 7
        %v4172 = vsub.s32 0, %v4171
        %v4173 = vrot.slane %v4168, %v4172
        %v4183 = vunpack.c.l.b16 %v4160
        %v4184 = vunpack.c.l.b16 %v4161
        %v4185 = vunpack.c.l.b16 %v4162
        %v4186 = vunpack.c.l.b16 %v4163
        %v4187 = vunpack.c.l.b16 %v4164
        %v4188 = vunpack.c.l.b16 %v4165
        %v4189 = vunpack.c.l.b16 %v4166
        %v4190 = vunpack.c.l.b16 %v4167
        %v4191 = vpack.c.b16 %v4184, %v4183
        %v4192 = vpack.c.b16 %v4186, %v4185
        %v4193 = vpack.c.b16 %v4188, %v4187
        %v4194 = vpack.c.b16 %v4190, %v4189
        %v4200 = vsel %vm2487, %v4144, 0
        %v4203 = vsel %vm2487, %v4145, 0
        %v4206 = vsel %vm2487, %v4146, 0
        %v4209 = vsel %vm2487, %v4147, 0
        %v4212 = vsel %vm2487, %v4148, 0
        %v4215 = vsel %vm2487, %v4149, 0
        %v4218 = vsel %vm2487, %v4150, 0
        %v4221 = vsel %vm2487, %v4151, 0
        %v4224 = vsel %vm2487, %v4152, 0
        %v4227 = vsel %vm2487, %v4153, 0
        %v4230 = vsel %vm2487, %v4154, 0
        %v4233 = vsel %vm2487, %v4155, 0
        %v4236 = vsel %vm2487, %v4156, 0
        %v4239 = vsel %vm2487, %v4157, 0
        %v4242 = vsel %vm2487, %v4158, 0
        %v4245 = vsel %vm2487, %v4159, 0
        %4247 = vmatprep.subr.bf16.mxu0 0
        %4248 = vmatpush1.bf16.msra.mxu0 0
        %4249 = vmatprep.subr.bf16.mxu0 0
        %4250 = vmatpush1.bf16.msra.mxu0 0
        %4251 = vmatprep.subr.bf16.mxu0 0
        %4252 = vmatpush1.bf16.msra.mxu0 0
        %4253 = vmatprep.subr.bf16.mxu0 0
        %4254 = vmatpush1.bf16.msra.mxu0 0
        %4255 = vmatprep.subr.bf16.mxu0 0
        %4256 = vmatpush1.bf16.msra.mxu0 %v4194
        %4257 = vmatprep.subr.bf16.mxu0 0
        %4258 = vmatpush1.bf16.msra.mxu0 %v4193
        %4259 = vmatprep.subr.bf16.mxu0 0
        %4260 = vmatpush1.bf16.msra.mxu0 %v4192
        %4261 = vmatprep.subr.bf16.mxu0 0
        %4262 = vmatpush1.bf16.msra.mxu0 %v4191
        %4263 = vmatprep.subr.bf16.mxu0 0
        %4264 = vmatpush2.bf16.msra.mxu0 0
        %4265 = vmatprep.subr.bf16.mxu0 0
        %4266 = vmatpush2.bf16.msra.mxu0 0
        %4267 = vmatprep.subr.bf16.mxu0 0
        %4268 = vmatpush2.bf16.msra.mxu0 0
        %4269 = vmatprep.subr.bf16.mxu0 0
        %4270 = vmatpush2.bf16.msra.mxu0 0
        %4271 = vmatprep.subr.bf16.mxu0 0
        %4272 = vmatpush2.bf16.msra.mxu0 0
        %4273 = vmatprep.subr.bf16.mxu0 0
        %4274 = vmatpush2.bf16.msra.mxu0 0
        %4275 = vmatprep.subr.bf16.mxu0 0
        %4276 = vmatpush2.bf16.msra.mxu0 0
        %4277 = vmatprep.subr.bf16.mxu0 0
        %4278 = vmatpush2.bf16.msra.mxu0 0
        %4279 = vmatprep.mubr.bf16.mxu0 0
        %4280 = vmatmul.mubr.bf16.gmra.mxu0 %v4200
        %v4281 = vpop.f32.mrf.mxu0
        %v4282 = vadd.f32 %v4173, %v4281
        %v4283 = vpop.f32.mrf.mxu0
        %v4284 = vpop.f32.mrf.mxu0
        %v4285 = vadd.f32 %v4173, %v4284
        %v4286 = vpop.f32.mrf.mxu0
        %4287 = vmatprep.mubr.bf16.mxu0 0
        %4288 = vmatmul.mubr.bf16.gmra.mxu0 %v4203
        %v4289 = vpop.f32.mrf.mxu0
        %v4290 = vadd.f32 %v4173, %v4289
        %v4291 = vpop.f32.mrf.mxu0
        %v4292 = vpop.f32.mrf.mxu0
        %v4293 = vadd.f32 %v4173, %v4292
        %v4294 = vpop.f32.mrf.mxu0
        %4295 = vmatprep.mubr.bf16.mxu0 0
        %4296 = vmatmul.mubr.bf16.gmra.mxu0 %v4206
        %v4297 = vpop.f32.mrf.mxu0
        %v4298 = vadd.f32 %v4173, %v4297
        %v4299 = vpop.f32.mrf.mxu0
        %v4300 = vpop.f32.mrf.mxu0
        %v4301 = vadd.f32 %v4173, %v4300
        %v4302 = vpop.f32.mrf.mxu0
        %4303 = vmatprep.mubr.bf16.mxu0 0
        %4304 = vmatmul.mubr.bf16.gmra.mxu0 %v4209
        %v4305 = vpop.f32.mrf.mxu0
        %v4306 = vadd.f32 %v4173, %v4305
        %v4307 = vpop.f32.mrf.mxu0
        %v4308 = vpop.f32.mrf.mxu0
        %v4309 = vadd.f32 %v4173, %v4308
        %v4310 = vpop.f32.mrf.mxu0
        %4311 = vmatprep.mubr.bf16.mxu0 0
        %4312 = vmatmul.mubr.bf16.gmra.mxu0 %v4212
        %v4313 = vpop.f32.mrf.mxu0
        %v4314 = vadd.f32 %v4173, %v4313
        %v4315 = vpop.f32.mrf.mxu0
        %v4316 = vpop.f32.mrf.mxu0
        %v4317 = vadd.f32 %v4173, %v4316
        %v4318 = vpop.f32.mrf.mxu0
        %4319 = vmatprep.mubr.bf16.mxu0 0
        %4320 = vmatmul.mubr.bf16.gmra.mxu0 %v4215
        %v4321 = vpop.f32.mrf.mxu0
        %v4322 = vadd.f32 %v4173, %v4321
        %v4323 = vpop.f32.mrf.mxu0
        %v4324 = vpop.f32.mrf.mxu0
        %v4325 = vadd.f32 %v4173, %v4324
        %v4326 = vpop.f32.mrf.mxu0
        %4327 = vmatprep.mubr.bf16.mxu0 0
        %4328 = vmatmul.mubr.bf16.gmra.mxu0 %v4218
        %v4329 = vpop.f32.mrf.mxu0
        %v4330 = vadd.f32 %v4173, %v4329
        %v4331 = vpop.f32.mrf.mxu0
        %v4332 = vpop.f32.mrf.mxu0
        %v4333 = vadd.f32 %v4173, %v4332
        %v4334 = vpop.f32.mrf.mxu0
        %4335 = vmatprep.mubr.bf16.mxu0 0
        %4336 = vmatmul.mubr.bf16.gmra.mxu0 %v4221
        %v4337 = vpop.f32.mrf.mxu0
        %v4338 = vadd.f32 %v4173, %v4337
        %v4339 = vpop.f32.mrf.mxu0
        %v4340 = vpop.f32.mrf.mxu0
        %v4341 = vadd.f32 %v4173, %v4340
        %v4342 = vpop.f32.mrf.mxu0
        %4343 = vmatprep.mubr.bf16.mxu0 0
        %4344 = vmatmul.mubr.bf16.gmra.mxu0 %v4224
        %v4345 = vpop.f32.mrf.mxu0
        %v4346 = vadd.f32 %v4173, %v4345
        %v4347 = vpop.f32.mrf.mxu0
        %v4348 = vpop.f32.mrf.mxu0
        %v4349 = vadd.f32 %v4173, %v4348
        %v4350 = vpop.f32.mrf.mxu0
        %4351 = vmatprep.mubr.bf16.mxu0 0
        %4352 = vmatmul.mubr.bf16.gmra.mxu0 %v4227
        %v4353 = vpop.f32.mrf.mxu0
        %v4354 = vadd.f32 %v4173, %v4353
        %v4355 = vpop.f32.mrf.mxu0
        %v4356 = vpop.f32.mrf.mxu0
        %v4357 = vadd.f32 %v4173, %v4356
        %v4358 = vpop.f32.mrf.mxu0
        %4359 = vmatprep.mubr.bf16.mxu0 0
        %4360 = vmatmul.mubr.bf16.gmra.mxu0 %v4230
        %v4361 = vpop.f32.mrf.mxu0
        %v4362 = vadd.f32 %v4173, %v4361
        %v4363 = vpop.f32.mrf.mxu0
        %v4364 = vpop.f32.mrf.mxu0
        %v4365 = vadd.f32 %v4173, %v4364
        %v4366 = vpop.f32.mrf.mxu0
        %4367 = vmatprep.mubr.bf16.mxu0 0
        %4368 = vmatmul.mubr.bf16.gmra.mxu0 %v4233
        %v4369 = vpop.f32.mrf.mxu0
        %v4370 = vadd.f32 %v4173, %v4369
        %v4371 = vpop.f32.mrf.mxu0
        %v4372 = vpop.f32.mrf.mxu0
        %v4373 = vadd.f32 %v4173, %v4372
        %v4374 = vpop.f32.mrf.mxu0
        %4375 = vmatprep.mubr.bf16.mxu0 0
        %4376 = vmatmul.mubr.bf16.gmra.mxu0 %v4236
        %v4377 = vpop.f32.mrf.mxu0
        %v4378 = vadd.f32 %v4173, %v4377
        %v4379 = vpop.f32.mrf.mxu0
        %v4380 = vpop.f32.mrf.mxu0
        %v4381 = vadd.f32 %v4173, %v4380
        %v4382 = vpop.f32.mrf.mxu0
        %4383 = vmatprep.mubr.bf16.mxu0 0
        %4384 = vmatmul.mubr.bf16.gmra.mxu0 %v4239
        %v4385 = vpop.f32.mrf.mxu0
        %v4386 = vadd.f32 %v4173, %v4385
        %v4387 = vpop.f32.mrf.mxu0
        %v4388 = vpop.f32.mrf.mxu0
        %v4389 = vadd.f32 %v4173, %v4388
        %v4390 = vpop.f32.mrf.mxu0
        %4391 = vmatprep.mubr.bf16.mxu0 0
        %4392 = vmatmul.mubr.bf16.gmra.mxu0 %v4242
        %v4393 = vpop.f32.mrf.mxu0
        %v4394 = vadd.f32 %v4173, %v4393
        %v4395 = vpop.f32.mrf.mxu0
        %v4396 = vpop.f32.mrf.mxu0
        %v4397 = vadd.f32 %v4173, %v4396
        %v4398 = vpop.f32.mrf.mxu0
        %4399 = vmatprep.mubr.bf16.mxu0 0
        %4400 = vmatmul.mubr.bf16.gmra.mxu0 %v4245
        %v4401 = vpop.f32.mrf.mxu0
        %v4402 = vadd.f32 %v4173, %v4401
        %v4403 = vpop.f32.mrf.mxu0
        %v4404 = vpop.f32.mrf.mxu0
        %v4405 = vadd.f32 %v4173, %v4404
        %v4406 = vpop.f32.mrf.mxu0
        %4407 = vdwg.mxu0
        %v4408 = vmax.f32 %v4282, 0.0
        %v4409 = vmax.f32 %v4285, 0.0
        %v4410 = vmax.f32 %v4290, 0.0
        %v4411 = vmax.f32 %v4293, 0.0
        %v4412 = vmax.f32 %v4298, 0.0
        %v4413 = vmax.f32 %v4301, 0.0
        %v4414 = vmax.f32 %v4306, 0.0
        %v4415 = vmax.f32 %v4309, 0.0
        %v4416 = vmax.f32 %v4314, 0.0
        %v4417 = vmax.f32 %v4317, 0.0
        %v4418 = vmax.f32 %v4322, 0.0
        %v4419 = vmax.f32 %v4325, 0.0
        %v4420 = vmax.f32 %v4330, 0.0
        %v4421 = vmax.f32 %v4333, 0.0
        %v4422 = vmax.f32 %v4338, 0.0
        %v4423 = vmax.f32 %v4341, 0.0
        %v4424 = vmax.f32 %v4346, 0.0
        %v4425 = vmax.f32 %v4349, 0.0
        %v4426 = vmax.f32 %v4354, 0.0
        %v4427 = vmax.f32 %v4357, 0.0
        %v4428 = vmax.f32 %v4362, 0.0
        %v4429 = vmax.f32 %v4365, 0.0
        %v4430 = vmax.f32 %v4370, 0.0
        %v4431 = vmax.f32 %v4373, 0.0
        %v4432 = vmax.f32 %v4378, 0.0
        %v4433 = vmax.f32 %v4381, 0.0
        %v4434 = vmax.f32 %v4386, 0.0
        %v4435 = vmax.f32 %v4389, 0.0
        %v4436 = vmax.f32 %v4394, 0.0
        %v4437 = vmax.f32 %v4397, 0.0
        %v4438 = vmax.f32 %v4402, 0.0
        %v4439 = vmax.f32 %v4405, 0.0
        %v4440 = vpack.c.bf16 %v4409, %v4408
        %v4441 = vpack.c.bf16 %v4411, %v4410
        %v4442 = vpack.c.bf16 %v4413, %v4412
        %v4443 = vpack.c.bf16 %v4415, %v4414
        %v4444 = vpack.c.bf16 %v4417, %v4416
        %v4445 = vpack.c.bf16 %v4419, %v4418
        %v4446 = vpack.c.bf16 %v4421, %v4420
        %v4447 = vpack.c.bf16 %v4423, %v4422
        %v4448 = vpack.c.bf16 %v4425, %v4424
        %v4449 = vpack.c.bf16 %v4427, %v4426
        %v4450 = vpack.c.bf16 %v4429, %v4428
        %v4451 = vpack.c.bf16 %v4431, %v4430
        %v4452 = vpack.c.bf16 %v4433, %v4432
        %v4453 = vpack.c.bf16 %v4435, %v4434
        %v4454 = vpack.c.bf16 %v4437, %v4436
        %v4455 = vpack.c.bf16 %v4439, %v4438
        %v4456 = vld [vmem:[%s19] sm:$0xff]
        %v4457 = vld [vmem:[%s19 + $0x8] sm:$0xff]
        %v4458 = vld [vmem:[%s19 + $0x10] sm:$0xff]
        %v4459 = vld [vmem:[%s19 + $0x18] sm:$0xf]
        %v4460 = vld [vmem:[%s19 + $0x1c] sm:$0xff]
        %v4461 = vld [vmem:[%s19 + $0x24] sm:$0xff]
        %v4462 = vld [vmem:[%s19 + $0x2c] sm:$0xff]
        %v4463 = vld [vmem:[%s19 + $0x34] sm:$0xf]
        %v4464 = vld [vmem:[%s19 + $0x38] sm:$0xff]
        %v4465 = vld [vmem:[%s19 + $0x40] sm:$0xff]
        %v4466 = vld [vmem:[%s19 + $0x48] sm:$0xff]
        %v4467 = vld [vmem:[%s19 + $0x50] sm:$0xf]
        %v4468 = vld [vmem:[%s19 + $0x54] sm:$0xff]
        %v4469 = vld [vmem:[%s19 + $0x5c] sm:$0xff]
        %v4470 = vld [vmem:[%s19 + $0x64] sm:$0xff]
        %v4471 = vld [vmem:[%s19 + $0x6c] sm:$0xf]
        %v4472 = vld [vmem:[%s19 + $0x70] sm:$0xff]
        %v4473 = vld [vmem:[%s19 + $0x78] sm:$0xff]
        %v4474 = vld [vmem:[%s19 + $0x80] sm:$0xff]
        %v4475 = vld [vmem:[%s19 + $0x88] sm:$0xf]
        %v4476 = vld [vmem:[%s19 + $0x8c] sm:$0xff]
        %v4477 = vld [vmem:[%s19 + $0x94] sm:$0xff]
        %v4478 = vld [vmem:[%s19 + $0x9c] sm:$0xff]
        %v4479 = vld [vmem:[%s19 + $0xa4] sm:$0xf]
        %v4480 = vld [vmem:[%s19 + $0xa8] sm:$0xff]
        %v4481 = vld [vmem:[%s19 + $0xb0] sm:$0xff]
        %v4482 = vld [vmem:[%s19 + $0xb8] sm:$0xff]
        %v4483 = vld [vmem:[%s19 + $0xc0] sm:$0xf]
        %v4484 = vld [vmem:[%s19 + $0xc4] sm:$0xff]
        %v4485 = vld [vmem:[%s19 + $0xcc] sm:$0xff]
        %v4486 = vld [vmem:[%s19 + $0xd4] sm:$0xff]
        %v4487 = vld [vmem:[%s19 + $0xdc] sm:$0xf]
        %v4488 = vld [vmem:[%s19 + $0xe0] sm:$0xff]
        %v4489 = vld [vmem:[%s19 + $0xe8] sm:$0xff]
        %v4490 = vld [vmem:[%s19 + $0xf0] sm:$0xff]
        %v4491 = vld [vmem:[%s19 + $0xf8] sm:$0xf]
        %v4492 = vld [vmem:[%s19 + $0xfc] sm:$0xff]
        %v4493 = vld [vmem:[%s19 + $0x104] sm:$0xff]
        %v4494 = vld [vmem:[%s19 + $0x10c] sm:$0xff]
        %v4495 = vld [vmem:[%s19 + $0x114] sm:$0xf]
        %v4496 = vld [vmem:[%s19 + $0x118] sm:$0xff]
        %v4497 = vld [vmem:[%s19 + $0x120] sm:$0xff]
        %v4498 = vld [vmem:[%s19 + $0x128] sm:$0xff]
        %v4499 = vld [vmem:[%s19 + $0x130] sm:$0xf]
        %v4500 = vld [vmem:[%s19 + $0x134] sm:$0xff]
        %v4501 = vld [vmem:[%s19 + $0x13c] sm:$0xff]
        %v4502 = vld [vmem:[%s19 + $0x144] sm:$0xff]
        %v4503 = vld [vmem:[%s19 + $0x14c] sm:$0xf]
        %v4504 = vld [vmem:[%s19 + $0x150] sm:$0xff]
        %v4505 = vld [vmem:[%s19 + $0x158] sm:$0xff]
        %v4506 = vld [vmem:[%s19 + $0x160] sm:$0xff]
        %v4507 = vld [vmem:[%s19 + $0x168] sm:$0xf]
        %v4508 = vld [vmem:[%s19 + $0x16c] sm:$0xff]
        %v4509 = vld [vmem:[%s19 + $0x174] sm:$0xff]
        %v4510 = vld [vmem:[%s19 + $0x17c] sm:$0xff]
        %v4511 = vld [vmem:[%s19 + $0x184] sm:$0xf]
        %v4512 = vld [vmem:[%s19 + $0x188] sm:$0xff]
        %v4513 = vld [vmem:[%s19 + $0x190] sm:$0xff]
        %v4514 = vld [vmem:[%s19 + $0x198] sm:$0xff]
        %v4515 = vld [vmem:[%s19 + $0x1a0] sm:$0xf]
        %v4516 = vld [vmem:[%s19 + $0x1a4] sm:$0xff]
        %v4517 = vld [vmem:[%s19 + $0x1ac] sm:$0xff]
        %v4518 = vld [vmem:[%s19 + $0x1b4] sm:$0xff]
        %v4519 = vld [vmem:[%s19 + $0x1bc] sm:$0xf]
        %v4520 = vld [vmem:[%s20] sm:$0x7f]
        %v4522 = vlaneseq
        %v4523 = vshrl.u32 %v4522, 7
        %v4524 = vsub.s32 0, %v4523
        %v4525 = vrot.slane %v4520, %v4524
        %v4526 = vlaneseq
        %v4527 = vshrl.u32 %v4526, 7
        %v4528 = vsub.s32 1, %v4527
        %v4529 = vrot.slane %v4520, %v4528
        %v4530 = vlaneseq
        %v4531 = vshrl.u32 %v4530, 7
        %v4532 = vsub.s32 2, %v4531
        %v4533 = vrot.slane %v4520, %v4532
        %v4534 = vlaneseq
        %v4535 = vshrl.u32 %v4534, 7
        %v4536 = vsub.s32 3, %v4535
        %v4537 = vrot.slane %v4520, %v4536
        %v4538 = vlaneseq
        %v4539 = vshrl.u32 %v4538, 7
        %v4540 = vsub.s32 4, %v4539
        %v4541 = vrot.slane %v4520, %v4540
        %v4542 = vlaneseq
        %v4543 = vshrl.u32 %v4542, 7
        %v4544 = vsub.s32 5, %v4543
        %v4545 = vrot.slane %v4520, %v4544
        %v4546 = vlaneseq
        %v4547 = vshrl.u32 %v4546, 7
        %v4548 = vsub.s32 6, %v4547
        %v4549 = vrot.slane %v4520, %v4548
        %v4621 = vunpack.c.l.b16 %v4456
        %v4622 = vunpack.c.h.b16 %v4456
        %v4623 = vunpack.c.l.b16 %v4457
        %v4624 = vunpack.c.h.b16 %v4457
        %v4625 = vunpack.c.l.b16 %v4458
        %v4626 = vunpack.c.h.b16 %v4458
        %v4627 = vunpack.c.l.b16 %v4459
        %v4628 = vunpack.c.l.b16 %v4460
        %v4629 = vunpack.c.h.b16 %v4460
        %v4630 = vunpack.c.l.b16 %v4461
        %v4631 = vunpack.c.h.b16 %v4461
        %v4632 = vunpack.c.l.b16 %v4462
        %v4633 = vunpack.c.h.b16 %v4462
        %v4634 = vunpack.c.l.b16 %v4463
        %v4635 = vunpack.c.l.b16 %v4464
        %v4636 = vunpack.c.h.b16 %v4464
        %v4637 = vunpack.c.l.b16 %v4465
        %v4638 = vunpack.c.h.b16 %v4465
        %v4639 = vunpack.c.l.b16 %v4466
        %v4640 = vunpack.c.h.b16 %v4466
        %v4641 = vunpack.c.l.b16 %v4467
        %v4642 = vunpack.c.l.b16 %v4468
        %v4643 = vunpack.c.h.b16 %v4468
        %v4644 = vunpack.c.l.b16 %v4469
        %v4645 = vunpack.c.h.b16 %v4469
        %v4646 = vunpack.c.l.b16 %v4470
        %v4647 = vunpack.c.h.b16 %v4470
        %v4648 = vunpack.c.l.b16 %v4471
        %v4649 = vunpack.c.l.b16 %v4472
        %v4650 = vunpack.c.h.b16 %v4472
        %v4651 = vunpack.c.l.b16 %v4473
        %v4652 = vunpack.c.h.b16 %v4473
        %v4653 = vunpack.c.l.b16 %v4474
        %v4654 = vunpack.c.h.b16 %v4474
        %v4655 = vunpack.c.l.b16 %v4475
        %v4656 = vunpack.c.l.b16 %v4476
        %v4657 = vunpack.c.h.b16 %v4476
        %v4658 = vunpack.c.l.b16 %v4477
        %v4659 = vunpack.c.h.b16 %v4477
        %v4660 = vunpack.c.l.b16 %v4478
        %v4661 = vunpack.c.h.b16 %v4478
        %v4662 = vunpack.c.l.b16 %v4479
        %v4663 = vunpack.c.l.b16 %v4480
        %v4664 = vunpack.c.h.b16 %v4480
        %v4665 = vunpack.c.l.b16 %v4481
        %v4666 = vunpack.c.h.b16 %v4481
        %v4667 = vunpack.c.l.b16 %v4482
        %v4668 = vunpack.c.h.b16 %v4482
        %v4669 = vunpack.c.l.b16 %v4483
        %v4670 = vunpack.c.l.b16 %v4484
        %v4671 = vunpack.c.h.b16 %v4484
        %v4672 = vunpack.c.l.b16 %v4485
        %v4673 = vunpack.c.h.b16 %v4485
        %v4674 = vunpack.c.l.b16 %v4486
        %v4675 = vunpack.c.h.b16 %v4486
        %v4676 = vunpack.c.l.b16 %v4487
        %v4677 = vunpack.c.l.b16 %v4488
        %v4678 = vunpack.c.h.b16 %v4488
        %v4679 = vunpack.c.l.b16 %v4489
        %v4680 = vunpack.c.h.b16 %v4489
        %v4681 = vunpack.c.l.b16 %v4490
        %v4682 = vunpack.c.h.b16 %v4490
        %v4683 = vunpack.c.l.b16 %v4491
        %v4684 = vunpack.c.l.b16 %v4492
        %v4685 = vunpack.c.h.b16 %v4492
        %v4686 = vunpack.c.l.b16 %v4493
        %v4687 = vunpack.c.h.b16 %v4493
        %v4688 = vunpack.c.l.b16 %v4494
        %v4689 = vunpack.c.h.b16 %v4494
        %v4690 = vunpack.c.l.b16 %v4495
        %v4691 = vunpack.c.l.b16 %v4496
        %v4692 = vunpack.c.h.b16 %v4496
        %v4693 = vunpack.c.l.b16 %v4497
        %v4694 = vunpack.c.h.b16 %v4497
        %v4695 = vunpack.c.l.b16 %v4498
        %v4696 = vunpack.c.h.b16 %v4498
        %v4697 = vunpack.c.l.b16 %v4499
        %v4698 = vunpack.c.l.b16 %v4500
        %v4699 = vunpack.c.h.b16 %v4500
        %v4700 = vunpack.c.l.b16 %v4501
        %v4701 = vunpack.c.h.b16 %v4501
        %v4702 = vunpack.c.l.b16 %v4502
        %v4703 = vunpack.c.h.b16 %v4502
        %v4704 = vunpack.c.l.b16 %v4503
        %v4705 = vunpack.c.l.b16 %v4504
        %v4706 = vunpack.c.h.b16 %v4504
        %v4707 = vunpack.c.l.b16 %v4505
        %v4708 = vunpack.c.h.b16 %v4505
        %v4709 = vunpack.c.l.b16 %v4506
        %v4710 = vunpack.c.h.b16 %v4506
        %v4711 = vunpack.c.l.b16 %v4507
        %v4712 = vunpack.c.l.b16 %v4508
        %v4713 = vunpack.c.h.b16 %v4508
        %v4714 = vunpack.c.l.b16 %v4509
        %v4715 = vunpack.c.h.b16 %v4509
        %v4716 = vunpack.c.l.b16 %v4510
        %v4717 = vunpack.c.h.b16 %v4510
        %v4718 = vunpack.c.l.b16 %v4511
        %v4719 = vunpack.c.l.b16 %v4512
        %v4720 = vunpack.c.h.b16 %v4512
        %v4721 = vunpack.c.l.b16 %v4513
        %v4722 = vunpack.c.h.b16 %v4513
        %v4723 = vunpack.c.l.b16 %v4514
        %v4724 = vunpack.c.h.b16 %v4514
        %v4725 = vunpack.c.l.b16 %v4515
        %v4726 = vunpack.c.l.b16 %v4516
        %v4727 = vunpack.c.h.b16 %v4516
        %v4728 = vunpack.c.l.b16 %v4517
        %v4729 = vunpack.c.h.b16 %v4517
        %v4730 = vunpack.c.l.b16 %v4518
        %v4731 = vunpack.c.h.b16 %v4518
        %v4732 = vunpack.c.l.b16 %v4519
        %v4733 = vpack.c.b16 %v4628, %v4621
        %v4734 = vpack.c.b16 %v4629, %v4622
        %v4735 = vpack.c.b16 %v4630, %v4623
        %v4736 = vpack.c.b16 %v4631, %v4624
        %v4737 = vpack.c.b16 %v4632, %v4625
        %v4738 = vpack.c.b16 %v4633, %v4626
        %v4739 = vpack.c.b16 %v4634, %v4627
        %v4740 = vpack.c.b16 %v4642, %v4635
        %v4741 = vpack.c.b16 %v4643, %v4636
        %v4742 = vpack.c.b16 %v4644, %v4637
        %v4743 = vpack.c.b16 %v4645, %v4638
        %v4744 = vpack.c.b16 %v4646, %v4639
        %v4745 = vpack.c.b16 %v4647, %v4640
        %v4746 = vpack.c.b16 %v4648, %v4641
        %v4747 = vpack.c.b16 %v4656, %v4649
        %v4748 = vpack.c.b16 %v4657, %v4650
        %v4749 = vpack.c.b16 %v4658, %v4651
        %v4750 = vpack.c.b16 %v4659, %v4652
        %v4751 = vpack.c.b16 %v4660, %v4653
        %v4752 = vpack.c.b16 %v4661, %v4654
        %v4753 = vpack.c.b16 %v4662, %v4655
        %v4754 = vpack.c.b16 %v4670, %v4663
        %v4755 = vpack.c.b16 %v4671, %v4664
        %v4756 = vpack.c.b16 %v4672, %v4665
        %v4757 = vpack.c.b16 %v4673, %v4666
        %v4758 = vpack.c.b16 %v4674, %v4667
        %v4759 = vpack.c.b16 %v4675, %v4668
        %v4760 = vpack.c.b16 %v4676, %v4669
        %v4761 = vpack.c.b16 %v4684, %v4677
        %v4762 = vpack.c.b16 %v4685, %v4678
        %v4763 = vpack.c.b16 %v4686, %v4679
        %v4764 = vpack.c.b16 %v4687, %v4680
        %v4765 = vpack.c.b16 %v4688, %v4681
        %v4766 = vpack.c.b16 %v4689, %v4682
        %v4767 = vpack.c.b16 %v4690, %v4683
        %v4768 = vpack.c.b16 %v4698, %v4691
        %v4769 = vpack.c.b16 %v4699, %v4692
        %v4770 = vpack.c.b16 %v4700, %v4693
        %v4771 = vpack.c.b16 %v4701, %v4694
        %v4772 = vpack.c.b16 %v4702, %v4695
        %v4773 = vpack.c.b16 %v4703, %v4696
        %v4774 = vpack.c.b16 %v4704, %v4697
        %v4775 = vpack.c.b16 %v4712, %v4705
        %v4776 = vpack.c.b16 %v4713, %v4706
        %v4777 = vpack.c.b16 %v4714, %v4707
        %v4778 = vpack.c.b16 %v4715, %v4708
        %v4779 = vpack.c.b16 %v4716, %v4709
        %v4780 = vpack.c.b16 %v4717, %v4710
        %v4781 = vpack.c.b16 %v4718, %v4711
        %v4782 = vpack.c.b16 %v4726, %v4719
        %v4783 = vpack.c.b16 %v4727, %v4720
        %v4784 = vpack.c.b16 %v4728, %v4721
        %v4785 = vpack.c.b16 %v4729, %v4722
        %v4786 = vpack.c.b16 %v4730, %v4723
        %v4787 = vpack.c.b16 %v4731, %v4724
        %v4788 = vpack.c.b16 %v4732, %v4725
        %4845 = vmatprep.subr.bf16.mxu0 %v4783
        %4846 = vmatpush1.bf16.msra.mxu0 %v4782
        %4847 = vmatprep.subr.bf16.mxu0 %v4776
        %4848 = vmatpush1.bf16.msra.mxu0 %v4775
        %4849 = vmatprep.subr.bf16.mxu0 %v4769
        %4850 = vmatpush1.bf16.msra.mxu0 %v4768
        %4851 = vmatprep.subr.bf16.mxu0 %v4762
        %4852 = vmatpush1.bf16.msra.mxu0 %v4761
        %4853 = vmatprep.subr.bf16.mxu0 %v4755
        %4854 = vmatpush1.bf16.msra.mxu0 %v4754
        %4855 = vmatprep.subr.bf16.mxu0 %v4748
        %4856 = vmatpush1.bf16.msra.mxu0 %v4747
        %4857 = vmatprep.subr.bf16.mxu0 %v4741
        %4858 = vmatpush1.bf16.msra.mxu0 %v4740
        %4859 = vmatprep.subr.bf16.mxu0 %v4734
        %4860 = vmatpush1.bf16.msra.mxu0 %v4733
        %4861 = vmatprep.subr.bf16.mxu0 0
        %4862 = vmatpush2.bf16.msra.mxu0 0
        %4863 = vmatprep.subr.bf16.mxu0 0
        %4864 = vmatpush2.bf16.msra.mxu0 0
        %4865 = vmatprep.subr.bf16.mxu0 0
        %4866 = vmatpush2.bf16.msra.mxu0 0
        %4867 = vmatprep.subr.bf16.mxu0 0
        %4868 = vmatpush2.bf16.msra.mxu0 0
        %4869 = vmatprep.subr.bf16.mxu0 0
        %4870 = vmatpush2.bf16.msra.mxu0 0
        %4871 = vmatprep.subr.bf16.mxu0 0
        %4872 = vmatpush2.bf16.msra.mxu0 0
        %4873 = vmatprep.subr.bf16.mxu0 0
        %4874 = vmatpush2.bf16.msra.mxu0 0
        %4875 = vmatprep.subr.bf16.mxu0 0
        %4876 = vmatpush2.bf16.msra.mxu0 0
        %4877 = vmatprep.mubr.bf16.mxu0 0
        %4878 = vmatmul.mubr.bf16.gmra.mxu0 %v4440
        %v4879 = vpop.f32.mrf.mxu0
        %v4880 = vadd.f32 %v4525, %v4879
        %v4881 = vpop.f32.mrf.mxu0
        %v4882 = vadd.f32 %v4529, %v4881
        %v4883 = vpop.f32.mrf.mxu0
        %v4884 = vadd.f32 %v4525, %v4883
        %v4885 = vpop.f32.mrf.mxu0
        %v4886 = vadd.f32 %v4529, %v4885
        %4887 = vmatprep.mubr.bf16.mxu0 0
        %4888 = vmatmul.mubr.bf16.gmra.mxu0 %v4441
        %v4889 = vpop.f32.mrf.mxu0
        %v4890 = vadd.f32 %v4525, %v4889
        %v4891 = vpop.f32.mrf.mxu0
        %v4892 = vadd.f32 %v4529, %v4891
        %v4893 = vpop.f32.mrf.mxu0
        %v4894 = vadd.f32 %v4525, %v4893
        %v4895 = vpop.f32.mrf.mxu0
        %v4896 = vadd.f32 %v4529, %v4895
        %4897 = vmatprep.mubr.bf16.mxu0 0
        %4898 = vmatmul.mubr.bf16.gmra.mxu0 %v4442
        %v4899 = vpop.f32.mrf.mxu0
        %v4900 = vadd.f32 %v4525, %v4899
        %v4901 = vpop.f32.mrf.mxu0
        %v4902 = vadd.f32 %v4529, %v4901
        %v4903 = vpop.f32.mrf.mxu0
        %v4904 = vadd.f32 %v4525, %v4903
        %v4905 = vpop.f32.mrf.mxu0
        %v4906 = vadd.f32 %v4529, %v4905
        %4907 = vmatprep.mubr.bf16.mxu0 0
        %4908 = vmatmul.mubr.bf16.gmra.mxu0 %v4443
        %v4909 = vpop.f32.mrf.mxu0
        %v4910 = vadd.f32 %v4525, %v4909
        %v4911 = vpop.f32.mrf.mxu0
        %v4912 = vadd.f32 %v4529, %v4911
        %v4913 = vpop.f32.mrf.mxu0
        %v4914 = vadd.f32 %v4525, %v4913
        %v4915 = vpop.f32.mrf.mxu0
        %v4916 = vadd.f32 %v4529, %v4915
        %4917 = vmatprep.mubr.bf16.mxu0 0
        %4918 = vmatmul.mubr.bf16.gmra.mxu0 %v4444
        %v4919 = vpop.f32.mrf.mxu0
        %v4920 = vadd.f32 %v4525, %v4919
        %v4921 = vpop.f32.mrf.mxu0
        %v4922 = vadd.f32 %v4529, %v4921
        %v4923 = vpop.f32.mrf.mxu0
        %v4924 = vadd.f32 %v4525, %v4923
        %v4925 = vpop.f32.mrf.mxu0
        %v4926 = vadd.f32 %v4529, %v4925
        %4927 = vmatprep.mubr.bf16.mxu0 0
        %4928 = vmatmul.mubr.bf16.gmra.mxu0 %v4445
        %v4929 = vpop.f32.mrf.mxu0
        %v4930 = vadd.f32 %v4525, %v4929
        %v4931 = vpop.f32.mrf.mxu0
        %v4932 = vadd.f32 %v4529, %v4931
        %v4933 = vpop.f32.mrf.mxu0
        %v4934 = vadd.f32 %v4525, %v4933
        %v4935 = vpop.f32.mrf.mxu0
        %v4936 = vadd.f32 %v4529, %v4935
        %4937 = vmatprep.mubr.bf16.mxu0 0
        %4938 = vmatmul.mubr.bf16.gmra.mxu0 %v4446
        %v4939 = vpop.f32.mrf.mxu0
        %v4940 = vadd.f32 %v4525, %v4939
        %v4941 = vpop.f32.mrf.mxu0
        %v4942 = vadd.f32 %v4529, %v4941
        %v4943 = vpop.f32.mrf.mxu0
        %v4944 = vadd.f32 %v4525, %v4943
        %v4945 = vpop.f32.mrf.mxu0
        %v4946 = vadd.f32 %v4529, %v4945
        %4947 = vmatprep.mubr.bf16.mxu0 0
        %4948 = vmatmul.mubr.bf16.gmra.mxu0 %v4447
        %v4949 = vpop.f32.mrf.mxu0
        %v4950 = vadd.f32 %v4525, %v4949
        %v4951 = vpop.f32.mrf.mxu0
        %v4952 = vadd.f32 %v4529, %v4951
        %v4953 = vpop.f32.mrf.mxu0
        %v4954 = vadd.f32 %v4525, %v4953
        %v4955 = vpop.f32.mrf.mxu0
        %v4956 = vadd.f32 %v4529, %v4955
        %4957 = vmatprep.mubr.bf16.mxu0 0
        %4958 = vmatmul.mubr.bf16.gmra.mxu0 %v4448
        %v4959 = vpop.f32.mrf.mxu0
        %v4960 = vadd.f32 %v4525, %v4959
        %v4961 = vpop.f32.mrf.mxu0
        %v4962 = vadd.f32 %v4529, %v4961
        %v4963 = vpop.f32.mrf.mxu0
        %v4964 = vadd.f32 %v4525, %v4963
        %v4965 = vpop.f32.mrf.mxu0
        %v4966 = vadd.f32 %v4529, %v4965
        %4967 = vmatprep.mubr.bf16.mxu0 0
        %4968 = vmatmul.mubr.bf16.gmra.mxu0 %v4449
        %v4969 = vpop.f32.mrf.mxu0
        %v4970 = vadd.f32 %v4525, %v4969
        %v4971 = vpop.f32.mrf.mxu0
        %v4972 = vadd.f32 %v4529, %v4971
        %v4973 = vpop.f32.mrf.mxu0
        %v4974 = vadd.f32 %v4525, %v4973
        %v4975 = vpop.f32.mrf.mxu0
        %v4976 = vadd.f32 %v4529, %v4975
        %4977 = vmatprep.mubr.bf16.mxu0 0
        %4978 = vmatmul.mubr.bf16.gmra.mxu0 %v4450
        %v4979 = vpop.f32.mrf.mxu0
        %v4980 = vadd.f32 %v4525, %v4979
        %v4981 = vpop.f32.mrf.mxu0
        %v4982 = vadd.f32 %v4529, %v4981
        %v4983 = vpop.f32.mrf.mxu0
        %v4984 = vadd.f32 %v4525, %v4983
        %v4985 = vpop.f32.mrf.mxu0
        %v4986 = vadd.f32 %v4529, %v4985
        %4987 = vmatprep.mubr.bf16.mxu0 0
        %4988 = vmatmul.mubr.bf16.gmra.mxu0 %v4451
        %v4989 = vpop.f32.mrf.mxu0
        %v4990 = vadd.f32 %v4525, %v4989
        %v4991 = vpop.f32.mrf.mxu0
        %v4992 = vadd.f32 %v4529, %v4991
        %v4993 = vpop.f32.mrf.mxu0
        %v4994 = vadd.f32 %v4525, %v4993
        %v4995 = vpop.f32.mrf.mxu0
        %v4996 = vadd.f32 %v4529, %v4995
        %4997 = vmatprep.mubr.bf16.mxu0 0
        %4998 = vmatmul.mubr.bf16.gmra.mxu0 %v4452
        %v4999 = vpop.f32.mrf.mxu0
        %v5000 = vadd.f32 %v4525, %v4999
        %v5001 = vpop.f32.mrf.mxu0
        %v5002 = vadd.f32 %v4529, %v5001
        %v5003 = vpop.f32.mrf.mxu0
        %v5004 = vadd.f32 %v4525, %v5003
        %v5005 = vpop.f32.mrf.mxu0
        %v5006 = vadd.f32 %v4529, %v5005
        %5007 = vmatprep.mubr.bf16.mxu0 0
        %5008 = vmatmul.mubr.bf16.gmra.mxu0 %v4453
        %v5009 = vpop.f32.mrf.mxu0
        %v5010 = vadd.f32 %v4525, %v5009
        %v5011 = vpop.f32.mrf.mxu0
        %v5012 = vadd.f32 %v4529, %v5011
        %v5013 = vpop.f32.mrf.mxu0
        %v5014 = vadd.f32 %v4525, %v5013
        %v5015 = vpop.f32.mrf.mxu0
        %v5016 = vadd.f32 %v4529, %v5015
        %5017 = vmatprep.mubr.bf16.mxu0 0
        %5018 = vmatmul.mubr.bf16.gmra.mxu0 %v4454
        %v5019 = vpop.f32.mrf.mxu0
        %v5020 = vadd.f32 %v4525, %v5019
        %v5021 = vpop.f32.mrf.mxu0
        %v5022 = vadd.f32 %v4529, %v5021
        %v5023 = vpop.f32.mrf.mxu0
        %v5024 = vadd.f32 %v4525, %v5023
        %v5025 = vpop.f32.mrf.mxu0
        %v5026 = vadd.f32 %v4529, %v5025
        %5027 = vmatprep.mubr.bf16.mxu0 0
        %5028 = vmatmul.mubr.bf16.gmra.mxu0 %v4455
        %v5029 = vpop.f32.mrf.mxu0
        %v5030 = vadd.f32 %v4525, %v5029
        %v5031 = vpop.f32.mrf.mxu0
        %v5032 = vadd.f32 %v4529, %v5031
        %v5033 = vpop.f32.mrf.mxu0
        %v5034 = vadd.f32 %v4525, %v5033
        %v5035 = vpop.f32.mrf.mxu0
        %v5036 = vadd.f32 %v4529, %v5035
        %5037 = vdwg.mxu0
        %5038 = vmatprep.subr.bf16.mxu0 %v4785
        %5039 = vmatpush1.bf16.msra.mxu0 %v4784
        %5040 = vmatprep.subr.bf16.mxu0 %v4778
        %5041 = vmatpush1.bf16.msra.mxu0 %v4777
        %5042 = vmatprep.subr.bf16.mxu0 %v4771
        %5043 = vmatpush1.bf16.msra.mxu0 %v4770
        %5044 = vmatprep.subr.bf16.mxu0 %v4764
        %5045 = vmatpush1.bf16.msra.mxu0 %v4763
        %5046 = vmatprep.subr.bf16.mxu0 %v4757
        %5047 = vmatpush1.bf16.msra.mxu0 %v4756
        %5048 = vmatprep.subr.bf16.mxu0 %v4750
        %5049 = vmatpush1.bf16.msra.mxu0 %v4749
        %5050 = vmatprep.subr.bf16.mxu0 %v4743
        %5051 = vmatpush1.bf16.msra.mxu0 %v4742
        %5052 = vmatprep.subr.bf16.mxu0 %v4736
        %5053 = vmatpush1.bf16.msra.mxu0 %v4735
        %5054 = vmatprep.subr.bf16.mxu0 0
        %5055 = vmatpush2.bf16.msra.mxu0 0
        %5056 = vmatprep.subr.bf16.mxu0 0
        %5057 = vmatpush2.bf16.msra.mxu0 0
        %5058 = vmatprep.subr.bf16.mxu0 0
        %5059 = vmatpush2.bf16.msra.mxu0 0
        %5060 = vmatprep.subr.bf16.mxu0 0
        %5061 = vmatpush2.bf16.msra.mxu0 0
        %5062 = vmatprep.subr.bf16.mxu0 0
        %5063 = vmatpush2.bf16.msra.mxu0 0
        %5064 = vmatprep.subr.bf16.mxu0 0
        %5065 = vmatpush2.bf16.msra.mxu0 0
        %5066 = vmatprep.subr.bf16.mxu0 0
        %5067 = vmatpush2.bf16.msra.mxu0 0
        %5068 = vmatprep.subr.bf16.mxu0 0
        %5069 = vmatpush2.bf16.msra.mxu0 0
        %5070 = vmatprep.mubr.bf16.mxu0 0
        %5071 = vmatmul.mubr.bf16.gmra.mxu0 %v4440
        %v5072 = vpop.f32.mrf.mxu0
        %v5073 = vadd.f32 %v4533, %v5072
        %v5074 = vpop.f32.mrf.mxu0
        %v5075 = vadd.f32 %v4537, %v5074
        %v5076 = vpop.f32.mrf.mxu0
        %v5077 = vadd.f32 %v4533, %v5076
        %v5078 = vpop.f32.mrf.mxu0
        %v5079 = vadd.f32 %v4537, %v5078
        %5080 = vmatprep.mubr.bf16.mxu0 0
        %5081 = vmatmul.mubr.bf16.gmra.mxu0 %v4441
        %v5082 = vpop.f32.mrf.mxu0
        %v5083 = vadd.f32 %v4533, %v5082
        %v5084 = vpop.f32.mrf.mxu0
        %v5085 = vadd.f32 %v4537, %v5084
        %v5086 = vpop.f32.mrf.mxu0
        %v5087 = vadd.f32 %v4533, %v5086
        %v5088 = vpop.f32.mrf.mxu0
        %v5089 = vadd.f32 %v4537, %v5088
        %5090 = vmatprep.mubr.bf16.mxu0 0
        %5091 = vmatmul.mubr.bf16.gmra.mxu0 %v4442
        %v5092 = vpop.f32.mrf.mxu0
        %v5093 = vadd.f32 %v4533, %v5092
        %v5094 = vpop.f32.mrf.mxu0
        %v5095 = vadd.f32 %v4537, %v5094
        %v5096 = vpop.f32.mrf.mxu0
        %v5097 = vadd.f32 %v4533, %v5096
        %v5098 = vpop.f32.mrf.mxu0
        %v5099 = vadd.f32 %v4537, %v5098
        %5100 = vmatprep.mubr.bf16.mxu0 0
        %5101 = vmatmul.mubr.bf16.gmra.mxu0 %v4443
        %v5102 = vpop.f32.mrf.mxu0
        %v5103 = vadd.f32 %v4533, %v5102
        %v5104 = vpop.f32.mrf.mxu0
        %v5105 = vadd.f32 %v4537, %v5104
        %v5106 = vpop.f32.mrf.mxu0
        %v5107 = vadd.f32 %v4533, %v5106
        %v5108 = vpop.f32.mrf.mxu0
        %v5109 = vadd.f32 %v4537, %v5108
        %5110 = vmatprep.mubr.bf16.mxu0 0
        %5111 = vmatmul.mubr.bf16.gmra.mxu0 %v4444
        %v5112 = vpop.f32.mrf.mxu0
        %v5113 = vadd.f32 %v4533, %v5112
        %v5114 = vpop.f32.mrf.mxu0
        %v5115 = vadd.f32 %v4537, %v5114
        %v5116 = vpop.f32.mrf.mxu0
        %v5117 = vadd.f32 %v4533, %v5116
        %v5118 = vpop.f32.mrf.mxu0
        %v5119 = vadd.f32 %v4537, %v5118
        %5120 = vmatprep.mubr.bf16.mxu0 0
        %5121 = vmatmul.mubr.bf16.gmra.mxu0 %v4445
        %v5122 = vpop.f32.mrf.mxu0
        %v5123 = vadd.f32 %v4533, %v5122
        %v5124 = vpop.f32.mrf.mxu0
        %v5125 = vadd.f32 %v4537, %v5124
        %v5126 = vpop.f32.mrf.mxu0
        %v5127 = vadd.f32 %v4533, %v5126
        %v5128 = vpop.f32.mrf.mxu0
        %v5129 = vadd.f32 %v4537, %v5128
        %5130 = vmatprep.mubr.bf16.mxu0 0
        %5131 = vmatmul.mubr.bf16.gmra.mxu0 %v4446
        %v5132 = vpop.f32.mrf.mxu0
        %v5133 = vadd.f32 %v4533, %v5132
        %v5134 = vpop.f32.mrf.mxu0
        %v5135 = vadd.f32 %v4537, %v5134
        %v5136 = vpop.f32.mrf.mxu0
        %v5137 = vadd.f32 %v4533, %v5136
        %v5138 = vpop.f32.mrf.mxu0
        %v5139 = vadd.f32 %v4537, %v5138
        %5140 = vmatprep.mubr.bf16.mxu0 0
        %5141 = vmatmul.mubr.bf16.gmra.mxu0 %v4447
        %v5142 = vpop.f32.mrf.mxu0
        %v5143 = vadd.f32 %v4533, %v5142
        %v5144 = vpop.f32.mrf.mxu0
        %v5145 = vadd.f32 %v4537, %v5144
        %v5146 = vpop.f32.mrf.mxu0
        %v5147 = vadd.f32 %v4533, %v5146
        %v5148 = vpop.f32.mrf.mxu0
        %v5149 = vadd.f32 %v4537, %v5148
        %5150 = vmatprep.mubr.bf16.mxu0 0
        %5151 = vmatmul.mubr.bf16.gmra.mxu0 %v4448
        %v5152 = vpop.f32.mrf.mxu0
        %v5153 = vadd.f32 %v4533, %v5152
        %v5154 = vpop.f32.mrf.mxu0
        %v5155 = vadd.f32 %v4537, %v5154
        %v5156 = vpop.f32.mrf.mxu0
        %v5157 = vadd.f32 %v4533, %v5156
        %v5158 = vpop.f32.mrf.mxu0
        %v5159 = vadd.f32 %v4537, %v5158
        %5160 = vmatprep.mubr.bf16.mxu0 0
        %5161 = vmatmul.mubr.bf16.gmra.mxu0 %v4449
        %v5162 = vpop.f32.mrf.mxu0
        %v5163 = vadd.f32 %v4533, %v5162
        %v5164 = vpop.f32.mrf.mxu0
        %v5165 = vadd.f32 %v4537, %v5164
        %v5166 = vpop.f32.mrf.mxu0
        %v5167 = vadd.f32 %v4533, %v5166
        %v5168 = vpop.f32.mrf.mxu0
        %v5169 = vadd.f32 %v4537, %v5168
        %5170 = vmatprep.mubr.bf16.mxu0 0
        %5171 = vmatmul.mubr.bf16.gmra.mxu0 %v4450
        %v5172 = vpop.f32.mrf.mxu0
        %v5173 = vadd.f32 %v4533, %v5172
        %v5174 = vpop.f32.mrf.mxu0
        %v5175 = vadd.f32 %v4537, %v5174
        %v5176 = vpop.f32.mrf.mxu0
        %v5177 = vadd.f32 %v4533, %v5176
        %v5178 = vpop.f32.mrf.mxu0
        %v5179 = vadd.f32 %v4537, %v5178
        %5180 = vmatprep.mubr.bf16.mxu0 0
        %5181 = vmatmul.mubr.bf16.gmra.mxu0 %v4451
        %v5182 = vpop.f32.mrf.mxu0
        %v5183 = vadd.f32 %v4533, %v5182
        %v5184 = vpop.f32.mrf.mxu0
        %v5185 = vadd.f32 %v4537, %v5184
        %v5186 = vpop.f32.mrf.mxu0
        %v5187 = vadd.f32 %v4533, %v5186
        %v5188 = vpop.f32.mrf.mxu0
        %v5189 = vadd.f32 %v4537, %v5188
        %5190 = vmatprep.mubr.bf16.mxu0 0
        %5191 = vmatmul.mubr.bf16.gmra.mxu0 %v4452
        %v5192 = vpop.f32.mrf.mxu0
        %v5193 = vadd.f32 %v4533, %v5192
        %v5194 = vpop.f32.mrf.mxu0
        %v5195 = vadd.f32 %v4537, %v5194
        %v5196 = vpop.f32.mrf.mxu0
        %v5197 = vadd.f32 %v4533, %v5196
        %v5198 = vpop.f32.mrf.mxu0
        %v5199 = vadd.f32 %v4537, %v5198
        %5200 = vmatprep.mubr.bf16.mxu0 0
        %5201 = vmatmul.mubr.bf16.gmra.mxu0 %v4453
        %v5202 = vpop.f32.mrf.mxu0
        %v5203 = vadd.f32 %v4533, %v5202
        %v5204 = vpop.f32.mrf.mxu0
        %v5205 = vadd.f32 %v4537, %v5204
        %v5206 = vpop.f32.mrf.mxu0
        %v5207 = vadd.f32 %v4533, %v5206
        %v5208 = vpop.f32.mrf.mxu0
        %v5209 = vadd.f32 %v4537, %v5208
        %5210 = vmatprep.mubr.bf16.mxu0 0
        %5211 = vmatmul.mubr.bf16.gmra.mxu0 %v4454
        %v5212 = vpop.f32.mrf.mxu0
        %v5213 = vadd.f32 %v4533, %v5212
        %v5214 = vpop.f32.mrf.mxu0
        %v5215 = vadd.f32 %v4537, %v5214
        %v5216 = vpop.f32.mrf.mxu0
        %v5217 = vadd.f32 %v4533, %v5216
        %v5218 = vpop.f32.mrf.mxu0
        %v5219 = vadd.f32 %v4537, %v5218
        %5220 = vmatprep.mubr.bf16.mxu0 0
        %5221 = vmatmul.mubr.bf16.gmra.mxu0 %v4455
        %v5222 = vpop.f32.mrf.mxu0
        %v5223 = vadd.f32 %v4533, %v5222
        %v5224 = vpop.f32.mrf.mxu0
        %v5225 = vadd.f32 %v4537, %v5224
        %v5226 = vpop.f32.mrf.mxu0
        %v5227 = vadd.f32 %v4533, %v5226
        %v5228 = vpop.f32.mrf.mxu0
        %v5229 = vadd.f32 %v4537, %v5228
        %5230 = vdwg.mxu0
        %5231 = vmatprep.subr.bf16.mxu0 %v4787
        %5232 = vmatpush1.bf16.msra.mxu0 %v4786
        %5233 = vmatprep.subr.bf16.mxu0 %v4780
        %5234 = vmatpush1.bf16.msra.mxu0 %v4779
        %5235 = vmatprep.subr.bf16.mxu0 %v4773
        %5236 = vmatpush1.bf16.msra.mxu0 %v4772
        %5237 = vmatprep.subr.bf16.mxu0 %v4766
        %5238 = vmatpush1.bf16.msra.mxu0 %v4765
        %5239 = vmatprep.subr.bf16.mxu0 %v4759
        %5240 = vmatpush1.bf16.msra.mxu0 %v4758
        %5241 = vmatprep.subr.bf16.mxu0 %v4752
        %5242 = vmatpush1.bf16.msra.mxu0 %v4751
        %5243 = vmatprep.subr.bf16.mxu0 %v4745
        %5244 = vmatpush1.bf16.msra.mxu0 %v4744
        %5245 = vmatprep.subr.bf16.mxu0 %v4738
        %5246 = vmatpush1.bf16.msra.mxu0 %v4737
        %5247 = vmatprep.subr.bf16.mxu0 0
        %5248 = vmatpush2.bf16.msra.mxu0 0
        %5249 = vmatprep.subr.bf16.mxu0 0
        %5250 = vmatpush2.bf16.msra.mxu0 0
        %5251 = vmatprep.subr.bf16.mxu0 0
        %5252 = vmatpush2.bf16.msra.mxu0 0
        %5253 = vmatprep.subr.bf16.mxu0 0
        %5254 = vmatpush2.bf16.msra.mxu0 0
        %5255 = vmatprep.subr.bf16.mxu0 0
        %5256 = vmatpush2.bf16.msra.mxu0 0
        %5257 = vmatprep.subr.bf16.mxu0 0
        %5258 = vmatpush2.bf16.msra.mxu0 0
        %5259 = vmatprep.subr.bf16.mxu0 0
        %5260 = vmatpush2.bf16.msra.mxu0 0
        %5261 = vmatprep.subr.bf16.mxu0 0
        %5262 = vmatpush2.bf16.msra.mxu0 0
        %5263 = vmatprep.mubr.bf16.mxu0 0
        %5264 = vmatmul.mubr.bf16.gmra.mxu0 %v4440
        %v5265 = vpop.f32.mrf.mxu0
        %v5266 = vadd.f32 %v4541, %v5265
        %v5267 = vpop.f32.mrf.mxu0
        %v5268 = vadd.f32 %v4545, %v5267
        %v5269 = vpop.f32.mrf.mxu0
        %v5270 = vadd.f32 %v4541, %v5269
        %v5271 = vpop.f32.mrf.mxu0
        %v5272 = vadd.f32 %v4545, %v5271
        %5273 = vmatprep.mubr.bf16.mxu0 0
        %5274 = vmatmul.mubr.bf16.gmra.mxu0 %v4441
        %v5275 = vpop.f32.mrf.mxu0
        %v5276 = vadd.f32 %v4541, %v5275
        %v5277 = vpop.f32.mrf.mxu0
        %v5278 = vadd.f32 %v4545, %v5277
        %v5279 = vpop.f32.mrf.mxu0
        %v5280 = vadd.f32 %v4541, %v5279
        %v5281 = vpop.f32.mrf.mxu0
        %v5282 = vadd.f32 %v4545, %v5281
        %5283 = vmatprep.mubr.bf16.mxu0 0
        %5284 = vmatmul.mubr.bf16.gmra.mxu0 %v4442
        %v5285 = vpop.f32.mrf.mxu0
        %v5286 = vadd.f32 %v4541, %v5285
        %v5287 = vpop.f32.mrf.mxu0
        %v5288 = vadd.f32 %v4545, %v5287
        %v5289 = vpop.f32.mrf.mxu0
        %v5290 = vadd.f32 %v4541, %v5289
        %v5291 = vpop.f32.mrf.mxu0
        %v5292 = vadd.f32 %v4545, %v5291
        %5293 = vmatprep.mubr.bf16.mxu0 0
        %5294 = vmatmul.mubr.bf16.gmra.mxu0 %v4443
        %v5295 = vpop.f32.mrf.mxu0
        %v5296 = vadd.f32 %v4541, %v5295
        %v5297 = vpop.f32.mrf.mxu0
        %v5298 = vadd.f32 %v4545, %v5297
        %v5299 = vpop.f32.mrf.mxu0
        %v5300 = vadd.f32 %v4541, %v5299
        %v5301 = vpop.f32.mrf.mxu0
        %v5302 = vadd.f32 %v4545, %v5301
        %5303 = vmatprep.mubr.bf16.mxu0 0
        %5304 = vmatmul.mubr.bf16.gmra.mxu0 %v4444
        %v5305 = vpop.f32.mrf.mxu0
        %v5306 = vadd.f32 %v4541, %v5305
        %v5307 = vpop.f32.mrf.mxu0
        %v5308 = vadd.f32 %v4545, %v5307
        %v5309 = vpop.f32.mrf.mxu0
        %v5310 = vadd.f32 %v4541, %v5309
        %v5311 = vpop.f32.mrf.mxu0
        %v5312 = vadd.f32 %v4545, %v5311
        %5313 = vmatprep.mubr.bf16.mxu0 0
        %5314 = vmatmul.mubr.bf16.gmra.mxu0 %v4445
        %v5315 = vpop.f32.mrf.mxu0
        %v5316 = vadd.f32 %v4541, %v5315
        %v5317 = vpop.f32.mrf.mxu0
        %v5318 = vadd.f32 %v4545, %v5317
        %v5319 = vpop.f32.mrf.mxu0
        %v5320 = vadd.f32 %v4541, %v5319
        %v5321 = vpop.f32.mrf.mxu0
        %v5322 = vadd.f32 %v4545, %v5321
        %5323 = vmatprep.mubr.bf16.mxu0 0
        %5324 = vmatmul.mubr.bf16.gmra.mxu0 %v4446
        %v5325 = vpop.f32.mrf.mxu0
        %v5326 = vadd.f32 %v4541, %v5325
        %v5327 = vpop.f32.mrf.mxu0
        %v5328 = vadd.f32 %v4545, %v5327
        %v5329 = vpop.f32.mrf.mxu0
        %v5330 = vadd.f32 %v4541, %v5329
        %v5331 = vpop.f32.mrf.mxu0
        %v5332 = vadd.f32 %v4545, %v5331
        %5333 = vmatprep.mubr.bf16.mxu0 0
        %5334 = vmatmul.mubr.bf16.gmra.mxu0 %v4447
        %v5335 = vpop.f32.mrf.mxu0
        %v5336 = vadd.f32 %v4541, %v5335
        %v5337 = vpop.f32.mrf.mxu0
        %v5338 = vadd.f32 %v4545, %v5337
        %v5339 = vpop.f32.mrf.mxu0
        %v5340 = vadd.f32 %v4541, %v5339
        %v5341 = vpop.f32.mrf.mxu0
        %v5342 = vadd.f32 %v4545, %v5341
        %5343 = vmatprep.mubr.bf16.mxu0 0
        %5344 = vmatmul.mubr.bf16.gmra.mxu0 %v4448
        %v5345 = vpop.f32.mrf.mxu0
        %v5346 = vadd.f32 %v4541, %v5345
        %v5347 = vpop.f32.mrf.mxu0
        %v5348 = vadd.f32 %v4545, %v5347
        %v5349 = vpop.f32.mrf.mxu0
        %v5350 = vadd.f32 %v4541, %v5349
        %v5351 = vpop.f32.mrf.mxu0
        %v5352 = vadd.f32 %v4545, %v5351
        %5353 = vmatprep.mubr.bf16.mxu0 0
        %5354 = vmatmul.mubr.bf16.gmra.mxu0 %v4449
        %v5355 = vpop.f32.mrf.mxu0
        %v5356 = vadd.f32 %v4541, %v5355
        %v5357 = vpop.f32.mrf.mxu0
        %v5358 = vadd.f32 %v4545, %v5357
        %v5359 = vpop.f32.mrf.mxu0
        %v5360 = vadd.f32 %v4541, %v5359
        %v5361 = vpop.f32.mrf.mxu0
        %v5362 = vadd.f32 %v4545, %v5361
        %5363 = vmatprep.mubr.bf16.mxu0 0
        %5364 = vmatmul.mubr.bf16.gmra.mxu0 %v4450
        %v5365 = vpop.f32.mrf.mxu0
        %v5366 = vadd.f32 %v4541, %v5365
        %v5367 = vpop.f32.mrf.mxu0
        %v5368 = vadd.f32 %v4545, %v5367
        %v5369 = vpop.f32.mrf.mxu0
        %v5370 = vadd.f32 %v4541, %v5369
        %v5371 = vpop.f32.mrf.mxu0
        %v5372 = vadd.f32 %v4545, %v5371
        %5373 = vmatprep.mubr.bf16.mxu0 0
        %5374 = vmatmul.mubr.bf16.gmra.mxu0 %v4451
        %v5375 = vpop.f32.mrf.mxu0
        %v5376 = vadd.f32 %v4541, %v5375
        %v5377 = vpop.f32.mrf.mxu0
        %v5378 = vadd.f32 %v4545, %v5377
        %v5379 = vpop.f32.mrf.mxu0
        %v5380 = vadd.f32 %v4541, %v5379
        %v5381 = vpop.f32.mrf.mxu0
        %v5382 = vadd.f32 %v4545, %v5381
        %5383 = vmatprep.mubr.bf16.mxu0 0
        %5384 = vmatmul.mubr.bf16.gmra.mxu0 %v4452
        %v5385 = vpop.f32.mrf.mxu0
        %v5386 = vadd.f32 %v4541, %v5385
        %v5387 = vpop.f32.mrf.mxu0
        %v5388 = vadd.f32 %v4545, %v5387
        %v5389 = vpop.f32.mrf.mxu0
        %v5390 = vadd.f32 %v4541, %v5389
        %v5391 = vpop.f32.mrf.mxu0
        %v5392 = vadd.f32 %v4545, %v5391
        %5393 = vmatprep.mubr.bf16.mxu0 0
        %5394 = vmatmul.mubr.bf16.gmra.mxu0 %v4453
        %v5395 = vpop.f32.mrf.mxu0
        %v5396 = vadd.f32 %v4541, %v5395
        %v5397 = vpop.f32.mrf.mxu0
        %v5398 = vadd.f32 %v4545, %v5397
        %v5399 = vpop.f32.mrf.mxu0
        %v5400 = vadd.f32 %v4541, %v5399
        %v5401 = vpop.f32.mrf.mxu0
        %v5402 = vadd.f32 %v4545, %v5401
        %5403 = vmatprep.mubr.bf16.mxu0 0
        %5404 = vmatmul.mubr.bf16.gmra.mxu0 %v4454
        %v5405 = vpop.f32.mrf.mxu0
        %v5406 = vadd.f32 %v4541, %v5405
        %v5407 = vpop.f32.mrf.mxu0
        %v5408 = vadd.f32 %v4545, %v5407
        %v5409 = vpop.f32.mrf.mxu0
        %v5410 = vadd.f32 %v4541, %v5409
        %v5411 = vpop.f32.mrf.mxu0
        %v5412 = vadd.f32 %v4545, %v5411
        %5413 = vmatprep.mubr.bf16.mxu0 0
        %5414 = vmatmul.mubr.bf16.gmra.mxu0 %v4455
        %v5415 = vpop.f32.mrf.mxu0
        %v5416 = vadd.f32 %v4541, %v5415
        %v5417 = vpop.f32.mrf.mxu0
        %v5418 = vadd.f32 %v4545, %v5417
        %v5419 = vpop.f32.mrf.mxu0
        %v5420 = vadd.f32 %v4541, %v5419
        %v5421 = vpop.f32.mrf.mxu0
        %v5422 = vadd.f32 %v4545, %v5421
        %5423 = vdwg.mxu0
        %5424 = vmatprep.subr.bf16.mxu0 0
        %5425 = vmatpush1.bf16.msra.mxu0 %v4788
        %5426 = vmatprep.subr.bf16.mxu0 0
        %5427 = vmatpush1.bf16.msra.mxu0 %v4781
        %5428 = vmatprep.subr.bf16.mxu0 0
        %5429 = vmatpush1.bf16.msra.mxu0 %v4774
        %5430 = vmatprep.subr.bf16.mxu0 0
        %5431 = vmatpush1.bf16.msra.mxu0 %v4767
        %5432 = vmatprep.subr.bf16.mxu0 0
        %5433 = vmatpush1.bf16.msra.mxu0 %v4760
        %5434 = vmatprep.subr.bf16.mxu0 0
        %5435 = vmatpush1.bf16.msra.mxu0 %v4753
        %5436 = vmatprep.subr.bf16.mxu0 0
        %5437 = vmatpush1.bf16.msra.mxu0 %v4746
        %5438 = vmatprep.subr.bf16.mxu0 0
        %5439 = vmatpush1.bf16.msra.mxu0 %v4739
        %5440 = vmatprep.subr.bf16.mxu0 0
        %5441 = vmatpush2.bf16.msra.mxu0 0
        %5442 = vmatprep.subr.bf16.mxu0 0
        %5443 = vmatpush2.bf16.msra.mxu0 0
        %5444 = vmatprep.subr.bf16.mxu0 0
        %5445 = vmatpush2.bf16.msra.mxu0 0
        %5446 = vmatprep.subr.bf16.mxu0 0
        %5447 = vmatpush2.bf16.msra.mxu0 0
        %5448 = vmatprep.subr.bf16.mxu0 0
        %5449 = vmatpush2.bf16.msra.mxu0 0
        %5450 = vmatprep.subr.bf16.mxu0 0
        %5451 = vmatpush2.bf16.msra.mxu0 0
        %5452 = vmatprep.subr.bf16.mxu0 0
        %5453 = vmatpush2.bf16.msra.mxu0 0
        %5454 = vmatprep.subr.bf16.mxu0 0
        %5455 = vmatpush2.bf16.msra.mxu0 0
        %5456 = vmatprep.mubr.bf16.mxu0 0
        %5457 = vmatmul.mubr.bf16.gmra.mxu0 %v4440
        %v5458 = vpop.f32.mrf.mxu0
        %v5459 = vadd.f32 %v4549, %v5458
        %v5460 = vpop.f32.mrf.mxu0
        %v5461 = vpop.f32.mrf.mxu0
        %v5462 = vadd.f32 %v4549, %v5461
        %v5463 = vpop.f32.mrf.mxu0
        %5464 = vmatprep.mubr.bf16.mxu0 0
        %5465 = vmatmul.mubr.bf16.gmra.mxu0 %v4441
        %v5466 = vpop.f32.mrf.mxu0
        %v5467 = vadd.f32 %v4549, %v5466
        %v5468 = vpop.f32.mrf.mxu0
        %v5469 = vpop.f32.mrf.mxu0
        %v5470 = vadd.f32 %v4549, %v5469
        %v5471 = vpop.f32.mrf.mxu0
        %5472 = vmatprep.mubr.bf16.mxu0 0
        %5473 = vmatmul.mubr.bf16.gmra.mxu0 %v4442
        %v5474 = vpop.f32.mrf.mxu0
        %v5475 = vadd.f32 %v4549, %v5474
        %v5476 = vpop.f32.mrf.mxu0
        %v5477 = vpop.f32.mrf.mxu0
        %v5478 = vadd.f32 %v4549, %v5477
        %v5479 = vpop.f32.mrf.mxu0
        %5480 = vmatprep.mubr.bf16.mxu0 0
        %5481 = vmatmul.mubr.bf16.gmra.mxu0 %v4443
        %v5482 = vpop.f32.mrf.mxu0
        %v5483 = vadd.f32 %v4549, %v5482
        %v5484 = vpop.f32.mrf.mxu0
        %v5485 = vpop.f32.mrf.mxu0
        %v5486 = vadd.f32 %v4549, %v5485
        %v5487 = vpop.f32.mrf.mxu0
        %5488 = vmatprep.mubr.bf16.mxu0 0
        %5489 = vmatmul.mubr.bf16.gmra.mxu0 %v4444
        %v5490 = vpop.f32.mrf.mxu0
        %v5491 = vadd.f32 %v4549, %v5490
        %v5492 = vpop.f32.mrf.mxu0
        %v5493 = vpop.f32.mrf.mxu0
        %v5494 = vadd.f32 %v4549, %v5493
        %v5495 = vpop.f32.mrf.mxu0
        %5496 = vmatprep.mubr.bf16.mxu0 0
        %5497 = vmatmul.mubr.bf16.gmra.mxu0 %v4445
        %v5498 = vpop.f32.mrf.mxu0
        %v5499 = vadd.f32 %v4549, %v5498
        %v5500 = vpop.f32.mrf.mxu0
        %v5501 = vpop.f32.mrf.mxu0
        %v5502 = vadd.f32 %v4549, %v5501
        %v5503 = vpop.f32.mrf.mxu0
        %5504 = vmatprep.mubr.bf16.mxu0 0
        %5505 = vmatmul.mubr.bf16.gmra.mxu0 %v4446
        %v5506 = vpop.f32.mrf.mxu0
        %v5507 = vadd.f32 %v4549, %v5506
        %v5508 = vpop.f32.mrf.mxu0
        %v5509 = vpop.f32.mrf.mxu0
        %v5510 = vadd.f32 %v4549, %v5509
        %v5511 = vpop.f32.mrf.mxu0
        %5512 = vmatprep.mubr.bf16.mxu0 0
        %5513 = vmatmul.mubr.bf16.gmra.mxu0 %v4447
        %v5514 = vpop.f32.mrf.mxu0
        %v5515 = vadd.f32 %v4549, %v5514
        %v5516 = vpop.f32.mrf.mxu0
        %v5517 = vpop.f32.mrf.mxu0
        %v5518 = vadd.f32 %v4549, %v5517
        %v5519 = vpop.f32.mrf.mxu0
        %5520 = vmatprep.mubr.bf16.mxu0 0
        %5521 = vmatmul.mubr.bf16.gmra.mxu0 %v4448
        %v5522 = vpop.f32.mrf.mxu0
        %v5523 = vadd.f32 %v4549, %v5522
        %v5524 = vpop.f32.mrf.mxu0
        %v5525 = vpop.f32.mrf.mxu0
        %v5526 = vadd.f32 %v4549, %v5525
        %v5527 = vpop.f32.mrf.mxu0
        %5528 = vmatprep.mubr.bf16.mxu0 0
        %5529 = vmatmul.mubr.bf16.gmra.mxu0 %v4449
        %v5530 = vpop.f32.mrf.mxu0
        %v5531 = vadd.f32 %v4549, %v5530
        %v5532 = vpop.f32.mrf.mxu0
        %v5533 = vpop.f32.mrf.mxu0
        %v5534 = vadd.f32 %v4549, %v5533
        %v5535 = vpop.f32.mrf.mxu0
        %5536 = vmatprep.mubr.bf16.mxu0 0
        %5537 = vmatmul.mubr.bf16.gmra.mxu0 %v4450
        %v5538 = vpop.f32.mrf.mxu0
        %v5539 = vadd.f32 %v4549, %v5538
        %v5540 = vpop.f32.mrf.mxu0
        %v5541 = vpop.f32.mrf.mxu0
        %v5542 = vadd.f32 %v4549, %v5541
        %v5543 = vpop.f32.mrf.mxu0
        %5544 = vmatprep.mubr.bf16.mxu0 0
        %5545 = vmatmul.mubr.bf16.gmra.mxu0 %v4451
        %v5546 = vpop.f32.mrf.mxu0
        %v5547 = vadd.f32 %v4549, %v5546
        %v5548 = vpop.f32.mrf.mxu0
        %v5549 = vpop.f32.mrf.mxu0
        %v5550 = vadd.f32 %v4549, %v5549
        %v5551 = vpop.f32.mrf.mxu0
        %5552 = vmatprep.mubr.bf16.mxu0 0
        %5553 = vmatmul.mubr.bf16.gmra.mxu0 %v4452
        %v5554 = vpop.f32.mrf.mxu0
        %v5555 = vadd.f32 %v4549, %v5554
        %v5556 = vpop.f32.mrf.mxu0
        %v5557 = vpop.f32.mrf.mxu0
        %v5558 = vadd.f32 %v4549, %v5557
        %v5559 = vpop.f32.mrf.mxu0
        %5560 = vmatprep.mubr.bf16.mxu0 0
        %5561 = vmatmul.mubr.bf16.gmra.mxu0 %v4453
        %v5562 = vpop.f32.mrf.mxu0
        %v5563 = vadd.f32 %v4549, %v5562
        %v5564 = vpop.f32.mrf.mxu0
        %v5565 = vpop.f32.mrf.mxu0
        %v5566 = vadd.f32 %v4549, %v5565
        %v5567 = vpop.f32.mrf.mxu0
        %5568 = vmatprep.mubr.bf16.mxu0 0
        %5569 = vmatmul.mubr.bf16.gmra.mxu0 %v4454
        %v5570 = vpop.f32.mrf.mxu0
        %v5571 = vadd.f32 %v4549, %v5570
        %v5572 = vpop.f32.mrf.mxu0
        %v5573 = vpop.f32.mrf.mxu0
        %v5574 = vadd.f32 %v4549, %v5573
        %v5575 = vpop.f32.mrf.mxu0
        %5576 = vmatprep.mubr.bf16.mxu0 0
        %5577 = vmatmul.mubr.bf16.gmra.mxu0 %v4455
        %v5578 = vpop.f32.mrf.mxu0
        %v5579 = vadd.f32 %v4549, %v5578
        %v5580 = vpop.f32.mrf.mxu0
        %v5581 = vpop.f32.mrf.mxu0
        %v5582 = vadd.f32 %v4549, %v5581
        %v5583 = vpop.f32.mrf.mxu0
        %5584 = vdwg.mxu0
        %v5585 = vmul.f32 %v4880, 0.5
        %v5586 = vmul.f32 %v4882, 0.5
        %v5587 = vmul.f32 %v5073, 0.5
        %v5588 = vmul.f32 %v5075, 0.5
        %v5589 = vmul.f32 %v5266, 0.5
        %v5590 = vmul.f32 %v5268, 0.5
        %v5591 = vmul.f32 %v5459, 0.5
        %v5592 = vmul.f32 %v4884, 0.5
        %v5593 = vmul.f32 %v4886, 0.5
        %v5594 = vmul.f32 %v5077, 0.5
        %v5595 = vmul.f32 %v5079, 0.5
        %v5596 = vmul.f32 %v5270, 0.5
        %v5597 = vmul.f32 %v5272, 0.5
        %v5598 = vmul.f32 %v5462, 0.5
        %v5599 = vmul.f32 %v4890, 0.5
        %v5600 = vmul.f32 %v4892, 0.5
        %v5601 = vmul.f32 %v5083, 0.5
        %v5602 = vmul.f32 %v5085, 0.5
        %v5603 = vmul.f32 %v5276, 0.5
        %v5604 = vmul.f32 %v5278, 0.5
        %v5605 = vmul.f32 %v5467, 0.5
        %v5606 = vmul.f32 %v4894, 0.5
        %v5607 = vmul.f32 %v4896, 0.5
        %v5608 = vmul.f32 %v5087, 0.5
        %v5609 = vmul.f32 %v5089, 0.5
        %v5610 = vmul.f32 %v5280, 0.5
        %v5611 = vmul.f32 %v5282, 0.5
        %v5612 = vmul.f32 %v5470, 0.5
        %v5613 = vmul.f32 %v4900, 0.5
        %v5614 = vmul.f32 %v4902, 0.5
        %v5615 = vmul.f32 %v5093, 0.5
        %v5616 = vmul.f32 %v5095, 0.5
        %v5617 = vmul.f32 %v5286, 0.5
        %v5618 = vmul.f32 %v5288, 0.5
        %v5619 = vmul.f32 %v5475, 0.5
        %v5620 = vmul.f32 %v4904, 0.5
        %v5621 = vmul.f32 %v4906, 0.5
        %v5622 = vmul.f32 %v5097, 0.5
        %v5623 = vmul.f32 %v5099, 0.5
        %v5624 = vmul.f32 %v5290, 0.5
        %v5625 = vmul.f32 %v5292, 0.5
        %v5626 = vmul.f32 %v5478, 0.5
        %v5627 = vmul.f32 %v4910, 0.5
        %v5628 = vmul.f32 %v4912, 0.5
        %v5629 = vmul.f32 %v5103, 0.5
        %v5630 = vmul.f32 %v5105, 0.5
        %v5631 = vmul.f32 %v5296, 0.5
        %v5632 = vmul.f32 %v5298, 0.5
        %v5633 = vmul.f32 %v5483, 0.5
        %v5634 = vmul.f32 %v4914, 0.5
        %v5635 = vmul.f32 %v4916, 0.5
        %v5636 = vmul.f32 %v5107, 0.5
        %v5637 = vmul.f32 %v5109, 0.5
        %v5638 = vmul.f32 %v5300, 0.5
        %v5639 = vmul.f32 %v5302, 0.5
        %v5640 = vmul.f32 %v5486, 0.5
        %v5641 = vmul.f32 %v4920, 0.5
        %v5642 = vmul.f32 %v4922, 0.5
        %v5643 = vmul.f32 %v5113, 0.5
        %v5644 = vmul.f32 %v5115, 0.5
        %v5645 = vmul.f32 %v5306, 0.5
        %v5646 = vmul.f32 %v5308, 0.5
        %v5647 = vmul.f32 %v5491, 0.5
        %v5648 = vmul.f32 %v4924, 0.5
        %v5649 = vmul.f32 %v4926, 0.5
        %v5650 = vmul.f32 %v5117, 0.5
        %v5651 = vmul.f32 %v5119, 0.5
        %v5652 = vmul.f32 %v5310, 0.5
        %v5653 = vmul.f32 %v5312, 0.5
        %v5654 = vmul.f32 %v5494, 0.5
        %v5655 = vmul.f32 %v4930, 0.5
        %v5656 = vmul.f32 %v4932, 0.5
        %v5657 = vmul.f32 %v5123, 0.5
        %v5658 = vmul.f32 %v5125, 0.5
        %v5659 = vmul.f32 %v5316, 0.5
        %v5660 = vmul.f32 %v5318, 0.5
        %v5661 = vmul.f32 %v5499, 0.5
        %v5662 = vmul.f32 %v4934, 0.5
        %v5663 = vmul.f32 %v4936, 0.5
        %v5664 = vmul.f32 %v5127, 0.5
        %v5665 = vmul.f32 %v5129, 0.5
        %v5666 = vmul.f32 %v5320, 0.5
        %v5667 = vmul.f32 %v5322, 0.5
        %v5668 = vmul.f32 %v5502, 0.5
        %v5669 = vmul.f32 %v4940, 0.5
        %v5670 = vmul.f32 %v4942, 0.5
        %v5671 = vmul.f32 %v5133, 0.5
        %v5672 = vmul.f32 %v5135, 0.5
        %v5673 = vmul.f32 %v5326, 0.5
        %v5674 = vmul.f32 %v5328, 0.5
        %v5675 = vmul.f32 %v5507, 0.5
        %v5676 = vmul.f32 %v4944, 0.5
        %v5677 = vmul.f32 %v4946, 0.5
        %v5678 = vmul.f32 %v5137, 0.5
        %v5679 = vmul.f32 %v5139, 0.5
        %v5680 = vmul.f32 %v5330, 0.5
        %v5681 = vmul.f32 %v5332, 0.5
        %v5682 = vmul.f32 %v5510, 0.5
        %v5683 = vmul.f32 %v4950, 0.5
        %v5684 = vmul.f32 %v4952, 0.5
        %v5685 = vmul.f32 %v5143, 0.5
        %v5686 = vmul.f32 %v5145, 0.5
        %v5687 = vmul.f32 %v5336, 0.5
        %v5688 = vmul.f32 %v5338, 0.5
        %v5689 = vmul.f32 %v5515, 0.5
        %v5690 = vmul.f32 %v4954, 0.5
        %v5691 = vmul.f32 %v4956, 0.5
        %v5692 = vmul.f32 %v5147, 0.5
        %v5693 = vmul.f32 %v5149, 0.5
        %v5694 = vmul.f32 %v5340, 0.5
        %v5695 = vmul.f32 %v5342, 0.5
        %v5696 = vmul.f32 %v5518, 0.5
        %v5697 = vmul.f32 %v4960, 0.5
        %v5698 = vmul.f32 %v4962, 0.5
        %v5699 = vmul.f32 %v5153, 0.5
        %v5700 = vmul.f32 %v5155, 0.5
        %v5701 = vmul.f32 %v5346, 0.5
        %v5702 = vmul.f32 %v5348, 0.5
        %v5703 = vmul.f32 %v5523, 0.5
        %v5704 = vmul.f32 %v4964, 0.5
        %v5705 = vmul.f32 %v4966, 0.5
        %v5706 = vmul.f32 %v5157, 0.5
        %v5707 = vmul.f32 %v5159, 0.5
        %v5708 = vmul.f32 %v5350, 0.5
        %v5709 = vmul.f32 %v5352, 0.5
        %v5710 = vmul.f32 %v5526, 0.5
        %v5711 = vmul.f32 %v4970, 0.5
        %v5712 = vmul.f32 %v4972, 0.5
        %v5713 = vmul.f32 %v5163, 0.5
        %v5714 = vmul.f32 %v5165, 0.5
        %v5715 = vmul.f32 %v5356, 0.5
        %v5716 = vmul.f32 %v5358, 0.5
        %v5717 = vmul.f32 %v5531, 0.5
        %v5718 = vmul.f32 %v4974, 0.5
        %v5719 = vmul.f32 %v4976, 0.5
        %v5720 = vmul.f32 %v5167, 0.5
        %v5721 = vmul.f32 %v5169, 0.5
        %v5722 = vmul.f32 %v5360, 0.5
        %v5723 = vmul.f32 %v5362, 0.5
        %v5724 = vmul.f32 %v5534, 0.5
        %v5725 = vmul.f32 %v4980, 0.5
        %v5726 = vmul.f32 %v4982, 0.5
        %v5727 = vmul.f32 %v5173, 0.5
        %v5728 = vmul.f32 %v5175, 0.5
        %v5729 = vmul.f32 %v5366, 0.5
        %v5730 = vmul.f32 %v5368, 0.5
        %v5731 = vmul.f32 %v5539, 0.5
        %v5732 = vmul.f32 %v4984, 0.5
        %v5733 = vmul.f32 %v4986, 0.5
        %v5734 = vmul.f32 %v5177, 0.5
        %v5735 = vmul.f32 %v5179, 0.5
        %v5736 = vmul.f32 %v5370, 0.5
        %v5737 = vmul.f32 %v5372, 0.5
        %v5738 = vmul.f32 %v5542, 0.5
        %v5739 = vmul.f32 %v4990, 0.5
        %v5740 = vmul.f32 %v4992, 0.5
        %v5741 = vmul.f32 %v5183, 0.5
        %v5742 = vmul.f32 %v5185, 0.5
        %v5743 = vmul.f32 %v5376, 0.5
        %v5744 = vmul.f32 %v5378, 0.5
        %v5745 = vmul.f32 %v5547, 0.5
        %v5746 = vmul.f32 %v4994, 0.5
        %v5747 = vmul.f32 %v4996, 0.5
        %v5748 = vmul.f32 %v5187, 0.5
        %v5749 = vmul.f32 %v5189, 0.5
        %v5750 = vmul.f32 %v5380, 0.5
        %v5751 = vmul.f32 %v5382, 0.5
        %v5752 = vmul.f32 %v5550, 0.5
        %v5753 = vmul.f32 %v5000, 0.5
        %v5754 = vmul.f32 %v5002, 0.5
        %v5755 = vmul.f32 %v5193, 0.5
        %v5756 = vmul.f32 %v5195, 0.5
        %v5757 = vmul.f32 %v5386, 0.5
        %v5758 = vmul.f32 %v5388, 0.5
        %v5759 = vmul.f32 %v5555, 0.5
        %v5760 = vmul.f32 %v5004, 0.5
        %v5761 = vmul.f32 %v5006, 0.5
        %v5762 = vmul.f32 %v5197, 0.5
        %v5763 = vmul.f32 %v5199, 0.5
        %v5764 = vmul.f32 %v5390, 0.5
        %v5765 = vmul.f32 %v5392, 0.5
        %v5766 = vmul.f32 %v5558, 0.5
        %v5767 = vmul.f32 %v5010, 0.5
        %v5768 = vmul.f32 %v5012, 0.5
        %v5769 = vmul.f32 %v5203, 0.5
        %v5770 = vmul.f32 %v5205, 0.5
        %v5771 = vmul.f32 %v5396, 0.5
        %v5772 = vmul.f32 %v5398, 0.5
        %v5773 = vmul.f32 %v5563, 0.5
        %v5774 = vmul.f32 %v5014, 0.5
        %v5775 = vmul.f32 %v5016, 0.5
        %v5776 = vmul.f32 %v5207, 0.5
        %v5777 = vmul.f32 %v5209, 0.5
        %v5778 = vmul.f32 %v5400, 0.5
        %v5779 = vmul.f32 %v5402, 0.5
        %v5780 = vmul.f32 %v5566, 0.5
        %v5781 = vmul.f32 %v5020, 0.5
        %v5782 = vmul.f32 %v5022, 0.5
        %v5783 = vmul.f32 %v5213, 0.5
        %v5784 = vmul.f32 %v5215, 0.5
        %v5785 = vmul.f32 %v5406, 0.5
        %v5786 = vmul.f32 %v5408, 0.5
        %v5787 = vmul.f32 %v5571, 0.5
        %v5788 = vmul.f32 %v5024, 0.5
        %v5789 = vmul.f32 %v5026, 0.5
        %v5790 = vmul.f32 %v5217, 0.5
        %v5791 = vmul.f32 %v5219, 0.5
        %v5792 = vmul.f32 %v5410, 0.5
        %v5793 = vmul.f32 %v5412, 0.5
        %v5794 = vmul.f32 %v5574, 0.5
        %v5795 = vmul.f32 %v5030, 0.5
        %v5796 = vmul.f32 %v5032, 0.5
        %v5797 = vmul.f32 %v5223, 0.5
        %v5798 = vmul.f32 %v5225, 0.5
        %v5799 = vmul.f32 %v5416, 0.5
        %v5800 = vmul.f32 %v5418, 0.5
        %v5801 = vmul.f32 %v5579, 0.5
        %v5802 = vmul.f32 %v5034, 0.5
        %v5803 = vmul.f32 %v5036, 0.5
        %v5804 = vmul.f32 %v5227, 0.5
        %v5805 = vmul.f32 %v5229, 0.5
        %v5806 = vmul.f32 %v5420, 0.5
        %v5807 = vmul.f32 %v5422, 0.5
        %v5808 = vmul.f32 %v5582, 0.5
        %v5809 = vtanh.pop %v5585
        %v5810 = vtanh.pop %v5586
        %v5811 = vtanh.pop %v5587
        %v5812 = vtanh.pop %v5588
        %v5813 = vtanh.pop %v5589
        %v5814 = vtanh.pop %v5590
        %v5815 = vtanh.pop %v5591
        %v5816 = vtanh.pop %v5592
        %v5817 = vtanh.pop %v5593
        %v5818 = vtanh.pop %v5594
        %v5819 = vtanh.pop %v5595
        %v5820 = vtanh.pop %v5596
        %v5821 = vtanh.pop %v5597
        %v5822 = vtanh.pop %v5598
        %v5823 = vtanh.pop %v5599
        %v5824 = vtanh.pop %v5600
        %v5825 = vtanh.pop %v5601
        %v5826 = vtanh.pop %v5602
        %v5827 = vtanh.pop %v5603
        %v5828 = vtanh.pop %v5604
        %v5829 = vtanh.pop %v5605
        %v5830 = vtanh.pop %v5606
        %v5831 = vtanh.pop %v5607
        %v5832 = vtanh.pop %v5608
        %v5833 = vtanh.pop %v5609
        %v5834 = vtanh.pop %v5610
        %v5835 = vtanh.pop %v5611
        %v5836 = vtanh.pop %v5612
        %v5837 = vtanh.pop %v5613
        %v5838 = vtanh.pop %v5614
        %v5839 = vtanh.pop %v5615
        %v5840 = vtanh.pop %v5616
        %v5841 = vtanh.pop %v5617
        %v5842 = vtanh.pop %v5618
        %v5843 = vtanh.pop %v5619
        %v5844 = vtanh.pop %v5620
        %v5845 = vtanh.pop %v5621
        %v5846 = vtanh.pop %v5622
        %v5847 = vtanh.pop %v5623
        %v5848 = vtanh.pop %v5624
        %v5849 = vtanh.pop %v5625
        %v5850 = vtanh.pop %v5626
        %v5851 = vtanh.pop %v5627
        %v5852 = vtanh.pop %v5628
        %v5853 = vtanh.pop %v5629
        %v5854 = vtanh.pop %v5630
        %v5855 = vtanh.pop %v5631
        %v5856 = vtanh.pop %v5632
        %v5857 = vtanh.pop %v5633
        %v5858 = vtanh.pop %v5634
        %v5859 = vtanh.pop %v5635
        %v5860 = vtanh.pop %v5636
        %v5861 = vtanh.pop %v5637
        %v5862 = vtanh.pop %v5638
        %v5863 = vtanh.pop %v5639
        %v5864 = vtanh.pop %v5640
        %v5865 = vtanh.pop %v5641
        %v5866 = vtanh.pop %v5642
        %v5867 = vtanh.pop %v5643
        %v5868 = vtanh.pop %v5644
        %v5869 = vtanh.pop %v5645
        %v5870 = vtanh.pop %v5646
        %v5871 = vtanh.pop %v5647
        %v5872 = vtanh.pop %v5648
        %v5873 = vtanh.pop %v5649
        %v5874 = vtanh.pop %v5650
        %v5875 = vtanh.pop %v5651
        %v5876 = vtanh.pop %v5652
        %v5877 = vtanh.pop %v5653
        %v5878 = vtanh.pop %v5654
        %v5879 = vtanh.pop %v5655
        %v5880 = vtanh.pop %v5656
        %v5881 = vtanh.pop %v5657
        %v5882 = vtanh.pop %v5658
        %v5883 = vtanh.pop %v5659
        %v5884 = vtanh.pop %v5660
        %v5885 = vtanh.pop %v5661
        %v5886 = vtanh.pop %v5662
        %v5887 = vtanh.pop %v5663
        %v5888 = vtanh.pop %v5664
        %v5889 = vtanh.pop %v5665
        %v5890 = vtanh.pop %v5666
        %v5891 = vtanh.pop %v5667
        %v5892 = vtanh.pop %v5668
        %v5893 = vtanh.pop %v5669
        %v5894 = vtanh.pop %v5670
        %v5895 = vtanh.pop %v5671
        %v5896 = vtanh.pop %v5672
        %v5897 = vtanh.pop %v5673
        %v5898 = vtanh.pop %v5674
        %v5899 = vtanh.pop %v5675
        %v5900 = vtanh.pop %v5676
        %v5901 = vtanh.pop %v5677
        %v5902 = vtanh.pop %v5678
        %v5903 = vtanh.pop %v5679
        %v5904 = vtanh.pop %v5680
        %v5905 = vtanh.pop %v5681
        %v5906 = vtanh.pop %v5682
        %v5907 = vtanh.pop %v5683
        %v5908 = vtanh.pop %v5684
        %v5909 = vtanh.pop %v5685
        %v5910 = vtanh.pop %v5686
        %v5911 = vtanh.pop %v5687
        %v5912 = vtanh.pop %v5688
        %v5913 = vtanh.pop %v5689
        %v5914 = vtanh.pop %v5690
        %v5915 = vtanh.pop %v5691
        %v5916 = vtanh.pop %v5692
        %v5917 = vtanh.pop %v5693
        %v5918 = vtanh.pop %v5694
        %v5919 = vtanh.pop %v5695
        %v5920 = vtanh.pop %v5696
        %v5921 = vtanh.pop %v5697
        %v5922 = vtanh.pop %v5698
        %v5923 = vtanh.pop %v5699
        %v5924 = vtanh.pop %v5700
        %v5925 = vtanh.pop %v5701
        %v5926 = vtanh.pop %v5702
        %v5927 = vtanh.pop %v5703
        %v5928 = vtanh.pop %v5704
        %v5929 = vtanh.pop %v5705
        %v5930 = vtanh.pop %v5706
        %v5931 = vtanh.pop %v5707
        %v5932 = vtanh.pop %v5708
        %v5933 = vtanh.pop %v5709
        %v5934 = vtanh.pop %v5710
        %v5935 = vtanh.pop %v5711
        %v5936 = vtanh.pop %v5712
        %v5937 = vtanh.pop %v5713
        %v5938 = vtanh.pop %v5714
        %v5939 = vtanh.pop %v5715
        %v5940 = vtanh.pop %v5716
        %v5941 = vtanh.pop %v5717
        %v5942 = vtanh.pop %v5718
        %v5943 = vtanh.pop %v5719
        %v5944 = vtanh.pop %v5720
        %v5945 = vtanh.pop %v5721
        %v5946 = vtanh.pop %v5722
        %v5947 = vtanh.pop %v5723
        %v5948 = vtanh.pop %v5724
        %v5949 = vtanh.pop %v5725
        %v5950 = vtanh.pop %v5726
        %v5951 = vtanh.pop %v5727
        %v5952 = vtanh.pop %v5728
        %v5953 = vtanh.pop %v5729
        %v5954 = vtanh.pop %v5730
        %v5955 = vtanh.pop %v5731
        %v5956 = vtanh.pop %v5732
        %v5957 = vtanh.pop %v5733
        %v5958 = vtanh.pop %v5734
        %v5959 = vtanh.pop %v5735
        %v5960 = vtanh.pop %v5736
        %v5961 = vtanh.pop %v5737
        %v5962 = vtanh.pop %v5738
        %v5963 = vtanh.pop %v5739
        %v5964 = vtanh.pop %v5740
        %v5965 = vtanh.pop %v5741
        %v5966 = vtanh.pop %v5742
        %v5967 = vtanh.pop %v5743
        %v5968 = vtanh.pop %v5744
        %v5969 = vtanh.pop %v5745
        %v5970 = vtanh.pop %v5746
        %v5971 = vtanh.pop %v5747
        %v5972 = vtanh.pop %v5748
        %v5973 = vtanh.pop %v5749
        %v5974 = vtanh.pop %v5750
        %v5975 = vtanh.pop %v5751
        %v5976 = vtanh.pop %v5752
        %v5977 = vtanh.pop %v5753
        %v5978 = vtanh.pop %v5754
        %v5979 = vtanh.pop %v5755
        %v5980 = vtanh.pop %v5756
        %v5981 = vtanh.pop %v5757
        %v5982 = vtanh.pop %v5758
        %v5983 = vtanh.pop %v5759
        %v5984 = vtanh.pop %v5760
        %v5985 = vtanh.pop %v5761
        %v5986 = vtanh.pop %v5762
        %v5987 = vtanh.pop %v5763
        %v5988 = vtanh.pop %v5764
        %v5989 = vtanh.pop %v5765
        %v5990 = vtanh.pop %v5766
        %v5991 = vtanh.pop %v5767
        %v5992 = vtanh.pop %v5768
        %v5993 = vtanh.pop %v5769
        %v5994 = vtanh.pop %v5770
        %v5995 = vtanh.pop %v5771
        %v5996 = vtanh.pop %v5772
        %v5997 = vtanh.pop %v5773
        %v5998 = vtanh.pop %v5774
        %v5999 = vtanh.pop %v5775
        %v6000 = vtanh.pop %v5776
        %v6001 = vtanh.pop %v5777
        %v6002 = vtanh.pop %v5778
        %v6003 = vtanh.pop %v5779
        %v6004 = vtanh.pop %v5780
        %v6005 = vtanh.pop %v5781
        %v6006 = vtanh.pop %v5782
        %v6007 = vtanh.pop %v5783
        %v6008 = vtanh.pop %v5784
        %v6009 = vtanh.pop %v5785
        %v6010 = vtanh.pop %v5786
        %v6011 = vtanh.pop %v5787
        %v6012 = vtanh.pop %v5788
        %v6013 = vtanh.pop %v5789
        %v6014 = vtanh.pop %v5790
        %v6015 = vtanh.pop %v5791
        %v6016 = vtanh.pop %v5792
        %v6017 = vtanh.pop %v5793
        %v6018 = vtanh.pop %v5794
        %v6019 = vtanh.pop %v5795
        %v6020 = vtanh.pop %v5796
        %v6021 = vtanh.pop %v5797
        %v6022 = vtanh.pop %v5798
        %v6023 = vtanh.pop %v5799
        %v6024 = vtanh.pop %v5800
        %v6025 = vtanh.pop %v5801
        %v6026 = vtanh.pop %v5802
        %v6027 = vtanh.pop %v5803
        %v6028 = vtanh.pop %v5804
        %v6029 = vtanh.pop %v5805
        %v6030 = vtanh.pop %v5806
        %v6031 = vtanh.pop %v5807
        %v6032 = vtanh.pop %v5808
        %v6033 = vmul.f32 %v5809, 0.5
        %v6034 = vmul.f32 %v5810, 0.5
        %v6035 = vmul.f32 %v5811, 0.5
        %v6036 = vmul.f32 %v5812, 0.5
        %v6037 = vmul.f32 %v5813, 0.5
        %v6038 = vmul.f32 %v5814, 0.5
        %v6039 = vmul.f32 %v5815, 0.5
        %v6040 = vmul.f32 %v5816, 0.5
        %v6041 = vmul.f32 %v5817, 0.5
        %v6042 = vmul.f32 %v5818, 0.5
        %v6043 = vmul.f32 %v5819, 0.5
        %v6044 = vmul.f32 %v5820, 0.5
        %v6045 = vmul.f32 %v5821, 0.5
        %v6046 = vmul.f32 %v5822, 0.5
        %v6047 = vmul.f32 %v5823, 0.5
        %v6048 = vmul.f32 %v5824, 0.5
        %v6049 = vmul.f32 %v5825, 0.5
        %v6050 = vmul.f32 %v5826, 0.5
        %v6051 = vmul.f32 %v5827, 0.5
        %v6052 = vmul.f32 %v5828, 0.5
        %v6053 = vmul.f32 %v5829, 0.5
        %v6054 = vmul.f32 %v5830, 0.5
        %v6055 = vmul.f32 %v5831, 0.5
        %v6056 = vmul.f32 %v5832, 0.5
        %v6057 = vmul.f32 %v5833, 0.5
        %v6058 = vmul.f32 %v5834, 0.5
        %v6059 = vmul.f32 %v5835, 0.5
        %v6060 = vmul.f32 %v5836, 0.5
        %v6061 = vmul.f32 %v5837, 0.5
        %v6062 = vmul.f32 %v5838, 0.5
        %v6063 = vmul.f32 %v5839, 0.5
        %v6064 = vmul.f32 %v5840, 0.5
        %v6065 = vmul.f32 %v5841, 0.5
        %v6066 = vmul.f32 %v5842, 0.5
        %v6067 = vmul.f32 %v5843, 0.5
        %v6068 = vmul.f32 %v5844, 0.5
        %v6069 = vmul.f32 %v5845, 0.5
        %v6070 = vmul.f32 %v5846, 0.5
        %v6071 = vmul.f32 %v5847, 0.5
        %v6072 = vmul.f32 %v5848, 0.5
        %v6073 = vmul.f32 %v5849, 0.5
        %v6074 = vmul.f32 %v5850, 0.5
        %v6075 = vmul.f32 %v5851, 0.5
        %v6076 = vmul.f32 %v5852, 0.5
        %v6077 = vmul.f32 %v5853, 0.5
        %v6078 = vmul.f32 %v5854, 0.5
        %v6079 = vmul.f32 %v5855, 0.5
        %v6080 = vmul.f32 %v5856, 0.5
        %v6081 = vmul.f32 %v5857, 0.5
        %v6082 = vmul.f32 %v5858, 0.5
        %v6083 = vmul.f32 %v5859, 0.5
        %v6084 = vmul.f32 %v5860, 0.5
        %v6085 = vmul.f32 %v5861, 0.5
        %v6086 = vmul.f32 %v5862, 0.5
        %v6087 = vmul.f32 %v5863, 0.5
        %v6088 = vmul.f32 %v5864, 0.5
        %v6089 = vmul.f32 %v5865, 0.5
        %v6090 = vmul.f32 %v5866, 0.5
        %v6091 = vmul.f32 %v5867, 0.5
        %v6092 = vmul.f32 %v5868, 0.5
        %v6093 = vmul.f32 %v5869, 0.5
        %v6094 = vmul.f32 %v5870, 0.5
        %v6095 = vmul.f32 %v5871, 0.5
        %v6096 = vmul.f32 %v5872, 0.5
        %v6097 = vmul.f32 %v5873, 0.5
        %v6098 = vmul.f32 %v5874, 0.5
        %v6099 = vmul.f32 %v5875, 0.5
        %v6100 = vmul.f32 %v5876, 0.5
        %v6101 = vmul.f32 %v5877, 0.5
        %v6102 = vmul.f32 %v5878, 0.5
        %v6103 = vmul.f32 %v5879, 0.5
        %v6104 = vmul.f32 %v5880, 0.5
        %v6105 = vmul.f32 %v5881, 0.5
        %v6106 = vmul.f32 %v5882, 0.5
        %v6107 = vmul.f32 %v5883, 0.5
        %v6108 = vmul.f32 %v5884, 0.5
        %v6109 = vmul.f32 %v5885, 0.5
        %v6110 = vmul.f32 %v5886, 0.5
        %v6111 = vmul.f32 %v5887, 0.5
        %v6112 = vmul.f32 %v5888, 0.5
        %v6113 = vmul.f32 %v5889, 0.5
        %v6114 = vmul.f32 %v5890, 0.5
        %v6115 = vmul.f32 %v5891, 0.5
        %v6116 = vmul.f32 %v5892, 0.5
        %v6117 = vmul.f32 %v5893, 0.5
        %v6118 = vmul.f32 %v5894, 0.5
        %v6119 = vmul.f32 %v5895, 0.5
        %v6120 = vmul.f32 %v5896, 0.5
        %v6121 = vmul.f32 %v5897, 0.5
        %v6122 = vmul.f32 %v5898, 0.5
        %v6123 = vmul.f32 %v5899, 0.5
        %v6124 = vmul.f32 %v5900, 0.5
        %v6125 = vmul.f32 %v5901, 0.5
        %v6126 = vmul.f32 %v5902, 0.5
        %v6127 = vmul.f32 %v5903, 0.5
        %v6128 = vmul.f32 %v5904, 0.5
        %v6129 = vmul.f32 %v5905, 0.5
        %v6130 = vmul.f32 %v5906, 0.5
        %v6131 = vmul.f32 %v5907, 0.5
        %v6132 = vmul.f32 %v5908, 0.5
        %v6133 = vmul.f32 %v5909, 0.5
        %v6134 = vmul.f32 %v5910, 0.5
        %v6135 = vmul.f32 %v5911, 0.5
        %v6136 = vmul.f32 %v5912, 0.5
        %v6137 = vmul.f32 %v5913, 0.5
        %v6138 = vmul.f32 %v5914, 0.5
        %v6139 = vmul.f32 %v5915, 0.5
        %v6140 = vmul.f32 %v5916, 0.5
        %v6141 = vmul.f32 %v5917, 0.5
        %v6142 = vmul.f32 %v5918, 0.5
        %v6143 = vmul.f32 %v5919, 0.5
        %v6144 = vmul.f32 %v5920, 0.5
        %v6145 = vmul.f32 %v5921, 0.5
        %v6146 = vmul.f32 %v5922, 0.5
        %v6147 = vmul.f32 %v5923, 0.5
        %v6148 = vmul.f32 %v5924, 0.5
        %v6149 = vmul.f32 %v5925, 0.5
        %v6150 = vmul.f32 %v5926, 0.5
        %v6151 = vmul.f32 %v5927, 0.5
        %v6152 = vmul.f32 %v5928, 0.5
        %v6153 = vmul.f32 %v5929, 0.5
        %v6154 = vmul.f32 %v5930, 0.5
        %v6155 = vmul.f32 %v5931, 0.5
        %v6156 = vmul.f32 %v5932, 0.5
        %v6157 = vmul.f32 %v5933, 0.5
        %v6158 = vmul.f32 %v5934, 0.5
        %v6159 = vmul.f32 %v5935, 0.5
        %v6160 = vmul.f32 %v5936, 0.5
        %v6161 = vmul.f32 %v5937, 0.5
        %v6162 = vmul.f32 %v5938, 0.5
        %v6163 = vmul.f32 %v5939, 0.5
        %v6164 = vmul.f32 %v5940, 0.5
        %v6165 = vmul.f32 %v5941, 0.5
        %v6166 = vmul.f32 %v5942, 0.5
        %v6167 = vmul.f32 %v5943, 0.5
        %v6168 = vmul.f32 %v5944, 0.5
        %v6169 = vmul.f32 %v5945, 0.5
        %v6170 = vmul.f32 %v5946, 0.5
        %v6171 = vmul.f32 %v5947, 0.5
        %v6172 = vmul.f32 %v5948, 0.5
        %v6173 = vmul.f32 %v5949, 0.5
        %v6174 = vmul.f32 %v5950, 0.5
        %v6175 = vmul.f32 %v5951, 0.5
        %v6176 = vmul.f32 %v5952, 0.5
        %v6177 = vmul.f32 %v5953, 0.5
        %v6178 = vmul.f32 %v5954, 0.5
        %v6179 = vmul.f32 %v5955, 0.5
        %v6180 = vmul.f32 %v5956, 0.5
        %v6181 = vmul.f32 %v5957, 0.5
        %v6182 = vmul.f32 %v5958, 0.5
        %v6183 = vmul.f32 %v5959, 0.5
        %v6184 = vmul.f32 %v5960, 0.5
        %v6185 = vmul.f32 %v5961, 0.5
        %v6186 = vmul.f32 %v5962, 0.5
        %v6187 = vmul.f32 %v5963, 0.5
        %v6188 = vmul.f32 %v5964, 0.5
        %v6189 = vmul.f32 %v5965, 0.5
        %v6190 = vmul.f32 %v5966, 0.5
        %v6191 = vmul.f32 %v5967, 0.5
        %v6192 = vmul.f32 %v5968, 0.5
        %v6193 = vmul.f32 %v5969, 0.5
        %v6194 = vmul.f32 %v5970, 0.5
        %v6195 = vmul.f32 %v5971, 0.5
        %v6196 = vmul.f32 %v5972, 0.5
        %v6197 = vmul.f32 %v5973, 0.5
        %v6198 = vmul.f32 %v5974, 0.5
        %v6199 = vmul.f32 %v5975, 0.5
        %v6200 = vmul.f32 %v5976, 0.5
        %v6201 = vmul.f32 %v5977, 0.5
        %v6202 = vmul.f32 %v5978, 0.5
        %v6203 = vmul.f32 %v5979, 0.5
        %v6204 = vmul.f32 %v5980, 0.5
        %v6205 = vmul.f32 %v5981, 0.5
        %v6206 = vmul.f32 %v5982, 0.5
        %v6207 = vmul.f32 %v5983, 0.5
        %v6208 = vmul.f32 %v5984, 0.5
        %v6209 = vmul.f32 %v5985, 0.5
        %v6210 = vmul.f32 %v5986, 0.5
        %v6211 = vmul.f32 %v5987, 0.5
        %v6212 = vmul.f32 %v5988, 0.5
        %v6213 = vmul.f32 %v5989, 0.5
        %v6214 = vmul.f32 %v5990, 0.5
        %v6215 = vmul.f32 %v5991, 0.5
        %v6216 = vmul.f32 %v5992, 0.5
        %v6217 = vmul.f32 %v5993, 0.5
        %v6218 = vmul.f32 %v5994, 0.5
        %v6219 = vmul.f32 %v5995, 0.5
        %v6220 = vmul.f32 %v5996, 0.5
        %v6221 = vmul.f32 %v5997, 0.5
        %v6222 = vmul.f32 %v5998, 0.5
        %v6223 = vmul.f32 %v5999, 0.5
        %v6224 = vmul.f32 %v6000, 0.5
        %v6225 = vmul.f32 %v6001, 0.5
        %v6226 = vmul.f32 %v6002, 0.5
        %v6227 = vmul.f32 %v6003, 0.5
        %v6228 = vmul.f32 %v6004, 0.5
        %v6229 = vmul.f32 %v6005, 0.5
        %v6230 = vmul.f32 %v6006, 0.5
        %v6231 = vmul.f32 %v6007, 0.5
        %v6232 = vmul.f32 %v6008, 0.5
        %v6233 = vmul.f32 %v6009, 0.5
        %v6234 = vmul.f32 %v6010, 0.5
        %v6235 = vmul.f32 %v6011, 0.5
        %v6236 = vmul.f32 %v6012, 0.5
        %v6237 = vmul.f32 %v6013, 0.5
        %v6238 = vmul.f32 %v6014, 0.5
        %v6239 = vmul.f32 %v6015, 0.5
        %v6240 = vmul.f32 %v6016, 0.5
        %v6241 = vmul.f32 %v6017, 0.5
        %v6242 = vmul.f32 %v6018, 0.5
        %v6243 = vmul.f32 %v6019, 0.5
        %v6244 = vmul.f32 %v6020, 0.5
        %v6245 = vmul.f32 %v6021, 0.5
        %v6246 = vmul.f32 %v6022, 0.5
        %v6247 = vmul.f32 %v6023, 0.5
        %v6248 = vmul.f32 %v6024, 0.5
        %v6249 = vmul.f32 %v6025, 0.5
        %v6250 = vmul.f32 %v6026, 0.5
        %v6251 = vmul.f32 %v6027, 0.5
        %v6252 = vmul.f32 %v6028, 0.5
        %v6253 = vmul.f32 %v6029, 0.5
        %v6254 = vmul.f32 %v6030, 0.5
        %v6255 = vmul.f32 %v6031, 0.5
        %v6256 = vmul.f32 %v6032, 0.5
        %v6257 = vadd.f32 %v6033, 0.5
        %v6258 = vadd.f32 %v6034, 0.5
        %v6259 = vadd.f32 %v6035, 0.5
        %v6260 = vadd.f32 %v6036, 0.5
        %v6261 = vadd.f32 %v6037, 0.5
        %v6262 = vadd.f32 %v6038, 0.5
        %v6263 = vadd.f32 %v6039, 0.5
        %v6264 = vadd.f32 %v6040, 0.5
        %v6265 = vadd.f32 %v6041, 0.5
        %v6266 = vadd.f32 %v6042, 0.5
        %v6267 = vadd.f32 %v6043, 0.5
        %v6268 = vadd.f32 %v6044, 0.5
        %v6269 = vadd.f32 %v6045, 0.5
        %v6270 = vadd.f32 %v6046, 0.5
        %v6271 = vadd.f32 %v6047, 0.5
        %v6272 = vadd.f32 %v6048, 0.5
        %v6273 = vadd.f32 %v6049, 0.5
        %v6274 = vadd.f32 %v6050, 0.5
        %v6275 = vadd.f32 %v6051, 0.5
        %v6276 = vadd.f32 %v6052, 0.5
        %v6277 = vadd.f32 %v6053, 0.5
        %v6278 = vadd.f32 %v6054, 0.5
        %v6279 = vadd.f32 %v6055, 0.5
        %v6280 = vadd.f32 %v6056, 0.5
        %v6281 = vadd.f32 %v6057, 0.5
        %v6282 = vadd.f32 %v6058, 0.5
        %v6283 = vadd.f32 %v6059, 0.5
        %v6284 = vadd.f32 %v6060, 0.5
        %v6285 = vadd.f32 %v6061, 0.5
        %v6286 = vadd.f32 %v6062, 0.5
        %v6287 = vadd.f32 %v6063, 0.5
        %v6288 = vadd.f32 %v6064, 0.5
        %v6289 = vadd.f32 %v6065, 0.5
        %v6290 = vadd.f32 %v6066, 0.5
        %v6291 = vadd.f32 %v6067, 0.5
        %v6292 = vadd.f32 %v6068, 0.5
        %v6293 = vadd.f32 %v6069, 0.5
        %v6294 = vadd.f32 %v6070, 0.5
        %v6295 = vadd.f32 %v6071, 0.5
        %v6296 = vadd.f32 %v6072, 0.5
        %v6297 = vadd.f32 %v6073, 0.5
        %v6298 = vadd.f32 %v6074, 0.5
        %v6299 = vadd.f32 %v6075, 0.5
        %v6300 = vadd.f32 %v6076, 0.5
        %v6301 = vadd.f32 %v6077, 0.5
        %v6302 = vadd.f32 %v6078, 0.5
        %v6303 = vadd.f32 %v6079, 0.5
        %v6304 = vadd.f32 %v6080, 0.5
        %v6305 = vadd.f32 %v6081, 0.5
        %v6306 = vadd.f32 %v6082, 0.5
        %v6307 = vadd.f32 %v6083, 0.5
        %v6308 = vadd.f32 %v6084, 0.5
        %v6309 = vadd.f32 %v6085, 0.5
        %v6310 = vadd.f32 %v6086, 0.5
        %v6311 = vadd.f32 %v6087, 0.5
        %v6312 = vadd.f32 %v6088, 0.5
        %v6313 = vadd.f32 %v6089, 0.5
        %v6314 = vadd.f32 %v6090, 0.5
        %v6315 = vadd.f32 %v6091, 0.5
        %v6316 = vadd.f32 %v6092, 0.5
        %v6317 = vadd.f32 %v6093, 0.5
        %v6318 = vadd.f32 %v6094, 0.5
        %v6319 = vadd.f32 %v6095, 0.5
        %v6320 = vadd.f32 %v6096, 0.5
        %v6321 = vadd.f32 %v6097, 0.5
        %v6322 = vadd.f32 %v6098, 0.5
        %v6323 = vadd.f32 %v6099, 0.5
        %v6324 = vadd.f32 %v6100, 0.5
        %v6325 = vadd.f32 %v6101, 0.5
        %v6326 = vadd.f32 %v6102, 0.5
        %v6327 = vadd.f32 %v6103, 0.5
        %v6328 = vadd.f32 %v6104, 0.5
        %v6329 = vadd.f32 %v6105, 0.5
        %v6330 = vadd.f32 %v6106, 0.5
        %v6331 = vadd.f32 %v6107, 0.5
        %v6332 = vadd.f32 %v6108, 0.5
        %v6333 = vadd.f32 %v6109, 0.5
        %v6334 = vadd.f32 %v6110, 0.5
        %v6335 = vadd.f32 %v6111, 0.5
        %v6336 = vadd.f32 %v6112, 0.5
        %v6337 = vadd.f32 %v6113, 0.5
        %v6338 = vadd.f32 %v6114, 0.5
        %v6339 = vadd.f32 %v6115, 0.5
        %v6340 = vadd.f32 %v6116, 0.5
        %v6341 = vadd.f32 %v6117, 0.5
        %v6342 = vadd.f32 %v6118, 0.5
        %v6343 = vadd.f32 %v6119, 0.5
        %v6344 = vadd.f32 %v6120, 0.5
        %v6345 = vadd.f32 %v6121, 0.5
        %v6346 = vadd.f32 %v6122, 0.5
        %v6347 = vadd.f32 %v6123, 0.5
        %v6348 = vadd.f32 %v6124, 0.5
        %v6349 = vadd.f32 %v6125, 0.5
        %v6350 = vadd.f32 %v6126, 0.5
        %v6351 = vadd.f32 %v6127, 0.5
        %v6352 = vadd.f32 %v6128, 0.5
        %v6353 = vadd.f32 %v6129, 0.5
        %v6354 = vadd.f32 %v6130, 0.5
        %v6355 = vadd.f32 %v6131, 0.5
        %v6356 = vadd.f32 %v6132, 0.5
        %v6357 = vadd.f32 %v6133, 0.5
        %v6358 = vadd.f32 %v6134, 0.5
        %v6359 = vadd.f32 %v6135, 0.5
        %v6360 = vadd.f32 %v6136, 0.5
        %v6361 = vadd.f32 %v6137, 0.5
        %v6362 = vadd.f32 %v6138, 0.5
        %v6363 = vadd.f32 %v6139, 0.5
        %v6364 = vadd.f32 %v6140, 0.5
        %v6365 = vadd.f32 %v6141, 0.5
        %v6366 = vadd.f32 %v6142, 0.5
        %v6367 = vadd.f32 %v6143, 0.5
        %v6368 = vadd.f32 %v6144, 0.5
        %v6369 = vadd.f32 %v6145, 0.5
        %v6370 = vadd.f32 %v6146, 0.5
        %v6371 = vadd.f32 %v6147, 0.5
        %v6372 = vadd.f32 %v6148, 0.5
        %v6373 = vadd.f32 %v6149, 0.5
        %v6374 = vadd.f32 %v6150, 0.5
        %v6375 = vadd.f32 %v6151, 0.5
        %v6376 = vadd.f32 %v6152, 0.5
        %v6377 = vadd.f32 %v6153, 0.5
        %v6378 = vadd.f32 %v6154, 0.5
        %v6379 = vadd.f32 %v6155, 0.5
        %v6380 = vadd.f32 %v6156, 0.5
        %v6381 = vadd.f32 %v6157, 0.5
        %v6382 = vadd.f32 %v6158, 0.5
        %v6383 = vadd.f32 %v6159, 0.5
        %v6384 = vadd.f32 %v6160, 0.5
        %v6385 = vadd.f32 %v6161, 0.5
        %v6386 = vadd.f32 %v6162, 0.5
        %v6387 = vadd.f32 %v6163, 0.5
        %v6388 = vadd.f32 %v6164, 0.5
        %v6389 = vadd.f32 %v6165, 0.5
        %v6390 = vadd.f32 %v6166, 0.5
        %v6391 = vadd.f32 %v6167, 0.5
        %v6392 = vadd.f32 %v6168, 0.5
        %v6393 = vadd.f32 %v6169, 0.5
        %v6394 = vadd.f32 %v6170, 0.5
        %v6395 = vadd.f32 %v6171, 0.5
        %v6396 = vadd.f32 %v6172, 0.5
        %v6397 = vadd.f32 %v6173, 0.5
        %v6398 = vadd.f32 %v6174, 0.5
        %v6399 = vadd.f32 %v6175, 0.5
        %v6400 = vadd.f32 %v6176, 0.5
        %v6401 = vadd.f32 %v6177, 0.5
        %v6402 = vadd.f32 %v6178, 0.5
        %v6403 = vadd.f32 %v6179, 0.5
        %v6404 = vadd.f32 %v6180, 0.5
        %v6405 = vadd.f32 %v6181, 0.5
        %v6406 = vadd.f32 %v6182, 0.5
        %v6407 = vadd.f32 %v6183, 0.5
        %v6408 = vadd.f32 %v6184, 0.5
        %v6409 = vadd.f32 %v6185, 0.5
        %v6410 = vadd.f32 %v6186, 0.5
        %v6411 = vadd.f32 %v6187, 0.5
        %v6412 = vadd.f32 %v6188, 0.5
        %v6413 = vadd.f32 %v6189, 0.5
        %v6414 = vadd.f32 %v6190, 0.5
        %v6415 = vadd.f32 %v6191, 0.5
        %v6416 = vadd.f32 %v6192, 0.5
        %v6417 = vadd.f32 %v6193, 0.5
        %v6418 = vadd.f32 %v6194, 0.5
        %v6419 = vadd.f32 %v6195, 0.5
        %v6420 = vadd.f32 %v6196, 0.5
        %v6421 = vadd.f32 %v6197, 0.5
        %v6422 = vadd.f32 %v6198, 0.5
        %v6423 = vadd.f32 %v6199, 0.5
        %v6424 = vadd.f32 %v6200, 0.5
        %v6425 = vadd.f32 %v6201, 0.5
        %v6426 = vadd.f32 %v6202, 0.5
        %v6427 = vadd.f32 %v6203, 0.5
        %v6428 = vadd.f32 %v6204, 0.5
        %v6429 = vadd.f32 %v6205, 0.5
        %v6430 = vadd.f32 %v6206, 0.5
        %v6431 = vadd.f32 %v6207, 0.5
        %v6432 = vadd.f32 %v6208, 0.5
        %v6433 = vadd.f32 %v6209, 0.5
        %v6434 = vadd.f32 %v6210, 0.5
        %v6435 = vadd.f32 %v6211, 0.5
        %v6436 = vadd.f32 %v6212, 0.5
        %v6437 = vadd.f32 %v6213, 0.5
        %v6438 = vadd.f32 %v6214, 0.5
        %v6439 = vadd.f32 %v6215, 0.5
        %v6440 = vadd.f32 %v6216, 0.5
        %v6441 = vadd.f32 %v6217, 0.5
        %v6442 = vadd.f32 %v6218, 0.5
        %v6443 = vadd.f32 %v6219, 0.5
        %v6444 = vadd.f32 %v6220, 0.5
        %v6445 = vadd.f32 %v6221, 0.5
        %v6446 = vadd.f32 %v6222, 0.5
        %v6447 = vadd.f32 %v6223, 0.5
        %v6448 = vadd.f32 %v6224, 0.5
        %v6449 = vadd.f32 %v6225, 0.5
        %v6450 = vadd.f32 %v6226, 0.5
        %v6451 = vadd.f32 %v6227, 0.5
        %v6452 = vadd.f32 %v6228, 0.5
        %v6453 = vadd.f32 %v6229, 0.5
        %v6454 = vadd.f32 %v6230, 0.5
        %v6455 = vadd.f32 %v6231, 0.5
        %v6456 = vadd.f32 %v6232, 0.5
        %v6457 = vadd.f32 %v6233, 0.5
        %v6458 = vadd.f32 %v6234, 0.5
        %v6459 = vadd.f32 %v6235, 0.5
        %v6460 = vadd.f32 %v6236, 0.5
        %v6461 = vadd.f32 %v6237, 0.5
        %v6462 = vadd.f32 %v6238, 0.5
        %v6463 = vadd.f32 %v6239, 0.5
        %v6464 = vadd.f32 %v6240, 0.5
        %v6465 = vadd.f32 %v6241, 0.5
        %v6466 = vadd.f32 %v6242, 0.5
        %v6467 = vadd.f32 %v6243, 0.5
        %v6468 = vadd.f32 %v6244, 0.5
        %v6469 = vadd.f32 %v6245, 0.5
        %v6470 = vadd.f32 %v6246, 0.5
        %v6471 = vadd.f32 %v6247, 0.5
        %v6472 = vadd.f32 %v6248, 0.5
        %v6473 = vadd.f32 %v6249, 0.5
        %v6474 = vadd.f32 %v6250, 0.5
        %v6475 = vadd.f32 %v6251, 0.5
        %v6476 = vadd.f32 %v6252, 0.5
        %v6477 = vadd.f32 %v6253, 0.5
        %v6478 = vadd.f32 %v6254, 0.5
        %v6479 = vadd.f32 %v6255, 0.5
        %v6480 = vadd.f32 %v6256, 0.5
        %v6481 = vpack.c.bf16 %v6264, %v6257
        %v6482 = vpack.c.bf16 %v6265, %v6258
        %v6483 = vpack.c.bf16 %v6266, %v6259
        %v6484 = vpack.c.bf16 %v6267, %v6260
        %v6485 = vpack.c.bf16 %v6268, %v6261
        %v6486 = vpack.c.bf16 %v6269, %v6262
        %v6487 = vpack.c.bf16 %v6270, %v6263
        %v6488 = vpack.c.bf16 %v6278, %v6271
        %v6489 = vpack.c.bf16 %v6279, %v6272
        %v6490 = vpack.c.bf16 %v6280, %v6273
        %v6491 = vpack.c.bf16 %v6281, %v6274
        %v6492 = vpack.c.bf16 %v6282, %v6275
        %v6493 = vpack.c.bf16 %v6283, %v6276
        %v6494 = vpack.c.bf16 %v6284, %v6277
        %v6495 = vpack.c.bf16 %v6292, %v6285
        %v6496 = vpack.c.bf16 %v6293, %v6286
        %v6497 = vpack.c.bf16 %v6294, %v6287
        %v6498 = vpack.c.bf16 %v6295, %v6288
        %v6499 = vpack.c.bf16 %v6296, %v6289
        %v6500 = vpack.c.bf16 %v6297, %v6290
        %v6501 = vpack.c.bf16 %v6298, %v6291
        %v6502 = vpack.c.bf16 %v6306, %v6299
        %v6503 = vpack.c.bf16 %v6307, %v6300
        %v6504 = vpack.c.bf16 %v6308, %v6301
        %v6505 = vpack.c.bf16 %v6309, %v6302
        %v6506 = vpack.c.bf16 %v6310, %v6303
        %v6507 = vpack.c.bf16 %v6311, %v6304
        %v6508 = vpack.c.bf16 %v6312, %v6305
        %v6509 = vpack.c.bf16 %v6320, %v6313
        %v6510 = vpack.c.bf16 %v6321, %v6314
        %v6511 = vpack.c.bf16 %v6322, %v6315
        %v6512 = vpack.c.bf16 %v6323, %v6316
        %v6513 = vpack.c.bf16 %v6324, %v6317
        %v6514 = vpack.c.bf16 %v6325, %v6318
        %v6515 = vpack.c.bf16 %v6326, %v6319
        %v6516 = vpack.c.bf16 %v6334, %v6327
        %v6517 = vpack.c.bf16 %v6335, %v6328
        %v6518 = vpack.c.bf16 %v6336, %v6329
        %v6519 = vpack.c.bf16 %v6337, %v6330
        %v6520 = vpack.c.bf16 %v6338, %v6331
        %v6521 = vpack.c.bf16 %v6339, %v6332
        %v6522 = vpack.c.bf16 %v6340, %v6333
        %v6523 = vpack.c.bf16 %v6348, %v6341
        %v6524 = vpack.c.bf16 %v6349, %v6342
        %v6525 = vpack.c.bf16 %v6350, %v6343
        %v6526 = vpack.c.bf16 %v6351, %v6344
        %v6527 = vpack.c.bf16 %v6352, %v6345
        %v6528 = vpack.c.bf16 %v6353, %v6346
        %v6529 = vpack.c.bf16 %v6354, %v6347
        %v6530 = vpack.c.bf16 %v6362, %v6355
        %v6531 = vpack.c.bf16 %v6363, %v6356
        %v6532 = vpack.c.bf16 %v6364, %v6357
        %v6533 = vpack.c.bf16 %v6365, %v6358
        %v6534 = vpack.c.bf16 %v6366, %v6359
        %v6535 = vpack.c.bf16 %v6367, %v6360
        %v6536 = vpack.c.bf16 %v6368, %v6361
        %v6537 = vpack.c.bf16 %v6376, %v6369
        %v6538 = vpack.c.bf16 %v6377, %v6370
        %v6539 = vpack.c.bf16 %v6378, %v6371
        %v6540 = vpack.c.bf16 %v6379, %v6372
        %v6541 = vpack.c.bf16 %v6380, %v6373
        %v6542 = vpack.c.bf16 %v6381, %v6374
        %v6543 = vpack.c.bf16 %v6382, %v6375
        %v6544 = vpack.c.bf16 %v6390, %v6383
        %v6545 = vpack.c.bf16 %v6391, %v6384
        %v6546 = vpack.c.bf16 %v6392, %v6385
        %v6547 = vpack.c.bf16 %v6393, %v6386
        %v6548 = vpack.c.bf16 %v6394, %v6387
        %v6549 = vpack.c.bf16 %v6395, %v6388
        %v6550 = vpack.c.bf16 %v6396, %v6389
        %v6551 = vpack.c.bf16 %v6404, %v6397
        %v6552 = vpack.c.bf16 %v6405, %v6398
        %v6553 = vpack.c.bf16 %v6406, %v6399
        %v6554 = vpack.c.bf16 %v6407, %v6400
        %v6555 = vpack.c.bf16 %v6408, %v6401
        %v6556 = vpack.c.bf16 %v6409, %v6402
        %v6557 = vpack.c.bf16 %v6410, %v6403
        %v6558 = vpack.c.bf16 %v6418, %v6411
        %v6559 = vpack.c.bf16 %v6419, %v6412
        %v6560 = vpack.c.bf16 %v6420, %v6413
        %v6561 = vpack.c.bf16 %v6421, %v6414
        %v6562 = vpack.c.bf16 %v6422, %v6415
        %v6563 = vpack.c.bf16 %v6423, %v6416
        %v6564 = vpack.c.bf16 %v6424, %v6417
        %v6565 = vpack.c.bf16 %v6432, %v6425
        %v6566 = vpack.c.bf16 %v6433, %v6426
        %v6567 = vpack.c.bf16 %v6434, %v6427
        %v6568 = vpack.c.bf16 %v6435, %v6428
        %v6569 = vpack.c.bf16 %v6436, %v6429
        %v6570 = vpack.c.bf16 %v6437, %v6430
        %v6571 = vpack.c.bf16 %v6438, %v6431
        %v6572 = vpack.c.bf16 %v6446, %v6439
        %v6573 = vpack.c.bf16 %v6447, %v6440
        %v6574 = vpack.c.bf16 %v6448, %v6441
        %v6575 = vpack.c.bf16 %v6449, %v6442
        %v6576 = vpack.c.bf16 %v6450, %v6443
        %v6577 = vpack.c.bf16 %v6451, %v6444
        %v6578 = vpack.c.bf16 %v6452, %v6445
        %v6579 = vpack.c.bf16 %v6460, %v6453
        %v6580 = vpack.c.bf16 %v6461, %v6454
        %v6581 = vpack.c.bf16 %v6462, %v6455
        %v6582 = vpack.c.bf16 %v6463, %v6456
        %v6583 = vpack.c.bf16 %v6464, %v6457
        %v6584 = vpack.c.bf16 %v6465, %v6458
        %v6585 = vpack.c.bf16 %v6466, %v6459
        %v6586 = vpack.c.bf16 %v6474, %v6467
        %v6587 = vpack.c.bf16 %v6475, %v6468
        %v6588 = vpack.c.bf16 %v6476, %v6469
        %v6589 = vpack.c.bf16 %v6477, %v6470
        %v6590 = vpack.c.bf16 %v6478, %v6471
        %v6591 = vpack.c.bf16 %v6479, %v6472
        %v6592 = vpack.c.bf16 %v6480, %v6473
        %v6705 = vunpack.c.l.b16 %v6481
        %v6706 = vunpack.c.l.b16 %v6482
        %v6707 = vunpack.c.l.b16 %v6483
        %v6708 = vunpack.c.l.b16 %v6484
        %v6709 = vunpack.c.l.b16 %v6485
        %v6710 = vunpack.c.l.b16 %v6486
        %v6711 = vunpack.c.l.b16 %v6487
        %v6712 = vunpack.c.h.b16 %v6481
        %v6713 = vunpack.c.h.b16 %v6482
        %v6714 = vunpack.c.h.b16 %v6483
        %v6715 = vunpack.c.h.b16 %v6484
        %v6716 = vunpack.c.h.b16 %v6485
        %v6717 = vunpack.c.h.b16 %v6486
        %v6718 = vunpack.c.h.b16 %v6487
        %v6719 = vunpack.c.l.b16 %v6488
        %v6720 = vunpack.c.l.b16 %v6489
        %v6721 = vunpack.c.l.b16 %v6490
        %v6722 = vunpack.c.l.b16 %v6491
        %v6723 = vunpack.c.l.b16 %v6492
        %v6724 = vunpack.c.l.b16 %v6493
        %v6725 = vunpack.c.l.b16 %v6494
        %v6726 = vunpack.c.h.b16 %v6488
        %v6727 = vunpack.c.h.b16 %v6489
        %v6728 = vunpack.c.h.b16 %v6490
        %v6729 = vunpack.c.h.b16 %v6491
        %v6730 = vunpack.c.h.b16 %v6492
        %v6731 = vunpack.c.h.b16 %v6493
        %v6732 = vunpack.c.h.b16 %v6494
        %v6733 = vunpack.c.l.b16 %v6495
        %v6734 = vunpack.c.l.b16 %v6496
        %v6735 = vunpack.c.l.b16 %v6497
        %v6736 = vunpack.c.l.b16 %v6498
        %v6737 = vunpack.c.l.b16 %v6499
        %v6738 = vunpack.c.l.b16 %v6500
        %v6739 = vunpack.c.l.b16 %v6501
        %v6740 = vunpack.c.h.b16 %v6495
        %v6741 = vunpack.c.h.b16 %v6496
        %v6742 = vunpack.c.h.b16 %v6497
        %v6743 = vunpack.c.h.b16 %v6498
        %v6744 = vunpack.c.h.b16 %v6499
        %v6745 = vunpack.c.h.b16 %v6500
        %v6746 = vunpack.c.h.b16 %v6501
        %v6747 = vunpack.c.l.b16 %v6502
        %v6748 = vunpack.c.l.b16 %v6503
        %v6749 = vunpack.c.l.b16 %v6504
        %v6750 = vunpack.c.l.b16 %v6505
        %v6751 = vunpack.c.l.b16 %v6506
        %v6752 = vunpack.c.l.b16 %v6507
        %v6753 = vunpack.c.l.b16 %v6508
        %v6754 = vunpack.c.h.b16 %v6502
        %v6755 = vunpack.c.h.b16 %v6503
        %v6756 = vunpack.c.h.b16 %v6504
        %v6757 = vunpack.c.h.b16 %v6505
        %v6758 = vunpack.c.h.b16 %v6506
        %v6759 = vunpack.c.h.b16 %v6507
        %v6760 = vunpack.c.h.b16 %v6508
        %v6761 = vunpack.c.l.b16 %v6509
        %v6762 = vunpack.c.l.b16 %v6510
        %v6763 = vunpack.c.l.b16 %v6511
        %v6764 = vunpack.c.l.b16 %v6512
        %v6765 = vunpack.c.l.b16 %v6513
        %v6766 = vunpack.c.l.b16 %v6514
        %v6767 = vunpack.c.l.b16 %v6515
        %v6768 = vunpack.c.h.b16 %v6509
        %v6769 = vunpack.c.h.b16 %v6510
        %v6770 = vunpack.c.h.b16 %v6511
        %v6771 = vunpack.c.h.b16 %v6512
        %v6772 = vunpack.c.h.b16 %v6513
        %v6773 = vunpack.c.h.b16 %v6514
        %v6774 = vunpack.c.h.b16 %v6515
        %v6775 = vunpack.c.l.b16 %v6516
        %v6776 = vunpack.c.l.b16 %v6517
        %v6777 = vunpack.c.l.b16 %v6518
        %v6778 = vunpack.c.l.b16 %v6519
        %v6779 = vunpack.c.l.b16 %v6520
        %v6780 = vunpack.c.l.b16 %v6521
        %v6781 = vunpack.c.l.b16 %v6522
        %v6782 = vunpack.c.h.b16 %v6516
        %v6783 = vunpack.c.h.b16 %v6517
        %v6784 = vunpack.c.h.b16 %v6518
        %v6785 = vunpack.c.h.b16 %v6519
        %v6786 = vunpack.c.h.b16 %v6520
        %v6787 = vunpack.c.h.b16 %v6521
        %v6788 = vunpack.c.h.b16 %v6522
        %v6789 = vunpack.c.l.b16 %v6523
        %v6790 = vunpack.c.l.b16 %v6524
        %v6791 = vunpack.c.l.b16 %v6525
        %v6792 = vunpack.c.l.b16 %v6526
        %v6793 = vunpack.c.l.b16 %v6527
        %v6794 = vunpack.c.l.b16 %v6528
        %v6795 = vunpack.c.l.b16 %v6529
        %v6796 = vunpack.c.h.b16 %v6523
        %v6797 = vunpack.c.h.b16 %v6524
        %v6798 = vunpack.c.h.b16 %v6525
        %v6799 = vunpack.c.h.b16 %v6526
        %v6800 = vunpack.c.h.b16 %v6527
        %v6801 = vunpack.c.h.b16 %v6528
        %v6802 = vunpack.c.h.b16 %v6529
        %v6803 = vunpack.c.l.b16 %v6530
        %v6804 = vunpack.c.l.b16 %v6531
        %v6805 = vunpack.c.l.b16 %v6532
        %v6806 = vunpack.c.l.b16 %v6533
        %v6807 = vunpack.c.l.b16 %v6534
        %v6808 = vunpack.c.l.b16 %v6535
        %v6809 = vunpack.c.l.b16 %v6536
        %v6810 = vunpack.c.h.b16 %v6530
        %v6811 = vunpack.c.h.b16 %v6531
        %v6812 = vunpack.c.h.b16 %v6532
        %v6813 = vunpack.c.h.b16 %v6533
        %v6814 = vunpack.c.h.b16 %v6534
        %v6815 = vunpack.c.h.b16 %v6535
        %v6816 = vunpack.c.h.b16 %v6536
        %v6817 = vunpack.c.l.b16 %v6537
        %v6818 = vunpack.c.l.b16 %v6538
        %v6819 = vunpack.c.l.b16 %v6539
        %v6820 = vunpack.c.l.b16 %v6540
        %v6821 = vunpack.c.l.b16 %v6541
        %v6822 = vunpack.c.l.b16 %v6542
        %v6823 = vunpack.c.l.b16 %v6543
        %v6824 = vunpack.c.h.b16 %v6537
        %v6825 = vunpack.c.h.b16 %v6538
        %v6826 = vunpack.c.h.b16 %v6539
        %v6827 = vunpack.c.h.b16 %v6540
        %v6828 = vunpack.c.h.b16 %v6541
        %v6829 = vunpack.c.h.b16 %v6542
        %v6830 = vunpack.c.h.b16 %v6543
        %v6831 = vunpack.c.l.b16 %v6544
        %v6832 = vunpack.c.l.b16 %v6545
        %v6833 = vunpack.c.l.b16 %v6546
        %v6834 = vunpack.c.l.b16 %v6547
        %v6835 = vunpack.c.l.b16 %v6548
        %v6836 = vunpack.c.l.b16 %v6549
        %v6837 = vunpack.c.l.b16 %v6550
        %v6838 = vunpack.c.h.b16 %v6544
        %v6839 = vunpack.c.h.b16 %v6545
        %v6840 = vunpack.c.h.b16 %v6546
        %v6841 = vunpack.c.h.b16 %v6547
        %v6842 = vunpack.c.h.b16 %v6548
        %v6843 = vunpack.c.h.b16 %v6549
        %v6844 = vunpack.c.h.b16 %v6550
        %v6845 = vunpack.c.l.b16 %v6551
        %v6846 = vunpack.c.l.b16 %v6552
        %v6847 = vunpack.c.l.b16 %v6553
        %v6848 = vunpack.c.l.b16 %v6554
        %v6849 = vunpack.c.l.b16 %v6555
        %v6850 = vunpack.c.l.b16 %v6556
        %v6851 = vunpack.c.l.b16 %v6557
        %v6852 = vunpack.c.h.b16 %v6551
        %v6853 = vunpack.c.h.b16 %v6552
        %v6854 = vunpack.c.h.b16 %v6553
        %v6855 = vunpack.c.h.b16 %v6554
        %v6856 = vunpack.c.h.b16 %v6555
        %v6857 = vunpack.c.h.b16 %v6556
        %v6858 = vunpack.c.h.b16 %v6557
        %v6859 = vunpack.c.l.b16 %v6558
        %v6860 = vunpack.c.l.b16 %v6559
        %v6861 = vunpack.c.l.b16 %v6560
        %v6862 = vunpack.c.l.b16 %v6561
        %v6863 = vunpack.c.l.b16 %v6562
        %v6864 = vunpack.c.l.b16 %v6563
        %v6865 = vunpack.c.l.b16 %v6564
        %v6866 = vunpack.c.h.b16 %v6558
        %v6867 = vunpack.c.h.b16 %v6559
        %v6868 = vunpack.c.h.b16 %v6560
        %v6869 = vunpack.c.h.b16 %v6561
        %v6870 = vunpack.c.h.b16 %v6562
        %v6871 = vunpack.c.h.b16 %v6563
        %v6872 = vunpack.c.h.b16 %v6564
        %v6873 = vunpack.c.l.b16 %v6565
        %v6874 = vunpack.c.l.b16 %v6566
        %v6875 = vunpack.c.l.b16 %v6567
        %v6876 = vunpack.c.l.b16 %v6568
        %v6877 = vunpack.c.l.b16 %v6569
        %v6878 = vunpack.c.l.b16 %v6570
        %v6879 = vunpack.c.l.b16 %v6571
        %v6880 = vunpack.c.h.b16 %v6565
        %v6881 = vunpack.c.h.b16 %v6566
        %v6882 = vunpack.c.h.b16 %v6567
        %v6883 = vunpack.c.h.b16 %v6568
        %v6884 = vunpack.c.h.b16 %v6569
        %v6885 = vunpack.c.h.b16 %v6570
        %v6886 = vunpack.c.h.b16 %v6571
        %v6887 = vunpack.c.l.b16 %v6572
        %v6888 = vunpack.c.l.b16 %v6573
        %v6889 = vunpack.c.l.b16 %v6574
        %v6890 = vunpack.c.l.b16 %v6575
        %v6891 = vunpack.c.l.b16 %v6576
        %v6892 = vunpack.c.l.b16 %v6577
        %v6893 = vunpack.c.l.b16 %v6578
        %v6894 = vunpack.c.h.b16 %v6572
        %v6895 = vunpack.c.h.b16 %v6573
        %v6896 = vunpack.c.h.b16 %v6574
        %v6897 = vunpack.c.h.b16 %v6575
        %v6898 = vunpack.c.h.b16 %v6576
        %v6899 = vunpack.c.h.b16 %v6577
        %v6900 = vunpack.c.h.b16 %v6578
        %v6901 = vunpack.c.l.b16 %v6579
        %v6902 = vunpack.c.l.b16 %v6580
        %v6903 = vunpack.c.l.b16 %v6581
        %v6904 = vunpack.c.l.b16 %v6582
        %v6905 = vunpack.c.l.b16 %v6583
        %v6906 = vunpack.c.l.b16 %v6584
        %v6907 = vunpack.c.l.b16 %v6585
        %v6908 = vunpack.c.h.b16 %v6579
        %v6909 = vunpack.c.h.b16 %v6580
        %v6910 = vunpack.c.h.b16 %v6581
        %v6911 = vunpack.c.h.b16 %v6582
        %v6912 = vunpack.c.h.b16 %v6583
        %v6913 = vunpack.c.h.b16 %v6584
        %v6914 = vunpack.c.h.b16 %v6585
        %v6915 = vunpack.c.l.b16 %v6586
        %v6916 = vunpack.c.l.b16 %v6587
        %v6917 = vunpack.c.l.b16 %v6588
        %v6918 = vunpack.c.l.b16 %v6589
        %v6919 = vunpack.c.l.b16 %v6590
        %v6920 = vunpack.c.l.b16 %v6591
        %v6921 = vunpack.c.l.b16 %v6592
        %v6922 = vunpack.c.h.b16 %v6586
        %v6923 = vunpack.c.h.b16 %v6587
        %v6924 = vunpack.c.h.b16 %v6588
        %v6925 = vunpack.c.h.b16 %v6589
        %v6926 = vunpack.c.h.b16 %v6590
        %v6927 = vunpack.c.h.b16 %v6591
        %v6928 = vunpack.c.h.b16 %v6592
        %v6929 = vpack.c.b16 %v6706, %v6705
        %v6930 = vpack.c.b16 %v6708, %v6707
        %v6931 = vpack.c.b16 %v6710, %v6709
        %v6932 = vpack.c.b16 %v6711, %v6711
        %v6933 = vpack.c.b16 %v6713, %v6712
        %v6934 = vpack.c.b16 %v6715, %v6714
        %v6935 = vpack.c.b16 %v6717, %v6716
        %v6936 = vpack.c.b16 %v6718, %v6718
        %v6937 = vpack.c.b16 %v6720, %v6719
        %v6938 = vpack.c.b16 %v6722, %v6721
        %v6939 = vpack.c.b16 %v6724, %v6723
        %v6940 = vpack.c.b16 %v6725, %v6725
        %v6941 = vpack.c.b16 %v6727, %v6726
        %v6942 = vpack.c.b16 %v6729, %v6728
        %v6943 = vpack.c.b16 %v6731, %v6730
        %v6944 = vpack.c.b16 %v6732, %v6732
        %v6945 = vpack.c.b16 %v6734, %v6733
        %v6946 = vpack.c.b16 %v6736, %v6735
        %v6947 = vpack.c.b16 %v6738, %v6737
        %v6948 = vpack.c.b16 %v6739, %v6739
        %v6949 = vpack.c.b16 %v6741, %v6740
        %v6950 = vpack.c.b16 %v6743, %v6742
        %v6951 = vpack.c.b16 %v6745, %v6744
        %v6952 = vpack.c.b16 %v6746, %v6746
        %v6953 = vpack.c.b16 %v6748, %v6747
        %v6954 = vpack.c.b16 %v6750, %v6749
        %v6955 = vpack.c.b16 %v6752, %v6751
        %v6956 = vpack.c.b16 %v6753, %v6753
        %v6957 = vpack.c.b16 %v6755, %v6754
        %v6958 = vpack.c.b16 %v6757, %v6756
        %v6959 = vpack.c.b16 %v6759, %v6758
        %v6960 = vpack.c.b16 %v6760, %v6760
        %v6961 = vpack.c.b16 %v6762, %v6761
        %v6962 = vpack.c.b16 %v6764, %v6763
        %v6963 = vpack.c.b16 %v6766, %v6765
        %v6964 = vpack.c.b16 %v6767, %v6767
        %v6965 = vpack.c.b16 %v6769, %v6768
        %v6966 = vpack.c.b16 %v6771, %v6770
        %v6967 = vpack.c.b16 %v6773, %v6772
        %v6968 = vpack.c.b16 %v6774, %v6774
        %v6969 = vpack.c.b16 %v6776, %v6775
        %v6970 = vpack.c.b16 %v6778, %v6777
        %v6971 = vpack.c.b16 %v6780, %v6779
        %v6972 = vpack.c.b16 %v6781, %v6781
        %v6973 = vpack.c.b16 %v6783, %v6782
        %v6974 = vpack.c.b16 %v6785, %v6784
        %v6975 = vpack.c.b16 %v6787, %v6786
        %v6976 = vpack.c.b16 %v6788, %v6788
        %v6977 = vpack.c.b16 %v6790, %v6789
        %v6978 = vpack.c.b16 %v6792, %v6791
        %v6979 = vpack.c.b16 %v6794, %v6793
        %v6980 = vpack.c.b16 %v6795, %v6795
        %v6981 = vpack.c.b16 %v6797, %v6796
        %v6982 = vpack.c.b16 %v6799, %v6798
        %v6983 = vpack.c.b16 %v6801, %v6800
        %v6984 = vpack.c.b16 %v6802, %v6802
        %v6985 = vpack.c.b16 %v6804, %v6803
        %v6986 = vpack.c.b16 %v6806, %v6805
        %v6987 = vpack.c.b16 %v6808, %v6807
        %v6988 = vpack.c.b16 %v6809, %v6809
        %v6989 = vpack.c.b16 %v6811, %v6810
        %v6990 = vpack.c.b16 %v6813, %v6812
        %v6991 = vpack.c.b16 %v6815, %v6814
        %v6992 = vpack.c.b16 %v6816, %v6816
        %v6993 = vpack.c.b16 %v6818, %v6817
        %v6994 = vpack.c.b16 %v6820, %v6819
        %v6995 = vpack.c.b16 %v6822, %v6821
        %v6996 = vpack.c.b16 %v6823, %v6823
        %v6997 = vpack.c.b16 %v6825, %v6824
        %v6998 = vpack.c.b16 %v6827, %v6826
        %v6999 = vpack.c.b16 %v6829, %v6828
        %v7000 = vpack.c.b16 %v6830, %v6830
        %v7001 = vpack.c.b16 %v6832, %v6831
        %v7002 = vpack.c.b16 %v6834, %v6833
        %v7003 = vpack.c.b16 %v6836, %v6835
        %v7004 = vpack.c.b16 %v6837, %v6837
        %v7005 = vpack.c.b16 %v6839, %v6838
        %v7006 = vpack.c.b16 %v6841, %v6840
        %v7007 = vpack.c.b16 %v6843, %v6842
        %v7008 = vpack.c.b16 %v6844, %v6844
        %v7009 = vpack.c.b16 %v6846, %v6845
        %v7010 = vpack.c.b16 %v6848, %v6847
        %v7011 = vpack.c.b16 %v6850, %v6849
        %v7012 = vpack.c.b16 %v6851, %v6851
        %v7013 = vpack.c.b16 %v6853, %v6852
        %v7014 = vpack.c.b16 %v6855, %v6854
        %v7015 = vpack.c.b16 %v6857, %v6856
        %v7016 = vpack.c.b16 %v6858, %v6858
        %v7017 = vpack.c.b16 %v6860, %v6859
        %v7018 = vpack.c.b16 %v6862, %v6861
        %v7019 = vpack.c.b16 %v6864, %v6863
        %v7020 = vpack.c.b16 %v6865, %v6865
        %v7021 = vpack.c.b16 %v6867, %v6866
        %v7022 = vpack.c.b16 %v6869, %v6868
        %v7023 = vpack.c.b16 %v6871, %v6870
        %v7024 = vpack.c.b16 %v6872, %v6872
        %v7025 = vpack.c.b16 %v6874, %v6873
        %v7026 = vpack.c.b16 %v6876, %v6875
        %v7027 = vpack.c.b16 %v6878, %v6877
        %v7028 = vpack.c.b16 %v6879, %v6879
        %v7029 = vpack.c.b16 %v6881, %v6880
        %v7030 = vpack.c.b16 %v6883, %v6882
        %v7031 = vpack.c.b16 %v6885, %v6884
        %v7032 = vpack.c.b16 %v6886, %v6886
        %v7033 = vpack.c.b16 %v6888, %v6887
        %v7034 = vpack.c.b16 %v6890, %v6889
        %v7035 = vpack.c.b16 %v6892, %v6891
        %v7036 = vpack.c.b16 %v6893, %v6893
        %v7037 = vpack.c.b16 %v6895, %v6894
        %v7038 = vpack.c.b16 %v6897, %v6896
        %v7039 = vpack.c.b16 %v6899, %v6898
        %v7040 = vpack.c.b16 %v6900, %v6900
        %v7041 = vpack.c.b16 %v6902, %v6901
        %v7042 = vpack.c.b16 %v6904, %v6903
        %v7043 = vpack.c.b16 %v6906, %v6905
        %v7044 = vpack.c.b16 %v6907, %v6907
        %v7045 = vpack.c.b16 %v6909, %v6908
        %v7046 = vpack.c.b16 %v6911, %v6910
        %v7047 = vpack.c.b16 %v6913, %v6912
        %v7048 = vpack.c.b16 %v6914, %v6914
        %v7049 = vpack.c.b16 %v6916, %v6915
        %v7050 = vpack.c.b16 %v6918, %v6917
        %v7051 = vpack.c.b16 %v6920, %v6919
        %v7052 = vpack.c.b16 %v6921, %v6921
        %v7053 = vpack.c.b16 %v6923, %v6922
        %v7054 = vpack.c.b16 %v6925, %v6924
        %v7055 = vpack.c.b16 %v6927, %v6926
        %v7056 = vpack.c.b16 %v6928, %v6928
        %7185 = vst [vmem:[%s667] sm:$0xff] %v6929
        %7186 = vst [vmem:[%s667 + $0x8] sm:$0xff] %v6930
        %7187 = vst [vmem:[%s667 + $0x10] sm:$0xff] %v6931
        %vm7188 = vcmask 125952
        %7189 = vst.msk [vmem:[%s667 + $0x18] sm:$0xf] %vm7188, %v6932
        %7190 = vst [vmem:[%s667 + $0x1c] sm:$0xff] %v6933
        %7191 = vst [vmem:[%s667 + $0x24] sm:$0xff] %v6934
        %7192 = vst [vmem:[%s667 + $0x2c] sm:$0xff] %v6935
        %7193 = vst.msk [vmem:[%s667 + $0x34] sm:$0xf] %vm7188, %v6936
        %7194 = vst [vmem:[%s667 + $0x38] sm:$0xff] %v6937
        %7195 = vst [vmem:[%s667 + $0x40] sm:$0xff] %v6938
        %7196 = vst [vmem:[%s667 + $0x48] sm:$0xff] %v6939
        %7197 = vst.msk [vmem:[%s667 + $0x50] sm:$0xf] %vm7188, %v6940
        %7198 = vst [vmem:[%s667 + $0x54] sm:$0xff] %v6941
        %7199 = vst [vmem:[%s667 + $0x5c] sm:$0xff] %v6942
        %7200 = vst [vmem:[%s667 + $0x64] sm:$0xff] %v6943
        %7201 = vst.msk [vmem:[%s667 + $0x6c] sm:$0xf] %vm7188, %v6944
        %7202 = vst [vmem:[%s667 + $0x70] sm:$0xff] %v6945
        %7203 = vst [vmem:[%s667 + $0x78] sm:$0xff] %v6946
        %7204 = vst [vmem:[%s667 + $0x80] sm:$0xff] %v6947
        %7205 = vst.msk [vmem:[%s667 + $0x88] sm:$0xf] %vm7188, %v6948
        %7206 = vst [vmem:[%s667 + $0x8c] sm:$0xff] %v6949
        %7207 = vst [vmem:[%s667 + $0x94] sm:$0xff] %v6950
        %7208 = vst [vmem:[%s667 + $0x9c] sm:$0xff] %v6951
        %7209 = vst.msk [vmem:[%s667 + $0xa4] sm:$0xf] %vm7188, %v6952
        %7210 = vst [vmem:[%s667 + $0xa8] sm:$0xff] %v6953
        %7211 = vst [vmem:[%s667 + $0xb0] sm:$0xff] %v6954
        %7212 = vst [vmem:[%s667 + $0xb8] sm:$0xff] %v6955
        %7213 = vst.msk [vmem:[%s667 + $0xc0] sm:$0xf] %vm7188, %v6956
        %7214 = vst [vmem:[%s667 + $0xc4] sm:$0xff] %v6957
        %7215 = vst [vmem:[%s667 + $0xcc] sm:$0xff] %v6958
        %7216 = vst [vmem:[%s667 + $0xd4] sm:$0xff] %v6959
        %7217 = vst.msk [vmem:[%s667 + $0xdc] sm:$0xf] %vm7188, %v6960
        %7218 = vst [vmem:[%s667 + $0xe0] sm:$0xff] %v6961
        %7219 = vst [vmem:[%s667 + $0xe8] sm:$0xff] %v6962
        %7220 = vst [vmem:[%s667 + $0xf0] sm:$0xff] %v6963
        %7221 = vst.msk [vmem:[%s667 + $0xf8] sm:$0xf] %vm7188, %v6964
        %7222 = vst [vmem:[%s667 + $0xfc] sm:$0xff] %v6965
        %7223 = vst [vmem:[%s667 + $0x104] sm:$0xff] %v6966
        %7224 = vst [vmem:[%s667 + $0x10c] sm:$0xff] %v6967
        %7225 = vst.msk [vmem:[%s667 + $0x114] sm:$0xf] %vm7188, %v6968
        %7226 = vst [vmem:[%s667 + $0x118] sm:$0xff] %v6969
        %7227 = vst [vmem:[%s667 + $0x120] sm:$0xff] %v6970
        %7228 = vst [vmem:[%s667 + $0x128] sm:$0xff] %v6971
        %7229 = vst.msk [vmem:[%s667 + $0x130] sm:$0xf] %vm7188, %v6972
        %7230 = vst [vmem:[%s667 + $0x134] sm:$0xff] %v6973
        %7231 = vst [vmem:[%s667 + $0x13c] sm:$0xff] %v6974
        %7232 = vst [vmem:[%s667 + $0x144] sm:$0xff] %v6975
        %7233 = vst.msk [vmem:[%s667 + $0x14c] sm:$0xf] %vm7188, %v6976
        %7234 = vst [vmem:[%s667 + $0x150] sm:$0xff] %v6977
        %7235 = vst [vmem:[%s667 + $0x158] sm:$0xff] %v6978
        %7236 = vst [vmem:[%s667 + $0x160] sm:$0xff] %v6979
        %7237 = vst.msk [vmem:[%s667 + $0x168] sm:$0xf] %vm7188, %v6980
        %7238 = vst [vmem:[%s667 + $0x16c] sm:$0xff] %v6981
        %7239 = vst [vmem:[%s667 + $0x174] sm:$0xff] %v6982
        %7240 = vst [vmem:[%s667 + $0x17c] sm:$0xff] %v6983
        %7241 = vst.msk [vmem:[%s667 + $0x184] sm:$0xf] %vm7188, %v6984
        %7242 = vst [vmem:[%s667 + $0x188] sm:$0xff] %v6985
        %7243 = vst [vmem:[%s667 + $0x190] sm:$0xff] %v6986
        %7244 = vst [vmem:[%s667 + $0x198] sm:$0xff] %v6987
        %7245 = vst.msk [vmem:[%s667 + $0x1a0] sm:$0xf] %vm7188, %v6988
        %7246 = vst [vmem:[%s667 + $0x1a4] sm:$0xff] %v6989
        %7247 = vst [vmem:[%s667 + $0x1ac] sm:$0xff] %v6990
        %7248 = vst [vmem:[%s667 + $0x1b4] sm:$0xff] %v6991
        %7249 = vst.msk [vmem:[%s667 + $0x1bc] sm:$0xf] %vm7188, %v6992
        %7250 = vst [vmem:[%s667 + $0x1c0] sm:$0xff] %v6993
        %7251 = vst [vmem:[%s667 + $0x1c8] sm:$0xff] %v6994
        %7252 = vst [vmem:[%s667 + $0x1d0] sm:$0xff] %v6995
        %7253 = vst.msk [vmem:[%s667 + $0x1d8] sm:$0xf] %vm7188, %v6996
        %7254 = vst [vmem:[%s667 + $0x1dc] sm:$0xff] %v6997
        %7255 = vst [vmem:[%s667 + $0x1e4] sm:$0xff] %v6998
        %7256 = vst [vmem:[%s667 + $0x1ec] sm:$0xff] %v6999
        %7257 = vst.msk [vmem:[%s667 + $0x1f4] sm:$0xf] %vm7188, %v7000
        %7258 = vst [vmem:[%s667 + $0x1f8] sm:$0xff] %v7001
        %7259 = vst [vmem:[%s667 + $0x200] sm:$0xff] %v7002
        %7260 = vst [vmem:[%s667 + $0x208] sm:$0xff] %v7003
        %7261 = vst.msk [vmem:[%s667 + $0x210] sm:$0xf] %vm7188, %v7004
        %7262 = vst [vmem:[%s667 + $0x214] sm:$0xff] %v7005
        %7263 = vst [vmem:[%s667 + $0x21c] sm:$0xff] %v7006
        %7264 = vst [vmem:[%s667 + $0x224] sm:$0xff] %v7007
        %7265 = vst.msk [vmem:[%s667 + $0x22c] sm:$0xf] %vm7188, %v7008
        %7266 = vst [vmem:[%s667 + $0x230] sm:$0xff] %v7009
        %7267 = vst [vmem:[%s667 + $0x238] sm:$0xff] %v7010
        %7268 = vst [vmem:[%s667 + $0x240] sm:$0xff] %v7011
        %7269 = vst.msk [vmem:[%s667 + $0x248] sm:$0xf] %vm7188, %v7012
        %7270 = vst [vmem:[%s667 + $0x24c] sm:$0xff] %v7013
        %7271 = vst [vmem:[%s667 + $0x254] sm:$0xff] %v7014
        %7272 = vst [vmem:[%s667 + $0x25c] sm:$0xff] %v7015
        %7273 = vst.msk [vmem:[%s667 + $0x264] sm:$0xf] %vm7188, %v7016
        %7274 = vst [vmem:[%s667 + $0x268] sm:$0xff] %v7017
        %7275 = vst [vmem:[%s667 + $0x270] sm:$0xff] %v7018
        %7276 = vst [vmem:[%s667 + $0x278] sm:$0xff] %v7019
        %7277 = vst.msk [vmem:[%s667 + $0x280] sm:$0xf] %vm7188, %v7020
        %7278 = vst [vmem:[%s667 + $0x284] sm:$0xff] %v7021
        %7279 = vst [vmem:[%s667 + $0x28c] sm:$0xff] %v7022
        %7280 = vst [vmem:[%s667 + $0x294] sm:$0xff] %v7023
        %7281 = vst.msk [vmem:[%s667 + $0x29c] sm:$0xf] %vm7188, %v7024
        %7282 = vst [vmem:[%s667 + $0x2a0] sm:$0xff] %v7025
        %7283 = vst [vmem:[%s667 + $0x2a8] sm:$0xff] %v7026
        %7284 = vst [vmem:[%s667 + $0x2b0] sm:$0xff] %v7027
        %7285 = vst.msk [vmem:[%s667 + $0x2b8] sm:$0xf] %vm7188, %v7028
        %7286 = vst [vmem:[%s667 + $0x2bc] sm:$0xff] %v7029
        %7287 = vst [vmem:[%s667 + $0x2c4] sm:$0xff] %v7030
        %7288 = vst [vmem:[%s667 + $0x2cc] sm:$0xff] %v7031
        %7289 = vst.msk [vmem:[%s667 + $0x2d4] sm:$0xf] %vm7188, %v7032
        %7290 = vst [vmem:[%s667 + $0x2d8] sm:$0xff] %v7033
        %7291 = vst [vmem:[%s667 + $0x2e0] sm:$0xff] %v7034
        %7292 = vst [vmem:[%s667 + $0x2e8] sm:$0xff] %v7035
        %7293 = vst.msk [vmem:[%s667 + $0x2f0] sm:$0xf] %vm7188, %v7036
        %7294 = vst [vmem:[%s667 + $0x2f4] sm:$0xff] %v7037
        %7295 = vst [vmem:[%s667 + $0x2fc] sm:$0xff] %v7038
        %7296 = vst [vmem:[%s667 + $0x304] sm:$0xff] %v7039
        %7297 = vst.msk [vmem:[%s667 + $0x30c] sm:$0xf] %vm7188, %v7040
        %7298 = vst [vmem:[%s667 + $0x310] sm:$0xff] %v7041
        %7299 = vst [vmem:[%s667 + $0x318] sm:$0xff] %v7042
        %7300 = vst [vmem:[%s667 + $0x320] sm:$0xff] %v7043
        %7301 = vst.msk [vmem:[%s667 + $0x328] sm:$0xf] %vm7188, %v7044
        %7302 = vst [vmem:[%s667 + $0x32c] sm:$0xff] %v7045
        %7303 = vst [vmem:[%s667 + $0x334] sm:$0xff] %v7046
        %7304 = vst [vmem:[%s667 + $0x33c] sm:$0xff] %v7047
        %7305 = vst.msk [vmem:[%s667 + $0x344] sm:$0xf] %vm7188, %v7048
        %7306 = vst [vmem:[%s667 + $0x348] sm:$0xff] %v7049
        %7307 = vst [vmem:[%s667 + $0x350] sm:$0xff] %v7050
        %7308 = vst [vmem:[%s667 + $0x358] sm:$0xff] %v7051
        %7309 = vst.msk [vmem:[%s667 + $0x360] sm:$0xf] %vm7188, %v7052
        %7310 = vst [vmem:[%s667 + $0x364] sm:$0xff] %v7053
        %7311 = vst [vmem:[%s667 + $0x36c] sm:$0xff] %v7054
        %7312 = vst [vmem:[%s667 + $0x374] sm:$0xff] %v7055
        %7313 = vst.msk [vmem:[%s667 + $0x37c] sm:$0xf] %vm7188, %v7056
        %s7314 = sand.u32 %s489, 1
        %s7315 = scalar_lea.sflag [#allocation3], %s7314
        %s7316 = sand.u32 %s489, 1
        %s7317 = smul.addr %s7316, 896
        %s7318 = scalar_lea.vmem [#allocation2], %s7317
        // Predicated region
        $region105: #{ae_forward.1} parent=103 // pred_check
          %p7319 = pneg %p499
        $region106: #{ae_forward.1} parent=103 // pred_check_branch
          %7321 = sbr.rel (%p7319) target = $region108
        $region107: #{ae_forward.1} parent=103 // pred_region
          %s7322 = smul.u32 32, %s35
          %s7323 = ssub.s32 38, %s7322
          %p7324 = scmp.lt.s32.totalorder %s7323, 32
          %s7325 = scalar_select %p7324, %s7323, 32
          %s7326 = smul.u32 64, %s7325
          %s7327 = smul.u32 %s7326, 7
          %s7329 = ssub.s32 14336, %s7327
          %7330 = vsyncadd %s7315, %s7329
          %p7331 = scmp.ne.s32.totalorder 0, %s7327
          %s7332 = smul.addr %s7322, 7
          %s7333 = smul.addr %s7332, 64
          %s7334 = scalar_lea.hbm %s21, %s7333
          %s7335 = smul.u32 28, %s7325
          %s7336 = sshll.u32 %s7318, 4
          %s7337 = int_to_ptr.vmem [resolvable:$true] %s7336
          %s7338 = sshll.u32 %s7335, 4
          %7342 = dma.vmem_to_hbm [thread:$0]  (%p7331), %s7337, %s7338, %s7334, %s7315, 448, 448, 28
        $region108: #{ae_forward.1} parent=103 // pred_fallthru
          _
      $region104: #{ae_forward.1} parent=5 // pred_fallthru
        _
      %p7343 = scmp.le.s32.totalorder 2, %s30
      // Predicated region
      $region109: #{ae_forward.1} parent=5 // pred_check
        %p7344 = pneg %p7343
      $region110: #{ae_forward.1} parent=5 // pred_check_branch
        %7346 = sbr.rel (%p7344) target = $region112
      $region111: #{ae_forward.1} parent=5 // pred_region
        %s7347 = ssub.s32 %s30, 2
        // Predicated region
        $region113: #{ae_forward.1} parent=111 // pred_check
          %p7348 = pneg %p505
        $region114: #{ae_forward.1} parent=111 // pred_check_branch
          %7350 = sbr.rel (%p7348) target = $region116
        $region115: #{ae_forward.1} parent=111 // pred_region
          %s7351 = sand.u32 %s490, 1
          %s7352 = scalar_lea.sflag [#allocation3], %s7351
          %s7353 = sand.u32 %s490, 1
          %s7354 = smul.addr %s7353, 896
          %s7355 = scalar_lea.vmem [#allocation2], %s7354
          %7356 = dma.done %s7352, 14336
        $region116: #{ae_forward.1} parent=111 // pred_fallthru
          _
      $region112: #{ae_forward.1} parent=5 // pred_fallthru
        _
    $region6: #{ae_forward.1} parent=1 // loop_footer
      %s34 = sadd.s32 1, %s30
    $region7: #{ae_forward.1} parent=1 // loop_footer_branch
      %29 = sbr.rel target = $region3
    $region8: #{ae_forward.1} parent=1 // loop_exit
      _
    %7357 = vsyncpa [#allocation3], 1
    %s7358 = scalar_lea.sflag [#allocation3], 1
    %7359 = vsyncpa %s7358, 1

</llo_original>
